<compile_context>
chip_gen: v7x
topology: tpu7x:2x2x1
jax: 0.10.0
libtpu: 0.0.40
codegen_flags: <defaults>
</compile_context>

<pallas_src>
import jax
import jax.numpy as jnp
from jax.experimental import pallas as pl
from jax.experimental.pallas import tpu as pltpu


# ----------------------------------------------------------------------------
# Fused Pallas kernel: conv(1,20)+BN+SiLU -> conv(22,1)+BN+SiLU -> avgpool ->
#                      1x1 conv, for B lane-packed batch elements per grid step.
# ----------------------------------------------------------------------------
def _convblock_kernel(x_ref, m1_ref, s1_ref, m2_ref, s2_ref,
                      pool_ref, w3_ref, b3_ref, o_ref,
                      patch_ref, a1_ref):
    Hp = x_ref.shape[1]                 # 24  (22 EEG rows + 2 zero pad rows)
    LW = patch_ref.shape[1]             # B * Wp packed lane width
    K1 = patch_ref.shape[0] // Hp       # 20 conv-1 taps
    R1 = a1_ref.shape[0]                # 22 * 40 = 880 stage-1 rows (h, c)

    # ---- im2col: K1 lane-shifted FULL-WIDTH slabs (no masked stores) --------
    # patch[(k*Hp + h), b*Wp + t] = x[b, h, t + k]   (pad lanes hold junk that
    # the zero rows of the pooling matrix eliminate later).
    xsrc = x_ref[0]                                         # (Hp, B*Wp+128) bf16
    for k in range(K1):                                     # static unroll
        patch_ref[k * Hp:(k + 1) * Hp, :] = xsrc[:, k:k + LW]

    # ---- stage 1: Conv2d(1,40,(1,20)) + BN (scale folded) + SiLU ------------
    # Block-diagonal-over-h weight -> single-matmul formulation; the epilogue
    # is chunked over ~176-row tiles to cap f32 live ranges (v5e guidance).
    row_chunk = R1
    for cand in (176, 128, 88, 80, 40, 16, 8):
        if R1 % cand == 0:
            row_chunk = cand
            break
    for r in range(R1 // row_chunk):                        # static unroll
        lo = r * row_chunk
        y1 = jnp.dot(m1_ref[lo:lo + row_chunk, :], patch_ref[...],
                     preferred_element_type=jnp.float32)
        y1 = y1 + s1_ref[lo:lo + row_chunk, :]
        a1_ref[lo:lo + row_chunk, :] = (y1 * jax.nn.sigmoid(y1)).astype(jnp.bfloat16)

    # ---- stage 2: Conv2d(40,40,(22,1)) + BN + SiLU --------------------------
    # Contracts the full (h, c) row axis in one MXU matmul.
    y2 = jnp.dot(m2_ref[...], a1_ref[...],
                 preferred_element_type=jnp.float32) + s2_ref[...]   # (40, B*Wp)
    a2 = y2 * jax.nn.sigmoid(y2)

    # ---- stage 3: AvgPool (block-diag-per-element pooling matrix)
    #               + Dropout(eval: identity) + Conv2d(40, E, (1,1)) ----------
    pooled = jnp.dot(a2, pool_ref[...],
                     preferred_element_type=jnp.float32)             # (40, B*n_pool)
    out = jnp.dot(w3_ref[...], pooled,
                  preferred_element_type=jnp.float32) + b3_ref[...]  # (E, B*n_pool)
    o_ref[0] = out.astype(o_ref.dtype)


# ----------------------------------------------------------------------------
# Parameters (deterministic synthetic init, shapes from ConvBlock.__init__)
# ----------------------------------------------------------------------------
def init_params(key, embedding_size):
    ks = jax.random.split(key, 14)
    f32 = jnp.float32
    return {
        # Conv2d(1, 40, (1, 20)) + BatchNorm2d(40)
        "w1": jax.random.normal(ks[0], (40, 1, 1, 20), f32) * 0.2,
        "b1": jax.random.normal(ks[1], (40,), f32) * 0.1,
        "gamma1": 1.0 + 0.1 * jax.random.normal(ks[2], (40,), f32),
        "beta1": 0.1 * jax.random.normal(ks[3], (40,), f32),
        "mean1": 0.1 * jax.random.normal(ks[4], (40,), f32),
        "var1": jax.random.uniform(ks[5], (40,), f32, 0.5, 1.5),
        # Conv2d(40, 40, (22, 1)) + BatchNorm2d(40)
        "w2": jax.random.normal(ks[6], (40, 40, 22, 1), f32) * 0.05,
        "b2": jax.random.normal(ks[7], (40,), f32) * 0.1,
        "gamma2": 1.0 + 0.1 * jax.random.normal(ks[8], (40,), f32),
        "beta2": 0.1 * jax.random.normal(ks[9], (40,), f32),
        "mean2": 0.1 * jax.random.normal(ks[10], (40,), f32),
        "var2": jax.random.uniform(ks[11], (40,), f32, 0.5, 1.5),
        # Conv2d(40, embedding_size, (1, 1))
        "w3": jax.random.normal(ks[12], (embedding_size, 40, 1, 1), f32) * 0.15,
        "b3": jax.random.normal(ks[13], (embedding_size,), f32) * 0.1,
    }


# ----------------------------------------------------------------------------
# Forward pass: weight folding + lane packing at trace time, one pallas_call
# ----------------------------------------------------------------------------
def conv_block_forward(x, params, *, eps=1e-5, batch_per_step=None):
    N, cin, H, W = x.shape
    assert cin == 1 and H == 22, "ConvBlock expects NCHW input (N, 1, 22, W)"
    f32, bf16 = jnp.float32, jnp.bfloat16

    nC = params["w1"].shape[0]                    # 40
    K1 = params["w1"].shape[-1]                   # 20
    W1 = W - K1 + 1                               # conv-1 output width
    pool_k, pool_s = 30, 15
    n_pool = (W1 - pool_k) // pool_s + 1
    assert n_pool >= 1, "input too short for AvgPool2d((1,30),(1,15))"
    E = params["w3"].shape[0]

    Hp = 24                                       # 22 rows padded to mult. of 8
    Wp = ((W + 127) // 128) * 128                 # per-element lane chunk (>= W)

    # Per-step batch packing: aim for big lane occupancy while keeping >= 2
    # grid steps when N >= 2 so "parallel" can shard across 2 TensorCores.
    if batch_per_step is None:
        if N >= 16:
            B = 8
        elif N >= 2:
            B = max(1, N // 2)
        else:
            B = 1
    else:
        B = max(1, min(batch_per_step, N))
    G = (N + B - 1) // B
    Npad = G * B

    # ---- fold BatchNorm (eval) into conv weights / additive shifts ----------
    scale1 = params["gamma1"] / jnp.sqrt(params["var1"] + eps)
    shift1 = params["beta1"] + (params["b1"] - params["mean1"]) * scale1
    scale2 = params["gamma2"] / jnp.sqrt(params["var2"] + eps)
    shift2 = params["beta2"] + (params["b2"] - params["mean2"]) * scale2

    # Stage-1 weight, block-diagonal over h (columns indexed by (k, g<Hp)):
    #   m1[h*nC + c, k*Hp + g] = w1[c, k] * scale1[c] * (g == h)
    w1s = params["w1"].reshape(nC, K1) * scale1[:, None]              # (40, 20)
    sel = jnp.eye(Hp, dtype=f32)[:H]                                  # (H, Hp)
    m1 = jnp.einsum("ck,hg->hckg", w1s, sel).reshape(H * nC, K1 * Hp)  # (880, 480)
    s1 = jnp.tile(shift1, H).reshape(H * nC, 1)

    # Stage-2 weight: m2[d, h*nC + c] = w2[d, c, h] * scale2[d]
    m2 = (jnp.transpose(params["w2"][:, :, :, 0], (0, 2, 1)).reshape(nC, H * nC)
          * scale2[:, None])                                          # (40, 880)
    s2 = shift2.reshape(nC, 1)

    # Constant pooling matrix, block-diagonal over the B packed elements.
    t_idx = jnp.arange(Wp)[:, None]
    p_idx = jnp.arange(n_pool)[None, :]
    pool_mat = (((t_idx >= p_idx * pool_s) &
                 (t_idx < p_idx * pool_s + pool_k)).astype(f32) / pool_k)  # (Wp, n_pool)
    pool_big = jnp.kron(jnp.eye(B, dtype=f32), pool_mat)              # (B*Wp, B*n_pool)

    w3 = params["w3"].reshape(E, nC)
    b3 = params["b3"].reshape(E, 1)

    # ---- lane-packed bf16 input: (G, Hp, B*Wp + 128) -------------------------
    #   x_packed[g, h, b*Wp + w] = x[g*B + b, 0, h, w]  (zeros elsewhere);
    #   the trailing 128 zero lanes give slack for the in-kernel k-shifts.
    x2d = x[:, 0].astype(f32)
    x2d = jnp.pad(x2d, ((0, Npad - N), (0, Hp - H), (0, Wp - W)))
    xp = (x2d.reshape(G, B, Hp, Wp).transpose(0, 2, 1, 3)
              .reshape(G, Hp, B * Wp))
    xp = jnp.pad(xp, ((0, 0), (0, 0), (0, 128))).astype(bf16)

    # Weight operands are grid-invariant (index_map constant), so Pallas does
    # not re-DMA them between steps; double-buffer VMEM cost is ~1 MB.
    out_packed = pl.pallas_call(
        _convblock_kernel,
        out_shape=jax.ShapeDtypeStruct((G, E, B * n_pool), f32),
        grid=(G,),
        in_specs=[
            pl.BlockSpec((1, Hp, B * Wp + 128), lambda n: (n, 0, 0)),  # packed input
            pl.BlockSpec((H * nC, K1 * Hp), lambda n: (0, 0)),         # m1 (bf16)
            pl.BlockSpec((H * nC, 1), lambda n: (0, 0)),               # shift1
            pl.BlockSpec((nC, H * nC), lambda n: (0, 0)),              # m2 (bf16)
            pl.BlockSpec((nC, 1), lambda n: (0, 0)),                   # shift2
            pl.BlockSpec((B * Wp, B * n_pool), lambda n: (0, 0)),      # pooling matrix
            pl.BlockSpec((E, nC), lambda n: (0, 0)),                   # 1x1 conv weight
            pl.BlockSpec((E, 1), lambda n: (0, 0)),                    # 1x1 conv bias
        ],
        out_specs=pl.BlockSpec((1, E, B * n_pool), lambda n: (n, 0, 0)),
        scratch_shapes=[pltpu.VMEM((K1 * Hp, B * Wp), bf16),   # im2col patches
                        pltpu.VMEM((H * nC, B * Wp), bf16)],   # a1 activations
        compiler_params=pltpu.CompilerParams(
            dimension_semantics=("parallel",)),
    )(xp, m1.astype(bf16), s1, m2.astype(bf16), s2, pool_big, w3, b3)

    # Un-pack the lane-dense output slab in the wrapper (layout plumbing only).
    out = (out_packed.reshape(G, E, B, n_pool).transpose(0, 2, 1, 3)
                     .reshape(Npad, E, n_pool))
    return out[:N]


# ----------------------------------------------------------------------------
# Pure-JAX reference (eval-mode semantics) for a numerical sanity check
# ----------------------------------------------------------------------------
def _reference(x, params, eps=1e-5):
    hi = jax.lax.Precision.HIGHEST
    N, _, H, W = x.shape
    K1 = params["w1"].shape[-1]
    W1 = W - K1 + 1
    w1 = params["w1"].reshape(-1, K1)
    patches = jnp.stack([x[:, 0, :, k:k + W1] for k in range(K1)], axis=-1)
    c1 = jnp.einsum("nhwk,ck->nchw", patches, w1, precision=hi)
    c1 = c1 + params["b1"][None, :, None, None]
    s1 = params["gamma1"] / jnp.sqrt(params["var1"] + eps)
    c1 = c1 * s1[None, :, None, None] + (params["beta1"]
                                         - params["mean1"] * s1)[None, :, None, None]
    a1 = c1 * jax.nn.sigmoid(c1)
    w2 = params["w2"][:, :, :, 0]
    c2 = jnp.einsum("nchw,dch->ndw", a1, w2, precision=hi) + params["b2"][None, :, None]
    s2 = params["gamma2"] / jnp.sqrt(params["var2"] + eps)
    c2 = c2 * s2[None, :, None] + (params["beta2"] - params["mean2"] * s2)[None, :, None]
    a2 = c2 * jax.nn.sigmoid(c2)
    n_pool = (W1 - 30) // 15 + 1
    pooled = jnp.stack([a2[:, :, p * 15:p * 15 + 30].mean(-1) for p in range(n_pool)],
                       axis=-1)
    w3 = params["w3"].reshape(-1, a2.shape[1])
    return jnp.einsum("ec,ncp->nep", w3, pooled, precision=hi) + params["b3"][None, :, None]


# ----------------------------------------------------------------------------
if __name__ == "__main__":
    key = jax.random.PRNGKey(0)
    k_x, k_p = jax.random.split(key)

    N, H, W = 2, 22, 64           # 22 EEG channels, 64 time samples
    embedding_size = 32
    dropout_p = 0.25              # identity in eval mode

    x = jax.random.normal(k_x, (N, 1, H, W), dtype=jnp.float32)
    params = init_params(k_p, embedding_size)

    out = jax.jit(conv_block_forward)(x, params)
    out = jax.block_until_ready(out)

    expected_w = ((W - 20 + 1) - 30) // 15 + 1     # -> 2
    assert out.shape == (N, embedding_size, expected_w), out.shape
    assert bool(jnp.all(jnp.isfinite(out)))

    ref = _reference(x, params)
    assert bool(jnp.allclose(out, ref, rtol=8e-2, atol=8e-2)), (
        "max abs err = %f" % float(jnp.max(jnp.abs(out - ref))))

    print("KERNEL_OK")
</pallas_src>

<mosaic_0001>
module attributes {stable_mosaic.version = 11 : i64} {
  func.func @_convblock_kernel(%arg0: i32, %arg1: memref<1x24x256xbf16, #tpu.memory_space<vmem>>, %arg2: memref<880x480xbf16, #tpu.memory_space<vmem>>, %arg3: memref<880x1xf32, #tpu.memory_space<vmem>>, %arg4: memref<40x880xbf16, #tpu.memory_space<vmem>>, %arg5: memref<40x1xf32, #tpu.memory_space<vmem>>, %arg6: memref<128x2xf32, #tpu.memory_space<vmem>>, %arg7: memref<32x40xf32, #tpu.memory_space<vmem>>, %arg8: memref<32x1xf32, #tpu.memory_space<vmem>>, %arg9: memref<1x32x2xf32, #tpu.memory_space<vmem>>, %arg10: memref<480x128xbf16, #tpu.memory_space<vmem>>, %arg11: memref<880x128xbf16, #tpu.memory_space<vmem>>) attributes {dimension_semantics = [#tpu.dimension_semantics<parallel>], iteration_bounds = array<i64: 2>, scalar_prefetch = 0 : i64, scratch_operands = 2 : i64, tpu.core_type = #tpu.core_type<tc>, window_params = [{transform_indices = @transform_0, window_bounds = array<i64: 1, 24, 256>}, {pipeline_mode = #tpu.pipeline_mode<synchronous>, transform_indices = @transform_1, window_bounds = array<i64: 880, 480>}, {pipeline_mode = #tpu.pipeline_mode<synchronous>, transform_indices = @transform_2, window_bounds = array<i64: 880, 1>}, {pipeline_mode = #tpu.pipeline_mode<synchronous>, transform_indices = @transform_3, window_bounds = array<i64: 40, 880>}, {pipeline_mode = #tpu.pipeline_mode<synchronous>, transform_indices = @transform_4, window_bounds = array<i64: 40, 1>}, {pipeline_mode = #tpu.pipeline_mode<synchronous>, transform_indices = @transform_5, window_bounds = array<i64: 128, 2>}, {pipeline_mode = #tpu.pipeline_mode<synchronous>, transform_indices = @transform_6, window_bounds = array<i64: 32, 40>}, {pipeline_mode = #tpu.pipeline_mode<synchronous>, transform_indices = @transform_7, window_bounds = array<i64: 32, 1>}, {transform_indices = @transform_8, window_bounds = array<i64: 1, 32, 2>}]} {
    %c0 = arith.constant 0 : index
    %c0_0 = arith.constant 0 : index
    %c0_1 = arith.constant 0 : index
    %0 = vector.load %arg1[%c0, %c0_0, %c0_1] : memref<1x24x256xbf16, #tpu.memory_space<vmem>>, vector<1x24x256xbf16>
    %1 = vector.shape_cast %0 : vector<1x24x256xbf16> to vector<24x256xbf16>
    %2 = vector.extract_strided_slice %1 {offsets = [0, 0], sizes = [24, 128], strides = [1, 1]} : vector<24x256xbf16> to vector<24x128xbf16>
    %c0_2 = arith.constant 0 : index
    %c0_3 = arith.constant 0 : index
    %3 = vector.load %arg10[%c0_2, %c0_3] : memref<480x128xbf16, #tpu.memory_space<vmem>>, vector<24x128xbf16>
    tpu.vector_store %arg10[%c0_2, %c0_3], %2 {strides = array<i32>} : memref<480x128xbf16, #tpu.memory_space<vmem>>, vector<24x128xbf16>,
    %4 = vector.extract_strided_slice %1 {offsets = [0, 1], sizes = [24, 128], strides = [1, 1]} : vector<24x256xbf16> to vector<24x128xbf16>
    %c24 = arith.constant 24 : index
    %c0_4 = arith.constant 0 : index
    %5 = vector.load %arg10[%c24, %c0_4] : memref<480x128xbf16, #tpu.memory_space<vmem>>, vector<24x128xbf16>
    tpu.vector_store %arg10[%c24, %c0_4], %4 {strides = array<i32>} : memref<480x128xbf16, #tpu.memory_space<vmem>>, vector<24x128xbf16>,
    %6 = vector.extract_strided_slice %1 {offsets = [0, 2], sizes = [24, 128], strides = [1, 1]} : vector<24x256xbf16> to vector<24x128xbf16>
    %c48 = arith.constant 48 : index
    %c0_5 = arith.constant 0 : index
    %7 = vector.load %arg10[%c48, %c0_5] : memref<480x128xbf16, #tpu.memory_space<vmem>>, vector<24x128xbf16>
    tpu.vector_store %arg10[%c48, %c0_5], %6 {strides = array<i32>} : memref<480x128xbf16, #tpu.memory_space<vmem>>, vector<24x128xbf16>,
    %8 = vector.extract_strided_slice %1 {offsets = [0, 3], sizes = [24, 128], strides = [1, 1]} : vector<24x256xbf16> to vector<24x128xbf16>
    %c72 = arith.constant 72 : index
    %c0_6 = arith.constant 0 : index
    %9 = vector.load %arg10[%c72, %c0_6] : memref<480x128xbf16, #tpu.memory_space<vmem>>, vector<24x128xbf16>
    tpu.vector_store %arg10[%c72, %c0_6], %8 {strides = array<i32>} : memref<480x128xbf16, #tpu.memory_space<vmem>>, vector<24x128xbf16>,
    %10 = vector.extract_strided_slice %1 {offsets = [0, 4], sizes = [24, 128], strides = [1, 1]} : vector<24x256xbf16> to vector<24x128xbf16>
    %c96 = arith.constant 96 : index
    %c0_7 = arith.constant 0 : index
    %11 = vector.load %arg10[%c96, %c0_7] : memref<480x128xbf16, #tpu.memory_space<vmem>>, vector<24x128xbf16>
    tpu.vector_store %arg10[%c96, %c0_7], %10 {strides = array<i32>} : memref<480x128xbf16, #tpu.memory_space<vmem>>, vector<24x128xbf16>,
    %12 = vector.extract_strided_slice %1 {offsets = [0, 5], sizes = [24, 128], strides = [1, 1]} : vector<24x256xbf16> to vector<24x128xbf16>
    %c120 = arith.constant 120 : index
    %c0_8 = arith.constant 0 : index
    %13 = vector.load %arg10[%c120, %c0_8] : memref<480x128xbf16, #tpu.memory_space<vmem>>, vector<24x128xbf16>
    tpu.vector_store %arg10[%c120, %c0_8], %12 {strides = array<i32>} : memref<480x128xbf16, #tpu.memory_space<vmem>>, vector<24x128xbf16>,
    %14 = vector.extract_strided_slice %1 {offsets = [0, 6], sizes = [24, 128], strides = [1, 1]} : vector<24x256xbf16> to vector<24x128xbf16>
    %c144 = arith.constant 144 : index
    %c0_9 = arith.constant 0 : index
    %15 = vector.load %arg10[%c144, %c0_9] : memref<480x128xbf16, #tpu.memory_space<vmem>>, vector<24x128xbf16>
    tpu.vector_store %arg10[%c144, %c0_9], %14 {strides = array<i32>} : memref<480x128xbf16, #tpu.memory_space<vmem>>, vector<24x128xbf16>,
    %16 = vector.extract_strided_slice %1 {offsets = [0, 7], sizes = [24, 128], strides = [1, 1]} : vector<24x256xbf16> to vector<24x128xbf16>
    %c168 = arith.constant 168 : index
    %c0_10 = arith.constant 0 : index
    %17 = vector.load %arg10[%c168, %c0_10] : memref<480x128xbf16, #tpu.memory_space<vmem>>, vector<24x128xbf16>
    tpu.vector_store %arg10[%c168, %c0_10], %16 {strides = array<i32>} : memref<480x128xbf16, #tpu.memory_space<vmem>>, vector<24x128xbf16>,
    %18 = vector.extract_strided_slice %1 {offsets = [0, 8], sizes = [24, 128], strides = [1, 1]} : vector<24x256xbf16> to vector<24x128xbf16>
    %c192 = arith.constant 192 : index
    %c0_11 = arith.constant 0 : index
    %19 = vector.load %arg10[%c192, %c0_11] : memref<480x128xbf16, #tpu.memory_space<vmem>>, vector<24x128xbf16>
    tpu.vector_store %arg10[%c192, %c0_11], %18 {strides = array<i32>} : memref<480x128xbf16, #tpu.memory_space<vmem>>, vector<24x128xbf16>,
    %20 = vector.extract_strided_slice %1 {offsets = [0, 9], sizes = [24, 128], strides = [1, 1]} : vector<24x256xbf16> to vector<24x128xbf16>
    %c216 = arith.constant 216 : index
    %c0_12 = arith.constant 0 : index
    %21 = vector.load %arg10[%c216, %c0_12] : memref<480x128xbf16, #tpu.memory_space<vmem>>, vector<24x128xbf16>
    tpu.vector_store %arg10[%c216, %c0_12], %20 {strides = array<i32>} : memref<480x128xbf16, #tpu.memory_space<vmem>>, vector<24x128xbf16>,
    %22 = vector.extract_strided_slice %1 {offsets = [0, 10], sizes = [24, 128], strides = [1, 1]} : vector<24x256xbf16> to vector<24x128xbf16>
    %c240 = arith.constant 240 : index
    %c0_13 = arith.constant 0 : index
    %23 = vector.load %arg10[%c240, %c0_13] : memref<480x128xbf16, #tpu.memory_space<vmem>>, vector<24x128xbf16>
    tpu.vector_store %arg10[%c240, %c0_13], %22 {strides = array<i32>} : memref<480x128xbf16, #tpu.memory_space<vmem>>, vector<24x128xbf16>,
    %24 = vector.extract_strided_slice %1 {offsets = [0, 11], sizes = [24, 128], strides = [1, 1]} : vector<24x256xbf16> to vector<24x128xbf16>
    %c264 = arith.constant 264 : index
    %c0_14 = arith.constant 0 : index
    %25 = vector.load %arg10[%c264, %c0_14] : memref<480x128xbf16, #tpu.memory_space<vmem>>, vector<24x128xbf16>
    tpu.vector_store %arg10[%c264, %c0_14], %24 {strides = array<i32>} : memref<480x128xbf16, #tpu.memory_space<vmem>>, vector<24x128xbf16>,
    %26 = vector.extract_strided_slice %1 {offsets = [0, 12], sizes = [24, 128], strides = [1, 1]} : vector<24x256xbf16> to vector<24x128xbf16>
    %c288 = arith.constant 288 : index
    %c0_15 = arith.constant 0 : index
    %27 = vector.load %arg10[%c288, %c0_15] : memref<480x128xbf16, #tpu.memory_space<vmem>>, vector<24x128xbf16>
    tpu.vector_store %arg10[%c288, %c0_15], %26 {strides = array<i32>} : memref<480x128xbf16, #tpu.memory_space<vmem>>, vector<24x128xbf16>,
    %28 = vector.extract_strided_slice %1 {offsets = [0, 13], sizes = [24, 128], strides = [1, 1]} : vector<24x256xbf16> to vector<24x128xbf16>
    %c312 = arith.constant 312 : index
    %c0_16 = arith.constant 0 : index
    %29 = vector.load %arg10[%c312, %c0_16] : memref<480x128xbf16, #tpu.memory_space<vmem>>, vector<24x128xbf16>
    tpu.vector_store %arg10[%c312, %c0_16], %28 {strides = array<i32>} : memref<480x128xbf16, #tpu.memory_space<vmem>>, vector<24x128xbf16>,
    %30 = vector.extract_strided_slice %1 {offsets = [0, 14], sizes = [24, 128], strides = [1, 1]} : vector<24x256xbf16> to vector<24x128xbf16>
    %c336 = arith.constant 336 : index
    %c0_17 = arith.constant 0 : index
    %31 = vector.load %arg10[%c336, %c0_17] : memref<480x128xbf16, #tpu.memory_space<vmem>>, vector<24x128xbf16>
    tpu.vector_store %arg10[%c336, %c0_17], %30 {strides = array<i32>} : memref<480x128xbf16, #tpu.memory_space<vmem>>, vector<24x128xbf16>,
    %32 = vector.extract_strided_slice %1 {offsets = [0, 15], sizes = [24, 128], strides = [1, 1]} : vector<24x256xbf16> to vector<24x128xbf16>
    %c360 = arith.constant 360 : index
    %c0_18 = arith.constant 0 : index
    %33 = vector.load %arg10[%c360, %c0_18] : memref<480x128xbf16, #tpu.memory_space<vmem>>, vector<24x128xbf16>
    tpu.vector_store %arg10[%c360, %c0_18], %32 {strides = array<i32>} : memref<480x128xbf16, #tpu.memory_space<vmem>>, vector<24x128xbf16>,
    %34 = vector.extract_strided_slice %1 {offsets = [0, 16], sizes = [24, 128], strides = [1, 1]} : vector<24x256xbf16> to vector<24x128xbf16>
    %c384 = arith.constant 384 : index
    %c0_19 = arith.constant 0 : index
    %35 = vector.load %arg10[%c384, %c0_19] : memref<480x128xbf16, #tpu.memory_space<vmem>>, vector<24x128xbf16>
    tpu.vector_store %arg10[%c384, %c0_19], %34 {strides = array<i32>} : memref<480x128xbf16, #tpu.memory_space<vmem>>, vector<24x128xbf16>,
    %36 = vector.extract_strided_slice %1 {offsets = [0, 17], sizes = [24, 128], strides = [1, 1]} : vector<24x256xbf16> to vector<24x128xbf16>
    %c408 = arith.constant 408 : index
    %c0_20 = arith.constant 0 : index
    %37 = vector.load %arg10[%c408, %c0_20] : memref<480x128xbf16, #tpu.memory_space<vmem>>, vector<24x128xbf16>
    tpu.vector_store %arg10[%c408, %c0_20], %36 {strides = array<i32>} : memref<480x128xbf16, #tpu.memory_space<vmem>>, vector<24x128xbf16>,
    %38 = vector.extract_strided_slice %1 {offsets = [0, 18], sizes = [24, 128], strides = [1, 1]} : vector<24x256xbf16> to vector<24x128xbf16>
    %c432 = arith.constant 432 : index
    %c0_21 = arith.constant 0 : index
    %39 = vector.load %arg10[%c432, %c0_21] : memref<480x128xbf16, #tpu.memory_space<vmem>>, vector<24x128xbf16>
    tpu.vector_store %arg10[%c432, %c0_21], %38 {strides = array<i32>} : memref<480x128xbf16, #tpu.memory_space<vmem>>, vector<24x128xbf16>,
    %40 = vector.extract_strided_slice %1 {offsets = [0, 19], sizes = [24, 128], strides = [1, 1]} : vector<24x256xbf16> to vector<24x128xbf16>
    %c456 = arith.constant 456 : index
    %c0_22 = arith.constant 0 : index
    %41 = vector.load %arg10[%c456, %c0_22] : memref<480x128xbf16, #tpu.memory_space<vmem>>, vector<24x128xbf16>
    tpu.vector_store %arg10[%c456, %c0_22], %40 {strides = array<i32>} : memref<480x128xbf16, #tpu.memory_space<vmem>>, vector<24x128xbf16>,
    %c0_23 = arith.constant 0 : index
    %c0_24 = arith.constant 0 : index
    %42 = vector.load %arg2[%c0_23, %c0_24] : memref<880x480xbf16, #tpu.memory_space<vmem>>, vector<176x480xbf16>
    %c0_25 = arith.constant 0 : index
    %c0_26 = arith.constant 0 : index
    %43 = vector.load %arg10[%c0_25, %c0_26] : memref<480x128xbf16, #tpu.memory_space<vmem>>, vector<480x128xbf16>
    %cst = arith.constant dense<0.000000e+00> : vector<176x128xf32>
    %44 = tpu.matmul %42, %43, %cst {dimension_numbers = #tpu.dot_dimension_numbers<[1], [0], [0], [1], [0, 0, 1, 1], [], []>} : vector<176x480xbf16>, vector<480x128xbf16>, vector<176x128xf32> -> vector<176x128xf32>
    %c0_27 = arith.constant 0 : index
    %c0_28 = arith.constant 0 : index
    %45 = vector.load %arg3[%c0_27, %c0_28] : memref<880x1xf32, #tpu.memory_space<vmem>>, vector<176x1xf32>
    %46 = vector.broadcast %45 : vector<176x1xf32> to vector<176x128xf32>
    %47 = arith.addf %44, %46 : vector<176x128xf32>
    %48 = arith.negf %47 : vector<176x128xf32>
    %49 = math.exp %48 : vector<176x128xf32>
    %cst_29 = arith.constant 1.000000e+00 : f32
    %50 = vector.broadcast %cst_29 : f32 to vector<176x128xf32>
    %51 = arith.addf %50, %49 : vector<176x128xf32>
    %52 = arith.divf %50, %51 : vector<176x128xf32>
    %53 = arith.mulf %47, %52 : vector<176x128xf32>
    %54 = arith.truncf %53 : vector<176x128xf32> to vector<176x128xbf16>
    %c0_30 = arith.constant 0 : index
    %c0_31 = arith.constant 0 : index
    %55 = vector.load %arg11[%c0_30, %c0_31] : memref<880x128xbf16, #tpu.memory_space<vmem>>, vector<176x128xbf16>
    tpu.vector_store %arg11[%c0_30, %c0_31], %54 {strides = array<i32>} : memref<880x128xbf16, #tpu.memory_space<vmem>>, vector<176x128xbf16>,
    %c176 = arith.constant 176 : index
    %c0_32 = arith.constant 0 : index
    %56 = vector.load %arg2[%c176, %c0_32] : memref<880x480xbf16, #tpu.memory_space<vmem>>, vector<176x480xbf16>
    %c0_33 = arith.constant 0 : index
    %c0_34 = arith.constant 0 : index
    %57 = vector.load %arg10[%c0_33, %c0_34] : memref<480x128xbf16, #tpu.memory_space<vmem>>, vector<480x128xbf16>
    %cst_35 = arith.constant dense<0.000000e+00> : vector<176x128xf32>
    %58 = tpu.matmul %56, %57, %cst_35 {dimension_numbers = #tpu.dot_dimension_numbers<[1], [0], [0], [1], [0, 0, 1, 1], [], []>} : vector<176x480xbf16>, vector<480x128xbf16>, vector<176x128xf32> -> vector<176x128xf32>
    %c176_36 = arith.constant 176 : index
    %c0_37 = arith.constant 0 : index
    %59 = vector.load %arg3[%c176_36, %c0_37] : memref<880x1xf32, #tpu.memory_space<vmem>>, vector<176x1xf32>
    %60 = vector.broadcast %59 : vector<176x1xf32> to vector<176x128xf32>
    %61 = arith.addf %58, %60 : vector<176x128xf32>
    %62 = arith.negf %61 : vector<176x128xf32>
    %63 = math.exp %62 : vector<176x128xf32>
    %cst_38 = arith.constant 1.000000e+00 : f32
    %64 = vector.broadcast %cst_38 : f32 to vector<176x128xf32>
    %65 = arith.addf %64, %63 : vector<176x128xf32>
    %66 = arith.divf %64, %65 : vector<176x128xf32>
    %67 = arith.mulf %61, %66 : vector<176x128xf32>
    %68 = arith.truncf %67 : vector<176x128xf32> to vector<176x128xbf16>
    %c176_39 = arith.constant 176 : index
    %c0_40 = arith.constant 0 : index
    %69 = vector.load %arg11[%c176_39, %c0_40] : memref<880x128xbf16, #tpu.memory_space<vmem>>, vector<176x128xbf16>
    tpu.vector_store %arg11[%c176_39, %c0_40], %68 {strides = array<i32>} : memref<880x128xbf16, #tpu.memory_space<vmem>>, vector<176x128xbf16>,
    %c352 = arith.constant 352 : index
    %c0_41 = arith.constant 0 : index
    %70 = vector.load %arg2[%c352, %c0_41] : memref<880x480xbf16, #tpu.memory_space<vmem>>, vector<176x480xbf16>
    %c0_42 = arith.constant 0 : index
    %c0_43 = arith.constant 0 : index
    %71 = vector.load %arg10[%c0_42, %c0_43] : memref<480x128xbf16, #tpu.memory_space<vmem>>, vector<480x128xbf16>
    %cst_44 = arith.constant dense<0.000000e+00> : vector<176x128xf32>
    %72 = tpu.matmul %70, %71, %cst_44 {dimension_numbers = #tpu.dot_dimension_numbers<[1], [0], [0], [1], [0, 0, 1, 1], [], []>} : vector<176x480xbf16>, vector<480x128xbf16>, vector<176x128xf32> -> vector<176x128xf32>
    %c352_45 = arith.constant 352 : index
    %c0_46 = arith.constant 0 : index
    %73 = vector.load %arg3[%c352_45, %c0_46] : memref<880x1xf32, #tpu.memory_space<vmem>>, vector<176x1xf32>
    %74 = vector.broadcast %73 : vector<176x1xf32> to vector<176x128xf32>
    %75 = arith.addf %72, %74 : vector<176x128xf32>
    %76 = arith.negf %75 : vector<176x128xf32>
    %77 = math.exp %76 : vector<176x128xf32>
    %cst_47 = arith.constant 1.000000e+00 : f32
    %78 = vector.broadcast %cst_47 : f32 to vector<176x128xf32>
    %79 = arith.addf %78, %77 : vector<176x128xf32>
    %80 = arith.divf %78, %79 : vector<176x128xf32>
    %81 = arith.mulf %75, %80 : vector<176x128xf32>
    %82 = arith.truncf %81 : vector<176x128xf32> to vector<176x128xbf16>
    %c352_48 = arith.constant 352 : index
    %c0_49 = arith.constant 0 : index
    %83 = vector.load %arg11[%c352_48, %c0_49] : memref<880x128xbf16, #tpu.memory_space<vmem>>, vector<176x128xbf16>
    tpu.vector_store %arg11[%c352_48, %c0_49], %82 {strides = array<i32>} : memref<880x128xbf16, #tpu.memory_space<vmem>>, vector<176x128xbf16>,
    %c528 = arith.constant 528 : index
    %c0_50 = arith.constant 0 : index
    %84 = vector.load %arg2[%c528, %c0_50] : memref<880x480xbf16, #tpu.memory_space<vmem>>, vector<176x480xbf16>
    %c0_51 = arith.constant 0 : index
    %c0_52 = arith.constant 0 : index
    %85 = vector.load %arg10[%c0_51, %c0_52] : memref<480x128xbf16, #tpu.memory_space<vmem>>, vector<480x128xbf16>
    %cst_53 = arith.constant dense<0.000000e+00> : vector<176x128xf32>
    %86 = tpu.matmul %84, %85, %cst_53 {dimension_numbers = #tpu.dot_dimension_numbers<[1], [0], [0], [1], [0, 0, 1, 1], [], []>} : vector<176x480xbf16>, vector<480x128xbf16>, vector<176x128xf32> -> vector<176x128xf32>
    %c528_54 = arith.constant 528 : index
    %c0_55 = arith.constant 0 : index
    %87 = vector.load %arg3[%c528_54, %c0_55] : memref<880x1xf32, #tpu.memory_space<vmem>>, vector<176x1xf32>
    %88 = vector.broadcast %87 : vector<176x1xf32> to vector<176x128xf32>
    %89 = arith.addf %86, %88 : vector<176x128xf32>
    %90 = arith.negf %89 : vector<176x128xf32>
    %91 = math.exp %90 : vector<176x128xf32>
    %cst_56 = arith.constant 1.000000e+00 : f32
    %92 = vector.broadcast %cst_56 : f32 to vector<176x128xf32>
    %93 = arith.addf %92, %91 : vector<176x128xf32>
    %94 = arith.divf %92, %93 : vector<176x128xf32>
    %95 = arith.mulf %89, %94 : vector<176x128xf32>
    %96 = arith.truncf %95 : vector<176x128xf32> to vector<176x128xbf16>
    %c528_57 = arith.constant 528 : index
    %c0_58 = arith.constant 0 : index
    %97 = vector.load %arg11[%c528_57, %c0_58] : memref<880x128xbf16, #tpu.memory_space<vmem>>, vector<176x128xbf16>
    tpu.vector_store %arg11[%c528_57, %c0_58], %96 {strides = array<i32>} : memref<880x128xbf16, #tpu.memory_space<vmem>>, vector<176x128xbf16>,
    %c704 = arith.constant 704 : index
    %c0_59 = arith.constant 0 : index
    %98 = vector.load %arg2[%c704, %c0_59] : memref<880x480xbf16, #tpu.memory_space<vmem>>, vector<176x480xbf16>
    %c0_60 = arith.constant 0 : index
    %c0_61 = arith.constant 0 : index
    %99 = vector.load %arg10[%c0_60, %c0_61] : memref<480x128xbf16, #tpu.memory_space<vmem>>, vector<480x128xbf16>
    %cst_62 = arith.constant dense<0.000000e+00> : vector<176x128xf32>
    %100 = tpu.matmul %98, %99, %cst_62 {dimension_numbers = #tpu.dot_dimension_numbers<[1], [0], [0], [1], [0, 0, 1, 1], [], []>} : vector<176x480xbf16>, vector<480x128xbf16>, vector<176x128xf32> -> vector<176x128xf32>
    %c704_63 = arith.constant 704 : index
    %c0_64 = arith.constant 0 : index
    %101 = vector.load %arg3[%c704_63, %c0_64] : memref<880x1xf32, #tpu.memory_space<vmem>>, vector<176x1xf32>
    %102 = vector.broadcast %101 : vector<176x1xf32> to vector<176x128xf32>
    %103 = arith.addf %100, %102 : vector<176x128xf32>
    %104 = arith.negf %103 : vector<176x128xf32>
    %105 = math.exp %104 : vector<176x128xf32>
    %cst_65 = arith.constant 1.000000e+00 : f32
    %106 = vector.broadcast %cst_65 : f32 to vector<176x128xf32>
    %107 = arith.addf %106, %105 : vector<176x128xf32>
    %108 = arith.divf %106, %107 : vector<176x128xf32>
    %109 = arith.mulf %103, %108 : vector<176x128xf32>
    %110 = arith.truncf %109 : vector<176x128xf32> to vector<176x128xbf16>
    %c704_66 = arith.constant 704 : index
    %c0_67 = arith.constant 0 : index
    %111 = vector.load %arg11[%c704_66, %c0_67] : memref<880x128xbf16, #tpu.memory_space<vmem>>, vector<176x128xbf16>
    tpu.vector_store %arg11[%c704_66, %c0_67], %110 {strides = array<i32>} : memref<880x128xbf16, #tpu.memory_space<vmem>>, vector<176x128xbf16>,
    %c0_68 = arith.constant 0 : index
    %c0_69 = arith.constant 0 : index
    %112 = vector.load %arg4[%c0_68, %c0_69] : memref<40x880xbf16, #tpu.memory_space<vmem>>, vector<40x880xbf16>
    %c0_70 = arith.constant 0 : index
    %c0_71 = arith.constant 0 : index
    %113 = vector.load %arg11[%c0_70, %c0_71] : memref<880x128xbf16, #tpu.memory_space<vmem>>, vector<880x128xbf16>
    %cst_72 = arith.constant dense<0.000000e+00> : vector<40x128xf32>
    %114 = tpu.matmul %112, %113, %cst_72 {dimension_numbers = #tpu.dot_dimension_numbers<[1], [0], [0], [1], [0, 0, 1, 1], [], []>} : vector<40x880xbf16>, vector<880x128xbf16>, vector<40x128xf32> -> vector<40x128xf32>
    %c0_73 = arith.constant 0 : index
    %c0_74 = arith.constant 0 : index
    %115 = vector.load %arg5[%c0_73, %c0_74] : memref<40x1xf32, #tpu.memory_space<vmem>>, vector<40x1xf32>
    %116 = vector.broadcast %115 : vector<40x1xf32> to vector<40x128xf32>
    %117 = arith.addf %114, %116 : vector<40x128xf32>
    %118 = arith.negf %117 : vector<40x128xf32>
    %119 = math.exp %118 : vector<40x128xf32>
    %cst_75 = arith.constant 1.000000e+00 : f32
    %120 = vector.broadcast %cst_75 : f32 to vector<40x128xf32>
    %121 = arith.addf %120, %119 : vector<40x128xf32>
    %122 = arith.divf %120, %121 : vector<40x128xf32>
    %123 = arith.mulf %117, %122 : vector<40x128xf32>
    %c0_76 = arith.constant 0 : index
    %c0_77 = arith.constant 0 : index
    %124 = vector.load %arg6[%c0_76, %c0_77] : memref<128x2xf32, #tpu.memory_space<vmem>>, vector<128x2xf32>
    %cst_78 = arith.constant dense<0.000000e+00> : vector<40x2xf32>
    %125 = tpu.matmul %123, %124, %cst_78 {dimension_numbers = #tpu.dot_dimension_numbers<[1], [0], [0], [1], [0, 0, 1, 1], [], []>} : vector<40x128xf32>, vector<128x2xf32>, vector<40x2xf32> -> vector<40x2xf32>
    %c0_79 = arith.constant 0 : index
    %c0_80 = arith.constant 0 : index
    %126 = vector.load %arg7[%c0_79, %c0_80] : memref<32x40xf32, #tpu.memory_space<vmem>>, vector<32x40xf32>
    %cst_81 = arith.constant dense<0.000000e+00> : vector<32x2xf32>
    %127 = tpu.matmul %126, %125, %cst_81 {dimension_numbers = #tpu.dot_dimension_numbers<[1], [0], [0], [1], [0, 0, 1, 1], [], []>} : vector<32x40xf32>, vector<40x2xf32>, vector<32x2xf32> -> vector<32x2xf32>
    %c0_82 = arith.constant 0 : index
    %c0_83 = arith.constant 0 : index
    %128 = vector.load %arg8[%c0_82, %c0_83] : memref<32x1xf32, #tpu.memory_space<vmem>>, vector<32x1xf32>
    %129 = vector.broadcast %128 : vector<32x1xf32> to vector<32x2xf32>
    %130 = arith.addf %127, %129 : vector<32x2xf32>
    %c0_84 = arith.constant 0 : index
    %c0_85 = arith.constant 0 : index
    %c0_86 = arith.constant 0 : index
    %131 = vector.load %arg9[%c0_84, %c0_85, %c0_86] : memref<1x32x2xf32, #tpu.memory_space<vmem>>, vector<1x32x2xf32>
    %132 = vector.shape_cast %131 : vector<1x32x2xf32> to vector<32x2xf32>
    %133 = vector.shape_cast %130 : vector<32x2xf32> to vector<1x32x2xf32>
    tpu.vector_store %arg9[%c0_84, %c0_85, %c0_86], %133 {strides = array<i32>} : memref<1x32x2xf32, #tpu.memory_space<vmem>>, vector<1x32x2xf32>,
    return
  }
  func.func @transform_0(%arg0: i32) -> (i32, i32, i32) {
    %c0_i32 = arith.constant 0 : i32
    %c0_i32_0 = arith.constant 0 : i32
    %c0_i32_1 = arith.constant 0 : i32
    return %arg0, %c0_i32, %c0_i32_0 : i32, i32, i32
  }
  func.func @transform_1(%arg0: i32) -> (i32, i32) {
    %c0_i32 = arith.constant 0 : i32
    %c0_i32_0 = arith.constant 0 : i32
    %c0_i32_1 = arith.constant 0 : i32
    return %c0_i32, %c0_i32_0 : i32, i32
  }
  func.func @transform_2(%arg0: i32) -> (i32, i32) {
    %c0_i32 = arith.constant 0 : i32
    %c0_i32_0 = arith.constant 0 : i32
    %c0_i32_1 = arith.constant 0 : i32
    return %c0_i32, %c0_i32_0 : i32, i32
  }
  func.func @transform_3(%arg0: i32) -> (i32, i32) {
    %c0_i32 = arith.constant 0 : i32
    %c0_i32_0 = arith.constant 0 : i32
    %c0_i32_1 = arith.constant 0 : i32
    return %c0_i32, %c0_i32_0 : i32, i32
  }
  func.func @transform_4(%arg0: i32) -> (i32, i32) {
    %c0_i32 = arith.constant 0 : i32
    %c0_i32_0 = arith.constant 0 : i32
    %c0_i32_1 = arith.constant 0 : i32
    return %c0_i32, %c0_i32_0 : i32, i32
  }
  func.func @transform_5(%arg0: i32) -> (i32, i32) {
    %c0_i32 = arith.constant 0 : i32
    %c0_i32_0 = arith.constant 0 : i32
    %c0_i32_1 = arith.constant 0 : i32
    return %c0_i32, %c0_i32_0 : i32, i32
  }
  func.func @transform_6(%arg0: i32) -> (i32, i32) {
    %c0_i32 = arith.constant 0 : i32
    %c0_i32_0 = arith.constant 0 : i32
    %c0_i32_1 = arith.constant 0 : i32
    return %c0_i32, %c0_i32_0 : i32, i32
  }
  func.func @transform_7(%arg0: i32) -> (i32, i32) {
    %c0_i32 = arith.constant 0 : i32
    %c0_i32_0 = arith.constant 0 : i32
    %c0_i32_1 = arith.constant 0 : i32
    return %c0_i32, %c0_i32_0 : i32, i32
  }
  func.func @transform_8(%arg0: i32) -> (i32, i32, i32) {
    %c0_i32 = arith.constant 0 : i32
    %c0_i32_0 = arith.constant 0 : i32
    %c0_i32_1 = arith.constant 0 : i32
    return %arg0, %c0_i32, %c0_i32_0 : i32, i32, i32
  }
}

</mosaic_0001>

<llo_original>
// kernel: tile.8
$region0: #{tile.8}
  #allocation0 [shape = 's32[1]{0}', space=sflag, size = 0x4, scoped, tag = 'scoped memory for tile.8']
  %s0 = inlined_call_operand.vmem [shape: f32[40], index: 0, kind: input, shape index: {}]
  %s1 = inlined_call_operand.vmem [shape: f32[22,40], index: 1, kind: output, shape index: {}]
  // Predicated region
  $region2: #{tile.8} parent=0 // pred_check
    _
  $region3: #{tile.8} parent=0 // pred_check_branch
    %3 = sbr.rel (0) target = $region5
  $region4: #{tile.8} parent=0 // pred_region
    _
  $region5: #{tile.8} parent=0 // pred_fallthru
    _
  %v4 = vld [vmem:[%s0] ss:$0 sm:$0xff]
  %5 = vst [vmem:[%s1] sm:$0xff] %v4
  %s6 = scalar_lea.vmem %s1, 8
  %7 = vst [vmem:[%s6] sm:$0xff] %v4
  %s8 = scalar_lea.vmem %s1, 16
  %9 = vst [vmem:[%s8] sm:$0xff] %v4

// kernel: tile.0
$region0: #{tile.0}
  %s0 = inlined_call_operand.vmem [shape: f32[22,40], index: 0, kind: input, shape index: {}]
  %s1 = inlined_call_operand.vmem [shape: f32[880,1], index: 1, kind: output, shape index: {}]
  %v2 = vld [vmem:[%s0] sm:$0xff]
  %vm3 = vcmask 7168
  %4 = vst.msk [vmem:[%s1] ss:$40 sm:$0xf] %vm3, %v2
  %5 = vst.msk [vmem:[%s1] ss:$40 sm:$0xf0] %vm3, %v2
  %s6 = scalar_lea.vmem %s0, 8
  %v7 = vld [vmem:[%s6] sm:$0xff]
  %vm8 = vcmask 7168
  %s9 = scalar_lea.vmem %s1, 320
  %10 = vst.msk [vmem:[%s9] ss:$40 sm:$0xf] %vm8, %v7
  %s11 = scalar_lea.vmem %s1, 320
  %12 = vst.msk [vmem:[%s11] ss:$40 sm:$0xf0] %vm8, %v7
  %s13 = scalar_lea.vmem %s0, 16
  %v14 = vld [vmem:[%s13] sm:$0x3f]
  %vm15 = vcmask 7168
  %s16 = scalar_lea.vmem %s1, 640
  %17 = vst.msk [vmem:[%s16] ss:$40 sm:$0xf] %vm15, %v14
  %s18 = scalar_lea.vmem %s1, 640
  %19 = vst.msk [vmem:[%s18] ss:$40 sm:$0x30] %vm15, %v14
  %v20 = vld [vmem:[%s0] sm:$0xff]
  %21 = vrot.lane.b32.xlu0 %v20, 127
  %v22 = vpop.permute.xlu0 %21
  %vm23 = vcmask 7168
  %s24 = scalar_lea.vmem %s1, 1
  %25 = vst.msk [vmem:[%s24] ss:$40 sm:$0xf] %vm23, %v22
  %s26 = scalar_lea.vmem %s1, 1
  %27 = vst.msk [vmem:[%s26] ss:$40 sm:$0xf0] %vm23, %v22
  %s28 = scalar_lea.vmem %s0, 8
  %v29 = vld [vmem:[%s28] sm:$0xff]
  %30 = vrot.lane.b32.xlu0 %v29, 127
  %v31 = vpop.permute.xlu0 %30
  %vm32 = vcmask 7168
  %s33 = scalar_lea.vmem %s1, 321
  %34 = vst.msk [vmem:[%s33] ss:$40 sm:$0xf] %vm32, %v31
  %s35 = scalar_lea.vmem %s1, 321
  %36 = vst.msk [vmem:[%s35] ss:$40 sm:$0xf0] %vm32, %v31
  %s37 = scalar_lea.vmem %s0, 16
  %v38 = vld [vmem:[%s37] sm:$0x3f]
  %39 = vrot.lane.b32.xlu0 %v38, 127
  %v40 = vpop.permute.xlu0 %39
  %vm41 = vcmask 7168
  %s42 = scalar_lea.vmem %s1, 641
  %43 = vst.msk [vmem:[%s42] ss:$40 sm:$0xf] %vm41, %v40
  %s44 = scalar_lea.vmem %s1, 641
  %45 = vst.msk [vmem:[%s44] ss:$40 sm:$0x30] %vm41, %v40
  %v46 = vld [vmem:[%s0] sm:$0xff]
  %47 = vrot.lane.b32.xlu0 %v46, 126
  %v48 = vpop.permute.xlu0 %47
  %vm49 = vcmask 7168
  %s50 = scalar_lea.vmem %s1, 2
  %51 = vst.msk [vmem:[%s50] ss:$40 sm:$0xf] %vm49, %v48
  %s52 = scalar_lea.vmem %s1, 2
  %53 = vst.msk [vmem:[%s52] ss:$40 sm:$0xf0] %vm49, %v48
  %s54 = scalar_lea.vmem %s0, 8
  %v55 = vld [vmem:[%s54] sm:$0xff]
  %56 = vrot.lane.b32.xlu0 %v55, 126
  %v57 = vpop.permute.xlu0 %56
  %vm58 = vcmask 7168
  %s59 = scalar_lea.vmem %s1, 322
  %60 = vst.msk [vmem:[%s59] ss:$40 sm:$0xf] %vm58, %v57
  %s61 = scalar_lea.vmem %s1, 322
  %62 = vst.msk [vmem:[%s61] ss:$40 sm:$0xf0] %vm58, %v57
  %s63 = scalar_lea.vmem %s0, 16
  %v64 = vld [vmem:[%s63] sm:$0x3f]
  %65 = vrot.lane.b32.xlu0 %v64, 126
  %v66 = vpop.permute.xlu0 %65
  %vm67 = vcmask 7168
  %s68 = scalar_lea.vmem %s1, 642
  %69 = vst.msk [vmem:[%s68] ss:$40 sm:$0xf] %vm67, %v66
  %s70 = scalar_lea.vmem %s1, 642
  %71 = vst.msk [vmem:[%s70] ss:$40 sm:$0x30] %vm67, %v66
  %v72 = vld [vmem:[%s0] sm:$0xff]
  %73 = vrot.lane.b32.xlu0 %v72, 125
  %v74 = vpop.permute.xlu0 %73
  %vm75 = vcmask 7168
  %s76 = scalar_lea.vmem %s1, 3
  %77 = vst.msk [vmem:[%s76] ss:$40 sm:$0xf] %vm75, %v74
  %s78 = scalar_lea.vmem %s1, 3
  %79 = vst.msk [vmem:[%s78] ss:$40 sm:$0xf0] %vm75, %v74
  %s80 = scalar_lea.vmem %s0, 8
  %v81 = vld [vmem:[%s80] sm:$0xff]
  %82 = vrot.lane.b32.xlu0 %v81, 125
  %v83 = vpop.permute.xlu0 %82
  %vm84 = vcmask 7168
  %s85 = scalar_lea.vmem %s1, 323
  %86 = vst.msk [vmem:[%s85] ss:$40 sm:$0xf] %vm84, %v83
  %s87 = scalar_lea.vmem %s1, 323
  %88 = vst.msk [vmem:[%s87] ss:$40 sm:$0xf0] %vm84, %v83
  %s89 = scalar_lea.vmem %s0, 16
  %v90 = vld [vmem:[%s89] sm:$0x3f]
  %91 = vrot.lane.b32.xlu0 %v90, 125
  %v92 = vpop.permute.xlu0 %91
  %vm93 = vcmask 7168
  %s94 = scalar_lea.vmem %s1, 643
  %95 = vst.msk [vmem:[%s94] ss:$40 sm:$0xf] %vm93, %v92
  %s96 = scalar_lea.vmem %s1, 643
  %97 = vst.msk [vmem:[%s96] ss:$40 sm:$0x30] %vm93, %v92
  %v98 = vld [vmem:[%s0] sm:$0xff]
  %99 = vrot.lane.b32.xlu0 %v98, 124
  %v100 = vpop.permute.xlu0 %99
  %vm101 = vcmask 7168
  %s102 = scalar_lea.vmem %s1, 4
  %103 = vst.msk [vmem:[%s102] ss:$40 sm:$0xf] %vm101, %v100
  %s104 = scalar_lea.vmem %s1, 4
  %105 = vst.msk [vmem:[%s104] ss:$40 sm:$0xf0] %vm101, %v100
  %s106 = scalar_lea.vmem %s0, 8
  %v107 = vld [vmem:[%s106] sm:$0xff]
  %108 = vrot.lane.b32.xlu0 %v107, 124
  %v109 = vpop.permute.xlu0 %108
  %vm110 = vcmask 7168
  %s111 = scalar_lea.vmem %s1, 324
  %112 = vst.msk [vmem:[%s111] ss:$40 sm:$0xf] %vm110, %v109
  %s113 = scalar_lea.vmem %s1, 324
  %114 = vst.msk [vmem:[%s113] ss:$40 sm:$0xf0] %vm110, %v109
  %s115 = scalar_lea.vmem %s0, 16
  %v116 = vld [vmem:[%s115] sm:$0x3f]
  %117 = vrot.lane.b32.xlu0 %v116, 124
  %v118 = vpop.permute.xlu0 %117
  %vm119 = vcmask 7168
  %s120 = scalar_lea.vmem %s1, 644
  %121 = vst.msk [vmem:[%s120] ss:$40 sm:$0xf] %vm119, %v118
  %s122 = scalar_lea.vmem %s1, 644
  %123 = vst.msk [vmem:[%s122] ss:$40 sm:$0x30] %vm119, %v118
  %v124 = vld [vmem:[%s0] sm:$0xff]
  %125 = vrot.lane.b32.xlu0 %v124, 123
  %v126 = vpop.permute.xlu0 %125
  %vm127 = vcmask 7168
  %s128 = scalar_lea.vmem %s1, 5
  %129 = vst.msk [vmem:[%s128] ss:$40 sm:$0xf] %vm127, %v126
  %s130 = scalar_lea.vmem %s1, 5
  %131 = vst.msk [vmem:[%s130] ss:$40 sm:$0xf0] %vm127, %v126
  %s132 = scalar_lea.vmem %s0, 8
  %v133 = vld [vmem:[%s132] sm:$0xff]
  %134 = vrot.lane.b32.xlu0 %v133, 123
  %v135 = vpop.permute.xlu0 %134
  %vm136 = vcmask 7168
  %s137 = scalar_lea.vmem %s1, 325
  %138 = vst.msk [vmem:[%s137] ss:$40 sm:$0xf] %vm136, %v135
  %s139 = scalar_lea.vmem %s1, 325
  %140 = vst.msk [vmem:[%s139] ss:$40 sm:$0xf0] %vm136, %v135
  %s141 = scalar_lea.vmem %s0, 16
  %v142 = vld [vmem:[%s141] sm:$0x3f]
  %143 = vrot.lane.b32.xlu0 %v142, 123
  %v144 = vpop.permute.xlu0 %143
  %vm145 = vcmask 7168
  %s146 = scalar_lea.vmem %s1, 645
  %147 = vst.msk [vmem:[%s146] ss:$40 sm:$0xf] %vm145, %v144
  %s148 = scalar_lea.vmem %s1, 645
  %149 = vst.msk [vmem:[%s148] ss:$40 sm:$0x30] %vm145, %v144
  %v150 = vld [vmem:[%s0] sm:$0xff]
  %151 = vrot.lane.b32.xlu0 %v150, 122
  %v152 = vpop.permute.xlu0 %151
  %vm153 = vcmask 7168
  %s154 = scalar_lea.vmem %s1, 6
  %155 = vst.msk [vmem:[%s154] ss:$40 sm:$0xf] %vm153, %v152
  %s156 = scalar_lea.vmem %s1, 6
  %157 = vst.msk [vmem:[%s156] ss:$40 sm:$0xf0] %vm153, %v152
  %s158 = scalar_lea.vmem %s0, 8
  %v159 = vld [vmem:[%s158] sm:$0xff]
  %160 = vrot.lane.b32.xlu0 %v159, 122
  %v161 = vpop.permute.xlu0 %160
  %vm162 = vcmask 7168
  %s163 = scalar_lea.vmem %s1, 326
  %164 = vst.msk [vmem:[%s163] ss:$40 sm:$0xf] %vm162, %v161
  %s165 = scalar_lea.vmem %s1, 326
  %166 = vst.msk [vmem:[%s165] ss:$40 sm:$0xf0] %vm162, %v161
  %s167 = scalar_lea.vmem %s0, 16
  %v168 = vld [vmem:[%s167] sm:$0x3f]
  %169 = vrot.lane.b32.xlu0 %v168, 122
  %v170 = vpop.permute.xlu0 %169
  %vm171 = vcmask 7168
  %s172 = scalar_lea.vmem %s1, 646
  %173 = vst.msk [vmem:[%s172] ss:$40 sm:$0xf] %vm171, %v170
  %s174 = scalar_lea.vmem %s1, 646
  %175 = vst.msk [vmem:[%s174] ss:$40 sm:$0x30] %vm171, %v170
  %v176 = vld [vmem:[%s0] sm:$0xff]
  %177 = vrot.lane.b32.xlu0 %v176, 121
  %v178 = vpop.permute.xlu0 %177
  %vm179 = vcmask 7168
  %s180 = scalar_lea.vmem %s1, 7
  %181 = vst.msk [vmem:[%s180] ss:$40 sm:$0xf] %vm179, %v178
  %s182 = scalar_lea.vmem %s1, 7
  %183 = vst.msk [vmem:[%s182] ss:$40 sm:$0xf0] %vm179, %v178
  %s184 = scalar_lea.vmem %s0, 8
  %v185 = vld [vmem:[%s184] sm:$0xff]
  %186 = vrot.lane.b32.xlu0 %v185, 121
  %v187 = vpop.permute.xlu0 %186
  %vm188 = vcmask 7168
  %s189 = scalar_lea.vmem %s1, 327
  %190 = vst.msk [vmem:[%s189] ss:$40 sm:$0xf] %vm188, %v187
  %s191 = scalar_lea.vmem %s1, 327
  %192 = vst.msk [vmem:[%s191] ss:$40 sm:$0xf0] %vm188, %v187
  %s193 = scalar_lea.vmem %s0, 16
  %v194 = vld [vmem:[%s193] sm:$0x3f]
  %195 = vrot.lane.b32.xlu0 %v194, 121
  %v196 = vpop.permute.xlu0 %195
  %vm197 = vcmask 7168
  %s198 = scalar_lea.vmem %s1, 647
  %199 = vst.msk [vmem:[%s198] ss:$40 sm:$0xf] %vm197, %v196
  %s200 = scalar_lea.vmem %s1, 647
  %201 = vst.msk [vmem:[%s200] ss:$40 sm:$0x30] %vm197, %v196
  %v202 = vld.sshfl [vmem:[%s0] sm:$0xff pattern:$0x65472103]
  %203 = vrot.lane.b32.xlu0 %v202, 120
  %v204 = vpop.permute.xlu0 %203
  %vm205 = vcmask 7168
  %s206 = scalar_lea.vmem %s1, 128
  %207 = vst.msk [vmem:[%s206] ss:$-120 sm:$0x3] %vm205, %v204
  %s208 = scalar_lea.vmem %s1, 4294967264
  %209 = vst.msk [vmem:[%s208] ss:$40 sm:$0xc] %vm205, %v204
  %s210 = scalar_lea.vmem %s1, 768
  %211 = vst.msk [vmem:[%s210] ss:$-120 sm:$0x30] %vm205, %v204
  %s212 = scalar_lea.vmem %s1, 4294967264
  %213 = vst.msk [vmem:[%s212] ss:$40 sm:$0xc0] %vm205, %v204
  %s214 = scalar_lea.vmem %s0, 8
  %v215 = vld.sshfl [vmem:[%s214] sm:$0xff pattern:$0x65472103]
  %216 = vrot.lane.b32.xlu0 %v215, 120
  %v217 = vpop.permute.xlu0 %216
  %vm218 = vcmask 7168
  %s219 = scalar_lea.vmem %s1, 448
  %220 = vst.msk [vmem:[%s219] ss:$-120 sm:$0x3] %vm218, %v217
  %s221 = scalar_lea.vmem %s1, 288
  %222 = vst.msk [vmem:[%s221] ss:$40 sm:$0xc] %vm218, %v217
  %s223 = scalar_lea.vmem %s1, 1088
  %224 = vst.msk [vmem:[%s223] ss:$-120 sm:$0x30] %vm218, %v217
  %s225 = scalar_lea.vmem %s1, 288
  %226 = vst.msk [vmem:[%s225] ss:$40 sm:$0xc0] %vm218, %v217
  %s227 = scalar_lea.vmem %s0, 16
  %v228 = vld.sshfl [vmem:[%s227] sm:$0xff pattern:$0x55542103]
  %229 = vrot.lane.b32.xlu0 %v228, 120
  %v230 = vpop.permute.xlu0 %229
  %vm231 = vcmask 7168
  %s232 = scalar_lea.vmem %s1, 768
  %233 = vst.msk [vmem:[%s232] ss:$-120 sm:$0x3] %vm231, %v230
  %s234 = scalar_lea.vmem %s1, 608
  %235 = vst.msk [vmem:[%s234] ss:$40 sm:$0xc] %vm231, %v230
  %s236 = scalar_lea.vmem %s1, 648
  %237 = vst.msk [vmem:[%s236] ss:$40 sm:$0x30] %vm231, %v230
  %v238 = vld.sshfl [vmem:[%s0] sm:$0xff pattern:$0x65472103]
  %239 = vrot.lane.b32.xlu0 %v238, 119
  %v240 = vpop.permute.xlu0 %239
  %vm241 = vcmask 7168
  %s242 = scalar_lea.vmem %s1, 129
  %243 = vst.msk [vmem:[%s242] ss:$-120 sm:$0x3] %vm241, %v240
  %s244 = scalar_lea.vmem %s1, 4294967265
  %245 = vst.msk [vmem:[%s244] ss:$40 sm:$0xc] %vm241, %v240
  %s246 = scalar_lea.vmem %s1, 769
  %247 = vst.msk [vmem:[%s246] ss:$-120 sm:$0x30] %vm241, %v240
  %s248 = scalar_lea.vmem %s1, 4294967265
  %249 = vst.msk [vmem:[%s248] ss:$40 sm:$0xc0] %vm241, %v240
  %s250 = scalar_lea.vmem %s0, 8
  %v251 = vld.sshfl [vmem:[%s250] sm:$0xff pattern:$0x65472103]
  %252 = vrot.lane.b32.xlu0 %v251, 119
  %v253 = vpop.permute.xlu0 %252
  %vm254 = vcmask 7168
  %s255 = scalar_lea.vmem %s1, 449
  %256 = vst.msk [vmem:[%s255] ss:$-120 sm:$0x3] %vm254, %v253
  %s257 = scalar_lea.vmem %s1, 289
  %258 = vst.msk [vmem:[%s257] ss:$40 sm:$0xc] %vm254, %v253
  %s259 = scalar_lea.vmem %s1, 1089
  %260 = vst.msk [vmem:[%s259] ss:$-120 sm:$0x30] %vm254, %v253
  %s261 = scalar_lea.vmem %s1, 289
  %262 = vst.msk [vmem:[%s261] ss:$40 sm:$0xc0] %vm254, %v253
  %s263 = scalar_lea.vmem %s0, 16
  %v264 = vld.sshfl [vmem:[%s263] sm:$0xff pattern:$0x55542103]
  %265 = vrot.lane.b32.xlu0 %v264, 119
  %v266 = vpop.permute.xlu0 %265
  %vm267 = vcmask 7168
  %s268 = scalar_lea.vmem %s1, 769
  %269 = vst.msk [vmem:[%s268] ss:$-120 sm:$0x3] %vm267, %v266
  %s270 = scalar_lea.vmem %s1, 609
  %271 = vst.msk [vmem:[%s270] ss:$40 sm:$0xc] %vm267, %v266
  %s272 = scalar_lea.vmem %s1, 649
  %273 = vst.msk [vmem:[%s272] ss:$40 sm:$0x30] %vm267, %v266
  %v274 = vld.sshfl [vmem:[%s0] sm:$0xff pattern:$0x65472103]
  %275 = vrot.lane.b32.xlu0 %v274, 118
  %v276 = vpop.permute.xlu0 %275
  %vm277 = vcmask 7168
  %s278 = scalar_lea.vmem %s1, 130
  %279 = vst.msk [vmem:[%s278] ss:$-120 sm:$0x3] %vm277, %v276
  %s280 = scalar_lea.vmem %s1, 4294967266
  %281 = vst.msk [vmem:[%s280] ss:$40 sm:$0xc] %vm277, %v276
  %s282 = scalar_lea.vmem %s1, 770
  %283 = vst.msk [vmem:[%s282] ss:$-120 sm:$0x30] %vm277, %v276
  %s284 = scalar_lea.vmem %s1, 4294967266
  %285 = vst.msk [vmem:[%s284] ss:$40 sm:$0xc0] %vm277, %v276
  %s286 = scalar_lea.vmem %s0, 8
  %v287 = vld.sshfl [vmem:[%s286] sm:$0xff pattern:$0x65472103]
  %288 = vrot.lane.b32.xlu0 %v287, 118
  %v289 = vpop.permute.xlu0 %288
  %vm290 = vcmask 7168
  %s291 = scalar_lea.vmem %s1, 450
  %292 = vst.msk [vmem:[%s291] ss:$-120 sm:$0x3] %vm290, %v289
  %s293 = scalar_lea.vmem %s1, 290
  %294 = vst.msk [vmem:[%s293] ss:$40 sm:$0xc] %vm290, %v289
  %s295 = scalar_lea.vmem %s1, 1090
  %296 = vst.msk [vmem:[%s295] ss:$-120 sm:$0x30] %vm290, %v289
  %s297 = scalar_lea.vmem %s1, 290
  %298 = vst.msk [vmem:[%s297] ss:$40 sm:$0xc0] %vm290, %v289
  %s299 = scalar_lea.vmem %s0, 16
  %v300 = vld.sshfl [vmem:[%s299] sm:$0xff pattern:$0x55542103]
  %301 = vrot.lane.b32.xlu0 %v300, 118
  %v302 = vpop.permute.xlu0 %301
  %vm303 = vcmask 7168
  %s304 = scalar_lea.vmem %s1, 770
  %305 = vst.msk [vmem:[%s304] ss:$-120 sm:$0x3] %vm303, %v302
  %s306 = scalar_lea.vmem %s1, 610
  %307 = vst.msk [vmem:[%s306] ss:$40 sm:$0xc] %vm303, %v302
  %s308 = scalar_lea.vmem %s1, 650
  %309 = vst.msk [vmem:[%s308] ss:$40 sm:$0x30] %vm303, %v302
  %v310 = vld.sshfl [vmem:[%s0] sm:$0xff pattern:$0x65472103]
  %311 = vrot.lane.b32.xlu0 %v310, 117
  %v312 = vpop.permute.xlu0 %311
  %vm313 = vcmask 7168
  %s314 = scalar_lea.vmem %s1, 131
  %315 = vst.msk [vmem:[%s314] ss:$-120 sm:$0x3] %vm313, %v312
  %s316 = scalar_lea.vmem %s1, 4294967267
  %317 = vst.msk [vmem:[%s316] ss:$40 sm:$0xc] %vm313, %v312
  %s318 = scalar_lea.vmem %s1, 771
  %319 = vst.msk [vmem:[%s318] ss:$-120 sm:$0x30] %vm313, %v312
  %s320 = scalar_lea.vmem %s1, 4294967267
  %321 = vst.msk [vmem:[%s320] ss:$40 sm:$0xc0] %vm313, %v312
  %s322 = scalar_lea.vmem %s0, 8
  %v323 = vld.sshfl [vmem:[%s322] sm:$0xff pattern:$0x65472103]
  %324 = vrot.lane.b32.xlu0 %v323, 117
  %v325 = vpop.permute.xlu0 %324
  %vm326 = vcmask 7168
  %s327 = scalar_lea.vmem %s1, 451
  %328 = vst.msk [vmem:[%s327] ss:$-120 sm:$0x3] %vm326, %v325
  %s329 = scalar_lea.vmem %s1, 291
  %330 = vst.msk [vmem:[%s329] ss:$40 sm:$0xc] %vm326, %v325
  %s331 = scalar_lea.vmem %s1, 1091
  %332 = vst.msk [vmem:[%s331] ss:$-120 sm:$0x30] %vm326, %v325
  %s333 = scalar_lea.vmem %s1, 291
  %334 = vst.msk [vmem:[%s333] ss:$40 sm:$0xc0] %vm326, %v325
  %s335 = scalar_lea.vmem %s0, 16
  %v336 = vld.sshfl [vmem:[%s335] sm:$0xff pattern:$0x55542103]
  %337 = vrot.lane.b32.xlu0 %v336, 117
  %v338 = vpop.permute.xlu0 %337
  %vm339 = vcmask 7168
  %s340 = scalar_lea.vmem %s1, 771
  %341 = vst.msk [vmem:[%s340] ss:$-120 sm:$0x3] %vm339, %v338
  %s342 = scalar_lea.vmem %s1, 611
  %343 = vst.msk [vmem:[%s342] ss:$40 sm:$0xc] %vm339, %v338
  %s344 = scalar_lea.vmem %s1, 651
  %345 = vst.msk [vmem:[%s344] ss:$40 sm:$0x30] %vm339, %v338
  %v346 = vld.sshfl [vmem:[%s0] sm:$0xff pattern:$0x65472103]
  %347 = vrot.lane.b32.xlu0 %v346, 116
  %v348 = vpop.permute.xlu0 %347
  %vm349 = vcmask 7168
  %s350 = scalar_lea.vmem %s1, 132
  %351 = vst.msk [vmem:[%s350] ss:$-120 sm:$0x3] %vm349, %v348
  %s352 = scalar_lea.vmem %s1, 4294967268
  %353 = vst.msk [vmem:[%s352] ss:$40 sm:$0xc] %vm349, %v348
  %s354 = scalar_lea.vmem %s1, 772
  %355 = vst.msk [vmem:[%s354] ss:$-120 sm:$0x30] %vm349, %v348
  %s356 = scalar_lea.vmem %s1, 4294967268
  %357 = vst.msk [vmem:[%s356] ss:$40 sm:$0xc0] %vm349, %v348
  %s358 = scalar_lea.vmem %s0, 8
  %v359 = vld.sshfl [vmem:[%s358] sm:$0xff pattern:$0x65472103]
  %360 = vrot.lane.b32.xlu0 %v359, 116
  %v361 = vpop.permute.xlu0 %360
  %vm362 = vcmask 7168
  %s363 = scalar_lea.vmem %s1, 452
  %364 = vst.msk [vmem:[%s363] ss:$-120 sm:$0x3] %vm362, %v361
  %s365 = scalar_lea.vmem %s1, 292
  %366 = vst.msk [vmem:[%s365] ss:$40 sm:$0xc] %vm362, %v361
  %s367 = scalar_lea.vmem %s1, 1092
  %368 = vst.msk [vmem:[%s367] ss:$-120 sm:$0x30] %vm362, %v361
  %s369 = scalar_lea.vmem %s1, 292
  %370 = vst.msk [vmem:[%s369] ss:$40 sm:$0xc0] %vm362, %v361
  %s371 = scalar_lea.vmem %s0, 16
  %v372 = vld.sshfl [vmem:[%s371] sm:$0xff pattern:$0x55542103]
  %373 = vrot.lane.b32.xlu0 %v372, 116
  %v374 = vpop.permute.xlu0 %373
  %vm375 = vcmask 7168
  %s376 = scalar_lea.vmem %s1, 772
  %377 = vst.msk [vmem:[%s376] ss:$-120 sm:$0x3] %vm375, %v374
  %s378 = scalar_lea.vmem %s1, 612
  %379 = vst.msk [vmem:[%s378] ss:$40 sm:$0xc] %vm375, %v374
  %s380 = scalar_lea.vmem %s1, 652
  %381 = vst.msk [vmem:[%s380] ss:$40 sm:$0x30] %vm375, %v374
  %v382 = vld.sshfl [vmem:[%s0] sm:$0xff pattern:$0x65472103]
  %383 = vrot.lane.b32.xlu0 %v382, 115
  %v384 = vpop.permute.xlu0 %383
  %vm385 = vcmask 7168
  %s386 = scalar_lea.vmem %s1, 133
  %387 = vst.msk [vmem:[%s386] ss:$-120 sm:$0x3] %vm385, %v384
  %s388 = scalar_lea.vmem %s1, 4294967269
  %389 = vst.msk [vmem:[%s388] ss:$40 sm:$0xc] %vm385, %v384
  %s390 = scalar_lea.vmem %s1, 773
  %391 = vst.msk [vmem:[%s390] ss:$-120 sm:$0x30] %vm385, %v384
  %s392 = scalar_lea.vmem %s1, 4294967269
  %393 = vst.msk [vmem:[%s392] ss:$40 sm:$0xc0] %vm385, %v384
  %s394 = scalar_lea.vmem %s0, 8
  %v395 = vld.sshfl [vmem:[%s394] sm:$0xff pattern:$0x65472103]
  %396 = vrot.lane.b32.xlu0 %v395, 115
  %v397 = vpop.permute.xlu0 %396
  %vm398 = vcmask 7168
  %s399 = scalar_lea.vmem %s1, 453
  %400 = vst.msk [vmem:[%s399] ss:$-120 sm:$0x3] %vm398, %v397
  %s401 = scalar_lea.vmem %s1, 293
  %402 = vst.msk [vmem:[%s401] ss:$40 sm:$0xc] %vm398, %v397
  %s403 = scalar_lea.vmem %s1, 1093
  %404 = vst.msk [vmem:[%s403] ss:$-120 sm:$0x30] %vm398, %v397
  %s405 = scalar_lea.vmem %s1, 293
  %406 = vst.msk [vmem:[%s405] ss:$40 sm:$0xc0] %vm398, %v397
  %s407 = scalar_lea.vmem %s0, 16
  %v408 = vld.sshfl [vmem:[%s407] sm:$0xff pattern:$0x55542103]
  %409 = vrot.lane.b32.xlu0 %v408, 115
  %v410 = vpop.permute.xlu0 %409
  %vm411 = vcmask 7168
  %s412 = scalar_lea.vmem %s1, 773
  %413 = vst.msk [vmem:[%s412] ss:$-120 sm:$0x3] %vm411, %v410
  %s414 = scalar_lea.vmem %s1, 613
  %415 = vst.msk [vmem:[%s414] ss:$40 sm:$0xc] %vm411, %v410
  %s416 = scalar_lea.vmem %s1, 653
  %417 = vst.msk [vmem:[%s416] ss:$40 sm:$0x30] %vm411, %v410
  %v418 = vld.sshfl [vmem:[%s0] sm:$0xff pattern:$0x65472103]
  %419 = vrot.lane.b32.xlu0 %v418, 114
  %v420 = vpop.permute.xlu0 %419
  %vm421 = vcmask 7168
  %s422 = scalar_lea.vmem %s1, 134
  %423 = vst.msk [vmem:[%s422] ss:$-120 sm:$0x3] %vm421, %v420
  %s424 = scalar_lea.vmem %s1, 4294967270
  %425 = vst.msk [vmem:[%s424] ss:$40 sm:$0xc] %vm421, %v420
  %s426 = scalar_lea.vmem %s1, 774
  %427 = vst.msk [vmem:[%s426] ss:$-120 sm:$0x30] %vm421, %v420
  %s428 = scalar_lea.vmem %s1, 4294967270
  %429 = vst.msk [vmem:[%s428] ss:$40 sm:$0xc0] %vm421, %v420
  %s430 = scalar_lea.vmem %s0, 8
  %v431 = vld.sshfl [vmem:[%s430] sm:$0xff pattern:$0x65472103]
  %432 = vrot.lane.b32.xlu0 %v431, 114
  %v433 = vpop.permute.xlu0 %432
  %vm434 = vcmask 7168
  %s435 = scalar_lea.vmem %s1, 454
  %436 = vst.msk [vmem:[%s435] ss:$-120 sm:$0x3] %vm434, %v433
  %s437 = scalar_lea.vmem %s1, 294
  %438 = vst.msk [vmem:[%s437] ss:$40 sm:$0xc] %vm434, %v433
  %s439 = scalar_lea.vmem %s1, 1094
  %440 = vst.msk [vmem:[%s439] ss:$-120 sm:$0x30] %vm434, %v433
  %s441 = scalar_lea.vmem %s1, 294
  %442 = vst.msk [vmem:[%s441] ss:$40 sm:$0xc0] %vm434, %v433
  %s443 = scalar_lea.vmem %s0, 16
  %v444 = vld.sshfl [vmem:[%s443] sm:$0xff pattern:$0x55542103]
  %445 = vrot.lane.b32.xlu0 %v444, 114
  %v446 = vpop.permute.xlu0 %445
  %vm447 = vcmask 7168
  %s448 = scalar_lea.vmem %s1, 774
  %449 = vst.msk [vmem:[%s448] ss:$-120 sm:$0x3] %vm447, %v446
  %s450 = scalar_lea.vmem %s1, 614
  %451 = vst.msk [vmem:[%s450] ss:$40 sm:$0xc] %vm447, %v446
  %s452 = scalar_lea.vmem %s1, 654
  %453 = vst.msk [vmem:[%s452] ss:$40 sm:$0x30] %vm447, %v446
  %v454 = vld.sshfl [vmem:[%s0] sm:$0xff pattern:$0x65472103]
  %455 = vrot.lane.b32.xlu0 %v454, 113
  %v456 = vpop.permute.xlu0 %455
  %vm457 = vcmask 7168
  %s458 = scalar_lea.vmem %s1, 135
  %459 = vst.msk [vmem:[%s458] ss:$-120 sm:$0x3] %vm457, %v456
  %s460 = scalar_lea.vmem %s1, 4294967271
  %461 = vst.msk [vmem:[%s460] ss:$40 sm:$0xc] %vm457, %v456
  %s462 = scalar_lea.vmem %s1, 775
  %463 = vst.msk [vmem:[%s462] ss:$-120 sm:$0x30] %vm457, %v456
  %s464 = scalar_lea.vmem %s1, 4294967271
  %465 = vst.msk [vmem:[%s464] ss:$40 sm:$0xc0] %vm457, %v456
  %s466 = scalar_lea.vmem %s0, 8
  %v467 = vld.sshfl [vmem:[%s466] sm:$0xff pattern:$0x65472103]
  %468 = vrot.lane.b32.xlu0 %v467, 113
  %v469 = vpop.permute.xlu0 %468
  %vm470 = vcmask 7168
  %s471 = scalar_lea.vmem %s1, 455
  %472 = vst.msk [vmem:[%s471] ss:$-120 sm:$0x3] %vm470, %v469
  %s473 = scalar_lea.vmem %s1, 295
  %474 = vst.msk [vmem:[%s473] ss:$40 sm:$0xc] %vm470, %v469
  %s475 = scalar_lea.vmem %s1, 1095
  %476 = vst.msk [vmem:[%s475] ss:$-120 sm:$0x30] %vm470, %v469
  %s477 = scalar_lea.vmem %s1, 295
  %478 = vst.msk [vmem:[%s477] ss:$40 sm:$0xc0] %vm470, %v469
  %s479 = scalar_lea.vmem %s0, 16
  %v480 = vld.sshfl [vmem:[%s479] sm:$0xff pattern:$0x55542103]
  %481 = vrot.lane.b32.xlu0 %v480, 113
  %v482 = vpop.permute.xlu0 %481
  %vm483 = vcmask 7168
  %s484 = scalar_lea.vmem %s1, 775
  %485 = vst.msk [vmem:[%s484] ss:$-120 sm:$0x3] %vm483, %v482
  %s486 = scalar_lea.vmem %s1, 615
  %487 = vst.msk [vmem:[%s486] ss:$40 sm:$0xc] %vm483, %v482
  %s488 = scalar_lea.vmem %s1, 655
  %489 = vst.msk [vmem:[%s488] ss:$40 sm:$0x30] %vm483, %v482
  %v490 = vld.sshfl [vmem:[%s0] sm:$0xff pattern:$0x54761032]
  %491 = vrot.lane.b32.xlu0 %v490, 112
  %v492 = vpop.permute.xlu0 %491
  %vm493 = vcmask 7168
  %s494 = scalar_lea.vmem %s1, 96
  %495 = vst.msk [vmem:[%s494] ss:$40 sm:$0x3] %vm493, %v492
  %s496 = scalar_lea.vmem %s1, 4294967232
  %497 = vst.msk [vmem:[%s496] ss:$40 sm:$0xc] %vm493, %v492
  %s498 = scalar_lea.vmem %s1, 96
  %499 = vst.msk [vmem:[%s498] ss:$40 sm:$0x30] %vm493, %v492
  %s500 = scalar_lea.vmem %s1, 4294967232
  %501 = vst.msk [vmem:[%s500] ss:$40 sm:$0xc0] %vm493, %v492
  %s502 = scalar_lea.vmem %s0, 8
  %v503 = vld.sshfl [vmem:[%s502] sm:$0xff pattern:$0x54761032]
  %504 = vrot.lane.b32.xlu0 %v503, 112
  %v505 = vpop.permute.xlu0 %504
  %vm506 = vcmask 7168
  %s507 = scalar_lea.vmem %s1, 416
  %508 = vst.msk [vmem:[%s507] ss:$40 sm:$0x3] %vm506, %v505
  %s509 = scalar_lea.vmem %s1, 256
  %510 = vst.msk [vmem:[%s509] ss:$40 sm:$0xc] %vm506, %v505
  %s511 = scalar_lea.vmem %s1, 416
  %512 = vst.msk [vmem:[%s511] ss:$40 sm:$0x30] %vm506, %v505
  %s513 = scalar_lea.vmem %s1, 256
  %514 = vst.msk [vmem:[%s513] ss:$40 sm:$0xc0] %vm506, %v505
  %s515 = scalar_lea.vmem %s0, 16
  %v516 = vld.sshfl [vmem:[%s515] sm:$0xff pattern:$0x55541032]
  %517 = vrot.lane.b32.xlu0 %v516, 112
  %v518 = vpop.permute.xlu0 %517
  %vm519 = vcmask 7168
  %s520 = scalar_lea.vmem %s1, 736
  %521 = vst.msk [vmem:[%s520] ss:$40 sm:$0x3] %vm519, %v518
  %s522 = scalar_lea.vmem %s1, 576
  %523 = vst.msk [vmem:[%s522] ss:$40 sm:$0xc] %vm519, %v518
  %s524 = scalar_lea.vmem %s1, 656
  %525 = vst.msk [vmem:[%s524] ss:$40 sm:$0x30] %vm519, %v518
  %v526 = vld.sshfl [vmem:[%s0] sm:$0xff pattern:$0x54761032]
  %527 = vrot.lane.b32.xlu0 %v526, 111
  %v528 = vpop.permute.xlu0 %527
  %vm529 = vcmask 7168
  %s530 = scalar_lea.vmem %s1, 97
  %531 = vst.msk [vmem:[%s530] ss:$40 sm:$0x3] %vm529, %v528
  %s532 = scalar_lea.vmem %s1, 4294967233
  %533 = vst.msk [vmem:[%s532] ss:$40 sm:$0xc] %vm529, %v528
  %s534 = scalar_lea.vmem %s1, 97
  %535 = vst.msk [vmem:[%s534] ss:$40 sm:$0x30] %vm529, %v528
  %s536 = scalar_lea.vmem %s1, 4294967233
  %537 = vst.msk [vmem:[%s536] ss:$40 sm:$0xc0] %vm529, %v528
  %s538 = scalar_lea.vmem %s0, 8
  %v539 = vld.sshfl [vmem:[%s538] sm:$0xff pattern:$0x54761032]
  %540 = vrot.lane.b32.xlu0 %v539, 111
  %v541 = vpop.permute.xlu0 %540
  %vm542 = vcmask 7168
  %s543 = scalar_lea.vmem %s1, 417
  %544 = vst.msk [vmem:[%s543] ss:$40 sm:$0x3] %vm542, %v541
  %s545 = scalar_lea.vmem %s1, 257
  %546 = vst.msk [vmem:[%s545] ss:$40 sm:$0xc] %vm542, %v541
  %s547 = scalar_lea.vmem %s1, 417
  %548 = vst.msk [vmem:[%s547] ss:$40 sm:$0x30] %vm542, %v541
  %s549 = scalar_lea.vmem %s1, 257
  %550 = vst.msk [vmem:[%s549] ss:$40 sm:$0xc0] %vm542, %v541
  %s551 = scalar_lea.vmem %s0, 16
  %v552 = vld.sshfl [vmem:[%s551] sm:$0xff pattern:$0x55541032]
  %553 = vrot.lane.b32.xlu0 %v552, 111
  %v554 = vpop.permute.xlu0 %553
  %vm555 = vcmask 7168
  %s556 = scalar_lea.vmem %s1, 737
  %557 = vst.msk [vmem:[%s556] ss:$40 sm:$0x3] %vm555, %v554
  %s558 = scalar_lea.vmem %s1, 577
  %559 = vst.msk [vmem:[%s558] ss:$40 sm:$0xc] %vm555, %v554
  %s560 = scalar_lea.vmem %s1, 657
  %561 = vst.msk [vmem:[%s560] ss:$40 sm:$0x30] %vm555, %v554
  %v562 = vld.sshfl [vmem:[%s0] sm:$0xff pattern:$0x54761032]
  %563 = vrot.lane.b32.xlu0 %v562, 110
  %v564 = vpop.permute.xlu0 %563
  %vm565 = vcmask 7168
  %s566 = scalar_lea.vmem %s1, 98
  %567 = vst.msk [vmem:[%s566] ss:$40 sm:$0x3] %vm565, %v564
  %s568 = scalar_lea.vmem %s1, 4294967234
  %569 = vst.msk [vmem:[%s568] ss:$40 sm:$0xc] %vm565, %v564
  %s570 = scalar_lea.vmem %s1, 98
  %571 = vst.msk [vmem:[%s570] ss:$40 sm:$0x30] %vm565, %v564
  %s572 = scalar_lea.vmem %s1, 4294967234
  %573 = vst.msk [vmem:[%s572] ss:$40 sm:$0xc0] %vm565, %v564
  %s574 = scalar_lea.vmem %s0, 8
  %v575 = vld.sshfl [vmem:[%s574] sm:$0xff pattern:$0x54761032]
  %576 = vrot.lane.b32.xlu0 %v575, 110
  %v577 = vpop.permute.xlu0 %576
  %vm578 = vcmask 7168
  %s579 = scalar_lea.vmem %s1, 418
  %580 = vst.msk [vmem:[%s579] ss:$40 sm:$0x3] %vm578, %v577
  %s581 = scalar_lea.vmem %s1, 258
  %582 = vst.msk [vmem:[%s581] ss:$40 sm:$0xc] %vm578, %v577
  %s583 = scalar_lea.vmem %s1, 418
  %584 = vst.msk [vmem:[%s583] ss:$40 sm:$0x30] %vm578, %v577
  %s585 = scalar_lea.vmem %s1, 258
  %586 = vst.msk [vmem:[%s585] ss:$40 sm:$0xc0] %vm578, %v577
  %s587 = scalar_lea.vmem %s0, 16
  %v588 = vld.sshfl [vmem:[%s587] sm:$0xff pattern:$0x55541032]
  %589 = vrot.lane.b32.xlu0 %v588, 110
  %v590 = vpop.permute.xlu0 %589
  %vm591 = vcmask 7168
  %s592 = scalar_lea.vmem %s1, 738
  %593 = vst.msk [vmem:[%s592] ss:$40 sm:$0x3] %vm591, %v590
  %s594 = scalar_lea.vmem %s1, 578
  %595 = vst.msk [vmem:[%s594] ss:$40 sm:$0xc] %vm591, %v590
  %s596 = scalar_lea.vmem %s1, 658
  %597 = vst.msk [vmem:[%s596] ss:$40 sm:$0x30] %vm591, %v590
  %v598 = vld.sshfl [vmem:[%s0] sm:$0xff pattern:$0x54761032]
  %599 = vrot.lane.b32.xlu0 %v598, 109
  %v600 = vpop.permute.xlu0 %599
  %vm601 = vcmask 7168
  %s602 = scalar_lea.vmem %s1, 99
  %603 = vst.msk [vmem:[%s602] ss:$40 sm:$0x3] %vm601, %v600
  %s604 = scalar_lea.vmem %s1, 4294967235
  %605 = vst.msk [vmem:[%s604] ss:$40 sm:$0xc] %vm601, %v600
  %s606 = scalar_lea.vmem %s1, 99
  %607 = vst.msk [vmem:[%s606] ss:$40 sm:$0x30] %vm601, %v600
  %s608 = scalar_lea.vmem %s1, 4294967235
  %609 = vst.msk [vmem:[%s608] ss:$40 sm:$0xc0] %vm601, %v600
  %s610 = scalar_lea.vmem %s0, 8
  %v611 = vld.sshfl [vmem:[%s610] sm:$0xff pattern:$0x54761032]
  %612 = vrot.lane.b32.xlu0 %v611, 109
  %v613 = vpop.permute.xlu0 %612
  %vm614 = vcmask 7168
  %s615 = scalar_lea.vmem %s1, 419
  %616 = vst.msk [vmem:[%s615] ss:$40 sm:$0x3] %vm614, %v613
  %s617 = scalar_lea.vmem %s1, 259
  %618 = vst.msk [vmem:[%s617] ss:$40 sm:$0xc] %vm614, %v613
  %s619 = scalar_lea.vmem %s1, 419
  %620 = vst.msk [vmem:[%s619] ss:$40 sm:$0x30] %vm614, %v613
  %s621 = scalar_lea.vmem %s1, 259
  %622 = vst.msk [vmem:[%s621] ss:$40 sm:$0xc0] %vm614, %v613
  %s623 = scalar_lea.vmem %s0, 16
  %v624 = vld.sshfl [vmem:[%s623] sm:$0xff pattern:$0x55541032]
  %625 = vrot.lane.b32.xlu0 %v624, 109
  %v626 = vpop.permute.xlu0 %625
  %vm627 = vcmask 7168
  %s628 = scalar_lea.vmem %s1, 739
  %629 = vst.msk [vmem:[%s628] ss:$40 sm:$0x3] %vm627, %v626
  %s630 = scalar_lea.vmem %s1, 579
  %631 = vst.msk [vmem:[%s630] ss:$40 sm:$0xc] %vm627, %v626
  %s632 = scalar_lea.vmem %s1, 659
  %633 = vst.msk [vmem:[%s632] ss:$40 sm:$0x30] %vm627, %v626
  %v634 = vld.sshfl [vmem:[%s0] sm:$0xff pattern:$0x54761032]
  %635 = vrot.lane.b32.xlu0 %v634, 108
  %v636 = vpop.permute.xlu0 %635
  %vm637 = vcmask 7168
  %s638 = scalar_lea.vmem %s1, 100
  %639 = vst.msk [vmem:[%s638] ss:$40 sm:$0x3] %vm637, %v636
  %s640 = scalar_lea.vmem %s1, 4294967236
  %641 = vst.msk [vmem:[%s640] ss:$40 sm:$0xc] %vm637, %v636
  %s642 = scalar_lea.vmem %s1, 100
  %643 = vst.msk [vmem:[%s642] ss:$40 sm:$0x30] %vm637, %v636
  %s644 = scalar_lea.vmem %s1, 4294967236
  %645 = vst.msk [vmem:[%s644] ss:$40 sm:$0xc0] %vm637, %v636
  %s646 = scalar_lea.vmem %s0, 8
  %v647 = vld.sshfl [vmem:[%s646] sm:$0xff pattern:$0x54761032]
  %648 = vrot.lane.b32.xlu0 %v647, 108
  %v649 = vpop.permute.xlu0 %648
  %vm650 = vcmask 7168
  %s651 = scalar_lea.vmem %s1, 420
  %652 = vst.msk [vmem:[%s651] ss:$40 sm:$0x3] %vm650, %v649
  %s653 = scalar_lea.vmem %s1, 260
  %654 = vst.msk [vmem:[%s653] ss:$40 sm:$0xc] %vm650, %v649
  %s655 = scalar_lea.vmem %s1, 420
  %656 = vst.msk [vmem:[%s655] ss:$40 sm:$0x30] %vm650, %v649
  %s657 = scalar_lea.vmem %s1, 260
  %658 = vst.msk [vmem:[%s657] ss:$40 sm:$0xc0] %vm650, %v649
  %s659 = scalar_lea.vmem %s0, 16
  %v660 = vld.sshfl [vmem:[%s659] sm:$0xff pattern:$0x55541032]
  %661 = vrot.lane.b32.xlu0 %v660, 108
  %v662 = vpop.permute.xlu0 %661
  %vm663 = vcmask 7168
  %s664 = scalar_lea.vmem %s1, 740
  %665 = vst.msk [vmem:[%s664] ss:$40 sm:$0x3] %vm663, %v662
  %s666 = scalar_lea.vmem %s1, 580
  %667 = vst.msk [vmem:[%s666] ss:$40 sm:$0xc] %vm663, %v662
  %s668 = scalar_lea.vmem %s1, 660
  %669 = vst.msk [vmem:[%s668] ss:$40 sm:$0x30] %vm663, %v662
  %v670 = vld.sshfl [vmem:[%s0] sm:$0xff pattern:$0x54761032]
  %671 = vrot.lane.b32.xlu0 %v670, 107
  %v672 = vpop.permute.xlu0 %671
  %vm673 = vcmask 7168
  %s674 = scalar_lea.vmem %s1, 101
  %675 = vst.msk [vmem:[%s674] ss:$40 sm:$0x3] %vm673, %v672
  %s676 = scalar_lea.vmem %s1, 4294967237
  %677 = vst.msk [vmem:[%s676] ss:$40 sm:$0xc] %vm673, %v672
  %s678 = scalar_lea.vmem %s1, 101
  %679 = vst.msk [vmem:[%s678] ss:$40 sm:$0x30] %vm673, %v672
  %s680 = scalar_lea.vmem %s1, 4294967237
  %681 = vst.msk [vmem:[%s680] ss:$40 sm:$0xc0] %vm673, %v672
  %s682 = scalar_lea.vmem %s0, 8
  %v683 = vld.sshfl [vmem:[%s682] sm:$0xff pattern:$0x54761032]
  %684 = vrot.lane.b32.xlu0 %v683, 107
  %v685 = vpop.permute.xlu0 %684
  %vm686 = vcmask 7168
  %s687 = scalar_lea.vmem %s1, 421
  %688 = vst.msk [vmem:[%s687] ss:$40 sm:$0x3] %vm686, %v685
  %s689 = scalar_lea.vmem %s1, 261
  %690 = vst.msk [vmem:[%s689] ss:$40 sm:$0xc] %vm686, %v685
  %s691 = scalar_lea.vmem %s1, 421
  %692 = vst.msk [vmem:[%s691] ss:$40 sm:$0x30] %vm686, %v685
  %s693 = scalar_lea.vmem %s1, 261
  %694 = vst.msk [vmem:[%s693] ss:$40 sm:$0xc0] %vm686, %v685
  %s695 = scalar_lea.vmem %s0, 16
  %v696 = vld.sshfl [vmem:[%s695] sm:$0xff pattern:$0x55541032]
  %697 = vrot.lane.b32.xlu0 %v696, 107
  %v698 = vpop.permute.xlu0 %697
  %vm699 = vcmask 7168
  %s700 = scalar_lea.vmem %s1, 741
  %701 = vst.msk [vmem:[%s700] ss:$40 sm:$0x3] %vm699, %v698
  %s702 = scalar_lea.vmem %s1, 581
  %703 = vst.msk [vmem:[%s702] ss:$40 sm:$0xc] %vm699, %v698
  %s704 = scalar_lea.vmem %s1, 661
  %705 = vst.msk [vmem:[%s704] ss:$40 sm:$0x30] %vm699, %v698
  %v706 = vld.sshfl [vmem:[%s0] sm:$0xff pattern:$0x54761032]
  %707 = vrot.lane.b32.xlu0 %v706, 106
  %v708 = vpop.permute.xlu0 %707
  %vm709 = vcmask 7168
  %s710 = scalar_lea.vmem %s1, 102
  %711 = vst.msk [vmem:[%s710] ss:$40 sm:$0x3] %vm709, %v708
  %s712 = scalar_lea.vmem %s1, 4294967238
  %713 = vst.msk [vmem:[%s712] ss:$40 sm:$0xc] %vm709, %v708
  %s714 = scalar_lea.vmem %s1, 102
  %715 = vst.msk [vmem:[%s714] ss:$40 sm:$0x30] %vm709, %v708
  %s716 = scalar_lea.vmem %s1, 4294967238
  %717 = vst.msk [vmem:[%s716] ss:$40 sm:$0xc0] %vm709, %v708
  %s718 = scalar_lea.vmem %s0, 8
  %v719 = vld.sshfl [vmem:[%s718] sm:$0xff pattern:$0x54761032]
  %720 = vrot.lane.b32.xlu0 %v719, 106
  %v721 = vpop.permute.xlu0 %720
  %vm722 = vcmask 7168
  %s723 = scalar_lea.vmem %s1, 422
  %724 = vst.msk [vmem:[%s723] ss:$40 sm:$0x3] %vm722, %v721
  %s725 = scalar_lea.vmem %s1, 262
  %726 = vst.msk [vmem:[%s725] ss:$40 sm:$0xc] %vm722, %v721
  %s727 = scalar_lea.vmem %s1, 422
  %728 = vst.msk [vmem:[%s727] ss:$40 sm:$0x30] %vm722, %v721
  %s729 = scalar_lea.vmem %s1, 262
  %730 = vst.msk [vmem:[%s729] ss:$40 sm:$0xc0] %vm722, %v721
  %s731 = scalar_lea.vmem %s0, 16
  %v732 = vld.sshfl [vmem:[%s731] sm:$0xff pattern:$0x55541032]
  %733 = vrot.lane.b32.xlu0 %v732, 106
  %v734 = vpop.permute.xlu0 %733
  %vm735 = vcmask 7168
  %s736 = scalar_lea.vmem %s1, 742
  %737 = vst.msk [vmem:[%s736] ss:$40 sm:$0x3] %vm735, %v734
  %s738 = scalar_lea.vmem %s1, 582
  %739 = vst.msk [vmem:[%s738] ss:$40 sm:$0xc] %vm735, %v734
  %s740 = scalar_lea.vmem %s1, 662
  %741 = vst.msk [vmem:[%s740] ss:$40 sm:$0x30] %vm735, %v734
  %v742 = vld.sshfl [vmem:[%s0] sm:$0xff pattern:$0x54761032]
  %743 = vrot.lane.b32.xlu0 %v742, 105
  %v744 = vpop.permute.xlu0 %743
  %vm745 = vcmask 7168
  %s746 = scalar_lea.vmem %s1, 103
  %747 = vst.msk [vmem:[%s746] ss:$40 sm:$0x3] %vm745, %v744
  %s748 = scalar_lea.vmem %s1, 4294967239
  %749 = vst.msk [vmem:[%s748] ss:$40 sm:$0xc] %vm745, %v744
  %s750 = scalar_lea.vmem %s1, 103
  %751 = vst.msk [vmem:[%s750] ss:$40 sm:$0x30] %vm745, %v744
  %s752 = scalar_lea.vmem %s1, 4294967239
  %753 = vst.msk [vmem:[%s752] ss:$40 sm:$0xc0] %vm745, %v744
  %s754 = scalar_lea.vmem %s0, 8
  %v755 = vld.sshfl [vmem:[%s754] sm:$0xff pattern:$0x54761032]
  %756 = vrot.lane.b32.xlu0 %v755, 105
  %v757 = vpop.permute.xlu0 %756
  %vm758 = vcmask 7168
  %s759 = scalar_lea.vmem %s1, 423
  %760 = vst.msk [vmem:[%s759] ss:$40 sm:$0x3] %vm758, %v757
  %s761 = scalar_lea.vmem %s1, 263
  %762 = vst.msk [vmem:[%s761] ss:$40 sm:$0xc] %vm758, %v757
  %s763 = scalar_lea.vmem %s1, 423
  %764 = vst.msk [vmem:[%s763] ss:$40 sm:$0x30] %vm758, %v757
  %s765 = scalar_lea.vmem %s1, 263
  %766 = vst.msk [vmem:[%s765] ss:$40 sm:$0xc0] %vm758, %v757
  %s767 = scalar_lea.vmem %s0, 16
  %v768 = vld.sshfl [vmem:[%s767] sm:$0xff pattern:$0x55541032]
  %769 = vrot.lane.b32.xlu0 %v768, 105
  %v770 = vpop.permute.xlu0 %769
  %vm771 = vcmask 7168
  %s772 = scalar_lea.vmem %s1, 743
  %773 = vst.msk [vmem:[%s772] ss:$40 sm:$0x3] %vm771, %v770
  %s774 = scalar_lea.vmem %s1, 583
  %775 = vst.msk [vmem:[%s774] ss:$40 sm:$0xc] %vm771, %v770
  %s776 = scalar_lea.vmem %s1, 663
  %777 = vst.msk [vmem:[%s776] ss:$40 sm:$0x30] %vm771, %v770
  %v778 = vld.sshfl [vmem:[%s0] sm:$0xff pattern:$0x47650321]
  %779 = vrot.lane.b32.xlu0 %v778, 104
  %v780 = vpop.permute.xlu0 %779
  %vm781 = vcmask 7168
  %s782 = scalar_lea.vmem %s1, 64
  %783 = vst.msk [vmem:[%s782] ss:$40 sm:$0x7] %vm781, %v780
  %s784 = scalar_lea.vmem %s1, 4294966720
  %785 = vst.msk [vmem:[%s784] ss:$200 sm:$0x18] %vm781, %v780
  %s786 = scalar_lea.vmem %s1, 64
  %787 = vst.msk [vmem:[%s786] ss:$40 sm:$0x60] %vm781, %v780
  %s788 = scalar_lea.vmem %s1, 177
  %789 = vst.msk [vmem:[%s788] sm:$0x80] %vm781, %v780
  %s790 = scalar_lea.vmem %s0, 8
  %v791 = vld.sshfl [vmem:[%s790] sm:$0xff pattern:$0x47650321]
  %792 = vrot.lane.b32.xlu0 %v791, 104
  %v793 = vpop.permute.xlu0 %792
  %vm794 = vcmask 7168
  %s795 = scalar_lea.vmem %s1, 384
  %796 = vst.msk [vmem:[%s795] ss:$40 sm:$0x7] %vm794, %v793
  %s797 = scalar_lea.vmem %s1, 4294967040
  %798 = vst.msk [vmem:[%s797] ss:$200 sm:$0x18] %vm794, %v793
  %s799 = scalar_lea.vmem %s1, 384
  %800 = vst.msk [vmem:[%s799] ss:$40 sm:$0x60] %vm794, %v793
  %s801 = scalar_lea.vmem %s1, 497
  %802 = vst.msk [vmem:[%s801] sm:$0x80] %vm794, %v793
  %s803 = scalar_lea.vmem %s0, 16
  %v804 = vld.sshfl [vmem:[%s803] sm:$0xff pattern:$0x44450321]
  %805 = vrot.lane.b32.xlu0 %v804, 104
  %v806 = vpop.permute.xlu0 %805
  %vm807 = vcmask 7168
  %s808 = scalar_lea.vmem %s1, 704
  %809 = vst.msk [vmem:[%s808] ss:$40 sm:$0x7] %vm807, %v806
  %s810 = scalar_lea.vmem %s1, 64
  %811 = vst.msk [vmem:[%s810] ss:$200 sm:$0x18] %vm807, %v806
  %s812 = scalar_lea.vmem %s1, 819
  %813 = vst.msk [vmem:[%s812] sm:$0x20] %vm807, %v806
  %v814 = vld.sshfl [vmem:[%s0] sm:$0xff pattern:$0x47650321]
  %815 = vrot.lane.b32.xlu0 %v814, 103
  %v816 = vpop.permute.xlu0 %815
  %vm817 = vcmask 7168
  %s818 = scalar_lea.vmem %s1, 65
  %819 = vst.msk [vmem:[%s818] ss:$40 sm:$0x7] %vm817, %v816
  %s820 = scalar_lea.vmem %s1, 4294966721
  %821 = vst.msk [vmem:[%s820] ss:$200 sm:$0x18] %vm817, %v816
  %s822 = scalar_lea.vmem %s1, 65
  %823 = vst.msk [vmem:[%s822] ss:$40 sm:$0x60] %vm817, %v816
  %s824 = scalar_lea.vmem %s1, 178
  %825 = vst.msk [vmem:[%s824] sm:$0x80] %vm817, %v816
  %s826 = scalar_lea.vmem %s0, 8
  %v827 = vld.sshfl [vmem:[%s826] sm:$0xff pattern:$0x47650321]
  %828 = vrot.lane.b32.xlu0 %v827, 103
  %v829 = vpop.permute.xlu0 %828
  %vm830 = vcmask 7168
  %s831 = scalar_lea.vmem %s1, 385
  %832 = vst.msk [vmem:[%s831] ss:$40 sm:$0x7] %vm830, %v829
  %s833 = scalar_lea.vmem %s1, 4294967041
  %834 = vst.msk [vmem:[%s833] ss:$200 sm:$0x18] %vm830, %v829
  %s835 = scalar_lea.vmem %s1, 385
  %836 = vst.msk [vmem:[%s835] ss:$40 sm:$0x60] %vm830, %v829
  %s837 = scalar_lea.vmem %s1, 498
  %838 = vst.msk [vmem:[%s837] sm:$0x80] %vm830, %v829
  %s839 = scalar_lea.vmem %s0, 16
  %v840 = vld.sshfl [vmem:[%s839] sm:$0xff pattern:$0x44450321]
  %841 = vrot.lane.b32.xlu0 %v840, 103
  %v842 = vpop.permute.xlu0 %841
  %vm843 = vcmask 7168
  %s844 = scalar_lea.vmem %s1, 705
  %845 = vst.msk [vmem:[%s844] ss:$40 sm:$0x7] %vm843, %v842
  %s846 = scalar_lea.vmem %s1, 65
  %847 = vst.msk [vmem:[%s846] ss:$200 sm:$0x18] %vm843, %v842
  %s848 = scalar_lea.vmem %s1, 820
  %849 = vst.msk [vmem:[%s848] sm:$0x20] %vm843, %v842
  %v850 = vld.sshfl [vmem:[%s0] sm:$0xff pattern:$0x47650321]
  %851 = vrot.lane.b32.xlu0 %v850, 102
  %v852 = vpop.permute.xlu0 %851
  %vm853 = vcmask 7168
  %s854 = scalar_lea.vmem %s1, 66
  %855 = vst.msk [vmem:[%s854] ss:$40 sm:$0x7] %vm853, %v852
  %s856 = scalar_lea.vmem %s1, 4294966722
  %857 = vst.msk [vmem:[%s856] ss:$200 sm:$0x18] %vm853, %v852
  %s858 = scalar_lea.vmem %s1, 66
  %859 = vst.msk [vmem:[%s858] ss:$40 sm:$0x60] %vm853, %v852
  %s860 = scalar_lea.vmem %s1, 179
  %861 = vst.msk [vmem:[%s860] sm:$0x80] %vm853, %v852
  %s862 = scalar_lea.vmem %s0, 8
  %v863 = vld.sshfl [vmem:[%s862] sm:$0xff pattern:$0x47650321]
  %864 = vrot.lane.b32.xlu0 %v863, 102
  %v865 = vpop.permute.xlu0 %864
  %vm866 = vcmask 7168
  %s867 = scalar_lea.vmem %s1, 386
  %868 = vst.msk [vmem:[%s867] ss:$40 sm:$0x7] %vm866, %v865
  %s869 = scalar_lea.vmem %s1, 4294967042
  %870 = vst.msk [vmem:[%s869] ss:$200 sm:$0x18] %vm866, %v865
  %s871 = scalar_lea.vmem %s1, 386
  %872 = vst.msk [vmem:[%s871] ss:$40 sm:$0x60] %vm866, %v865
  %s873 = scalar_lea.vmem %s1, 499
  %874 = vst.msk [vmem:[%s873] sm:$0x80] %vm866, %v865
  %s875 = scalar_lea.vmem %s0, 16
  %v876 = vld.sshfl [vmem:[%s875] sm:$0xff pattern:$0x44450321]
  %877 = vrot.lane.b32.xlu0 %v876, 102
  %v878 = vpop.permute.xlu0 %877
  %vm879 = vcmask 7168
  %s880 = scalar_lea.vmem %s1, 706
  %881 = vst.msk [vmem:[%s880] ss:$40 sm:$0x7] %vm879, %v878
  %s882 = scalar_lea.vmem %s1, 66
  %883 = vst.msk [vmem:[%s882] ss:$200 sm:$0x18] %vm879, %v878
  %s884 = scalar_lea.vmem %s1, 821
  %885 = vst.msk [vmem:[%s884] sm:$0x20] %vm879, %v878
  %v886 = vld.sshfl [vmem:[%s0] sm:$0xff pattern:$0x47650321]
  %887 = vrot.lane.b32.xlu0 %v886, 101
  %v888 = vpop.permute.xlu0 %887
  %vm889 = vcmask 7168
  %s890 = scalar_lea.vmem %s1, 67
  %891 = vst.msk [vmem:[%s890] ss:$40 sm:$0x7] %vm889, %v888
  %s892 = scalar_lea.vmem %s1, 4294966723
  %893 = vst.msk [vmem:[%s892] ss:$200 sm:$0x18] %vm889, %v888
  %s894 = scalar_lea.vmem %s1, 67
  %895 = vst.msk [vmem:[%s894] ss:$40 sm:$0x60] %vm889, %v888
  %s896 = scalar_lea.vmem %s1, 180
  %897 = vst.msk [vmem:[%s896] sm:$0x80] %vm889, %v888
  %s898 = scalar_lea.vmem %s0, 8
  %v899 = vld.sshfl [vmem:[%s898] sm:$0xff pattern:$0x47650321]
  %900 = vrot.lane.b32.xlu0 %v899, 101
  %v901 = vpop.permute.xlu0 %900
  %vm902 = vcmask 7168
  %s903 = scalar_lea.vmem %s1, 387
  %904 = vst.msk [vmem:[%s903] ss:$40 sm:$0x7] %vm902, %v901
  %s905 = scalar_lea.vmem %s1, 4294967043
  %906 = vst.msk [vmem:[%s905] ss:$200 sm:$0x18] %vm902, %v901
  %s907 = scalar_lea.vmem %s1, 387
  %908 = vst.msk [vmem:[%s907] ss:$40 sm:$0x60] %vm902, %v901
  %s909 = scalar_lea.vmem %s1, 500
  %910 = vst.msk [vmem:[%s909] sm:$0x80] %vm902, %v901
  %s911 = scalar_lea.vmem %s0, 16
  %v912 = vld.sshfl [vmem:[%s911] sm:$0xff pattern:$0x44450321]
  %913 = vrot.lane.b32.xlu0 %v912, 101
  %v914 = vpop.permute.xlu0 %913
  %vm915 = vcmask 7168
  %s916 = scalar_lea.vmem %s1, 707
  %917 = vst.msk [vmem:[%s916] ss:$40 sm:$0x7] %vm915, %v914
  %s918 = scalar_lea.vmem %s1, 67
  %919 = vst.msk [vmem:[%s918] ss:$200 sm:$0x18] %vm915, %v914
  %s920 = scalar_lea.vmem %s1, 822
  %921 = vst.msk [vmem:[%s920] sm:$0x20] %vm915, %v914
  %v922 = vld.sshfl [vmem:[%s0] sm:$0xff pattern:$0x47650321]
  %923 = vrot.lane.b32.xlu0 %v922, 100
  %v924 = vpop.permute.xlu0 %923
  %vm925 = vcmask 7168
  %s926 = scalar_lea.vmem %s1, 68
  %927 = vst.msk [vmem:[%s926] ss:$40 sm:$0x7] %vm925, %v924
  %s928 = scalar_lea.vmem %s1, 4294966724
  %929 = vst.msk [vmem:[%s928] ss:$200 sm:$0x18] %vm925, %v924
  %s930 = scalar_lea.vmem %s1, 68
  %931 = vst.msk [vmem:[%s930] ss:$40 sm:$0x60] %vm925, %v924
  %s932 = scalar_lea.vmem %s1, 181
  %933 = vst.msk [vmem:[%s932] sm:$0x80] %vm925, %v924
  %s934 = scalar_lea.vmem %s0, 8
  %v935 = vld.sshfl [vmem:[%s934] sm:$0xff pattern:$0x47650321]
  %936 = vrot.lane.b32.xlu0 %v935, 100
  %v937 = vpop.permute.xlu0 %936
  %vm938 = vcmask 7168
  %s939 = scalar_lea.vmem %s1, 388
  %940 = vst.msk [vmem:[%s939] ss:$40 sm:$0x7] %vm938, %v937
  %s941 = scalar_lea.vmem %s1, 4294967044
  %942 = vst.msk [vmem:[%s941] ss:$200 sm:$0x18] %vm938, %v937
  %s943 = scalar_lea.vmem %s1, 388
  %944 = vst.msk [vmem:[%s943] ss:$40 sm:$0x60] %vm938, %v937
  %s945 = scalar_lea.vmem %s1, 501
  %946 = vst.msk [vmem:[%s945] sm:$0x80] %vm938, %v937
  %s947 = scalar_lea.vmem %s0, 16
  %v948 = vld.sshfl [vmem:[%s947] sm:$0xff pattern:$0x44450321]
  %949 = vrot.lane.b32.xlu0 %v948, 100
  %v950 = vpop.permute.xlu0 %949
  %vm951 = vcmask 7168
  %s952 = scalar_lea.vmem %s1, 708
  %953 = vst.msk [vmem:[%s952] ss:$40 sm:$0x7] %vm951, %v950
  %s954 = scalar_lea.vmem %s1, 68
  %955 = vst.msk [vmem:[%s954] ss:$200 sm:$0x18] %vm951, %v950
  %s956 = scalar_lea.vmem %s1, 823
  %957 = vst.msk [vmem:[%s956] sm:$0x20] %vm951, %v950
  %v958 = vld.sshfl [vmem:[%s0] sm:$0xff pattern:$0x47650321]
  %959 = vrot.lane.b32.xlu0 %v958, 99
  %v960 = vpop.permute.xlu0 %959
  %vm961 = vcmask 7168
  %s962 = scalar_lea.vmem %s1, 69
  %963 = vst.msk [vmem:[%s962] ss:$40 sm:$0x7] %vm961, %v960
  %s964 = scalar_lea.vmem %s1, 4294966725
  %965 = vst.msk [vmem:[%s964] ss:$200 sm:$0x18] %vm961, %v960
  %s966 = scalar_lea.vmem %s1, 69
  %967 = vst.msk [vmem:[%s966] ss:$40 sm:$0x60] %vm961, %v960
  %s968 = scalar_lea.vmem %s1, 182
  %969 = vst.msk [vmem:[%s968] sm:$0x80] %vm961, %v960
  %s970 = scalar_lea.vmem %s0, 8
  %v971 = vld.sshfl [vmem:[%s970] sm:$0xff pattern:$0x47650321]
  %972 = vrot.lane.b32.xlu0 %v971, 99
  %v973 = vpop.permute.xlu0 %972
  %vm974 = vcmask 7168
  %s975 = scalar_lea.vmem %s1, 389
  %976 = vst.msk [vmem:[%s975] ss:$40 sm:$0x7] %vm974, %v973
  %s977 = scalar_lea.vmem %s1, 4294967045
  %978 = vst.msk [vmem:[%s977] ss:$200 sm:$0x18] %vm974, %v973
  %s979 = scalar_lea.vmem %s1, 389
  %980 = vst.msk [vmem:[%s979] ss:$40 sm:$0x60] %vm974, %v973
  %s981 = scalar_lea.vmem %s1, 502
  %982 = vst.msk [vmem:[%s981] sm:$0x80] %vm974, %v973
  %s983 = scalar_lea.vmem %s0, 16
  %v984 = vld.sshfl [vmem:[%s983] sm:$0xff pattern:$0x44450321]
  %985 = vrot.lane.b32.xlu0 %v984, 99
  %v986 = vpop.permute.xlu0 %985
  %vm987 = vcmask 7168
  %s988 = scalar_lea.vmem %s1, 709
  %989 = vst.msk [vmem:[%s988] ss:$40 sm:$0x7] %vm987, %v986
  %s990 = scalar_lea.vmem %s1, 69
  %991 = vst.msk [vmem:[%s990] ss:$200 sm:$0x18] %vm987, %v986
  %s992 = scalar_lea.vmem %s1, 824
  %993 = vst.msk [vmem:[%s992] sm:$0x20] %vm987, %v986
  %v994 = vld.sshfl [vmem:[%s0] sm:$0xff pattern:$0x47650321]
  %995 = vrot.lane.b32.xlu0 %v994, 98
  %v996 = vpop.permute.xlu0 %995
  %vm997 = vcmask 7168
  %s998 = scalar_lea.vmem %s1, 70
  %999 = vst.msk [vmem:[%s998] ss:$40 sm:$0x7] %vm997, %v996
  %s1000 = scalar_lea.vmem %s1, 4294966726
  %1001 = vst.msk [vmem:[%s1000] ss:$200 sm:$0x18] %vm997, %v996
  %s1002 = scalar_lea.vmem %s1, 70
  %1003 = vst.msk [vmem:[%s1002] ss:$40 sm:$0x60] %vm997, %v996
  %s1004 = scalar_lea.vmem %s1, 183
  %1005 = vst.msk [vmem:[%s1004] sm:$0x80] %vm997, %v996
  %s1006 = scalar_lea.vmem %s0, 8
  %v1007 = vld.sshfl [vmem:[%s1006] sm:$0xff pattern:$0x47650321]
  %1008 = vrot.lane.b32.xlu0 %v1007, 98
  %v1009 = vpop.permute.xlu0 %1008
  %vm1010 = vcmask 7168
  %s1011 = scalar_lea.vmem %s1, 390
  %1012 = vst.msk [vmem:[%s1011] ss:$40 sm:$0x7] %vm1010, %v1009
  %s1013 = scalar_lea.vmem %s1, 4294967046
  %1014 = vst.msk [vmem:[%s1013] ss:$200 sm:$0x18] %vm1010, %v1009
  %s1015 = scalar_lea.vmem %s1, 390
  %1016 = vst.msk [vmem:[%s1015] ss:$40 sm:$0x60] %vm1010, %v1009
  %s1017 = scalar_lea.vmem %s1, 503
  %1018 = vst.msk [vmem:[%s1017] sm:$0x80] %vm1010, %v1009
  %s1019 = scalar_lea.vmem %s0, 16
  %v1020 = vld.sshfl [vmem:[%s1019] sm:$0xff pattern:$0x44450321]
  %1021 = vrot.lane.b32.xlu0 %v1020, 98
  %v1022 = vpop.permute.xlu0 %1021
  %vm1023 = vcmask 7168
  %s1024 = scalar_lea.vmem %s1, 710
  %1025 = vst.msk [vmem:[%s1024] ss:$40 sm:$0x7] %vm1023, %v1022
  %s1026 = scalar_lea.vmem %s1, 70
  %1027 = vst.msk [vmem:[%s1026] ss:$200 sm:$0x18] %vm1023, %v1022
  %s1028 = scalar_lea.vmem %s1, 825
  %1029 = vst.msk [vmem:[%s1028] sm:$0x20] %vm1023, %v1022
  %v1030 = vld.sshfl [vmem:[%s0] sm:$0xff pattern:$0x47650321]
  %1031 = vrot.lane.b32.xlu0 %v1030, 97
  %v1032 = vpop.permute.xlu0 %1031
  %vm1033 = vcmask 7168
  %s1034 = scalar_lea.vmem %s1, 71
  %1035 = vst.msk [vmem:[%s1034] ss:$40 sm:$0x7] %vm1033, %v1032
  %s1036 = scalar_lea.vmem %s1, 4294966727
  %1037 = vst.msk [vmem:[%s1036] ss:$200 sm:$0x18] %vm1033, %v1032
  %s1038 = scalar_lea.vmem %s1, 71
  %1039 = vst.msk [vmem:[%s1038] ss:$40 sm:$0x60] %vm1033, %v1032
  %s1040 = scalar_lea.vmem %s1, 184
  %1041 = vst.msk [vmem:[%s1040] sm:$0x80] %vm1033, %v1032
  %s1042 = scalar_lea.vmem %s0, 8
  %v1043 = vld.sshfl [vmem:[%s1042] sm:$0xff pattern:$0x47650321]
  %1044 = vrot.lane.b32.xlu0 %v1043, 97
  %v1045 = vpop.permute.xlu0 %1044
  %vm1046 = vcmask 7168
  %s1047 = scalar_lea.vmem %s1, 391
  %1048 = vst.msk [vmem:[%s1047] ss:$40 sm:$0x7] %vm1046, %v1045
  %s1049 = scalar_lea.vmem %s1, 4294967047
  %1050 = vst.msk [vmem:[%s1049] ss:$200 sm:$0x18] %vm1046, %v1045
  %s1051 = scalar_lea.vmem %s1, 391
  %1052 = vst.msk [vmem:[%s1051] ss:$40 sm:$0x60] %vm1046, %v1045
  %s1053 = scalar_lea.vmem %s1, 504
  %1054 = vst.msk [vmem:[%s1053] sm:$0x80] %vm1046, %v1045
  %s1055 = scalar_lea.vmem %s0, 16
  %v1056 = vld.sshfl [vmem:[%s1055] sm:$0xff pattern:$0x44450321]
  %1057 = vrot.lane.b32.xlu0 %v1056, 97
  %v1058 = vpop.permute.xlu0 %1057
  %vm1059 = vcmask 7168
  %s1060 = scalar_lea.vmem %s1, 711
  %1061 = vst.msk [vmem:[%s1060] ss:$40 sm:$0x7] %vm1059, %v1058
  %s1062 = scalar_lea.vmem %s1, 71
  %1063 = vst.msk [vmem:[%s1062] ss:$200 sm:$0x18] %vm1059, %v1058
  %s1064 = scalar_lea.vmem %s1, 826
  %1065 = vst.msk [vmem:[%s1064] sm:$0x20] %vm1059, %v1058
  %v1066 = vld [vmem:[%s0] sm:$0xff]
  %1067 = vrot.lane.b32.xlu0 %v1066, 96
  %v1068 = vpop.permute.xlu0 %1067
  %vm1069 = vcmask 7168
  %s1070 = scalar_lea.vmem %s1, 32
  %1071 = vst.msk [vmem:[%s1070] ss:$40 sm:$0xf] %vm1069, %v1068
  %s1072 = scalar_lea.vmem %s1, 32
  %1073 = vst.msk [vmem:[%s1072] ss:$40 sm:$0xf0] %vm1069, %v1068
  %s1074 = scalar_lea.vmem %s0, 8
  %v1075 = vld [vmem:[%s1074] sm:$0xff]
  %1076 = vrot.lane.b32.xlu0 %v1075, 96
  %v1077 = vpop.permute.xlu0 %1076
  %vm1078 = vcmask 7168
  %s1079 = scalar_lea.vmem %s1, 352
  %1080 = vst.msk [vmem:[%s1079] ss:$40 sm:$0xf] %vm1078, %v1077
  %s1081 = scalar_lea.vmem %s1, 352
  %1082 = vst.msk [vmem:[%s1081] ss:$40 sm:$0xf0] %vm1078, %v1077
  %s1083 = scalar_lea.vmem %s0, 16
  %v1084 = vld [vmem:[%s1083] sm:$0x3f]
  %1085 = vrot.lane.b32.xlu0 %v1084, 96
  %v1086 = vpop.permute.xlu0 %1085
  %vm1087 = vcmask 7168
  %s1088 = scalar_lea.vmem %s1, 672
  %1089 = vst.msk [vmem:[%s1088] ss:$40 sm:$0xf] %vm1087, %v1086
  %s1090 = scalar_lea.vmem %s1, 672
  %1091 = vst.msk [vmem:[%s1090] ss:$40 sm:$0x30] %vm1087, %v1086
  %v1092 = vld [vmem:[%s0] sm:$0xff]
  %1093 = vrot.lane.b32.xlu0 %v1092, 95
  %v1094 = vpop.permute.xlu0 %1093
  %vm1095 = vcmask 7168
  %s1096 = scalar_lea.vmem %s1, 33
  %1097 = vst.msk [vmem:[%s1096] ss:$40 sm:$0xf] %vm1095, %v1094
  %s1098 = scalar_lea.vmem %s1, 33
  %1099 = vst.msk [vmem:[%s1098] ss:$40 sm:$0xf0] %vm1095, %v1094
  %s1100 = scalar_lea.vmem %s0, 8
  %v1101 = vld [vmem:[%s1100] sm:$0xff]
  %1102 = vrot.lane.b32.xlu0 %v1101, 95
  %v1103 = vpop.permute.xlu0 %1102
  %vm1104 = vcmask 7168
  %s1105 = scalar_lea.vmem %s1, 353
  %1106 = vst.msk [vmem:[%s1105] ss:$40 sm:$0xf] %vm1104, %v1103
  %s1107 = scalar_lea.vmem %s1, 353
  %1108 = vst.msk [vmem:[%s1107] ss:$40 sm:$0xf0] %vm1104, %v1103
  %s1109 = scalar_lea.vmem %s0, 16
  %v1110 = vld [vmem:[%s1109] sm:$0x3f]
  %1111 = vrot.lane.b32.xlu0 %v1110, 95
  %v1112 = vpop.permute.xlu0 %1111
  %vm1113 = vcmask 7168
  %s1114 = scalar_lea.vmem %s1, 673
  %1115 = vst.msk [vmem:[%s1114] ss:$40 sm:$0xf] %vm1113, %v1112
  %s1116 = scalar_lea.vmem %s1, 673
  %1117 = vst.msk [vmem:[%s1116] ss:$40 sm:$0x30] %vm1113, %v1112
  %v1118 = vld [vmem:[%s0] sm:$0xff]
  %1119 = vrot.lane.b32.xlu0 %v1118, 94
  %v1120 = vpop.permute.xlu0 %1119
  %vm1121 = vcmask 7168
  %s1122 = scalar_lea.vmem %s1, 34
  %1123 = vst.msk [vmem:[%s1122] ss:$40 sm:$0xf] %vm1121, %v1120
  %s1124 = scalar_lea.vmem %s1, 34
  %1125 = vst.msk [vmem:[%s1124] ss:$40 sm:$0xf0] %vm1121, %v1120
  %s1126 = scalar_lea.vmem %s0, 8
  %v1127 = vld [vmem:[%s1126] sm:$0xff]
  %1128 = vrot.lane.b32.xlu0 %v1127, 94
  %v1129 = vpop.permute.xlu0 %1128
  %vm1130 = vcmask 7168
  %s1131 = scalar_lea.vmem %s1, 354
  %1132 = vst.msk [vmem:[%s1131] ss:$40 sm:$0xf] %vm1130, %v1129
  %s1133 = scalar_lea.vmem %s1, 354
  %1134 = vst.msk [vmem:[%s1133] ss:$40 sm:$0xf0] %vm1130, %v1129
  %s1135 = scalar_lea.vmem %s0, 16
  %v1136 = vld [vmem:[%s1135] sm:$0x3f]
  %1137 = vrot.lane.b32.xlu0 %v1136, 94
  %v1138 = vpop.permute.xlu0 %1137
  %vm1139 = vcmask 7168
  %s1140 = scalar_lea.vmem %s1, 674
  %1141 = vst.msk [vmem:[%s1140] ss:$40 sm:$0xf] %vm1139, %v1138
  %s1142 = scalar_lea.vmem %s1, 674
  %1143 = vst.msk [vmem:[%s1142] ss:$40 sm:$0x30] %vm1139, %v1138
  %v1144 = vld [vmem:[%s0] sm:$0xff]
  %1145 = vrot.lane.b32.xlu0 %v1144, 93
  %v1146 = vpop.permute.xlu0 %1145
  %vm1147 = vcmask 7168
  %s1148 = scalar_lea.vmem %s1, 35
  %1149 = vst.msk [vmem:[%s1148] ss:$40 sm:$0xf] %vm1147, %v1146
  %s1150 = scalar_lea.vmem %s1, 35
  %1151 = vst.msk [vmem:[%s1150] ss:$40 sm:$0xf0] %vm1147, %v1146
  %s1152 = scalar_lea.vmem %s0, 8
  %v1153 = vld [vmem:[%s1152] sm:$0xff]
  %1154 = vrot.lane.b32.xlu0 %v1153, 93
  %v1155 = vpop.permute.xlu0 %1154
  %vm1156 = vcmask 7168
  %s1157 = scalar_lea.vmem %s1, 355
  %1158 = vst.msk [vmem:[%s1157] ss:$40 sm:$0xf] %vm1156, %v1155
  %s1159 = scalar_lea.vmem %s1, 355
  %1160 = vst.msk [vmem:[%s1159] ss:$40 sm:$0xf0] %vm1156, %v1155
  %s1161 = scalar_lea.vmem %s0, 16
  %v1162 = vld [vmem:[%s1161] sm:$0x3f]
  %1163 = vrot.lane.b32.xlu0 %v1162, 93
  %v1164 = vpop.permute.xlu0 %1163
  %vm1165 = vcmask 7168
  %s1166 = scalar_lea.vmem %s1, 675
  %1167 = vst.msk [vmem:[%s1166] ss:$40 sm:$0xf] %vm1165, %v1164
  %s1168 = scalar_lea.vmem %s1, 675
  %1169 = vst.msk [vmem:[%s1168] ss:$40 sm:$0x30] %vm1165, %v1164
  %v1170 = vld [vmem:[%s0] sm:$0xff]
  %1171 = vrot.lane.b32.xlu0 %v1170, 92
  %v1172 = vpop.permute.xlu0 %1171
  %vm1173 = vcmask 7168
  %s1174 = scalar_lea.vmem %s1, 36
  %1175 = vst.msk [vmem:[%s1174] ss:$40 sm:$0xf] %vm1173, %v1172
  %s1176 = scalar_lea.vmem %s1, 36
  %1177 = vst.msk [vmem:[%s1176] ss:$40 sm:$0xf0] %vm1173, %v1172
  %s1178 = scalar_lea.vmem %s0, 8
  %v1179 = vld [vmem:[%s1178] sm:$0xff]
  %1180 = vrot.lane.b32.xlu0 %v1179, 92
  %v1181 = vpop.permute.xlu0 %1180
  %vm1182 = vcmask 7168
  %s1183 = scalar_lea.vmem %s1, 356
  %1184 = vst.msk [vmem:[%s1183] ss:$40 sm:$0xf] %vm1182, %v1181
  %s1185 = scalar_lea.vmem %s1, 356
  %1186 = vst.msk [vmem:[%s1185] ss:$40 sm:$0xf0] %vm1182, %v1181
  %s1187 = scalar_lea.vmem %s0, 16
  %v1188 = vld [vmem:[%s1187] sm:$0x3f]
  %1189 = vrot.lane.b32.xlu0 %v1188, 92
  %v1190 = vpop.permute.xlu0 %1189
  %vm1191 = vcmask 7168
  %s1192 = scalar_lea.vmem %s1, 676
  %1193 = vst.msk [vmem:[%s1192] ss:$40 sm:$0xf] %vm1191, %v1190
  %s1194 = scalar_lea.vmem %s1, 676
  %1195 = vst.msk [vmem:[%s1194] ss:$40 sm:$0x30] %vm1191, %v1190
  %v1196 = vld [vmem:[%s0] sm:$0xff]
  %1197 = vrot.lane.b32.xlu0 %v1196, 91
  %v1198 = vpop.permute.xlu0 %1197
  %vm1199 = vcmask 7168
  %s1200 = scalar_lea.vmem %s1, 37
  %1201 = vst.msk [vmem:[%s1200] ss:$40 sm:$0xf] %vm1199, %v1198
  %s1202 = scalar_lea.vmem %s1, 37
  %1203 = vst.msk [vmem:[%s1202] ss:$40 sm:$0xf0] %vm1199, %v1198
  %s1204 = scalar_lea.vmem %s0, 8
  %v1205 = vld [vmem:[%s1204] sm:$0xff]
  %1206 = vrot.lane.b32.xlu0 %v1205, 91
  %v1207 = vpop.permute.xlu0 %1206
  %vm1208 = vcmask 7168
  %s1209 = scalar_lea.vmem %s1, 357
  %1210 = vst.msk [vmem:[%s1209] ss:$40 sm:$0xf] %vm1208, %v1207
  %s1211 = scalar_lea.vmem %s1, 357
  %1212 = vst.msk [vmem:[%s1211] ss:$40 sm:$0xf0] %vm1208, %v1207
  %s1213 = scalar_lea.vmem %s0, 16
  %v1214 = vld [vmem:[%s1213] sm:$0x3f]
  %1215 = vrot.lane.b32.xlu0 %v1214, 91
  %v1216 = vpop.permute.xlu0 %1215
  %vm1217 = vcmask 7168
  %s1218 = scalar_lea.vmem %s1, 677
  %1219 = vst.msk [vmem:[%s1218] ss:$40 sm:$0xf] %vm1217, %v1216
  %s1220 = scalar_lea.vmem %s1, 677
  %1221 = vst.msk [vmem:[%s1220] ss:$40 sm:$0x30] %vm1217, %v1216
  %v1222 = vld [vmem:[%s0] sm:$0xff]
  %1223 = vrot.lane.b32.xlu0 %v1222, 90
  %v1224 = vpop.permute.xlu0 %1223
  %vm1225 = vcmask 7168
  %s1226 = scalar_lea.vmem %s1, 38
  %1227 = vst.msk [vmem:[%s1226] ss:$40 sm:$0xf] %vm1225, %v1224
  %s1228 = scalar_lea.vmem %s1, 38
  %1229 = vst.msk [vmem:[%s1228] ss:$40 sm:$0xf0] %vm1225, %v1224
  %s1230 = scalar_lea.vmem %s0, 8
  %v1231 = vld [vmem:[%s1230] sm:$0xff]
  %1232 = vrot.lane.b32.xlu0 %v1231, 90
  %v1233 = vpop.permute.xlu0 %1232
  %vm1234 = vcmask 7168
  %s1235 = scalar_lea.vmem %s1, 358
  %1236 = vst.msk [vmem:[%s1235] ss:$40 sm:$0xf] %vm1234, %v1233
  %s1237 = scalar_lea.vmem %s1, 358
  %1238 = vst.msk [vmem:[%s1237] ss:$40 sm:$0xf0] %vm1234, %v1233
  %s1239 = scalar_lea.vmem %s0, 16
  %v1240 = vld [vmem:[%s1239] sm:$0x3f]
  %1241 = vrot.lane.b32.xlu0 %v1240, 90
  %v1242 = vpop.permute.xlu0 %1241
  %vm1243 = vcmask 7168
  %s1244 = scalar_lea.vmem %s1, 678
  %1245 = vst.msk [vmem:[%s1244] ss:$40 sm:$0xf] %vm1243, %v1242
  %s1246 = scalar_lea.vmem %s1, 678
  %1247 = vst.msk [vmem:[%s1246] ss:$40 sm:$0x30] %vm1243, %v1242
  %v1248 = vld [vmem:[%s0] sm:$0xff]
  %1249 = vrot.lane.b32.xlu0 %v1248, 89
  %v1250 = vpop.permute.xlu0 %1249
  %vm1251 = vcmask 7168
  %s1252 = scalar_lea.vmem %s1, 39
  %1253 = vst.msk [vmem:[%s1252] ss:$40 sm:$0xf] %vm1251, %v1250
  %s1254 = scalar_lea.vmem %s1, 39
  %1255 = vst.msk [vmem:[%s1254] ss:$40 sm:$0xf0] %vm1251, %v1250
  %s1256 = scalar_lea.vmem %s0, 8
  %v1257 = vld [vmem:[%s1256] sm:$0xff]
  %1258 = vrot.lane.b32.xlu0 %v1257, 89
  %v1259 = vpop.permute.xlu0 %1258
  %vm1260 = vcmask 7168
  %s1261 = scalar_lea.vmem %s1, 359
  %1262 = vst.msk [vmem:[%s1261] ss:$40 sm:$0xf] %vm1260, %v1259
  %s1263 = scalar_lea.vmem %s1, 359
  %1264 = vst.msk [vmem:[%s1263] ss:$40 sm:$0xf0] %vm1260, %v1259
  %s1265 = scalar_lea.vmem %s0, 16
  %v1266 = vld [vmem:[%s1265] sm:$0x3f]
  %1267 = vrot.lane.b32.xlu0 %v1266, 89
  %v1268 = vpop.permute.xlu0 %1267
  %vm1269 = vcmask 7168
  %s1270 = scalar_lea.vmem %s1, 679
  %1271 = vst.msk [vmem:[%s1270] ss:$40 sm:$0xf] %vm1269, %v1268
  %s1272 = scalar_lea.vmem %s1, 679
  %1273 = vst.msk [vmem:[%s1272] ss:$40 sm:$0x30] %vm1269, %v1268

// kernel: conv_block_forward.1
$region0: #{conv_block_forward.1}
  #allocation0 [shape = 'u32[]', space=smem, size = 0x4, offset = 0x4, fixed_abs, tag = 'smem constant byte address 0x4 - core index']
  #allocation1 [shape = 'u32[144,128]{1,0:T(1,128)}', space=vmem, size = 0x12000, scoped, tag = 'internal scratch']
  #allocation2 [shape = 'bf16[480,128]{1,0:T(16,128)(2,1)}', space=vmem, size = 0x1e000, scoped, tag = 'scratch operand']
  #allocation3 [shape = 'bf16[880,128]{1,0:T(16,128)(2,1)}', space=vmem, size = 0x37000, scoped, tag = 'scratch operand']
  %s0 = inlined_call_operand.vmem [shape: bf16[2,24,256], index: 0, kind: input, shape index: {}]
  %s1 = inlined_call_operand.vmem [shape: bf16[880,480], index: 1, kind: input, shape index: {}]
  %s2 = inlined_call_operand.vmem [shape: f32[880,1], index: 2, kind: input, shape index: {}]
  %s3 = inlined_call_operand.vmem [shape: bf16[40,880], index: 3, kind: input, shape index: {}]
  %s4 = inlined_call_operand.vmem [shape: f32[40,1], index: 4, kind: input, shape index: {}]
  %s5 = inlined_call_operand.vmem [shape: f32[128,2], index: 5, kind: input, shape index: {}]
  %s6 = inlined_call_operand.vmem [shape: f32[32,40], index: 6, kind: input, shape index: {}]
  %s7 = inlined_call_operand.vmem [shape: f32[32,1], index: 7, kind: input, shape index: {}]
  %s8 = inlined_call_operand.vmem [shape: f32[2,32,2], index: 8, kind: output, shape index: {}]
  %s9 = sld [smem:[#allocation0]]
  $region65: #{conv_block_forward.1} parent=0
    _
  %s11 = ssub.s32 1, %s9
  %s12 = scalar_select 0, %s11, %s9
  loop: start=0, step=1, limit=4
  $region2: #{conv_block_forward.1} parent=0 // loop_pre_header
    _
  $region3: #{conv_block_forward.1} parent=0 // loop_header
    %s14 = sphi 0, %s18
    %p15 = scmp.ge.s32.totalorder %s14, 4
    %s24 = sphi 0, %s26
    %s27 = sphi 0, %s24
    %s28 = sphi 0, %s27
    %s44 = sphi 0, %s28
    %s48 = sphi 0, %s48
    %s50 = sphi 0, %s48
    %s51 = sphi 0, %s50
    %s65 = sphi 0, %s51
    %s69 = sphi 0, %s69
    %s71 = sphi 0, %s69
    %s72 = sphi 0, %s71
    %s86 = sphi 0, %s72
    %s90 = sphi 0, %s90
    %s92 = sphi 0, %s90
    %s93 = sphi 0, %s92
    %s107 = sphi 0, %s93
    %s111 = sphi 0, %s111
    %s113 = sphi 0, %s111
    %s114 = sphi 0, %s113
    %s128 = sphi 0, %s114
    %s132 = sphi 0, %s132
    %s134 = sphi 0, %s132
    %s135 = sphi 0, %s134
    %s149 = sphi 0, %s135
    %s153 = sphi 0, %s153
    %s155 = sphi 0, %s153
    %s156 = sphi 0, %s155
    %s170 = sphi 0, %s156
    %s174 = sphi 0, %s174
    %s176 = sphi 0, %s174
    %s177 = sphi 0, %s176
    %s191 = sphi 0, %s177
    %s197 = sphi 0, %s199
    %s200 = sphi 0, %s197
    %s201 = sphi 0, %s200
    %s217 = sphi 0, %s201
  $region4: #{conv_block_forward.1} parent=0 // loop_header_branch
    %17 = sbr.rel (%p15) target = $region8
  $region5: #{conv_block_forward.1} parent=0 // loop_body
    %s19 = ssub.s32 %s14, 1
    %s20 = ssub.s32 %s14, 2
    %s21 = sadd.s32 %s14, 1
    %s22 = ssub.s32 %s14, %s21
    %p23 = scmp.eq.s32.totalorder %s22, 0
    %s25 = sadd.s32 %s24, 1
    %s26 = scalar_select %p23, %s24, %s25
    %p29 = pneg %p23
    %p30 = scmp.eq.s32.totalorder %s14, 1
    %p31 = por %p29, %p30
    %p32 = scmp.ne.s32.totalorder %s24, %s27
    %p33 = scmp.eq.s32.totalorder %s14, 0
    %p34 = por %p32, %p33
    %p35 = scmp.ne.s32.totalorder %s24, %s27
    %p36 = scmp.eq.s32.totalorder %s19, 1
    %p37 = por %p35, %p36
    %p38 = scmp.ne.s32.totalorder %s27, %s28
    %p39 = scmp.eq.s32.totalorder %s19, 0
    %p40 = por %p38, %p39
    %p41 = scmp.ne.s32.totalorder %s27, %s28
    %p42 = scmp.eq.s32.totalorder %s20, 1
    %p43 = por %p41, %p42
    %p45 = scmp.ne.s32.totalorder %s28, %s44
    %p46 = scmp.eq.s32.totalorder %s20, 0
    %p47 = por %p45, %p46
    %s49 = sadd.s32 %s48, 1
    %p52 = scmp.eq.s32.totalorder %s14, 1
    %p53 = scmp.ne.s32.totalorder %s48, %s50
    %p54 = scmp.eq.s32.totalorder %s14, 0
    %p55 = por %p53, %p54
    %p56 = scmp.ne.s32.totalorder %s48, %s50
    %p57 = scmp.eq.s32.totalorder %s19, 1
    %p58 = por %p56, %p57
    %p59 = scmp.ne.s32.totalorder %s50, %s51
    %p60 = scmp.eq.s32.totalorder %s19, 0
    %p61 = por %p59, %p60
    %p62 = scmp.ne.s32.totalorder %s50, %s51
    %p63 = scmp.eq.s32.totalorder %s20, 1
    %p64 = por %p62, %p63
    %p66 = scmp.ne.s32.totalorder %s51, %s65
    %p67 = scmp.eq.s32.totalorder %s20, 0
    %p68 = por %p66, %p67
    %s70 = sadd.s32 %s69, 1
    %p73 = scmp.eq.s32.totalorder %s14, 1
    %p74 = scmp.ne.s32.totalorder %s69, %s71
    %p75 = scmp.eq.s32.totalorder %s14, 0
    %p76 = por %p74, %p75
    %p77 = scmp.ne.s32.totalorder %s69, %s71
    %p78 = scmp.eq.s32.totalorder %s19, 1
    %p79 = por %p77, %p78
    %p80 = scmp.ne.s32.totalorder %s71, %s72
    %p81 = scmp.eq.s32.totalorder %s19, 0
    %p82 = por %p80, %p81
    %p83 = scmp.ne.s32.totalorder %s71, %s72
    %p84 = scmp.eq.s32.totalorder %s20, 1
    %p85 = por %p83, %p84
    %p87 = scmp.ne.s32.totalorder %s72, %s86
    %p88 = scmp.eq.s32.totalorder %s20, 0
    %p89 = por %p87, %p88
    %s91 = sadd.s32 %s90, 1
    %p94 = scmp.eq.s32.totalorder %s14, 1
    %p95 = scmp.ne.s32.totalorder %s90, %s92
    %p96 = scmp.eq.s32.totalorder %s14, 0
    %p97 = por %p95, %p96
    %p98 = scmp.ne.s32.totalorder %s90, %s92
    %p99 = scmp.eq.s32.totalorder %s19, 1
    %p100 = por %p98, %p99
    %p101 = scmp.ne.s32.totalorder %s92, %s93
    %p102 = scmp.eq.s32.totalorder %s19, 0
    %p103 = por %p101, %p102
    %p104 = scmp.ne.s32.totalorder %s92, %s93
    %p105 = scmp.eq.s32.totalorder %s20, 1
    %p106 = por %p104, %p105
    %p108 = scmp.ne.s32.totalorder %s93, %s107
    %p109 = scmp.eq.s32.totalorder %s20, 0
    %p110 = por %p108, %p109
    %s112 = sadd.s32 %s111, 1
    %p115 = scmp.eq.s32.totalorder %s14, 1
    %p116 = scmp.ne.s32.totalorder %s111, %s113
    %p117 = scmp.eq.s32.totalorder %s14, 0
    %p118 = por %p116, %p117
    %p119 = scmp.ne.s32.totalorder %s111, %s113
    %p120 = scmp.eq.s32.totalorder %s19, 1
    %p121 = por %p119, %p120
    %p122 = scmp.ne.s32.totalorder %s113, %s114
    %p123 = scmp.eq.s32.totalorder %s19, 0
    %p124 = por %p122, %p123
    %p125 = scmp.ne.s32.totalorder %s113, %s114
    %p126 = scmp.eq.s32.totalorder %s20, 1
    %p127 = por %p125, %p126
    %p129 = scmp.ne.s32.totalorder %s114, %s128
    %p130 = scmp.eq.s32.totalorder %s20, 0
    %p131 = por %p129, %p130
    %s133 = sadd.s32 %s132, 1
    %p136 = scmp.eq.s32.totalorder %s14, 1
    %p137 = scmp.ne.s32.totalorder %s132, %s134
    %p138 = scmp.eq.s32.totalorder %s14, 0
    %p139 = por %p137, %p138
    %p140 = scmp.ne.s32.totalorder %s132, %s134
    %p141 = scmp.eq.s32.totalorder %s19, 1
    %p142 = por %p140, %p141
    %p143 = scmp.ne.s32.totalorder %s134, %s135
    %p144 = scmp.eq.s32.totalorder %s19, 0
    %p145 = por %p143, %p144
    %p146 = scmp.ne.s32.totalorder %s134, %s135
    %p147 = scmp.eq.s32.totalorder %s20, 1
    %p148 = por %p146, %p147
    %p150 = scmp.ne.s32.totalorder %s135, %s149
    %p151 = scmp.eq.s32.totalorder %s20, 0
    %p152 = por %p150, %p151
    %s154 = sadd.s32 %s153, 1
    %p157 = scmp.eq.s32.totalorder %s14, 1
    %p158 = scmp.ne.s32.totalorder %s153, %s155
    %p159 = scmp.eq.s32.totalorder %s14, 0
    %p160 = por %p158, %p159
    %p161 = scmp.ne.s32.totalorder %s153, %s155
    %p162 = scmp.eq.s32.totalorder %s19, 1
    %p163 = por %p161, %p162
    %p164 = scmp.ne.s32.totalorder %s155, %s156
    %p165 = scmp.eq.s32.totalorder %s19, 0
    %p166 = por %p164, %p165
    %p167 = scmp.ne.s32.totalorder %s155, %s156
    %p168 = scmp.eq.s32.totalorder %s20, 1
    %p169 = por %p167, %p168
    %p171 = scmp.ne.s32.totalorder %s156, %s170
    %p172 = scmp.eq.s32.totalorder %s20, 0
    %p173 = por %p171, %p172
    %s175 = sadd.s32 %s174, 1
    %p178 = scmp.eq.s32.totalorder %s14, 1
    %p179 = scmp.ne.s32.totalorder %s174, %s176
    %p180 = scmp.eq.s32.totalorder %s14, 0
    %p181 = por %p179, %p180
    %p182 = scmp.ne.s32.totalorder %s174, %s176
    %p183 = scmp.eq.s32.totalorder %s19, 1
    %p184 = por %p182, %p183
    %p185 = scmp.ne.s32.totalorder %s176, %s177
    %p186 = scmp.eq.s32.totalorder %s19, 0
    %p187 = por %p185, %p186
    %p188 = scmp.ne.s32.totalorder %s176, %s177
    %p189 = scmp.eq.s32.totalorder %s20, 1
    %p190 = por %p188, %p189
    %p192 = scmp.ne.s32.totalorder %s177, %s191
    %p193 = scmp.eq.s32.totalorder %s20, 0
    %p194 = por %p192, %p193
    %s195 = ssub.s32 %s14, %s21
    %p196 = scmp.eq.s32.totalorder %s195, 0
    %s198 = sadd.s32 %s197, 1
    %s199 = scalar_select %p196, %s197, %s198
    %p202 = pneg %p196
    %p203 = scmp.eq.s32.totalorder %s14, 1
    %p204 = por %p202, %p203
    %p205 = scmp.ne.s32.totalorder %s197, %s200
    %p206 = scmp.eq.s32.totalorder %s14, 0
    %p207 = por %p205, %p206
    %p208 = scmp.ne.s32.totalorder %s197, %s200
    %p209 = scmp.eq.s32.totalorder %s19, 1
    %p210 = por %p208, %p209
    %p211 = scmp.ne.s32.totalorder %s200, %s201
    %p212 = scmp.eq.s32.totalorder %s19, 0
    %p213 = por %p211, %p212
    %p214 = scmp.ne.s32.totalorder %s200, %s201
    %p215 = scmp.eq.s32.totalorder %s20, 1
    %p216 = por %p214, %p215
    %p218 = scmp.ne.s32.totalorder %s201, %s217
    %p219 = scmp.eq.s32.totalorder %s20, 0
    %p220 = por %p218, %p219
    %p221 = scmp.le.s32.totalorder 1, %s14
    %p222 = scmp.lt.s32.totalorder %s14, 3
    %p223 = pnand %p221, %p222
    %p224 = pneg %p223
    // Predicated region
    $region9: #{conv_block_forward.1} parent=5 // pred_check
      _
    $region10: #{conv_block_forward.1} parent=5 // pred_check_branch
      %226 = sbr.rel (%p223) target = $region12
    $region11: #{conv_block_forward.1} parent=5 // pred_region
      %s227 = ssub.s32 %s14, 1
      // Predicated region
      $region13: #{conv_block_forward.1} parent=11 // pred_check
        %p228 = pneg %p61
      $region14: #{conv_block_forward.1} parent=11 // pred_check_branch
        %230 = sbr.rel (%p228) target = $region16
      $region15: #{conv_block_forward.1} parent=11 // pred_region
        _
      $region16: #{conv_block_forward.1} parent=11 // pred_fallthru
        _
      // Predicated region
      $region17: #{conv_block_forward.1} parent=11 // pred_check
        %p231 = pneg %p82
      $region18: #{conv_block_forward.1} parent=11 // pred_check_branch
        %233 = sbr.rel (%p231) target = $region20
      $region19: #{conv_block_forward.1} parent=11 // pred_region
        _
      $region20: #{conv_block_forward.1} parent=11 // pred_fallthru
        _
      // Predicated region
      $region21: #{conv_block_forward.1} parent=11 // pred_check
        %p234 = pneg %p103
      $region22: #{conv_block_forward.1} parent=11 // pred_check_branch
        %236 = sbr.rel (%p234) target = $region24
      $region23: #{conv_block_forward.1} parent=11 // pred_region
        _
      $region24: #{conv_block_forward.1} parent=11 // pred_fallthru
        _
      // Predicated region
      $region25: #{conv_block_forward.1} parent=11 // pred_check
        %p237 = pneg %p124
      $region26: #{conv_block_forward.1} parent=11 // pred_check_branch
        %239 = sbr.rel (%p237) target = $region28
      $region27: #{conv_block_forward.1} parent=11 // pred_region
        _
      $region28: #{conv_block_forward.1} parent=11 // pred_fallthru
        _
      // Predicated region
      $region29: #{conv_block_forward.1} parent=11 // pred_check
        %p240 = pneg %p145
      $region30: #{conv_block_forward.1} parent=11 // pred_check_branch
        %242 = sbr.rel (%p240) target = $region32
      $region31: #{conv_block_forward.1} parent=11 // pred_region
        _
      $region32: #{conv_block_forward.1} parent=11 // pred_fallthru
        _
      // Predicated region
      $region33: #{conv_block_forward.1} parent=11 // pred_check
        %p243 = pneg %p166
      $region34: #{conv_block_forward.1} parent=11 // pred_check_branch
        %245 = sbr.rel (%p243) target = $region36
      $region35: #{conv_block_forward.1} parent=11 // pred_region
        _
      $region36: #{conv_block_forward.1} parent=11 // pred_fallthru
        _
      // Predicated region
      $region37: #{conv_block_forward.1} parent=11 // pred_check
        %p246 = pneg %p187
      $region38: #{conv_block_forward.1} parent=11 // pred_check_branch
        %248 = sbr.rel (%p246) target = $region40
      $region39: #{conv_block_forward.1} parent=11 // pred_region
        _
      $region40: #{conv_block_forward.1} parent=11 // pred_fallthru
        _
    $region12: #{conv_block_forward.1} parent=5 // pred_fallthru
      _
    %p249 = scmp.lt.s32.totalorder %s14, 2
    // Predicated region
    $region41: #{conv_block_forward.1} parent=5 // pred_check
      %p250 = pneg %p249
    $region42: #{conv_block_forward.1} parent=5 // pred_check_branch
      %252 = sbr.rel (%p250) target = $region44
    $region43: #{conv_block_forward.1} parent=5 // pred_region
      // Predicated region
      $region45: #{conv_block_forward.1} parent=43 // pred_check
        %p253 = pneg %p34
      $region46: #{conv_block_forward.1} parent=43 // pred_check_branch
        %255 = sbr.rel (%p253) target = $region48
      $region47: #{conv_block_forward.1} parent=43 // pred_region
        %p256 = scmp.lt.s32.totalorder %s14, 1
        %s257 = scalar_select %p256, %s14, 1
        %s258 = smul.addr %s257, 6
        %s259 = smul.addr %s258, 4
        %s260 = scalar_lea.vmem %s0, %s259
      $region48: #{conv_block_forward.1} parent=43 // pred_fallthru
        _
    $region44: #{conv_block_forward.1} parent=5 // pred_fallthru
      _
    %p261 = scmp.le.s32.totalorder 1, %s14
    %p262 = scmp.lt.s32.totalorder %s14, 3
    %p263 = pnand %p261, %p262
    %p264 = pneg %p263
    // Predicated region
    $region49: #{conv_block_forward.1} parent=5 // pred_check
      _
    $region50: #{conv_block_forward.1} parent=5 // pred_check_branch
      %266 = sbr.rel (%p263) target = $region52
    $region51: #{conv_block_forward.1} parent=5 // pred_region
      %s267 = ssub.s32 %s14, 1
      %p268 = scmp.lt.s32.totalorder %s19, 1
      %s269 = scalar_select %p268, %s19, 1
      %s270 = smul.addr %s269, 6
      %s271 = smul.addr %s270, 4
      %s272 = scalar_lea.vmem %s0, %s271
      %p273 = pneg %p40
      %p274 = pneg %p37
      %p275 = pneg %p61
      %p276 = pneg %p58
      %p277 = pneg %p82
      %p278 = pneg %p79
      %p279 = pneg %p103
      %p280 = pneg %p100
      %p281 = pneg %p124
      %p282 = pneg %p121
      %p283 = pneg %p145
      %p284 = pneg %p142
      %p285 = pneg %p166
      %p286 = pneg %p163
      %p287 = pneg %p187
      %p288 = pneg %p184
      %p289 = pneg %p213
      %p290 = pneg %p210
      %p291 = scmp.lt.s32.totalorder %s19, 1
      %s292 = scalar_select %p291, %s19, 1
      %s293 = smul.addr %s292, 4
      %s294 = smul.addr %s293, 8
      %s295 = scalar_lea.vmem %s8, %s294
      %p296 = scmp.lt.s32.totalorder %s19, 1
      %s297 = scalar_select %p296, %s19, 1
      %s298 = smul.addr %s297, 6
      %s299 = smul.addr %s298, 4
      %s300 = scalar_lea.vmem %s0, %s299
      %p301 = scmp.lt.s32.totalorder %s19, 1
      %s302 = scalar_select %p301, %s19, 1
      %s303 = smul.addr %s302, 4
      %s304 = smul.addr %s303, 8
      %s305 = scalar_lea.vmem %s8, %s304
      %v307 = vld [vmem:[%s300] sm:$0xff]
      %v308 = vld [vmem:[%s300 + $0x8] sm:$0xff]
      %v309 = vld [vmem:[%s300 + $0x10] sm:$0xff]
      %v313 = vunpack.c.l.b16 %v307
      %v314 = vunpack.c.l.b16 %v308
      %v315 = vunpack.c.l.b16 %v309
      %v316 = vpack.c.b16 %v314, %v313
      %v317 = vpack.c.b16 %v315, %v315
      %320 = vst [vmem:[#allocation2] sm:$0xff] %v316
      %321 = vst [vmem:[#allocation2 + $0x8] sm:$0xf] %v317
      %v322 = vunpack.c.h.b16 %v307
      %v323 = vunpack.c.h.b16 %v308
      %v324 = vunpack.c.h.b16 %v309
      %v325 = vpack.c.b16 %v313, %v313
      %v326 = vpack.c.b16 %v322, %v322
      %v327 = vpack.c.b16 %v315, %v314
      %v328 = vpack.c.b16 %v324, %v323
      %329 = vrot.lane.b32.xlu0 %v325, 127
      %v330 = vpop.permute.xlu0 %329
      %331 = vrot.lane.b32.xlu0 %v326, 127
      %v332 = vpop.permute.xlu0 %331
      %333 = vrot.lane.b32.xlu0 %v327, 127
      %v334 = vpop.permute.xlu0 %333
      %335 = vrot.lane.b32.xlu0 %v328, 127
      %v336 = vpop.permute.xlu0 %335
      %vm337 = vcmask 1039360
      %v338 = vsel %vm337, %v330, %v332
      %v339 = vsel %vm337, %v334, %v336
      %342 = vst [vmem:[#allocation2 + $0x8] sm:$0xf0] %v338
      %343 = vst [vmem:[#allocation2 + $0x10] sm:$0xff] %v339
      %v344 = vpack.c.b16 %v323, %v322
      %v345 = vpack.c.b16 %v324, %v324
      %346 = vrot.lane.b32.xlu0 %v316, 126
      %v347 = vpop.permute.xlu0 %346
      %348 = vrot.lane.b32.xlu0 %v344, 126
      %v349 = vpop.permute.xlu0 %348
      %350 = vrot.lane.b32.xlu0 %v317, 126
      %v351 = vpop.permute.xlu0 %350
      %352 = vrot.lane.b32.xlu0 %v345, 126
      %v353 = vpop.permute.xlu0 %352
      %vm354 = vcmask 1031168
      %v355 = vsel %vm354, %v347, %v349
      %v356 = vsel %vm354, %v351, %v353
      %359 = vst [vmem:[#allocation2 + $0x18] sm:$0xff] %v355
      %360 = vst [vmem:[#allocation2 + $0x20] sm:$0xf] %v356
      %361 = vrot.lane.b32.xlu0 %v325, 125
      %v362 = vpop.permute.xlu0 %361
      %363 = vrot.lane.b32.xlu0 %v326, 125
      %v364 = vpop.permute.xlu0 %363
      %365 = vrot.lane.b32.xlu0 %v327, 125
      %v366 = vpop.permute.xlu0 %365
      %367 = vrot.lane.b32.xlu0 %v328, 125
      %v368 = vpop.permute.xlu0 %367
      %vm369 = vcmask 1022976
      %v370 = vsel %vm369, %v362, %v364
      %v371 = vsel %vm369, %v366, %v368
      %374 = vst [vmem:[#allocation2 + $0x20] sm:$0xf0] %v370
      %375 = vst [vmem:[#allocation2 + $0x28] sm:$0xff] %v371
      %376 = vrot.lane.b32.xlu0 %v316, 124
      %v377 = vpop.permute.xlu0 %376
      %378 = vrot.lane.b32.xlu0 %v344, 124
      %v379 = vpop.permute.xlu0 %378
      %380 = vrot.lane.b32.xlu0 %v317, 124
      %v381 = vpop.permute.xlu0 %380
      %382 = vrot.lane.b32.xlu0 %v345, 124
      %v383 = vpop.permute.xlu0 %382
      %vm384 = vcmask 1014784
      %v385 = vsel %vm384, %v377, %v379
      %v386 = vsel %vm384, %v381, %v383
      %389 = vst [vmem:[#allocation2 + $0x30] sm:$0xff] %v385
      %390 = vst [vmem:[#allocation2 + $0x38] sm:$0xf] %v386
      %391 = vrot.lane.b32.xlu0 %v325, 123
      %v392 = vpop.permute.xlu0 %391
      %393 = vrot.lane.b32.xlu0 %v326, 123
      %v394 = vpop.permute.xlu0 %393
      %395 = vrot.lane.b32.xlu0 %v327, 123
      %v396 = vpop.permute.xlu0 %395
      %397 = vrot.lane.b32.xlu0 %v328, 123
      %v398 = vpop.permute.xlu0 %397
      %vm399 = vcmask 1006592
      %v400 = vsel %vm399, %v392, %v394
      %v401 = vsel %vm399, %v396, %v398
      %404 = vst [vmem:[#allocation2 + $0x38] sm:$0xf0] %v400
      %405 = vst [vmem:[#allocation2 + $0x40] sm:$0xff] %v401
      %406 = vrot.lane.b32.xlu0 %v316, 122
      %v407 = vpop.permute.xlu0 %406
      %408 = vrot.lane.b32.xlu0 %v344, 122
      %v409 = vpop.permute.xlu0 %408
      %410 = vrot.lane.b32.xlu0 %v317, 122
      %v411 = vpop.permute.xlu0 %410
      %412 = vrot.lane.b32.xlu0 %v345, 122
      %v413 = vpop.permute.xlu0 %412
      %vm414 = vcmask 998400
      %v415 = vsel %vm414, %v407, %v409
      %v416 = vsel %vm414, %v411, %v413
      %419 = vst [vmem:[#allocation2 + $0x48] sm:$0xff] %v415
      %420 = vst [vmem:[#allocation2 + $0x50] sm:$0xf] %v416
      %421 = vrot.lane.b32.xlu0 %v325, 121
      %v422 = vpop.permute.xlu0 %421
      %423 = vrot.lane.b32.xlu0 %v326, 121
      %v424 = vpop.permute.xlu0 %423
      %425 = vrot.lane.b32.xlu0 %v327, 121
      %v426 = vpop.permute.xlu0 %425
      %427 = vrot.lane.b32.xlu0 %v328, 121
      %v428 = vpop.permute.xlu0 %427
      %vm429 = vcmask 990208
      %v430 = vsel %vm429, %v422, %v424
      %v431 = vsel %vm429, %v426, %v428
      %434 = vst [vmem:[#allocation2 + $0x50] sm:$0xf0] %v430
      %435 = vst [vmem:[#allocation2 + $0x58] sm:$0xff] %v431
      %436 = vrot.lane.b32.xlu0 %v316, 120
      %v437 = vpop.permute.xlu0 %436
      %438 = vrot.lane.b32.xlu0 %v344, 120
      %v439 = vpop.permute.xlu0 %438
      %440 = vrot.lane.b32.xlu0 %v317, 120
      %v441 = vpop.permute.xlu0 %440
      %442 = vrot.lane.b32.xlu0 %v345, 120
      %v443 = vpop.permute.xlu0 %442
      %vm444 = vcmask 982016
      %v445 = vsel %vm444, %v437, %v439
      %v446 = vsel %vm444, %v441, %v443
      %449 = vst [vmem:[#allocation2 + $0x60] sm:$0xff] %v445
      %450 = vst [vmem:[#allocation2 + $0x68] sm:$0xf] %v446
      %451 = vrot.lane.b32.xlu0 %v325, 119
      %v452 = vpop.permute.xlu0 %451
      %453 = vrot.lane.b32.xlu0 %v326, 119
      %v454 = vpop.permute.xlu0 %453
      %455 = vrot.lane.b32.xlu0 %v327, 119
      %v456 = vpop.permute.xlu0 %455
      %457 = vrot.lane.b32.xlu0 %v328, 119
      %v458 = vpop.permute.xlu0 %457
      %vm459 = vcmask 973824
      %v460 = vsel %vm459, %v452, %v454
      %v461 = vsel %vm459, %v456, %v458
      %464 = vst [vmem:[#allocation2 + $0x68] sm:$0xf0] %v460
      %465 = vst [vmem:[#allocation2 + $0x70] sm:$0xff] %v461
      %466 = vrot.lane.b32.xlu0 %v316, 118
      %v467 = vpop.permute.xlu0 %466
      %468 = vrot.lane.b32.xlu0 %v344, 118
      %v469 = vpop.permute.xlu0 %468
      %470 = vrot.lane.b32.xlu0 %v317, 118
      %v471 = vpop.permute.xlu0 %470
      %472 = vrot.lane.b32.xlu0 %v345, 118
      %v473 = vpop.permute.xlu0 %472
      %vm474 = vcmask 965632
      %v475 = vsel %vm474, %v467, %v469
      %v476 = vsel %vm474, %v471, %v473
      %479 = vst [vmem:[#allocation2 + $0x78] sm:$0xff] %v475
      %480 = vst [vmem:[#allocation2 + $0x80] sm:$0xf] %v476
      %481 = vrot.lane.b32.xlu0 %v325, 117
      %v482 = vpop.permute.xlu0 %481
      %483 = vrot.lane.b32.xlu0 %v326, 117
      %v484 = vpop.permute.xlu0 %483
      %485 = vrot.lane.b32.xlu0 %v327, 117
      %v486 = vpop.permute.xlu0 %485
      %487 = vrot.lane.b32.xlu0 %v328, 117
      %v488 = vpop.permute.xlu0 %487
      %vm489 = vcmask 957440
      %v490 = vsel %vm489, %v482, %v484
      %v491 = vsel %vm489, %v486, %v488
      %494 = vst [vmem:[#allocation2 + $0x80] sm:$0xf0] %v490
      %495 = vst [vmem:[#allocation2 + $0x88] sm:$0xff] %v491
      %496 = vrot.lane.b32.xlu0 %v316, 116
      %v497 = vpop.permute.xlu0 %496
      %498 = vrot.lane.b32.xlu0 %v344, 116
      %v499 = vpop.permute.xlu0 %498
      %500 = vrot.lane.b32.xlu0 %v317, 116
      %v501 = vpop.permute.xlu0 %500
      %502 = vrot.lane.b32.xlu0 %v345, 116
      %v503 = vpop.permute.xlu0 %502
      %vm504 = vcmask 949248
      %v505 = vsel %vm504, %v497, %v499
      %v506 = vsel %vm504, %v501, %v503
      %509 = vst [vmem:[#allocation2 + $0x90] sm:$0xff] %v505
      %510 = vst [vmem:[#allocation2 + $0x98] sm:$0xf] %v506
      %511 = vrot.lane.b32.xlu0 %v325, 115
      %v512 = vpop.permute.xlu0 %511
      %513 = vrot.lane.b32.xlu0 %v326, 115
      %v514 = vpop.permute.xlu0 %513
      %515 = vrot.lane.b32.xlu0 %v327, 115
      %v516 = vpop.permute.xlu0 %515
      %517 = vrot.lane.b32.xlu0 %v328, 115
      %v518 = vpop.permute.xlu0 %517
      %vm519 = vcmask 941056
      %v520 = vsel %vm519, %v512, %v514
      %v521 = vsel %vm519, %v516, %v518
      %524 = vst [vmem:[#allocation2 + $0x98] sm:$0xf0] %v520
      %525 = vst [vmem:[#allocation2 + $0xa0] sm:$0xff] %v521
      %526 = vrot.lane.b32.xlu0 %v316, 114
      %v527 = vpop.permute.xlu0 %526
      %528 = vrot.lane.b32.xlu0 %v344, 114
      %v529 = vpop.permute.xlu0 %528
      %530 = vrot.lane.b32.xlu0 %v317, 114
      %v531 = vpop.permute.xlu0 %530
      %532 = vrot.lane.b32.xlu0 %v345, 114
      %v533 = vpop.permute.xlu0 %532
      %vm534 = vcmask 932864
      %v535 = vsel %vm534, %v527, %v529
      %v536 = vsel %vm534, %v531, %v533
      %539 = vst [vmem:[#allocation2 + $0xa8] sm:$0xff] %v535
      %540 = vst [vmem:[#allocation2 + $0xb0] sm:$0xf] %v536
      %541 = vrot.lane.b32.xlu0 %v325, 113
      %v542 = vpop.permute.xlu0 %541
      %543 = vrot.lane.b32.xlu0 %v326, 113
      %v544 = vpop.permute.xlu0 %543
      %545 = vrot.lane.b32.xlu0 %v327, 113
      %v546 = vpop.permute.xlu0 %545
      %547 = vrot.lane.b32.xlu0 %v328, 113
      %v548 = vpop.permute.xlu0 %547
      %vm549 = vcmask 924672
      %v550 = vsel %vm549, %v542, %v544
      %v551 = vsel %vm549, %v546, %v548
      %554 = vst [vmem:[#allocation2 + $0xb0] sm:$0xf0] %v550
      %555 = vst [vmem:[#allocation2 + $0xb8] sm:$0xff] %v551
      %556 = vrot.lane.b32.xlu0 %v316, 112
      %v557 = vpop.permute.xlu0 %556
      %558 = vrot.lane.b32.xlu0 %v344, 112
      %v559 = vpop.permute.xlu0 %558
      %560 = vrot.lane.b32.xlu0 %v317, 112
      %v561 = vpop.permute.xlu0 %560
      %562 = vrot.lane.b32.xlu0 %v345, 112
      %v563 = vpop.permute.xlu0 %562
      %vm564 = vcmask 916480
      %v565 = vsel %vm564, %v557, %v559
      %v566 = vsel %vm564, %v561, %v563
      %569 = vst [vmem:[#allocation2 + $0xc0] sm:$0xff] %v565
      %570 = vst [vmem:[#allocation2 + $0xc8] sm:$0xf] %v566
      %571 = vrot.lane.b32.xlu0 %v325, 111
      %v572 = vpop.permute.xlu0 %571
      %573 = vrot.lane.b32.xlu0 %v326, 111
      %v574 = vpop.permute.xlu0 %573
      %575 = vrot.lane.b32.xlu0 %v327, 111
      %v576 = vpop.permute.xlu0 %575
      %577 = vrot.lane.b32.xlu0 %v328, 111
      %v578 = vpop.permute.xlu0 %577
      %vm579 = vcmask 908288
      %v580 = vsel %vm579, %v572, %v574
      %v581 = vsel %vm579, %v576, %v578
      %584 = vst [vmem:[#allocation2 + $0xc8] sm:$0xf0] %v580
      %585 = vst [vmem:[#allocation2 + $0xd0] sm:$0xff] %v581
      %586 = vrot.lane.b32.xlu0 %v316, 110
      %v587 = vpop.permute.xlu0 %586
      %588 = vrot.lane.b32.xlu0 %v344, 110
      %v589 = vpop.permute.xlu0 %588
      %590 = vrot.lane.b32.xlu0 %v317, 110
      %v591 = vpop.permute.xlu0 %590
      %592 = vrot.lane.b32.xlu0 %v345, 110
      %v593 = vpop.permute.xlu0 %592
      %vm594 = vcmask 900096
      %v595 = vsel %vm594, %v587, %v589
      %v596 = vsel %vm594, %v591, %v593
      %599 = vst [vmem:[#allocation2 + $0xd8] sm:$0xff] %v595
      %600 = vst [vmem:[#allocation2 + $0xe0] sm:$0xf] %v596
      %601 = vrot.lane.b32.xlu0 %v325, 109
      %v602 = vpop.permute.xlu0 %601
      %603 = vrot.lane.b32.xlu0 %v326, 109
      %v604 = vpop.permute.xlu0 %603
      %605 = vrot.lane.b32.xlu0 %v327, 109
      %v606 = vpop.permute.xlu0 %605
      %607 = vrot.lane.b32.xlu0 %v328, 109
      %v608 = vpop.permute.xlu0 %607
      %vm609 = vcmask 891904
      %v610 = vsel %vm609, %v602, %v604
      %v611 = vsel %vm609, %v606, %v608
      %614 = vst [vmem:[#allocation2 + $0xe0] sm:$0xf0] %v610
      %615 = vst [vmem:[#allocation2 + $0xe8] sm:$0xff] %v611
      %v616 = vld [vmem:[%s1] sm:$0xff]
      %v617 = vld [vmem:[%s1 + $0x8] sm:$0xff]
      %v618 = vld [vmem:[%s1 + $0x10] sm:$0xff]
      %v619 = vld [vmem:[%s1 + $0x18] sm:$0xff]
      %v620 = vld [vmem:[%s1 + $0x20] sm:$0xff]
      %v621 = vld [vmem:[%s1 + $0x28] sm:$0xff]
      %v622 = vld [vmem:[%s1 + $0x30] sm:$0xff]
      %v623 = vld [vmem:[%s1 + $0x38] sm:$0xff]
      %v624 = vld [vmem:[%s1 + $0x40] sm:$0xff]
      %v625 = vld [vmem:[%s1 + $0x48] sm:$0xff]
      %v626 = vld [vmem:[%s1 + $0x50] sm:$0xff]
      %v627 = vld [vmem:[%s1 + $0x58] sm:$0xff]
      %v628 = vld [vmem:[%s1 + $0x60] sm:$0xff]
      %v629 = vld [vmem:[%s1 + $0x68] sm:$0xff]
      %v630 = vld [vmem:[%s1 + $0x70] sm:$0xff]
      %v631 = vld [vmem:[%s1 + $0x78] sm:$0xff]
      %v632 = vld [vmem:[%s1 + $0x80] sm:$0xff]
      %v633 = vld [vmem:[%s1 + $0x88] sm:$0xff]
      %v634 = vld [vmem:[%s1 + $0x90] sm:$0xff]
      %v635 = vld [vmem:[%s1 + $0x98] sm:$0xff]
      %v636 = vld [vmem:[%s1 + $0xa0] sm:$0xff]
      %v637 = vld [vmem:[%s1 + $0xa8] sm:$0xff]
      %v638 = vld [vmem:[%s1 + $0xb0] sm:$0xff]
      %v639 = vld [vmem:[%s1 + $0xb8] sm:$0xff]
      %v640 = vld [vmem:[%s1 + $0xc0] sm:$0xff]
      %v641 = vld [vmem:[%s1 + $0xc8] sm:$0xff]
      %v642 = vld [vmem:[%s1 + $0xd0] sm:$0xff]
      %v643 = vld [vmem:[%s1 + $0xd8] sm:$0xff]
      %v644 = vld [vmem:[%s1 + $0xe0] sm:$0xff]
      %v645 = vld [vmem:[%s1 + $0xe8] sm:$0xff]
      %v646 = vld [vmem:[%s1 + $0xf0] sm:$0xff]
      %v647 = vld [vmem:[%s1 + $0xf8] sm:$0xff]
      %v648 = vld [vmem:[%s1 + $0x100] sm:$0xff]
      %v649 = vld [vmem:[%s1 + $0x108] sm:$0xff]
      %v650 = vld [vmem:[%s1 + $0x110] sm:$0xff]
      %v651 = vld [vmem:[%s1 + $0x118] sm:$0xff]
      %v652 = vld [vmem:[%s1 + $0x120] sm:$0xff]
      %v653 = vld [vmem:[%s1 + $0x128] sm:$0xff]
      %v654 = vld [vmem:[%s1 + $0x130] sm:$0xff]
      %v655 = vld [vmem:[%s1 + $0x138] sm:$0xff]
      %v656 = vld [vmem:[%s1 + $0x140] sm:$0xff]
      %v657 = vld [vmem:[%s1 + $0x148] sm:$0xff]
      %v658 = vld [vmem:[%s1 + $0x150] sm:$0xff]
      %v659 = vld [vmem:[%s1 + $0x158] sm:$0xff]
      %v660 = vld [vmem:[#allocation2] sm:$0xff]
      %v661 = vld [vmem:[#allocation2 + $0x8] sm:$0xff]
      %v662 = vld [vmem:[#allocation2 + $0x10] sm:$0xff]
      %v663 = vld [vmem:[#allocation2 + $0x18] sm:$0xff]
      %v664 = vld [vmem:[#allocation2 + $0x20] sm:$0xff]
      %v665 = vld [vmem:[#allocation2 + $0x28] sm:$0xff]
      %v666 = vld [vmem:[#allocation2 + $0x30] sm:$0xff]
      %v667 = vld [vmem:[#allocation2 + $0x38] sm:$0xff]
      %v668 = vld [vmem:[#allocation2 + $0x40] sm:$0xff]
      %v669 = vld [vmem:[#allocation2 + $0x48] sm:$0xff]
      %v670 = vld [vmem:[#allocation2 + $0x50] sm:$0xff]
      %v671 = vld [vmem:[#allocation2 + $0x58] sm:$0xff]
      %v672 = vld [vmem:[#allocation2 + $0x60] sm:$0xff]
      %v673 = vld [vmem:[#allocation2 + $0x68] sm:$0xff]
      %v674 = vld [vmem:[#allocation2 + $0x70] sm:$0xff]
      %v675 = vld [vmem:[#allocation2 + $0x78] sm:$0xff]
      %v676 = vld [vmem:[#allocation2 + $0x80] sm:$0xff]
      %v677 = vld [vmem:[#allocation2 + $0x88] sm:$0xff]
      %v678 = vld [vmem:[#allocation2 + $0x90] sm:$0xff]
      %v679 = vld [vmem:[#allocation2 + $0x98] sm:$0xff]
      %v680 = vld [vmem:[#allocation2 + $0xa0] sm:$0xff]
      %v681 = vld [vmem:[#allocation2 + $0xa8] sm:$0xff]
      %v682 = vld [vmem:[#allocation2 + $0xb0] sm:$0xff]
      %v683 = vld [vmem:[#allocation2 + $0xb8] sm:$0xff]
      %v684 = vld [vmem:[#allocation2 + $0xc0] sm:$0xff]
      %v685 = vld [vmem:[#allocation2 + $0xc8] sm:$0xff]
      %v686 = vld [vmem:[#allocation2 + $0xd0] sm:$0xff]
      %v687 = vld [vmem:[#allocation2 + $0xd8] sm:$0xff]
      %v688 = vld [vmem:[#allocation2 + $0xe0] sm:$0xff]
      %v689 = vld [vmem:[#allocation2 + $0xe8] sm:$0xff]
      %v690 = vld [vmem:[%s2] sm:$0xff]
      %v691 = vld [vmem:[%s2 + $0x8] sm:$0xff]
      %v692 = vld [vmem:[%s2 + $0x10] sm:$0xff]
      %v693 = vld [vmem:[%s2 + $0x18] sm:$0xff]
      %v694 = vld [vmem:[%s2 + $0x20] sm:$0xff]
      %v695 = vld [vmem:[%s2 + $0x28] sm:$0xff]
      %v696 = vld [vmem:[%s2 + $0x30] sm:$0xff]
      %v697 = vld [vmem:[%s2 + $0x38] sm:$0xff]
      %v698 = vld [vmem:[%s2 + $0x40] sm:$0xff]
      %v699 = vld [vmem:[%s2 + $0x48] sm:$0xff]
      %v700 = vld [vmem:[%s2 + $0x50] sm:$0xff]
      %v701 = vld [vmem:[%s2 + $0x58] sm:$0xff]
      %v702 = vld [vmem:[%s2 + $0x60] sm:$0xff]
      %v703 = vld [vmem:[%s2 + $0x68] sm:$0xff]
      %v704 = vld [vmem:[%s2 + $0x70] sm:$0xff]
      %v705 = vld [vmem:[%s2 + $0x78] sm:$0xff]
      %v706 = vld [vmem:[%s2 + $0x80] sm:$0xff]
      %v707 = vld [vmem:[%s2 + $0x88] sm:$0xff]
      %v708 = vld [vmem:[%s2 + $0x90] sm:$0xff]
      %v709 = vld [vmem:[%s2 + $0x98] sm:$0xff]
      %v710 = vld [vmem:[%s2 + $0xa0] sm:$0xff]
      %v711 = vld [vmem:[%s2 + $0xa8] sm:$0xff]
      %713 = vset.pattern.permute.xlu0 0
      %714 = vperm.xlu0 %713, %v690
      %v715 = vpop.permute.xlu0 %714
      %718 = vset.pattern.permute.xlu0 0
      %719 = vperm.xlu0 %718, %v691
      %v720 = vpop.permute.xlu0 %719
      %723 = vset.pattern.permute.xlu0 0
      %724 = vperm.xlu0 %723, %v692
      %v725 = vpop.permute.xlu0 %724
      %728 = vset.pattern.permute.xlu0 0
      %729 = vperm.xlu0 %728, %v693
      %v730 = vpop.permute.xlu0 %729
      %733 = vset.pattern.permute.xlu0 0
      %734 = vperm.xlu0 %733, %v694
      %v735 = vpop.permute.xlu0 %734
      %738 = vset.pattern.permute.xlu0 0
      %739 = vperm.xlu0 %738, %v695
      %v740 = vpop.permute.xlu0 %739
      %743 = vset.pattern.permute.xlu0 0
      %744 = vperm.xlu0 %743, %v696
      %v745 = vpop.permute.xlu0 %744
      %748 = vset.pattern.permute.xlu0 0
      %749 = vperm.xlu0 %748, %v697
      %v750 = vpop.permute.xlu0 %749
      %753 = vset.pattern.permute.xlu0 0
      %754 = vperm.xlu0 %753, %v698
      %v755 = vpop.permute.xlu0 %754
      %758 = vset.pattern.permute.xlu0 0
      %759 = vperm.xlu0 %758, %v699
      %v760 = vpop.permute.xlu0 %759
      %763 = vset.pattern.permute.xlu0 0
      %764 = vperm.xlu0 %763, %v700
      %v765 = vpop.permute.xlu0 %764
      %768 = vset.pattern.permute.xlu0 0
      %769 = vperm.xlu0 %768, %v701
      %v770 = vpop.permute.xlu0 %769
      %773 = vset.pattern.permute.xlu0 0
      %774 = vperm.xlu0 %773, %v702
      %v775 = vpop.permute.xlu0 %774
      %778 = vset.pattern.permute.xlu0 0
      %779 = vperm.xlu0 %778, %v703
      %v780 = vpop.permute.xlu0 %779
      %783 = vset.pattern.permute.xlu0 0
      %784 = vperm.xlu0 %783, %v704
      %v785 = vpop.permute.xlu0 %784
      %788 = vset.pattern.permute.xlu0 0
      %789 = vperm.xlu0 %788, %v705
      %v790 = vpop.permute.xlu0 %789
      %793 = vset.pattern.permute.xlu0 0
      %794 = vperm.xlu0 %793, %v706
      %v795 = vpop.permute.xlu0 %794
      %798 = vset.pattern.permute.xlu0 0
      %799 = vperm.xlu0 %798, %v707
      %v800 = vpop.permute.xlu0 %799
      %803 = vset.pattern.permute.xlu0 0
      %804 = vperm.xlu0 %803, %v708
      %v805 = vpop.permute.xlu0 %804
      %808 = vset.pattern.permute.xlu0 0
      %809 = vperm.xlu0 %808, %v709
      %v810 = vpop.permute.xlu0 %809
      %813 = vset.pattern.permute.xlu0 0
      %814 = vperm.xlu0 %813, %v710
      %v815 = vpop.permute.xlu0 %814
      %818 = vset.pattern.permute.xlu0 0
      %819 = vperm.xlu0 %818, %v711
      %v820 = vpop.permute.xlu0 %819
      %v866 = vunpack.c.l.b16 %v616
      %v867 = vunpack.c.h.b16 %v616
      %v868 = vunpack.c.l.b16 %v617
      %v869 = vunpack.c.h.b16 %v617
      %v870 = vunpack.c.l.b16 %v618
      %v871 = vunpack.c.h.b16 %v618
      %v872 = vunpack.c.l.b16 %v619
      %v873 = vunpack.c.h.b16 %v619
      %v874 = vunpack.c.l.b16 %v620
      %v875 = vunpack.c.h.b16 %v620
      %v876 = vunpack.c.l.b16 %v621
      %v877 = vunpack.c.h.b16 %v621
      %v878 = vunpack.c.l.b16 %v622
      %v879 = vunpack.c.h.b16 %v622
      %v880 = vunpack.c.l.b16 %v623
      %v881 = vunpack.c.h.b16 %v623
      %v882 = vunpack.c.l.b16 %v624
      %v883 = vunpack.c.h.b16 %v624
      %v884 = vunpack.c.l.b16 %v625
      %v885 = vunpack.c.h.b16 %v625
      %v886 = vunpack.c.l.b16 %v626
      %v887 = vunpack.c.h.b16 %v626
      %v888 = vunpack.c.l.b16 %v627
      %v889 = vunpack.c.h.b16 %v627
      %v890 = vunpack.c.l.b16 %v628
      %v891 = vunpack.c.h.b16 %v628
      %v892 = vunpack.c.l.b16 %v629
      %v893 = vunpack.c.h.b16 %v629
      %v894 = vunpack.c.l.b16 %v630
      %v895 = vunpack.c.h.b16 %v630
      %v896 = vunpack.c.l.b16 %v631
      %v897 = vunpack.c.h.b16 %v631
      %v898 = vunpack.c.l.b16 %v632
      %v899 = vunpack.c.h.b16 %v632
      %v900 = vunpack.c.l.b16 %v633
      %v901 = vunpack.c.h.b16 %v633
      %v902 = vunpack.c.l.b16 %v634
      %v903 = vunpack.c.h.b16 %v634
      %v904 = vunpack.c.l.b16 %v635
      %v905 = vunpack.c.h.b16 %v635
      %v906 = vunpack.c.l.b16 %v636
      %v907 = vunpack.c.h.b16 %v636
      %v908 = vunpack.c.l.b16 %v637
      %v909 = vunpack.c.h.b16 %v637
      %v910 = vunpack.c.l.b16 %v638
      %v911 = vunpack.c.h.b16 %v638
      %v912 = vunpack.c.l.b16 %v639
      %v913 = vunpack.c.h.b16 %v639
      %v914 = vunpack.c.l.b16 %v640
      %v915 = vunpack.c.h.b16 %v640
      %v916 = vunpack.c.l.b16 %v641
      %v917 = vunpack.c.h.b16 %v641
      %v918 = vunpack.c.l.b16 %v642
      %v919 = vunpack.c.h.b16 %v642
      %v920 = vunpack.c.l.b16 %v643
      %v921 = vunpack.c.h.b16 %v643
      %v922 = vunpack.c.l.b16 %v644
      %v923 = vunpack.c.h.b16 %v644
      %v924 = vunpack.c.l.b16 %v645
      %v925 = vunpack.c.h.b16 %v645
      %v926 = vunpack.c.l.b16 %v646
      %v927 = vunpack.c.h.b16 %v646
      %v928 = vunpack.c.l.b16 %v647
      %v929 = vunpack.c.h.b16 %v647
      %v930 = vunpack.c.l.b16 %v648
      %v931 = vunpack.c.h.b16 %v648
      %v932 = vunpack.c.l.b16 %v649
      %v933 = vunpack.c.h.b16 %v649
      %v934 = vunpack.c.l.b16 %v650
      %v935 = vunpack.c.h.b16 %v650
      %v936 = vunpack.c.l.b16 %v651
      %v937 = vunpack.c.h.b16 %v651
      %v938 = vunpack.c.l.b16 %v652
      %v939 = vunpack.c.h.b16 %v652
      %v940 = vunpack.c.l.b16 %v653
      %v941 = vunpack.c.h.b16 %v653
      %v942 = vunpack.c.l.b16 %v654
      %v943 = vunpack.c.h.b16 %v654
      %v944 = vunpack.c.l.b16 %v655
      %v945 = vunpack.c.h.b16 %v655
      %v946 = vunpack.c.l.b16 %v656
      %v947 = vunpack.c.h.b16 %v656
      %v948 = vunpack.c.l.b16 %v657
      %v949 = vunpack.c.h.b16 %v657
      %v950 = vunpack.c.l.b16 %v658
      %v951 = vunpack.c.h.b16 %v658
      %v952 = vunpack.c.l.b16 %v659
      %v953 = vunpack.c.h.b16 %v659
      %v954 = vpack.c.b16 %v870, %v866
      %v955 = vpack.c.b16 %v871, %v867
      %v956 = vpack.c.b16 %v872, %v868
      %v957 = vpack.c.b16 %v873, %v869
      %v958 = vpack.c.b16 %v878, %v874
      %v959 = vpack.c.b16 %v879, %v875
      %v960 = vpack.c.b16 %v880, %v876
      %v961 = vpack.c.b16 %v881, %v877
      %v962 = vpack.c.b16 %v886, %v882
      %v963 = vpack.c.b16 %v887, %v883
      %v964 = vpack.c.b16 %v888, %v884
      %v965 = vpack.c.b16 %v889, %v885
      %v966 = vpack.c.b16 %v894, %v890
      %v967 = vpack.c.b16 %v895, %v891
      %v968 = vpack.c.b16 %v896, %v892
      %v969 = vpack.c.b16 %v897, %v893
      %v970 = vpack.c.b16 %v902, %v898
      %v971 = vpack.c.b16 %v903, %v899
      %v972 = vpack.c.b16 %v904, %v900
      %v973 = vpack.c.b16 %v905, %v901
      %v974 = vpack.c.b16 %v910, %v906
      %v975 = vpack.c.b16 %v911, %v907
      %v976 = vpack.c.b16 %v912, %v908
      %v977 = vpack.c.b16 %v913, %v909
      %v978 = vpack.c.b16 %v918, %v914
      %v979 = vpack.c.b16 %v919, %v915
      %v980 = vpack.c.b16 %v920, %v916
      %v981 = vpack.c.b16 %v921, %v917
      %v982 = vpack.c.b16 %v926, %v922
      %v983 = vpack.c.b16 %v927, %v923
      %v984 = vpack.c.b16 %v928, %v924
      %v985 = vpack.c.b16 %v929, %v925
      %v986 = vpack.c.b16 %v934, %v930
      %v987 = vpack.c.b16 %v935, %v931
      %v988 = vpack.c.b16 %v936, %v932
      %v989 = vpack.c.b16 %v937, %v933
      %v990 = vpack.c.b16 %v942, %v938
      %v991 = vpack.c.b16 %v943, %v939
      %v992 = vpack.c.b16 %v944, %v940
      %v993 = vpack.c.b16 %v945, %v941
      %v994 = vpack.c.b16 %v950, %v946
      %v995 = vpack.c.b16 %v951, %v947
      %v996 = vpack.c.b16 %v952, %v948
      %v997 = vpack.c.b16 %v953, %v949
      %vm1031 = vcmask 785408
      %v1033 = vsel %vm1031, %v957, 0
      %v1036 = vsel %vm1031, %v961, 0
      %v1039 = vsel %vm1031, %v965, 0
      %v1042 = vsel %vm1031, %v969, 0
      %v1045 = vsel %vm1031, %v973, 0
      %v1048 = vsel %vm1031, %v977, 0
      %v1051 = vsel %vm1031, %v981, 0
      %v1054 = vsel %vm1031, %v985, 0
      %v1057 = vsel %vm1031, %v989, 0
      %v1060 = vsel %vm1031, %v993, 0
      %v1063 = vsel %vm1031, %v997, 0
      %1065 = vmatprep.subr.bf16.mxu0 0
      %1066 = vmatpush1.bf16.msra.mxu0 %v660
      %1067 = vmatprep.subr.bf16.mxu0 0
      %1068 = vmatpush1.bf16.msra.mxu0 %v661
      %1069 = vmatprep.subr.bf16.mxu0 0
      %1070 = vmatpush1.bf16.msra.mxu0 %v662
      %1071 = vmatprep.subr.bf16.mxu0 0
      %1072 = vmatpush1.bf16.msra.mxu0 %v663
      %1073 = vmatprep.subr.bf16.mxu0 0
      %1074 = vmatpush1.bf16.msra.mxu0 %v664
      %1075 = vmatprep.subr.bf16.mxu0 0
      %1076 = vmatpush1.bf16.msra.mxu0 %v665
      %1077 = vmatprep.subr.bf16.mxu0 0
      %1078 = vmatpush1.bf16.msra.mxu0 %v666
      %1079 = vmatprep.subr.bf16.mxu0 0
      %1080 = vmatpush1.bf16.msra.mxu0 %v667
      %1081 = vmatprep.subr.bf16.mxu0 0
      %1082 = vmatpush1.bf16.msra.mxu0 %v668
      %1083 = vmatprep.subr.bf16.mxu0 0
      %1084 = vmatpush1.bf16.msra.mxu0 %v669
      %1085 = vmatprep.subr.bf16.mxu0 0
      %1086 = vmatpush1.bf16.msra.mxu0 %v670
      %1087 = vmatprep.subr.bf16.mxu0 0
      %1088 = vmatpush1.bf16.msra.mxu0 %v671
      %1089 = vmatprep.subr.bf16.mxu0 0
      %1090 = vmatpush1.bf16.msra.mxu0 %v672
      %1091 = vmatprep.subr.bf16.mxu0 0
      %1092 = vmatpush1.bf16.msra.mxu0 %v673
      %1093 = vmatprep.subr.bf16.mxu0 0
      %1094 = vmatpush1.bf16.msra.mxu0 %v674
      %1095 = vmatprep.subr.bf16.mxu0 0
      %1096 = vmatpush1.bf16.msra.mxu0 %v675
      %1097 = vmatprep.mubr.bf16.mxu0 %v955
      %1098 = vmatmul.mubr.bf16.gmra.mrb[0].mxu0 %v954
      %v1099 = vpop.f32.mrb[0].mxu0
      %v1100 = vadd.f32 %v715, %v1099
      %v1101 = vpop.f32.mrb[0].mxu0
      %v1102 = vpop.f32.mrb[0].mxu0
      %v1103 = vadd.f32 %v720, %v1102
      %v1104 = vpop.f32.mrb[0].mxu0
      %1105 = vmatprep.mubr.bf16.mxu0 %v959
      %1106 = vmatmul.mubr.bf16.gmra.mrb[0].mxu0 %v958
      %v1107 = vpop.f32.mrb[0].mxu0
      %v1108 = vadd.f32 %v725, %v1107
      %v1109 = vpop.f32.mrb[0].mxu0
      %v1110 = vpop.f32.mrb[0].mxu0
      %v1111 = vadd.f32 %v730, %v1110
      %v1112 = vpop.f32.mrb[0].mxu0
      %1113 = vmatprep.mubr.bf16.mxu0 %v963
      %1114 = vmatmul.mubr.bf16.gmra.mrb[0].mxu0 %v962
      %v1115 = vpop.f32.mrb[0].mxu0
      %v1116 = vadd.f32 %v735, %v1115
      %v1117 = vpop.f32.mrb[0].mxu0
      %v1118 = vpop.f32.mrb[0].mxu0
      %v1119 = vadd.f32 %v740, %v1118
      %v1120 = vpop.f32.mrb[0].mxu0
      %1121 = vmatprep.mubr.bf16.mxu0 %v967
      %1122 = vmatmul.mubr.bf16.gmra.mrb[0].mxu0 %v966
      %v1123 = vpop.f32.mrb[0].mxu0
      %v1124 = vadd.f32 %v745, %v1123
      %v1125 = vpop.f32.mrb[0].mxu0
      %v1126 = vpop.f32.mrb[0].mxu0
      %v1127 = vadd.f32 %v750, %v1126
      %v1128 = vpop.f32.mrb[0].mxu0
      %1129 = vmatprep.mubr.bf16.mxu0 %v971
      %1130 = vmatmul.mubr.bf16.gmra.mrb[0].mxu0 %v970
      %v1131 = vpop.f32.mrb[0].mxu0
      %v1132 = vadd.f32 %v755, %v1131
      %v1133 = vpop.f32.mrb[0].mxu0
      %v1134 = vpop.f32.mrb[0].mxu0
      %v1135 = vadd.f32 %v760, %v1134
      %v1136 = vpop.f32.mrb[0].mxu0
      %1137 = vmatprep.mubr.bf16.mxu0 %v975
      %1138 = vmatmul.mubr.bf16.gmra.mrb[0].mxu0 %v974
      %v1139 = vpop.f32.mrb[0].mxu0
      %v1140 = vadd.f32 %v765, %v1139
      %v1141 = vpop.f32.mrb[0].mxu0
      %v1142 = vpop.f32.mrb[0].mxu0
      %v1143 = vadd.f32 %v770, %v1142
      %v1144 = vpop.f32.mrb[0].mxu0
      %1145 = vmatprep.mubr.bf16.mxu0 %v979
      %1146 = vmatmul.mubr.bf16.gmra.mrb[0].mxu0 %v978
      %v1147 = vpop.f32.mrb[0].mxu0
      %v1148 = vadd.f32 %v775, %v1147
      %v1149 = vpop.f32.mrb[0].mxu0
      %v1150 = vpop.f32.mrb[0].mxu0
      %v1151 = vadd.f32 %v780, %v1150
      %v1152 = vpop.f32.mrb[0].mxu0
      %1153 = vmatprep.mubr.bf16.mxu0 %v983
      %1154 = vmatmul.mubr.bf16.gmra.mrb[0].mxu0 %v982
      %v1155 = vpop.f32.mrb[0].mxu0
      %v1156 = vadd.f32 %v785, %v1155
      %v1157 = vpop.f32.mrb[0].mxu0
      %v1158 = vpop.f32.mrb[0].mxu0
      %v1159 = vadd.f32 %v790, %v1158
      %v1160 = vpop.f32.mrb[0].mxu0
      %1161 = vmatprep.mubr.bf16.mxu0 %v987
      %1162 = vmatmul.mubr.bf16.gmra.mrb[0].mxu0 %v986
      %v1163 = vpop.f32.mrb[0].mxu0
      %v1164 = vadd.f32 %v795, %v1163
      %v1165 = vpop.f32.mrb[0].mxu0
      %v1166 = vpop.f32.mrb[0].mxu0
      %v1167 = vadd.f32 %v800, %v1166
      %v1168 = vpop.f32.mrb[0].mxu0
      %1169 = vmatprep.mubr.bf16.mxu0 %v991
      %1170 = vmatmul.mubr.bf16.gmra.mrb[0].mxu0 %v990
      %v1171 = vpop.f32.mrb[0].mxu0
      %v1172 = vadd.f32 %v805, %v1171
      %v1173 = vpop.f32.mrb[0].mxu0
      %v1174 = vpop.f32.mrb[0].mxu0
      %v1175 = vadd.f32 %v810, %v1174
      %v1176 = vpop.f32.mrb[0].mxu0
      %1177 = vmatprep.mubr.bf16.mxu0 %v995
      %1178 = vmatmul.mubr.bf16.gmra.mrb[0].mxu0 %v994
      %v1179 = vpop.f32.mrb[0].mxu0
      %v1180 = vadd.f32 %v815, %v1179
      %v1181 = vpop.f32.mrb[0].mxu0
      %v1182 = vpop.f32.mrb[0].mxu0
      %v1183 = vadd.f32 %v820, %v1182
      %v1184 = vpop.f32.mrb[0].mxu0
      %1185 = vdwg.mxu0
      %1186 = vmatprep.subr.bf16.mxu0 0
      %1187 = vmatpush1.bf16.msra.mxu0 %v676
      %1188 = vmatprep.subr.bf16.mxu0 0
      %1189 = vmatpush1.bf16.msra.mxu0 %v677
      %1190 = vmatprep.subr.bf16.mxu0 0
      %1191 = vmatpush1.bf16.msra.mxu0 %v678
      %1192 = vmatprep.subr.bf16.mxu0 0
      %1193 = vmatpush1.bf16.msra.mxu0 %v679
      %1194 = vmatprep.subr.bf16.mxu0 0
      %1195 = vmatpush1.bf16.msra.mxu0 %v680
      %1196 = vmatprep.subr.bf16.mxu0 0
      %1197 = vmatpush1.bf16.msra.mxu0 %v681
      %1198 = vmatprep.subr.bf16.mxu0 0
      %1199 = vmatpush1.bf16.msra.mxu0 %v682
      %1200 = vmatprep.subr.bf16.mxu0 0
      %1201 = vmatpush1.bf16.msra.mxu0 %v683
      %1202 = vmatprep.subr.bf16.mxu0 0
      %1203 = vmatpush1.bf16.msra.mxu0 %v684
      %1204 = vmatprep.subr.bf16.mxu0 0
      %1205 = vmatpush1.bf16.msra.mxu0 %v685
      %1206 = vmatprep.subr.bf16.mxu0 0
      %1207 = vmatpush1.bf16.msra.mxu0 %v686
      %1208 = vmatprep.subr.bf16.mxu0 0
      %1209 = vmatpush1.bf16.msra.mxu0 %v687
      %1210 = vmatprep.subr.bf16.mxu0 0
      %1211 = vmatpush1.bf16.msra.mxu0 %v688
      %1212 = vmatprep.subr.bf16.mxu0 0
      %1213 = vmatpush1.bf16.msra.mxu0 %v689
      %1214 = vmatprep.subr.bf16.mxu0 0
      %1215 = vmatpush1.bf16.msra.mxu0 0
      %1216 = vmatprep.subr.bf16.mxu0 0
      %1217 = vmatpush1.bf16.msra.mxu0 0
      %1218 = vmatprep.mubr.bf16.mxu0 %v1033
      %1219 = vmatmul.mubr.bf16.gmra.mrb[0].mxu0 %v956
      %v1220 = vpop.f32.mrb[0].mxu0
      %v1221 = vadd.f32 %v1100, %v1220
      %v1222 = vpop.f32.mrb[0].mxu0
      %v1223 = vpop.f32.mrb[0].mxu0
      %v1224 = vadd.f32 %v1103, %v1223
      %v1225 = vpop.f32.mrb[0].mxu0
      %1226 = vmatprep.mubr.bf16.mxu0 %v1036
      %1227 = vmatmul.mubr.bf16.gmra.mrb[0].mxu0 %v960
      %v1228 = vpop.f32.mrb[0].mxu0
      %v1229 = vadd.f32 %v1108, %v1228
      %v1230 = vpop.f32.mrb[0].mxu0
      %v1231 = vpop.f32.mrb[0].mxu0
      %v1232 = vadd.f32 %v1111, %v1231
      %v1233 = vpop.f32.mrb[0].mxu0
      %1234 = vmatprep.mubr.bf16.mxu0 %v1039
      %1235 = vmatmul.mubr.bf16.gmra.mrb[0].mxu0 %v964
      %v1236 = vpop.f32.mrb[0].mxu0
      %v1237 = vadd.f32 %v1116, %v1236
      %v1238 = vpop.f32.mrb[0].mxu0
      %v1239 = vpop.f32.mrb[0].mxu0
      %v1240 = vadd.f32 %v1119, %v1239
      %v1241 = vpop.f32.mrb[0].mxu0
      %1242 = vmatprep.mubr.bf16.mxu0 %v1042
      %1243 = vmatmul.mubr.bf16.gmra.mrb[0].mxu0 %v968
      %v1244 = vpop.f32.mrb[0].mxu0
      %v1245 = vadd.f32 %v1124, %v1244
      %v1246 = vpop.f32.mrb[0].mxu0
      %v1247 = vpop.f32.mrb[0].mxu0
      %v1248 = vadd.f32 %v1127, %v1247
      %v1249 = vpop.f32.mrb[0].mxu0
      %1250 = vmatprep.mubr.bf16.mxu0 %v1045
      %1251 = vmatmul.mubr.bf16.gmra.mrb[0].mxu0 %v972
      %v1252 = vpop.f32.mrb[0].mxu0
      %v1253 = vadd.f32 %v1132, %v1252
      %v1254 = vpop.f32.mrb[0].mxu0
      %v1255 = vpop.f32.mrb[0].mxu0
      %v1256 = vadd.f32 %v1135, %v1255
      %v1257 = vpop.f32.mrb[0].mxu0
      %1258 = vmatprep.mubr.bf16.mxu0 %v1048
      %1259 = vmatmul.mubr.bf16.gmra.mrb[0].mxu0 %v976
      %v1260 = vpop.f32.mrb[0].mxu0
      %v1261 = vadd.f32 %v1140, %v1260
      %v1262 = vpop.f32.mrb[0].mxu0
      %v1263 = vpop.f32.mrb[0].mxu0
      %v1264 = vadd.f32 %v1143, %v1263
      %v1265 = vpop.f32.mrb[0].mxu0
      %1266 = vmatprep.mubr.bf16.mxu0 %v1051
      %1267 = vmatmul.mubr.bf16.gmra.mrb[0].mxu0 %v980
      %v1268 = vpop.f32.mrb[0].mxu0
      %v1269 = vadd.f32 %v1148, %v1268
      %v1270 = vpop.f32.mrb[0].mxu0
      %v1271 = vpop.f32.mrb[0].mxu0
      %v1272 = vadd.f32 %v1151, %v1271
      %v1273 = vpop.f32.mrb[0].mxu0
      %1274 = vmatprep.mubr.bf16.mxu0 %v1054
      %1275 = vmatmul.mubr.bf16.gmra.mrb[0].mxu0 %v984
      %v1276 = vpop.f32.mrb[0].mxu0
      %v1277 = vadd.f32 %v1156, %v1276
      %v1278 = vpop.f32.mrb[0].mxu0
      %v1279 = vpop.f32.mrb[0].mxu0
      %v1280 = vadd.f32 %v1159, %v1279
      %v1281 = vpop.f32.mrb[0].mxu0
      %1282 = vmatprep.mubr.bf16.mxu0 %v1057
      %1283 = vmatmul.mubr.bf16.gmra.mrb[0].mxu0 %v988
      %v1284 = vpop.f32.mrb[0].mxu0
      %v1285 = vadd.f32 %v1164, %v1284
      %v1286 = vpop.f32.mrb[0].mxu0
      %v1287 = vpop.f32.mrb[0].mxu0
      %v1288 = vadd.f32 %v1167, %v1287
      %v1289 = vpop.f32.mrb[0].mxu0
      %1290 = vmatprep.mubr.bf16.mxu0 %v1060
      %1291 = vmatmul.mubr.bf16.gmra.mrb[0].mxu0 %v992
      %v1292 = vpop.f32.mrb[0].mxu0
      %v1293 = vadd.f32 %v1172, %v1292
      %v1294 = vpop.f32.mrb[0].mxu0
      %v1295 = vpop.f32.mrb[0].mxu0
      %v1296 = vadd.f32 %v1175, %v1295
      %v1297 = vpop.f32.mrb[0].mxu0
      %1298 = vmatprep.mubr.bf16.mxu0 %v1063
      %1299 = vmatmul.mubr.bf16.gmra.mrb[0].mxu0 %v996
      %v1300 = vpop.f32.mrb[0].mxu0
      %v1301 = vadd.f32 %v1180, %v1300
      %v1302 = vpop.f32.mrb[0].mxu0
      %v1303 = vpop.f32.mrb[0].mxu0
      %v1304 = vadd.f32 %v1183, %v1303
      %v1305 = vpop.f32.mrb[0].mxu0
      %1306 = vdwg.mxu0
      %v1307 = vxor.u32 %v1221, 2147483648
      %v1308 = vxor.u32 %v1224, 2147483648
      %v1309 = vxor.u32 %v1229, 2147483648
      %v1310 = vxor.u32 %v1232, 2147483648
      %v1311 = vxor.u32 %v1237, 2147483648
      %v1312 = vxor.u32 %v1240, 2147483648
      %v1313 = vxor.u32 %v1245, 2147483648
      %v1314 = vxor.u32 %v1248, 2147483648
      %v1315 = vxor.u32 %v1253, 2147483648
      %v1316 = vxor.u32 %v1256, 2147483648
      %v1317 = vxor.u32 %v1261, 2147483648
      %v1318 = vxor.u32 %v1264, 2147483648
      %v1319 = vxor.u32 %v1269, 2147483648
      %v1320 = vxor.u32 %v1272, 2147483648
      %v1321 = vxor.u32 %v1277, 2147483648
      %v1322 = vxor.u32 %v1280, 2147483648
      %v1323 = vxor.u32 %v1285, 2147483648
      %v1324 = vxor.u32 %v1288, 2147483648
      %v1325 = vxor.u32 %v1293, 2147483648
      %v1326 = vxor.u32 %v1296, 2147483648
      %v1327 = vxor.u32 %v1301, 2147483648
      %v1328 = vxor.u32 %v1304, 2147483648
      %v1329 = vmul.f32 %v1307, 1.442695
      %v1330 = vpow.pop %v1329
      %v1331 = vmul.f32 %v1308, 1.442695
      %v1332 = vpow.pop %v1331
      %v1333 = vmul.f32 %v1309, 1.442695
      %v1334 = vpow.pop %v1333
      %v1335 = vmul.f32 %v1310, 1.442695
      %v1336 = vpow.pop %v1335
      %v1337 = vmul.f32 %v1311, 1.442695
      %v1338 = vpow.pop %v1337
      %v1339 = vmul.f32 %v1312, 1.442695
      %v1340 = vpow.pop %v1339
      %v1341 = vmul.f32 %v1313, 1.442695
      %v1342 = vpow.pop %v1341
      %v1343 = vmul.f32 %v1314, 1.442695
      %v1344 = vpow.pop %v1343
      %v1345 = vmul.f32 %v1315, 1.442695
      %v1346 = vpow.pop %v1345
      %v1347 = vmul.f32 %v1316, 1.442695
      %v1348 = vpow.pop %v1347
      %v1349 = vmul.f32 %v1317, 1.442695
      %v1350 = vpow.pop %v1349
      %v1351 = vmul.f32 %v1318, 1.442695
      %v1352 = vpow.pop %v1351
      %v1353 = vmul.f32 %v1319, 1.442695
      %v1354 = vpow.pop %v1353
      %v1355 = vmul.f32 %v1320, 1.442695
      %v1356 = vpow.pop %v1355
      %v1357 = vmul.f32 %v1321, 1.442695
      %v1358 = vpow.pop %v1357
      %v1359 = vmul.f32 %v1322, 1.442695
      %v1360 = vpow.pop %v1359
      %v1361 = vmul.f32 %v1323, 1.442695
      %v1362 = vpow.pop %v1361
      %v1363 = vmul.f32 %v1324, 1.442695
      %v1364 = vpow.pop %v1363
      %v1365 = vmul.f32 %v1325, 1.442695
      %v1366 = vpow.pop %v1365
      %v1367 = vmul.f32 %v1326, 1.442695
      %v1368 = vpow.pop %v1367
      %v1369 = vmul.f32 %v1327, 1.442695
      %v1370 = vpow.pop %v1369
      %v1371 = vmul.f32 %v1328, 1.442695
      %v1372 = vpow.pop %v1371
      %v1373 = vadd.f32 %v1330, 1.0
      %v1374 = vadd.f32 %v1332, 1.0
      %v1375 = vadd.f32 %v1334, 1.0
      %v1376 = vadd.f32 %v1336, 1.0
      %v1377 = vadd.f32 %v1338, 1.0
      %v1378 = vadd.f32 %v1340, 1.0
      %v1379 = vadd.f32 %v1342, 1.0
      %v1380 = vadd.f32 %v1344, 1.0
      %v1381 = vadd.f32 %v1346, 1.0
      %v1382 = vadd.f32 %v1348, 1.0
      %v1383 = vadd.f32 %v1350, 1.0
      %v1384 = vadd.f32 %v1352, 1.0
      %v1385 = vadd.f32 %v1354, 1.0
      %v1386 = vadd.f32 %v1356, 1.0
      %v1387 = vadd.f32 %v1358, 1.0
      %v1388 = vadd.f32 %v1360, 1.0
      %v1389 = vadd.f32 %v1362, 1.0
      %v1390 = vadd.f32 %v1364, 1.0
      %v1391 = vadd.f32 %v1366, 1.0
      %v1392 = vadd.f32 %v1368, 1.0
      %v1393 = vadd.f32 %v1370, 1.0
      %v1394 = vadd.f32 %v1372, 1.0
      %v1395 = vrcp.pop %v1373
      %v1396 = vmul.f32 1.0, %v1395
      %v1397 = vrcp.pop %v1374
      %v1398 = vmul.f32 1.0, %v1397
      %v1399 = vrcp.pop %v1375
      %v1400 = vmul.f32 1.0, %v1399
      %v1401 = vrcp.pop %v1376
      %v1402 = vmul.f32 1.0, %v1401
      %v1403 = vrcp.pop %v1377
      %v1404 = vmul.f32 1.0, %v1403
      %v1405 = vrcp.pop %v1378
      %v1406 = vmul.f32 1.0, %v1405
      %v1407 = vrcp.pop %v1379
      %v1408 = vmul.f32 1.0, %v1407
      %v1409 = vrcp.pop %v1380
      %v1410 = vmul.f32 1.0, %v1409
      %v1411 = vrcp.pop %v1381
      %v1412 = vmul.f32 1.0, %v1411
      %v1413 = vrcp.pop %v1382
      %v1414 = vmul.f32 1.0, %v1413
      %v1415 = vrcp.pop %v1383
      %v1416 = vmul.f32 1.0, %v1415
      %v1417 = vrcp.pop %v1384
      %v1418 = vmul.f32 1.0, %v1417
      %v1419 = vrcp.pop %v1385
      %v1420 = vmul.f32 1.0, %v1419
      %v1421 = vrcp.pop %v1386
      %v1422 = vmul.f32 1.0, %v1421
      %v1423 = vrcp.pop %v1387
      %v1424 = vmul.f32 1.0, %v1423
      %v1425 = vrcp.pop %v1388
      %v1426 = vmul.f32 1.0, %v1425
      %v1427 = vrcp.pop %v1389
      %v1428 = vmul.f32 1.0, %v1427
      %v1429 = vrcp.pop %v1390
      %v1430 = vmul.f32 1.0, %v1429
      %v1431 = vrcp.pop %v1391
      %v1432 = vmul.f32 1.0, %v1431
      %v1433 = vrcp.pop %v1392
      %v1434 = vmul.f32 1.0, %v1433
      %v1435 = vrcp.pop %v1393
      %v1436 = vmul.f32 1.0, %v1435
      %v1437 = vrcp.pop %v1394
      %v1438 = vmul.f32 1.0, %v1437
      %v1439 = vmul.f32 %v1221, %v1396
      %v1440 = vmul.f32 %v1224, %v1398
      %v1441 = vmul.f32 %v1229, %v1400
      %v1442 = vmul.f32 %v1232, %v1402
      %v1443 = vmul.f32 %v1237, %v1404
      %v1444 = vmul.f32 %v1240, %v1406
      %v1445 = vmul.f32 %v1245, %v1408
      %v1446 = vmul.f32 %v1248, %v1410
      %v1447 = vmul.f32 %v1253, %v1412
      %v1448 = vmul.f32 %v1256, %v1414
      %v1449 = vmul.f32 %v1261, %v1416
      %v1450 = vmul.f32 %v1264, %v1418
      %v1451 = vmul.f32 %v1269, %v1420
      %v1452 = vmul.f32 %v1272, %v1422
      %v1453 = vmul.f32 %v1277, %v1424
      %v1454 = vmul.f32 %v1280, %v1426
      %v1455 = vmul.f32 %v1285, %v1428
      %v1456 = vmul.f32 %v1288, %v1430
      %v1457 = vmul.f32 %v1293, %v1432
      %v1458 = vmul.f32 %v1296, %v1434
      %v1459 = vmul.f32 %v1301, %v1436
      %v1460 = vmul.f32 %v1304, %v1438
      %v1461 = vpack.c.bf16 %v1440, %v1439
      %v1462 = vpack.c.bf16 %v1442, %v1441
      %v1463 = vpack.c.bf16 %v1444, %v1443
      %v1464 = vpack.c.bf16 %v1446, %v1445
      %v1465 = vpack.c.bf16 %v1448, %v1447
      %v1466 = vpack.c.bf16 %v1450, %v1449
      %v1467 = vpack.c.bf16 %v1452, %v1451
      %v1468 = vpack.c.bf16 %v1454, %v1453
      %v1469 = vpack.c.bf16 %v1456, %v1455
      %v1470 = vpack.c.bf16 %v1458, %v1457
      %v1471 = vpack.c.bf16 %v1460, %v1459
      %1472 = vst [vmem:[#allocation3] sm:$0xff] %v1461
      %1473 = vst [vmem:[#allocation3 + $0x8] sm:$0xff] %v1462
      %1474 = vst [vmem:[#allocation3 + $0x10] sm:$0xff] %v1463
      %1475 = vst [vmem:[#allocation3 + $0x18] sm:$0xff] %v1464
      %1476 = vst [vmem:[#allocation3 + $0x20] sm:$0xff] %v1465
      %1477 = vst [vmem:[#allocation3 + $0x28] sm:$0xff] %v1466
      %1478 = vst [vmem:[#allocation3 + $0x30] sm:$0xff] %v1467
      %1479 = vst [vmem:[#allocation3 + $0x38] sm:$0xff] %v1468
      %1480 = vst [vmem:[#allocation3 + $0x40] sm:$0xff] %v1469
      %1481 = vst [vmem:[#allocation3 + $0x48] sm:$0xff] %v1470
      %1482 = vst [vmem:[#allocation3 + $0x50] sm:$0xff] %v1471
      %v1483 = vld [vmem:[%s1 + $0x160] sm:$0xff]
      %v1484 = vld [vmem:[%s1 + $0x168] sm:$0xff]
      %v1485 = vld [vmem:[%s1 + $0x170] sm:$0xff]
      %v1486 = vld [vmem:[%s1 + $0x178] sm:$0xff]
      %v1487 = vld [vmem:[%s1 + $0x180] sm:$0xff]
      %v1488 = vld [vmem:[%s1 + $0x188] sm:$0xff]
      %v1489 = vld [vmem:[%s1 + $0x190] sm:$0xff]
      %v1490 = vld [vmem:[%s1 + $0x198] sm:$0xff]
      %v1491 = vld [vmem:[%s1 + $0x1a0] sm:$0xff]
      %v1492 = vld [vmem:[%s1 + $0x1a8] sm:$0xff]
      %v1493 = vld [vmem:[%s1 + $0x1b0] sm:$0xff]
      %v1494 = vld [vmem:[%s1 + $0x1b8] sm:$0xff]
      %v1495 = vld [vmem:[%s1 + $0x1c0] sm:$0xff]
      %v1496 = vld [vmem:[%s1 + $0x1c8] sm:$0xff]
      %v1497 = vld [vmem:[%s1 + $0x1d0] sm:$0xff]
      %v1498 = vld [vmem:[%s1 + $0x1d8] sm:$0xff]
      %v1499 = vld [vmem:[%s1 + $0x1e0] sm:$0xff]
      %v1500 = vld [vmem:[%s1 + $0x1e8] sm:$0xff]
      %v1501 = vld [vmem:[%s1 + $0x1f0] sm:$0xff]
      %v1502 = vld [vmem:[%s1 + $0x1f8] sm:$0xff]
      %v1503 = vld [vmem:[%s1 + $0x200] sm:$0xff]
      %v1504 = vld [vmem:[%s1 + $0x208] sm:$0xff]
      %v1505 = vld [vmem:[%s1 + $0x210] sm:$0xff]
      %v1506 = vld [vmem:[%s1 + $0x218] sm:$0xff]
      %v1507 = vld [vmem:[%s1 + $0x220] sm:$0xff]
      %v1508 = vld [vmem:[%s1 + $0x228] sm:$0xff]
      %v1509 = vld [vmem:[%s1 + $0x230] sm:$0xff]
      %v1510 = vld [vmem:[%s1 + $0x238] sm:$0xff]
      %v1511 = vld [vmem:[%s1 + $0x240] sm:$0xff]
      %v1512 = vld [vmem:[%s1 + $0x248] sm:$0xff]
      %v1513 = vld [vmem:[%s1 + $0x250] sm:$0xff]
      %v1514 = vld [vmem:[%s1 + $0x258] sm:$0xff]
      %v1515 = vld [vmem:[%s1 + $0x260] sm:$0xff]
      %v1516 = vld [vmem:[%s1 + $0x268] sm:$0xff]
      %v1517 = vld [vmem:[%s1 + $0x270] sm:$0xff]
      %v1518 = vld [vmem:[%s1 + $0x278] sm:$0xff]
      %v1519 = vld [vmem:[%s1 + $0x280] sm:$0xff]
      %v1520 = vld [vmem:[%s1 + $0x288] sm:$0xff]
      %v1521 = vld [vmem:[%s1 + $0x290] sm:$0xff]
      %v1522 = vld [vmem:[%s1 + $0x298] sm:$0xff]
      %v1523 = vld [vmem:[%s1 + $0x2a0] sm:$0xff]
      %v1524 = vld [vmem:[%s1 + $0x2a8] sm:$0xff]
      %v1525 = vld [vmem:[%s1 + $0x2b0] sm:$0xff]
      %v1526 = vld [vmem:[%s1 + $0x2b8] sm:$0xff]
      %v1527 = vld [vmem:[#allocation2] sm:$0xff]
      %v1528 = vld [vmem:[#allocation2 + $0x8] sm:$0xff]
      %v1529 = vld [vmem:[#allocation2 + $0x10] sm:$0xff]
      %v1530 = vld [vmem:[#allocation2 + $0x18] sm:$0xff]
      %v1531 = vld [vmem:[#allocation2 + $0x20] sm:$0xff]
      %v1532 = vld [vmem:[#allocation2 + $0x28] sm:$0xff]
      %v1533 = vld [vmem:[#allocation2 + $0x30] sm:$0xff]
      %v1534 = vld [vmem:[#allocation2 + $0x38] sm:$0xff]
      %v1535 = vld [vmem:[#allocation2 + $0x40] sm:$0xff]
      %v1536 = vld [vmem:[#allocation2 + $0x48] sm:$0xff]
      %v1537 = vld [vmem:[#allocation2 + $0x50] sm:$0xff]
      %v1538 = vld [vmem:[#allocation2 + $0x58] sm:$0xff]
      %v1539 = vld [vmem:[#allocation2 + $0x60] sm:$0xff]
      %v1540 = vld [vmem:[#allocation2 + $0x68] sm:$0xff]
      %v1541 = vld [vmem:[#allocation2 + $0x70] sm:$0xff]
      %v1542 = vld [vmem:[#allocation2 + $0x78] sm:$0xff]
      %v1543 = vld [vmem:[#allocation2 + $0x80] sm:$0xff]
      %v1544 = vld [vmem:[#allocation2 + $0x88] sm:$0xff]
      %v1545 = vld [vmem:[#allocation2 + $0x90] sm:$0xff]
      %v1546 = vld [vmem:[#allocation2 + $0x98] sm:$0xff]
      %v1547 = vld [vmem:[#allocation2 + $0xa0] sm:$0xff]
      %v1548 = vld [vmem:[#allocation2 + $0xa8] sm:$0xff]
      %v1549 = vld [vmem:[#allocation2 + $0xb0] sm:$0xff]
      %v1550 = vld [vmem:[#allocation2 + $0xb8] sm:$0xff]
      %v1551 = vld [vmem:[#allocation2 + $0xc0] sm:$0xff]
      %v1552 = vld [vmem:[#allocation2 + $0xc8] sm:$0xff]
      %v1553 = vld [vmem:[#allocation2 + $0xd0] sm:$0xff]
      %v1554 = vld [vmem:[#allocation2 + $0xd8] sm:$0xff]
      %v1555 = vld [vmem:[#allocation2 + $0xe0] sm:$0xff]
      %v1556 = vld [vmem:[#allocation2 + $0xe8] sm:$0xff]
      %v1557 = vld [vmem:[%s2 + $0xb0] sm:$0xff]
      %v1558 = vld [vmem:[%s2 + $0xb8] sm:$0xff]
      %v1559 = vld [vmem:[%s2 + $0xc0] sm:$0xff]
      %v1560 = vld [vmem:[%s2 + $0xc8] sm:$0xff]
      %v1561 = vld [vmem:[%s2 + $0xd0] sm:$0xff]
      %v1562 = vld [vmem:[%s2 + $0xd8] sm:$0xff]
      %v1563 = vld [vmem:[%s2 + $0xe0] sm:$0xff]
      %v1564 = vld [vmem:[%s2 + $0xe8] sm:$0xff]
      %v1565 = vld [vmem:[%s2 + $0xf0] sm:$0xff]
      %v1566 = vld [vmem:[%s2 + $0xf8] sm:$0xff]
      %v1567 = vld [vmem:[%s2 + $0x100] sm:$0xff]
      %v1568 = vld [vmem:[%s2 + $0x108] sm:$0xff]
      %v1569 = vld [vmem:[%s2 + $0x110] sm:$0xff]
      %v1570 = vld [vmem:[%s2 + $0x118] sm:$0xff]
      %v1571 = vld [vmem:[%s2 + $0x120] sm:$0xff]
      %v1572 = vld [vmem:[%s2 + $0x128] sm:$0xff]
      %v1573 = vld [vmem:[%s2 + $0x130] sm:$0xff]
      %v1574 = vld [vmem:[%s2 + $0x138] sm:$0xff]
      %v1575 = vld [vmem:[%s2 + $0x140] sm:$0xff]
      %v1576 = vld [vmem:[%s2 + $0x148] sm:$0xff]
      %v1577 = vld [vmem:[%s2 + $0x150] sm:$0xff]
      %v1578 = vld [vmem:[%s2 + $0x158] sm:$0xff]
      %1580 = vset.pattern.permute.xlu0 0
      %1581 = vperm.xlu0 %1580, %v1557
      %v1582 = vpop.permute.xlu0 %1581
      %1585 = vset.pattern.permute.xlu0 0
      %1586 = vperm.xlu0 %1585, %v1558
      %v1587 = vpop.permute.xlu0 %1586
      %1590 = vset.pattern.permute.xlu0 0
      %1591 = vperm.xlu0 %1590, %v1559
      %v1592 = vpop.permute.xlu0 %1591
      %1595 = vset.pattern.permute.xlu0 0
      %1596 = vperm.xlu0 %1595, %v1560
      %v1597 = vpop.permute.xlu0 %1596
      %1600 = vset.pattern.permute.xlu0 0
      %1601 = vperm.xlu0 %1600, %v1561
      %v1602 = vpop.permute.xlu0 %1601
      %1605 = vset.pattern.permute.xlu0 0
      %1606 = vperm.xlu0 %1605, %v1562
      %v1607 = vpop.permute.xlu0 %1606
      %1610 = vset.pattern.permute.xlu0 0
      %1611 = vperm.xlu0 %1610, %v1563
      %v1612 = vpop.permute.xlu0 %1611
      %1615 = vset.pattern.permute.xlu0 0
      %1616 = vperm.xlu0 %1615, %v1564
      %v1617 = vpop.permute.xlu0 %1616
      %1620 = vset.pattern.permute.xlu0 0
      %1621 = vperm.xlu0 %1620, %v1565
      %v1622 = vpop.permute.xlu0 %1621
      %1625 = vset.pattern.permute.xlu0 0
      %1626 = vperm.xlu0 %1625, %v1566
      %v1627 = vpop.permute.xlu0 %1626
      %1630 = vset.pattern.permute.xlu0 0
      %1631 = vperm.xlu0 %1630, %v1567
      %v1632 = vpop.permute.xlu0 %1631
      %1635 = vset.pattern.permute.xlu0 0
      %1636 = vperm.xlu0 %1635, %v1568
      %v1637 = vpop.permute.xlu0 %1636
      %1640 = vset.pattern.permute.xlu0 0
      %1641 = vperm.xlu0 %1640, %v1569
      %v1642 = vpop.permute.xlu0 %1641
      %1645 = vset.pattern.permute.xlu0 0
      %1646 = vperm.xlu0 %1645, %v1570
      %v1647 = vpop.permute.xlu0 %1646
      %1650 = vset.pattern.permute.xlu0 0
      %1651 = vperm.xlu0 %1650, %v1571
      %v1652 = vpop.permute.xlu0 %1651
      %1655 = vset.pattern.permute.xlu0 0
      %1656 = vperm.xlu0 %1655, %v1572
      %v1657 = vpop.permute.xlu0 %1656
      %1660 = vset.pattern.permute.xlu0 0
      %1661 = vperm.xlu0 %1660, %v1573
      %v1662 = vpop.permute.xlu0 %1661
      %1665 = vset.pattern.permute.xlu0 0
      %1666 = vperm.xlu0 %1665, %v1574
      %v1667 = vpop.permute.xlu0 %1666
      %1670 = vset.pattern.permute.xlu0 0
      %1671 = vperm.xlu0 %1670, %v1575
      %v1672 = vpop.permute.xlu0 %1671
      %1675 = vset.pattern.permute.xlu0 0
      %1676 = vperm.xlu0 %1675, %v1576
      %v1677 = vpop.permute.xlu0 %1676
      %1680 = vset.pattern.permute.xlu0 0
      %1681 = vperm.xlu0 %1680, %v1577
      %v1682 = vpop.permute.xlu0 %1681
      %1685 = vset.pattern.permute.xlu0 0
      %1686 = vperm.xlu0 %1685, %v1578
      %v1687 = vpop.permute.xlu0 %1686
      %v1733 = vunpack.c.l.b16 %v1483
      %v1734 = vunpack.c.h.b16 %v1483
      %v1735 = vunpack.c.l.b16 %v1484
      %v1736 = vunpack.c.h.b16 %v1484
      %v1737 = vunpack.c.l.b16 %v1485
      %v1738 = vunpack.c.h.b16 %v1485
      %v1739 = vunpack.c.l.b16 %v1486
      %v1740 = vunpack.c.h.b16 %v1486
      %v1741 = vunpack.c.l.b16 %v1487
      %v1742 = vunpack.c.h.b16 %v1487
      %v1743 = vunpack.c.l.b16 %v1488
      %v1744 = vunpack.c.h.b16 %v1488
      %v1745 = vunpack.c.l.b16 %v1489
      %v1746 = vunpack.c.h.b16 %v1489
      %v1747 = vunpack.c.l.b16 %v1490
      %v1748 = vunpack.c.h.b16 %v1490
      %v1749 = vunpack.c.l.b16 %v1491
      %v1750 = vunpack.c.h.b16 %v1491
      %v1751 = vunpack.c.l.b16 %v1492
      %v1752 = vunpack.c.h.b16 %v1492
      %v1753 = vunpack.c.l.b16 %v1493
      %v1754 = vunpack.c.h.b16 %v1493
      %v1755 = vunpack.c.l.b16 %v1494
      %v1756 = vunpack.c.h.b16 %v1494
      %v1757 = vunpack.c.l.b16 %v1495
      %v1758 = vunpack.c.h.b16 %v1495
      %v1759 = vunpack.c.l.b16 %v1496
      %v1760 = vunpack.c.h.b16 %v1496
      %v1761 = vunpack.c.l.b16 %v1497
      %v1762 = vunpack.c.h.b16 %v1497
      %v1763 = vunpack.c.l.b16 %v1498
      %v1764 = vunpack.c.h.b16 %v1498
      %v1765 = vunpack.c.l.b16 %v1499
      %v1766 = vunpack.c.h.b16 %v1499
      %v1767 = vunpack.c.l.b16 %v1500
      %v1768 = vunpack.c.h.b16 %v1500
      %v1769 = vunpack.c.l.b16 %v1501
      %v1770 = vunpack.c.h.b16 %v1501
      %v1771 = vunpack.c.l.b16 %v1502
      %v1772 = vunpack.c.h.b16 %v1502
      %v1773 = vunpack.c.l.b16 %v1503
      %v1774 = vunpack.c.h.b16 %v1503
      %v1775 = vunpack.c.l.b16 %v1504
      %v1776 = vunpack.c.h.b16 %v1504
      %v1777 = vunpack.c.l.b16 %v1505
      %v1778 = vunpack.c.h.b16 %v1505
      %v1779 = vunpack.c.l.b16 %v1506
      %v1780 = vunpack.c.h.b16 %v1506
      %v1781 = vunpack.c.l.b16 %v1507
      %v1782 = vunpack.c.h.b16 %v1507
      %v1783 = vunpack.c.l.b16 %v1508
      %v1784 = vunpack.c.h.b16 %v1508
      %v1785 = vunpack.c.l.b16 %v1509
      %v1786 = vunpack.c.h.b16 %v1509
      %v1787 = vunpack.c.l.b16 %v1510
      %v1788 = vunpack.c.h.b16 %v1510
      %v1789 = vunpack.c.l.b16 %v1511
      %v1790 = vunpack.c.h.b16 %v1511
      %v1791 = vunpack.c.l.b16 %v1512
      %v1792 = vunpack.c.h.b16 %v1512
      %v1793 = vunpack.c.l.b16 %v1513
      %v1794 = vunpack.c.h.b16 %v1513
      %v1795 = vunpack.c.l.b16 %v1514
      %v1796 = vunpack.c.h.b16 %v1514
      %v1797 = vunpack.c.l.b16 %v1515
      %v1798 = vunpack.c.h.b16 %v1515
      %v1799 = vunpack.c.l.b16 %v1516
      %v1800 = vunpack.c.h.b16 %v1516
      %v1801 = vunpack.c.l.b16 %v1517
      %v1802 = vunpack.c.h.b16 %v1517
      %v1803 = vunpack.c.l.b16 %v1518
      %v1804 = vunpack.c.h.b16 %v1518
      %v1805 = vunpack.c.l.b16 %v1519
      %v1806 = vunpack.c.h.b16 %v1519
      %v1807 = vunpack.c.l.b16 %v1520
      %v1808 = vunpack.c.h.b16 %v1520
      %v1809 = vunpack.c.l.b16 %v1521
      %v1810 = vunpack.c.h.b16 %v1521
      %v1811 = vunpack.c.l.b16 %v1522
      %v1812 = vunpack.c.h.b16 %v1522
      %v1813 = vunpack.c.l.b16 %v1523
      %v1814 = vunpack.c.h.b16 %v1523
      %v1815 = vunpack.c.l.b16 %v1524
      %v1816 = vunpack.c.h.b16 %v1524
      %v1817 = vunpack.c.l.b16 %v1525
      %v1818 = vunpack.c.h.b16 %v1525
      %v1819 = vunpack.c.l.b16 %v1526
      %v1820 = vunpack.c.h.b16 %v1526
      %v1821 = vpack.c.b16 %v1737, %v1733
      %v1822 = vpack.c.b16 %v1738, %v1734
      %v1823 = vpack.c.b16 %v1739, %v1735
      %v1824 = vpack.c.b16 %v1740, %v1736
      %v1825 = vpack.c.b16 %v1745, %v1741
      %v1826 = vpack.c.b16 %v1746, %v1742
      %v1827 = vpack.c.b16 %v1747, %v1743
      %v1828 = vpack.c.b16 %v1748, %v1744
      %v1829 = vpack.c.b16 %v1753, %v1749
      %v1830 = vpack.c.b16 %v1754, %v1750
      %v1831 = vpack.c.b16 %v1755, %v1751
      %v1832 = vpack.c.b16 %v1756, %v1752
      %v1833 = vpack.c.b16 %v1761, %v1757
      %v1834 = vpack.c.b16 %v1762, %v1758
      %v1835 = vpack.c.b16 %v1763, %v1759
      %v1836 = vpack.c.b16 %v1764, %v1760
      %v1837 = vpack.c.b16 %v1769, %v1765
      %v1838 = vpack.c.b16 %v1770, %v1766
      %v1839 = vpack.c.b16 %v1771, %v1767
      %v1840 = vpack.c.b16 %v1772, %v1768
      %v1841 = vpack.c.b16 %v1777, %v1773
      %v1842 = vpack.c.b16 %v1778, %v1774
      %v1843 = vpack.c.b16 %v1779, %v1775
      %v1844 = vpack.c.b16 %v1780, %v1776
      %v1845 = vpack.c.b16 %v1785, %v1781
      %v1846 = vpack.c.b16 %v1786, %v1782
      %v1847 = vpack.c.b16 %v1787, %v1783
      %v1848 = vpack.c.b16 %v1788, %v1784
      %v1849 = vpack.c.b16 %v1793, %v1789
      %v1850 = vpack.c.b16 %v1794, %v1790
      %v1851 = vpack.c.b16 %v1795, %v1791
      %v1852 = vpack.c.b16 %v1796, %v1792
      %v1853 = vpack.c.b16 %v1801, %v1797
      %v1854 = vpack.c.b16 %v1802, %v1798
      %v1855 = vpack.c.b16 %v1803, %v1799
      %v1856 = vpack.c.b16 %v1804, %v1800
      %v1857 = vpack.c.b16 %v1809, %v1805
      %v1858 = vpack.c.b16 %v1810, %v1806
      %v1859 = vpack.c.b16 %v1811, %v1807
      %v1860 = vpack.c.b16 %v1812, %v1808
      %v1861 = vpack.c.b16 %v1817, %v1813
      %v1862 = vpack.c.b16 %v1818, %v1814
      %v1863 = vpack.c.b16 %v1819, %v1815
      %v1864 = vpack.c.b16 %v1820, %v1816
      %v1899 = vsel %vm1031, %v1824, 0
      %v1902 = vsel %vm1031, %v1828, 0
      %v1905 = vsel %vm1031, %v1832, 0
      %v1908 = vsel %vm1031, %v1836, 0
      %v1911 = vsel %vm1031, %v1840, 0
      %v1914 = vsel %vm1031, %v1844, 0
      %v1917 = vsel %vm1031, %v1848, 0
      %v1920 = vsel %vm1031, %v1852, 0
      %v1923 = vsel %vm1031, %v1856, 0
      %v1926 = vsel %vm1031, %v1860, 0
      %v1929 = vsel %vm1031, %v1864, 0
      %1931 = vmatprep.subr.bf16.mxu0 0
      %1932 = vmatpush1.bf16.msra.mxu0 %v1527
      %1933 = vmatprep.subr.bf16.mxu0 0
      %1934 = vmatpush1.bf16.msra.mxu0 %v1528
      %1935 = vmatprep.subr.bf16.mxu0 0
      %1936 = vmatpush1.bf16.msra.mxu0 %v1529
      %1937 = vmatprep.subr.bf16.mxu0 0
      %1938 = vmatpush1.bf16.msra.mxu0 %v1530
      %1939 = vmatprep.subr.bf16.mxu0 0
      %1940 = vmatpush1.bf16.msra.mxu0 %v1531
      %1941 = vmatprep.subr.bf16.mxu0 0
      %1942 = vmatpush1.bf16.msra.mxu0 %v1532
      %1943 = vmatprep.subr.bf16.mxu0 0
      %1944 = vmatpush1.bf16.msra.mxu0 %v1533
      %1945 = vmatprep.subr.bf16.mxu0 0
      %1946 = vmatpush1.bf16.msra.mxu0 %v1534
      %1947 = vmatprep.subr.bf16.mxu0 0
      %1948 = vmatpush1.bf16.msra.mxu0 %v1535
      %1949 = vmatprep.subr.bf16.mxu0 0
      %1950 = vmatpush1.bf16.msra.mxu0 %v1536
      %1951 = vmatprep.subr.bf16.mxu0 0
      %1952 = vmatpush1.bf16.msra.mxu0 %v1537
      %1953 = vmatprep.subr.bf16.mxu0 0
      %1954 = vmatpush1.bf16.msra.mxu0 %v1538
      %1955 = vmatprep.subr.bf16.mxu0 0
      %1956 = vmatpush1.bf16.msra.mxu0 %v1539
      %1957 = vmatprep.subr.bf16.mxu0 0
      %1958 = vmatpush1.bf16.msra.mxu0 %v1540
      %1959 = vmatprep.subr.bf16.mxu0 0
      %1960 = vmatpush1.bf16.msra.mxu0 %v1541
      %1961 = vmatprep.subr.bf16.mxu0 0
      %1962 = vmatpush1.bf16.msra.mxu0 %v1542
      %1963 = vmatprep.mubr.bf16.mxu0 %v1822
      %1964 = vmatmul.mubr.bf16.gmra.mrb[0].mxu0 %v1821
      %v1965 = vpop.f32.mrb[0].mxu0
      %v1966 = vadd.f32 %v1582, %v1965
      %v1967 = vpop.f32.mrb[0].mxu0
      %v1968 = vpop.f32.mrb[0].mxu0
      %v1969 = vadd.f32 %v1587, %v1968
      %v1970 = vpop.f32.mrb[0].mxu0
      %1971 = vmatprep.mubr.bf16.mxu0 %v1826
      %1972 = vmatmul.mubr.bf16.gmra.mrb[0].mxu0 %v1825
      %v1973 = vpop.f32.mrb[0].mxu0
      %v1974 = vadd.f32 %v1592, %v1973
      %v1975 = vpop.f32.mrb[0].mxu0
      %v1976 = vpop.f32.mrb[0].mxu0
      %v1977 = vadd.f32 %v1597, %v1976
      %v1978 = vpop.f32.mrb[0].mxu0
      %1979 = vmatprep.mubr.bf16.mxu0 %v1830
      %1980 = vmatmul.mubr.bf16.gmra.mrb[0].mxu0 %v1829
      %v1981 = vpop.f32.mrb[0].mxu0
      %v1982 = vadd.f32 %v1602, %v1981
      %v1983 = vpop.f32.mrb[0].mxu0
      %v1984 = vpop.f32.mrb[0].mxu0
      %v1985 = vadd.f32 %v1607, %v1984
      %v1986 = vpop.f32.mrb[0].mxu0
      %1987 = vmatprep.mubr.bf16.mxu0 %v1834
      %1988 = vmatmul.mubr.bf16.gmra.mrb[0].mxu0 %v1833
      %v1989 = vpop.f32.mrb[0].mxu0
      %v1990 = vadd.f32 %v1612, %v1989
      %v1991 = vpop.f32.mrb[0].mxu0
      %v1992 = vpop.f32.mrb[0].mxu0
      %v1993 = vadd.f32 %v1617, %v1992
      %v1994 = vpop.f32.mrb[0].mxu0
      %1995 = vmatprep.mubr.bf16.mxu0 %v1838
      %1996 = vmatmul.mubr.bf16.gmra.mrb[0].mxu0 %v1837
      %v1997 = vpop.f32.mrb[0].mxu0
      %v1998 = vadd.f32 %v1622, %v1997
      %v1999 = vpop.f32.mrb[0].mxu0
      %v2000 = vpop.f32.mrb[0].mxu0
      %v2001 = vadd.f32 %v1627, %v2000
      %v2002 = vpop.f32.mrb[0].mxu0
      %2003 = vmatprep.mubr.bf16.mxu0 %v1842
      %2004 = vmatmul.mubr.bf16.gmra.mrb[0].mxu0 %v1841
      %v2005 = vpop.f32.mrb[0].mxu0
      %v2006 = vadd.f32 %v1632, %v2005
      %v2007 = vpop.f32.mrb[0].mxu0
      %v2008 = vpop.f32.mrb[0].mxu0
      %v2009 = vadd.f32 %v1637, %v2008
      %v2010 = vpop.f32.mrb[0].mxu0
      %2011 = vmatprep.mubr.bf16.mxu0 %v1846
      %2012 = vmatmul.mubr.bf16.gmra.mrb[0].mxu0 %v1845
      %v2013 = vpop.f32.mrb[0].mxu0
      %v2014 = vadd.f32 %v1642, %v2013
      %v2015 = vpop.f32.mrb[0].mxu0
      %v2016 = vpop.f32.mrb[0].mxu0
      %v2017 = vadd.f32 %v1647, %v2016
      %v2018 = vpop.f32.mrb[0].mxu0
      %2019 = vmatprep.mubr.bf16.mxu0 %v1850
      %2020 = vmatmul.mubr.bf16.gmra.mrb[0].mxu0 %v1849
      %v2021 = vpop.f32.mrb[0].mxu0
      %v2022 = vadd.f32 %v1652, %v2021
      %v2023 = vpop.f32.mrb[0].mxu0
      %v2024 = vpop.f32.mrb[0].mxu0
      %v2025 = vadd.f32 %v1657, %v2024
      %v2026 = vpop.f32.mrb[0].mxu0
      %2027 = vmatprep.mubr.bf16.mxu0 %v1854
      %2028 = vmatmul.mubr.bf16.gmra.mrb[0].mxu0 %v1853
      %v2029 = vpop.f32.mrb[0].mxu0
      %v2030 = vadd.f32 %v1662, %v2029
      %v2031 = vpop.f32.mrb[0].mxu0
      %v2032 = vpop.f32.mrb[0].mxu0
      %v2033 = vadd.f32 %v1667, %v2032
      %v2034 = vpop.f32.mrb[0].mxu0
      %2035 = vmatprep.mubr.bf16.mxu0 %v1858
      %2036 = vmatmul.mubr.bf16.gmra.mrb[0].mxu0 %v1857
      %v2037 = vpop.f32.mrb[0].mxu0
      %v2038 = vadd.f32 %v1672, %v2037
      %v2039 = vpop.f32.mrb[0].mxu0
      %v2040 = vpop.f32.mrb[0].mxu0
      %v2041 = vadd.f32 %v1677, %v2040
      %v2042 = vpop.f32.mrb[0].mxu0
      %2043 = vmatprep.mubr.bf16.mxu0 %v1862
      %2044 = vmatmul.mubr.bf16.gmra.mrb[0].mxu0 %v1861
      %v2045 = vpop.f32.mrb[0].mxu0
      %v2046 = vadd.f32 %v1682, %v2045
      %v2047 = vpop.f32.mrb[0].mxu0
      %v2048 = vpop.f32.mrb[0].mxu0
      %v2049 = vadd.f32 %v1687, %v2048
      %v2050 = vpop.f32.mrb[0].mxu0
      %2051 = vdwg.mxu0
      %2052 = vmatprep.subr.bf16.mxu0 0
      %2053 = vmatpush1.bf16.msra.mxu0 %v1543
      %2054 = vmatprep.subr.bf16.mxu0 0
      %2055 = vmatpush1.bf16.msra.mxu0 %v1544
      %2056 = vmatprep.subr.bf16.mxu0 0
      %2057 = vmatpush1.bf16.msra.mxu0 %v1545
      %2058 = vmatprep.subr.bf16.mxu0 0
      %2059 = vmatpush1.bf16.msra.mxu0 %v1546
      %2060 = vmatprep.subr.bf16.mxu0 0
      %2061 = vmatpush1.bf16.msra.mxu0 %v1547
      %2062 = vmatprep.subr.bf16.mxu0 0
      %2063 = vmatpush1.bf16.msra.mxu0 %v1548
      %2064 = vmatprep.subr.bf16.mxu0 0
      %2065 = vmatpush1.bf16.msra.mxu0 %v1549
      %2066 = vmatprep.subr.bf16.mxu0 0
      %2067 = vmatpush1.bf16.msra.mxu0 %v1550
      %2068 = vmatprep.subr.bf16.mxu0 0
      %2069 = vmatpush1.bf16.msra.mxu0 %v1551
      %2070 = vmatprep.subr.bf16.mxu0 0
      %2071 = vmatpush1.bf16.msra.mxu0 %v1552
      %2072 = vmatprep.subr.bf16.mxu0 0
      %2073 = vmatpush1.bf16.msra.mxu0 %v1553
      %2074 = vmatprep.subr.bf16.mxu0 0
      %2075 = vmatpush1.bf16.msra.mxu0 %v1554
      %2076 = vmatprep.subr.bf16.mxu0 0
      %2077 = vmatpush1.bf16.msra.mxu0 %v1555
      %2078 = vmatprep.subr.bf16.mxu0 0
      %2079 = vmatpush1.bf16.msra.mxu0 %v1556
      %2080 = vmatprep.subr.bf16.mxu0 0
      %2081 = vmatpush1.bf16.msra.mxu0 0
      %2082 = vmatprep.subr.bf16.mxu0 0
      %2083 = vmatpush1.bf16.msra.mxu0 0
      %2084 = vmatprep.mubr.bf16.mxu0 %v1899
      %2085 = vmatmul.mubr.bf16.gmra.mrb[0].mxu0 %v1823
      %v2086 = vpop.f32.mrb[0].mxu0
      %v2087 = vadd.f32 %v1966, %v2086
      %v2088 = vpop.f32.mrb[0].mxu0
      %v2089 = vpop.f32.mrb[0].mxu0
      %v2090 = vadd.f32 %v1969, %v2089
      %v2091 = vpop.f32.mrb[0].mxu0
      %2092 = vmatprep.mubr.bf16.mxu0 %v1902
      %2093 = vmatmul.mubr.bf16.gmra.mrb[0].mxu0 %v1827
      %v2094 = vpop.f32.mrb[0].mxu0
      %v2095 = vadd.f32 %v1974, %v2094
      %v2096 = vpop.f32.mrb[0].mxu0
      %v2097 = vpop.f32.mrb[0].mxu0
      %v2098 = vadd.f32 %v1977, %v2097
      %v2099 = vpop.f32.mrb[0].mxu0
      %2100 = vmatprep.mubr.bf16.mxu0 %v1905
      %2101 = vmatmul.mubr.bf16.gmra.mrb[0].mxu0 %v1831
      %v2102 = vpop.f32.mrb[0].mxu0
      %v2103 = vadd.f32 %v1982, %v2102
      %v2104 = vpop.f32.mrb[0].mxu0
      %v2105 = vpop.f32.mrb[0].mxu0
      %v2106 = vadd.f32 %v1985, %v2105
      %v2107 = vpop.f32.mrb[0].mxu0
      %2108 = vmatprep.mubr.bf16.mxu0 %v1908
      %2109 = vmatmul.mubr.bf16.gmra.mrb[0].mxu0 %v1835
      %v2110 = vpop.f32.mrb[0].mxu0
      %v2111 = vadd.f32 %v1990, %v2110
      %v2112 = vpop.f32.mrb[0].mxu0
      %v2113 = vpop.f32.mrb[0].mxu0
      %v2114 = vadd.f32 %v1993, %v2113
      %v2115 = vpop.f32.mrb[0].mxu0
      %2116 = vmatprep.mubr.bf16.mxu0 %v1911
      %2117 = vmatmul.mubr.bf16.gmra.mrb[0].mxu0 %v1839
      %v2118 = vpop.f32.mrb[0].mxu0
      %v2119 = vadd.f32 %v1998, %v2118
      %v2120 = vpop.f32.mrb[0].mxu0
      %v2121 = vpop.f32.mrb[0].mxu0
      %v2122 = vadd.f32 %v2001, %v2121
      %v2123 = vpop.f32.mrb[0].mxu0
      %2124 = vmatprep.mubr.bf16.mxu0 %v1914
      %2125 = vmatmul.mubr.bf16.gmra.mrb[0].mxu0 %v1843
      %v2126 = vpop.f32.mrb[0].mxu0
      %v2127 = vadd.f32 %v2006, %v2126
      %v2128 = vpop.f32.mrb[0].mxu0
      %v2129 = vpop.f32.mrb[0].mxu0
      %v2130 = vadd.f32 %v2009, %v2129
      %v2131 = vpop.f32.mrb[0].mxu0
      %2132 = vmatprep.mubr.bf16.mxu0 %v1917
      %2133 = vmatmul.mubr.bf16.gmra.mrb[0].mxu0 %v1847
      %v2134 = vpop.f32.mrb[0].mxu0
      %v2135 = vadd.f32 %v2014, %v2134
      %v2136 = vpop.f32.mrb[0].mxu0
      %v2137 = vpop.f32.mrb[0].mxu0
      %v2138 = vadd.f32 %v2017, %v2137
      %v2139 = vpop.f32.mrb[0].mxu0
      %2140 = vmatprep.mubr.bf16.mxu0 %v1920
      %2141 = vmatmul.mubr.bf16.gmra.mrb[0].mxu0 %v1851
      %v2142 = vpop.f32.mrb[0].mxu0
      %v2143 = vadd.f32 %v2022, %v2142
      %v2144 = vpop.f32.mrb[0].mxu0
      %v2145 = vpop.f32.mrb[0].mxu0
      %v2146 = vadd.f32 %v2025, %v2145
      %v2147 = vpop.f32.mrb[0].mxu0
      %2148 = vmatprep.mubr.bf16.mxu0 %v1923
      %2149 = vmatmul.mubr.bf16.gmra.mrb[0].mxu0 %v1855
      %v2150 = vpop.f32.mrb[0].mxu0
      %v2151 = vadd.f32 %v2030, %v2150
      %v2152 = vpop.f32.mrb[0].mxu0
      %v2153 = vpop.f32.mrb[0].mxu0
      %v2154 = vadd.f32 %v2033, %v2153
      %v2155 = vpop.f32.mrb[0].mxu0
      %2156 = vmatprep.mubr.bf16.mxu0 %v1926
      %2157 = vmatmul.mubr.bf16.gmra.mrb[0].mxu0 %v1859
      %v2158 = vpop.f32.mrb[0].mxu0
      %v2159 = vadd.f32 %v2038, %v2158
      %v2160 = vpop.f32.mrb[0].mxu0
      %v2161 = vpop.f32.mrb[0].mxu0
      %v2162 = vadd.f32 %v2041, %v2161
      %v2163 = vpop.f32.mrb[0].mxu0
      %2164 = vmatprep.mubr.bf16.mxu0 %v1929
      %2165 = vmatmul.mubr.bf16.gmra.mrb[0].mxu0 %v1863
      %v2166 = vpop.f32.mrb[0].mxu0
      %v2167 = vadd.f32 %v2046, %v2166
      %v2168 = vpop.f32.mrb[0].mxu0
      %v2169 = vpop.f32.mrb[0].mxu0
      %v2170 = vadd.f32 %v2049, %v2169
      %v2171 = vpop.f32.mrb[0].mxu0
      %2172 = vdwg.mxu0
      %v2173 = vxor.u32 %v2087, 2147483648
      %v2174 = vxor.u32 %v2090, 2147483648
      %v2175 = vxor.u32 %v2095, 2147483648
      %v2176 = vxor.u32 %v2098, 2147483648
      %v2177 = vxor.u32 %v2103, 2147483648
      %v2178 = vxor.u32 %v2106, 2147483648
      %v2179 = vxor.u32 %v2111, 2147483648
      %v2180 = vxor.u32 %v2114, 2147483648
      %v2181 = vxor.u32 %v2119, 2147483648
      %v2182 = vxor.u32 %v2122, 2147483648
      %v2183 = vxor.u32 %v2127, 2147483648
      %v2184 = vxor.u32 %v2130, 2147483648
      %v2185 = vxor.u32 %v2135, 2147483648
      %v2186 = vxor.u32 %v2138, 2147483648
      %v2187 = vxor.u32 %v2143, 2147483648
      %v2188 = vxor.u32 %v2146, 2147483648
      %v2189 = vxor.u32 %v2151, 2147483648
      %v2190 = vxor.u32 %v2154, 2147483648
      %v2191 = vxor.u32 %v2159, 2147483648
      %v2192 = vxor.u32 %v2162, 2147483648
      %v2193 = vxor.u32 %v2167, 2147483648
      %v2194 = vxor.u32 %v2170, 2147483648
      %v2195 = vmul.f32 %v2173, 1.442695
      %v2196 = vpow.pop %v2195
      %v2197 = vmul.f32 %v2174, 1.442695
      %v2198 = vpow.pop %v2197
      %v2199 = vmul.f32 %v2175, 1.442695
      %v2200 = vpow.pop %v2199
      %v2201 = vmul.f32 %v2176, 1.442695
      %v2202 = vpow.pop %v2201
      %v2203 = vmul.f32 %v2177, 1.442695
      %v2204 = vpow.pop %v2203
      %v2205 = vmul.f32 %v2178, 1.442695
      %v2206 = vpow.pop %v2205
      %v2207 = vmul.f32 %v2179, 1.442695
      %v2208 = vpow.pop %v2207
      %v2209 = vmul.f32 %v2180, 1.442695
      %v2210 = vpow.pop %v2209
      %v2211 = vmul.f32 %v2181, 1.442695
      %v2212 = vpow.pop %v2211
      %v2213 = vmul.f32 %v2182, 1.442695
      %v2214 = vpow.pop %v2213
      %v2215 = vmul.f32 %v2183, 1.442695
      %v2216 = vpow.pop %v2215
      %v2217 = vmul.f32 %v2184, 1.442695
      %v2218 = vpow.pop %v2217
      %v2219 = vmul.f32 %v2185, 1.442695
      %v2220 = vpow.pop %v2219
      %v2221 = vmul.f32 %v2186, 1.442695
      %v2222 = vpow.pop %v2221
      %v2223 = vmul.f32 %v2187, 1.442695
      %v2224 = vpow.pop %v2223
      %v2225 = vmul.f32 %v2188, 1.442695
      %v2226 = vpow.pop %v2225
      %v2227 = vmul.f32 %v2189, 1.442695
      %v2228 = vpow.pop %v2227
      %v2229 = vmul.f32 %v2190, 1.442695
      %v2230 = vpow.pop %v2229
      %v2231 = vmul.f32 %v2191, 1.442695
      %v2232 = vpow.pop %v2231
      %v2233 = vmul.f32 %v2192, 1.442695
      %v2234 = vpow.pop %v2233
      %v2235 = vmul.f32 %v2193, 1.442695
      %v2236 = vpow.pop %v2235
      %v2237 = vmul.f32 %v2194, 1.442695
      %v2238 = vpow.pop %v2237
      %v2239 = vadd.f32 %v2196, 1.0
      %v2240 = vadd.f32 %v2198, 1.0
      %v2241 = vadd.f32 %v2200, 1.0
      %v2242 = vadd.f32 %v2202, 1.0
      %v2243 = vadd.f32 %v2204, 1.0
      %v2244 = vadd.f32 %v2206, 1.0
      %v2245 = vadd.f32 %v2208, 1.0
      %v2246 = vadd.f32 %v2210, 1.0
      %v2247 = vadd.f32 %v2212, 1.0
      %v2248 = vadd.f32 %v2214, 1.0
      %v2249 = vadd.f32 %v2216, 1.0
      %v2250 = vadd.f32 %v2218, 1.0
      %v2251 = vadd.f32 %v2220, 1.0
      %v2252 = vadd.f32 %v2222, 1.0
      %v2253 = vadd.f32 %v2224, 1.0
      %v2254 = vadd.f32 %v2226, 1.0
      %v2255 = vadd.f32 %v2228, 1.0
      %v2256 = vadd.f32 %v2230, 1.0
      %v2257 = vadd.f32 %v2232, 1.0
      %v2258 = vadd.f32 %v2234, 1.0
      %v2259 = vadd.f32 %v2236, 1.0
      %v2260 = vadd.f32 %v2238, 1.0
      %v2261 = vrcp.pop %v2239
      %v2262 = vmul.f32 1.0, %v2261
      %v2263 = vrcp.pop %v2240
      %v2264 = vmul.f32 1.0, %v2263
      %v2265 = vrcp.pop %v2241
      %v2266 = vmul.f32 1.0, %v2265
      %v2267 = vrcp.pop %v2242
      %v2268 = vmul.f32 1.0, %v2267
      %v2269 = vrcp.pop %v2243
      %v2270 = vmul.f32 1.0, %v2269
      %v2271 = vrcp.pop %v2244
      %v2272 = vmul.f32 1.0, %v2271
      %v2273 = vrcp.pop %v2245
      %v2274 = vmul.f32 1.0, %v2273
      %v2275 = vrcp.pop %v2246
      %v2276 = vmul.f32 1.0, %v2275
      %v2277 = vrcp.pop %v2247
      %v2278 = vmul.f32 1.0, %v2277
      %v2279 = vrcp.pop %v2248
      %v2280 = vmul.f32 1.0, %v2279
      %v2281 = vrcp.pop %v2249
      %v2282 = vmul.f32 1.0, %v2281
      %v2283 = vrcp.pop %v2250
      %v2284 = vmul.f32 1.0, %v2283
      %v2285 = vrcp.pop %v2251
      %v2286 = vmul.f32 1.0, %v2285
      %v2287 = vrcp.pop %v2252
      %v2288 = vmul.f32 1.0, %v2287
      %v2289 = vrcp.pop %v2253
      %v2290 = vmul.f32 1.0, %v2289
      %v2291 = vrcp.pop %v2254
      %v2292 = vmul.f32 1.0, %v2291
      %v2293 = vrcp.pop %v2255
      %v2294 = vmul.f32 1.0, %v2293
      %v2295 = vrcp.pop %v2256
      %v2296 = vmul.f32 1.0, %v2295
      %v2297 = vrcp.pop %v2257
      %v2298 = vmul.f32 1.0, %v2297
      %v2299 = vrcp.pop %v2258
      %v2300 = vmul.f32 1.0, %v2299
      %v2301 = vrcp.pop %v2259
      %v2302 = vmul.f32 1.0, %v2301
      %v2303 = vrcp.pop %v2260
      %v2304 = vmul.f32 1.0, %v2303
      %v2305 = vmul.f32 %v2087, %v2262
      %v2306 = vmul.f32 %v2090, %v2264
      %v2307 = vmul.f32 %v2095, %v2266
      %v2308 = vmul.f32 %v2098, %v2268
      %v2309 = vmul.f32 %v2103, %v2270
      %v2310 = vmul.f32 %v2106, %v2272
      %v2311 = vmul.f32 %v2111, %v2274
      %v2312 = vmul.f32 %v2114, %v2276
      %v2313 = vmul.f32 %v2119, %v2278
      %v2314 = vmul.f32 %v2122, %v2280
      %v2315 = vmul.f32 %v2127, %v2282
      %v2316 = vmul.f32 %v2130, %v2284
      %v2317 = vmul.f32 %v2135, %v2286
      %v2318 = vmul.f32 %v2138, %v2288
      %v2319 = vmul.f32 %v2143, %v2290
      %v2320 = vmul.f32 %v2146, %v2292
      %v2321 = vmul.f32 %v2151, %v2294
      %v2322 = vmul.f32 %v2154, %v2296
      %v2323 = vmul.f32 %v2159, %v2298
      %v2324 = vmul.f32 %v2162, %v2300
      %v2325 = vmul.f32 %v2167, %v2302
      %v2326 = vmul.f32 %v2170, %v2304
      %v2327 = vpack.c.bf16 %v2306, %v2305
      %v2328 = vpack.c.bf16 %v2308, %v2307
      %v2329 = vpack.c.bf16 %v2310, %v2309
      %v2330 = vpack.c.bf16 %v2312, %v2311
      %v2331 = vpack.c.bf16 %v2314, %v2313
      %v2332 = vpack.c.bf16 %v2316, %v2315
      %v2333 = vpack.c.bf16 %v2318, %v2317
      %v2334 = vpack.c.bf16 %v2320, %v2319
      %v2335 = vpack.c.bf16 %v2322, %v2321
      %v2336 = vpack.c.bf16 %v2324, %v2323
      %v2337 = vpack.c.bf16 %v2326, %v2325
      %2338 = vst [vmem:[#allocation3 + $0x58] sm:$0xff] %v2327
      %2339 = vst [vmem:[#allocation3 + $0x60] sm:$0xff] %v2328
      %2340 = vst [vmem:[#allocation3 + $0x68] sm:$0xff] %v2329
      %2341 = vst [vmem:[#allocation3 + $0x70] sm:$0xff] %v2330
      %2342 = vst [vmem:[#allocation3 + $0x78] sm:$0xff] %v2331
      %2343 = vst [vmem:[#allocation3 + $0x80] sm:$0xff] %v2332
      %2344 = vst [vmem:[#allocation3 + $0x88] sm:$0xff] %v2333
      %2345 = vst [vmem:[#allocation3 + $0x90] sm:$0xff] %v2334
      %2346 = vst [vmem:[#allocation3 + $0x98] sm:$0xff] %v2335
      %2347 = vst [vmem:[#allocation3 + $0xa0] sm:$0xff] %v2336
      %2348 = vst [vmem:[#allocation3 + $0xa8] sm:$0xff] %v2337
      %v2349 = vld [vmem:[%s1 + $0x2c0] sm:$0xff]
      %v2350 = vld [vmem:[%s1 + $0x2c8] sm:$0xff]
      %v2351 = vld [vmem:[%s1 + $0x2d0] sm:$0xff]
      %v2352 = vld [vmem:[%s1 + $0x2d8] sm:$0xff]
      %v2353 = vld [vmem:[%s1 + $0x2e0] sm:$0xff]
      %v2354 = vld [vmem:[%s1 + $0x2e8] sm:$0xff]
      %v2355 = vld [vmem:[%s1 + $0x2f0] sm:$0xff]
      %v2356 = vld [vmem:[%s1 + $0x2f8] sm:$0xff]
      %v2357 = vld [vmem:[%s1 + $0x300] sm:$0xff]
      %v2358 = vld [vmem:[%s1 + $0x308] sm:$0xff]
      %v2359 = vld [vmem:[%s1 + $0x310] sm:$0xff]
      %v2360 = vld [vmem:[%s1 + $0x318] sm:$0xff]
      %v2361 = vld [vmem:[%s1 + $0x320] sm:$0xff]
      %v2362 = vld [vmem:[%s1 + $0x328] sm:$0xff]
      %v2363 = vld [vmem:[%s1 + $0x330] sm:$0xff]
      %v2364 = vld [vmem:[%s1 + $0x338] sm:$0xff]
      %v2365 = vld [vmem:[%s1 + $0x340] sm:$0xff]
      %v2366 = vld [vmem:[%s1 + $0x348] sm:$0xff]
      %v2367 = vld [vmem:[%s1 + $0x350] sm:$0xff]
      %v2368 = vld [vmem:[%s1 + $0x358] sm:$0xff]
      %v2369 = vld [vmem:[%s1 + $0x360] sm:$0xff]
      %v2370 = vld [vmem:[%s1 + $0x368] sm:$0xff]
      %v2371 = vld [vmem:[%s1 + $0x370] sm:$0xff]
      %v2372 = vld [vmem:[%s1 + $0x378] sm:$0xff]
      %v2373 = vld [vmem:[%s1 + $0x380] sm:$0xff]
      %v2374 = vld [vmem:[%s1 + $0x388] sm:$0xff]
      %v2375 = vld [vmem:[%s1 + $0x390] sm:$0xff]
      %v2376 = vld [vmem:[%s1 + $0x398] sm:$0xff]
      %v2377 = vld [vmem:[%s1 + $0x3a0] sm:$0xff]
      %v2378 = vld [vmem:[%s1 + $0x3a8] sm:$0xff]
      %v2379 = vld [vmem:[%s1 + $0x3b0] sm:$0xff]
      %v2380 = vld [vmem:[%s1 + $0x3b8] sm:$0xff]
      %v2381 = vld [vmem:[%s1 + $0x3c0] sm:$0xff]
      %v2382 = vld [vmem:[%s1 + $0x3c8] sm:$0xff]
      %v2383 = vld [vmem:[%s1 + $0x3d0] sm:$0xff]
      %v2384 = vld [vmem:[%s1 + $0x3d8] sm:$0xff]
      %v2385 = vld [vmem:[%s1 + $0x3e0] sm:$0xff]
      %v2386 = vld [vmem:[%s1 + $0x3e8] sm:$0xff]
      %v2387 = vld [vmem:[%s1 + $0x3f0] sm:$0xff]
      %v2388 = vld [vmem:[%s1 + $0x3f8] sm:$0xff]
      %v2389 = vld [vmem:[%s1 + $0x400] sm:$0xff]
      %v2390 = vld [vmem:[%s1 + $0x408] sm:$0xff]
      %v2391 = vld [vmem:[%s1 + $0x410] sm:$0xff]
      %v2392 = vld [vmem:[%s1 + $0x418] sm:$0xff]
      %v2393 = vld [vmem:[#allocation2] sm:$0xff]
      %v2394 = vld [vmem:[#allocation2 + $0x8] sm:$0xff]
      %v2395 = vld [vmem:[#allocation2 + $0x10] sm:$0xff]
      %v2396 = vld [vmem:[#allocation2 + $0x18] sm:$0xff]
      %v2397 = vld [vmem:[#allocation2 + $0x20] sm:$0xff]
      %v2398 = vld [vmem:[#allocation2 + $0x28] sm:$0xff]
      %v2399 = vld [vmem:[#allocation2 + $0x30] sm:$0xff]
      %v2400 = vld [vmem:[#allocation2 + $0x38] sm:$0xff]
      %v2401 = vld [vmem:[#allocation2 + $0x40] sm:$0xff]
      %v2402 = vld [vmem:[#allocation2 + $0x48] sm:$0xff]
      %v2403 = vld [vmem:[#allocation2 + $0x50] sm:$0xff]
      %v2404 = vld [vmem:[#allocation2 + $0x58] sm:$0xff]
      %v2405 = vld [vmem:[#allocation2 + $0x60] sm:$0xff]
      %v2406 = vld [vmem:[#allocation2 + $0x68] sm:$0xff]
      %v2407 = vld [vmem:[#allocation2 + $0x70] sm:$0xff]
      %v2408 = vld [vmem:[#allocation2 + $0x78] sm:$0xff]
      %v2409 = vld [vmem:[#allocation2 + $0x80] sm:$0xff]
      %v2410 = vld [vmem:[#allocation2 + $0x88] sm:$0xff]
      %v2411 = vld [vmem:[#allocation2 + $0x90] sm:$0xff]
      %v2412 = vld [vmem:[#allocation2 + $0x98] sm:$0xff]
      %v2413 = vld [vmem:[#allocation2 + $0xa0] sm:$0xff]
      %v2414 = vld [vmem:[#allocation2 + $0xa8] sm:$0xff]
      %v2415 = vld [vmem:[#allocation2 + $0xb0] sm:$0xff]
      %v2416 = vld [vmem:[#allocation2 + $0xb8] sm:$0xff]
      %v2417 = vld [vmem:[#allocation2 + $0xc0] sm:$0xff]
      %v2418 = vld [vmem:[#allocation2 + $0xc8] sm:$0xff]
      %v2419 = vld [vmem:[#allocation2 + $0xd0] sm:$0xff]
      %v2420 = vld [vmem:[#allocation2 + $0xd8] sm:$0xff]
      %v2421 = vld [vmem:[#allocation2 + $0xe0] sm:$0xff]
      %v2422 = vld [vmem:[#allocation2 + $0xe8] sm:$0xff]
      %v2423 = vld [vmem:[%s2 + $0x160] sm:$0xff]
      %v2424 = vld [vmem:[%s2 + $0x168] sm:$0xff]
      %v2425 = vld [vmem:[%s2 + $0x170] sm:$0xff]
      %v2426 = vld [vmem:[%s2 + $0x178] sm:$0xff]
      %v2427 = vld [vmem:[%s2 + $0x180] sm:$0xff]
      %v2428 = vld [vmem:[%s2 + $0x188] sm:$0xff]
      %v2429 = vld [vmem:[%s2 + $0x190] sm:$0xff]
      %v2430 = vld [vmem:[%s2 + $0x198] sm:$0xff]
      %v2431 = vld [vmem:[%s2 + $0x1a0] sm:$0xff]
      %v2432 = vld [vmem:[%s2 + $0x1a8] sm:$0xff]
      %v2433 = vld [vmem:[%s2 + $0x1b0] sm:$0xff]
      %v2434 = vld [vmem:[%s2 + $0x1b8] sm:$0xff]
      %v2435 = vld [vmem:[%s2 + $0x1c0] sm:$0xff]
      %v2436 = vld [vmem:[%s2 + $0x1c8] sm:$0xff]
      %v2437 = vld [vmem:[%s2 + $0x1d0] sm:$0xff]
      %v2438 = vld [vmem:[%s2 + $0x1d8] sm:$0xff]
      %v2439 = vld [vmem:[%s2 + $0x1e0] sm:$0xff]
      %v2440 = vld [vmem:[%s2 + $0x1e8] sm:$0xff]
      %v2441 = vld [vmem:[%s2 + $0x1f0] sm:$0xff]
      %v2442 = vld [vmem:[%s2 + $0x1f8] sm:$0xff]
      %v2443 = vld [vmem:[%s2 + $0x200] sm:$0xff]
      %v2444 = vld [vmem:[%s2 + $0x208] sm:$0xff]
      %2446 = vset.pattern.permute.xlu0 0
      %2447 = vperm.xlu0 %2446, %v2423
      %v2448 = vpop.permute.xlu0 %2447
      %2451 = vset.pattern.permute.xlu0 0
      %2452 = vperm.xlu0 %2451, %v2424
      %v2453 = vpop.permute.xlu0 %2452
      %2456 = vset.pattern.permute.xlu0 0
      %2457 = vperm.xlu0 %2456, %v2425
      %v2458 = vpop.permute.xlu0 %2457
      %2461 = vset.pattern.permute.xlu0 0
      %2462 = vperm.xlu0 %2461, %v2426
      %v2463 = vpop.permute.xlu0 %2462
      %2466 = vset.pattern.permute.xlu0 0
      %2467 = vperm.xlu0 %2466, %v2427
      %v2468 = vpop.permute.xlu0 %2467
      %2471 = vset.pattern.permute.xlu0 0
      %2472 = vperm.xlu0 %2471, %v2428
      %v2473 = vpop.permute.xlu0 %2472
      %2476 = vset.pattern.permute.xlu0 0
      %2477 = vperm.xlu0 %2476, %v2429
      %v2478 = vpop.permute.xlu0 %2477
      %2481 = vset.pattern.permute.xlu0 0
      %2482 = vperm.xlu0 %2481, %v2430
      %v2483 = vpop.permute.xlu0 %2482
      %2486 = vset.pattern.permute.xlu0 0
      %2487 = vperm.xlu0 %2486, %v2431
      %v2488 = vpop.permute.xlu0 %2487
      %2491 = vset.pattern.permute.xlu0 0
      %2492 = vperm.xlu0 %2491, %v2432
      %v2493 = vpop.permute.xlu0 %2492
      %2496 = vset.pattern.permute.xlu0 0
      %2497 = vperm.xlu0 %2496, %v2433
      %v2498 = vpop.permute.xlu0 %2497
      %2501 = vset.pattern.permute.xlu0 0
      %2502 = vperm.xlu0 %2501, %v2434
      %v2503 = vpop.permute.xlu0 %2502
      %2506 = vset.pattern.permute.xlu0 0
      %2507 = vperm.xlu0 %2506, %v2435
      %v2508 = vpop.permute.xlu0 %2507
      %2511 = vset.pattern.permute.xlu0 0
      %2512 = vperm.xlu0 %2511, %v2436
      %v2513 = vpop.permute.xlu0 %2512
      %2516 = vset.pattern.permute.xlu0 0
      %2517 = vperm.xlu0 %2516, %v2437
      %v2518 = vpop.permute.xlu0 %2517
      %2521 = vset.pattern.permute.xlu0 0
      %2522 = vperm.xlu0 %2521, %v2438
      %v2523 = vpop.permute.xlu0 %2522
      %2526 = vset.pattern.permute.xlu0 0
      %2527 = vperm.xlu0 %2526, %v2439
      %v2528 = vpop.permute.xlu0 %2527
      %2531 = vset.pattern.permute.xlu0 0
      %2532 = vperm.xlu0 %2531, %v2440
      %v2533 = vpop.permute.xlu0 %2532
      %2536 = vset.pattern.permute.xlu0 0
      %2537 = vperm.xlu0 %2536, %v2441
      %v2538 = vpop.permute.xlu0 %2537
      %2541 = vset.pattern.permute.xlu0 0
      %2542 = vperm.xlu0 %2541, %v2442
      %v2543 = vpop.permute.xlu0 %2542
      %2546 = vset.pattern.permute.xlu0 0
      %2547 = vperm.xlu0 %2546, %v2443
      %v2548 = vpop.permute.xlu0 %2547
      %2551 = vset.pattern.permute.xlu0 0
      %2552 = vperm.xlu0 %2551, %v2444
      %v2553 = vpop.permute.xlu0 %2552
      %v2599 = vunpack.c.l.b16 %v2349
      %v2600 = vunpack.c.h.b16 %v2349
      %v2601 = vunpack.c.l.b16 %v2350
      %v2602 = vunpack.c.h.b16 %v2350
      %v2603 = vunpack.c.l.b16 %v2351
      %v2604 = vunpack.c.h.b16 %v2351
      %v2605 = vunpack.c.l.b16 %v2352
      %v2606 = vunpack.c.h.b16 %v2352
      %v2607 = vunpack.c.l.b16 %v2353
      %v2608 = vunpack.c.h.b16 %v2353
      %v2609 = vunpack.c.l.b16 %v2354
      %v2610 = vunpack.c.h.b16 %v2354
      %v2611 = vunpack.c.l.b16 %v2355
      %v2612 = vunpack.c.h.b16 %v2355
      %v2613 = vunpack.c.l.b16 %v2356
      %v2614 = vunpack.c.h.b16 %v2356
      %v2615 = vunpack.c.l.b16 %v2357
      %v2616 = vunpack.c.h.b16 %v2357
      %v2617 = vunpack.c.l.b16 %v2358
      %v2618 = vunpack.c.h.b16 %v2358
      %v2619 = vunpack.c.l.b16 %v2359
      %v2620 = vunpack.c.h.b16 %v2359
      %v2621 = vunpack.c.l.b16 %v2360
      %v2622 = vunpack.c.h.b16 %v2360
      %v2623 = vunpack.c.l.b16 %v2361
      %v2624 = vunpack.c.h.b16 %v2361
      %v2625 = vunpack.c.l.b16 %v2362
      %v2626 = vunpack.c.h.b16 %v2362
      %v2627 = vunpack.c.l.b16 %v2363
      %v2628 = vunpack.c.h.b16 %v2363
      %v2629 = vunpack.c.l.b16 %v2364
      %v2630 = vunpack.c.h.b16 %v2364
      %v2631 = vunpack.c.l.b16 %v2365
      %v2632 = vunpack.c.h.b16 %v2365
      %v2633 = vunpack.c.l.b16 %v2366
      %v2634 = vunpack.c.h.b16 %v2366
      %v2635 = vunpack.c.l.b16 %v2367
      %v2636 = vunpack.c.h.b16 %v2367
      %v2637 = vunpack.c.l.b16 %v2368
      %v2638 = vunpack.c.h.b16 %v2368
      %v2639 = vunpack.c.l.b16 %v2369
      %v2640 = vunpack.c.h.b16 %v2369
      %v2641 = vunpack.c.l.b16 %v2370
      %v2642 = vunpack.c.h.b16 %v2370
      %v2643 = vunpack.c.l.b16 %v2371
      %v2644 = vunpack.c.h.b16 %v2371
      %v2645 = vunpack.c.l.b16 %v2372
      %v2646 = vunpack.c.h.b16 %v2372
      %v2647 = vunpack.c.l.b16 %v2373
      %v2648 = vunpack.c.h.b16 %v2373
      %v2649 = vunpack.c.l.b16 %v2374
      %v2650 = vunpack.c.h.b16 %v2374
      %v2651 = vunpack.c.l.b16 %v2375
      %v2652 = vunpack.c.h.b16 %v2375
      %v2653 = vunpack.c.l.b16 %v2376
      %v2654 = vunpack.c.h.b16 %v2376
      %v2655 = vunpack.c.l.b16 %v2377
      %v2656 = vunpack.c.h.b16 %v2377
      %v2657 = vunpack.c.l.b16 %v2378
      %v2658 = vunpack.c.h.b16 %v2378
      %v2659 = vunpack.c.l.b16 %v2379
      %v2660 = vunpack.c.h.b16 %v2379
      %v2661 = vunpack.c.l.b16 %v2380
      %v2662 = vunpack.c.h.b16 %v2380
      %v2663 = vunpack.c.l.b16 %v2381
      %v2664 = vunpack.c.h.b16 %v2381
      %v2665 = vunpack.c.l.b16 %v2382
      %v2666 = vunpack.c.h.b16 %v2382
      %v2667 = vunpack.c.l.b16 %v2383
      %v2668 = vunpack.c.h.b16 %v2383
      %v2669 = vunpack.c.l.b16 %v2384
      %v2670 = vunpack.c.h.b16 %v2384
      %v2671 = vunpack.c.l.b16 %v2385
      %v2672 = vunpack.c.h.b16 %v2385
      %v2673 = vunpack.c.l.b16 %v2386
      %v2674 = vunpack.c.h.b16 %v2386
      %v2675 = vunpack.c.l.b16 %v2387
      %v2676 = vunpack.c.h.b16 %v2387
      %v2677 = vunpack.c.l.b16 %v2388
      %v2678 = vunpack.c.h.b16 %v2388
      %v2679 = vunpack.c.l.b16 %v2389
      %v2680 = vunpack.c.h.b16 %v2389
      %v2681 = vunpack.c.l.b16 %v2390
      %v2682 = vunpack.c.h.b16 %v2390
      %v2683 = vunpack.c.l.b16 %v2391
      %v2684 = vunpack.c.h.b16 %v2391
      %v2685 = vunpack.c.l.b16 %v2392
      %v2686 = vunpack.c.h.b16 %v2392
      %v2687 = vpack.c.b16 %v2603, %v2599
      %v2688 = vpack.c.b16 %v2604, %v2600
      %v2689 = vpack.c.b16 %v2605, %v2601
      %v2690 = vpack.c.b16 %v2606, %v2602
      %v2691 = vpack.c.b16 %v2611, %v2607
      %v2692 = vpack.c.b16 %v2612, %v2608
      %v2693 = vpack.c.b16 %v2613, %v2609
      %v2694 = vpack.c.b16 %v2614, %v2610
      %v2695 = vpack.c.b16 %v2619, %v2615
      %v2696 = vpack.c.b16 %v2620, %v2616
      %v2697 = vpack.c.b16 %v2621, %v2617
      %v2698 = vpack.c.b16 %v2622, %v2618
      %v2699 = vpack.c.b16 %v2627, %v2623
      %v2700 = vpack.c.b16 %v2628, %v2624
      %v2701 = vpack.c.b16 %v2629, %v2625
      %v2702 = vpack.c.b16 %v2630, %v2626
      %v2703 = vpack.c.b16 %v2635, %v2631
      %v2704 = vpack.c.b16 %v2636, %v2632
      %v2705 = vpack.c.b16 %v2637, %v2633
      %v2706 = vpack.c.b16 %v2638, %v2634
      %v2707 = vpack.c.b16 %v2643, %v2639
      %v2708 = vpack.c.b16 %v2644, %v2640
      %v2709 = vpack.c.b16 %v2645, %v2641
      %v2710 = vpack.c.b16 %v2646, %v2642
      %v2711 = vpack.c.b16 %v2651, %v2647
      %v2712 = vpack.c.b16 %v2652, %v2648
      %v2713 = vpack.c.b16 %v2653, %v2649
      %v2714 = vpack.c.b16 %v2654, %v2650
      %v2715 = vpack.c.b16 %v2659, %v2655
      %v2716 = vpack.c.b16 %v2660, %v2656
      %v2717 = vpack.c.b16 %v2661, %v2657
      %v2718 = vpack.c.b16 %v2662, %v2658
      %v2719 = vpack.c.b16 %v2667, %v2663
      %v2720 = vpack.c.b16 %v2668, %v2664
      %v2721 = vpack.c.b16 %v2669, %v2665
      %v2722 = vpack.c.b16 %v2670, %v2666
      %v2723 = vpack.c.b16 %v2675, %v2671
      %v2724 = vpack.c.b16 %v2676, %v2672
      %v2725 = vpack.c.b16 %v2677, %v2673
      %v2726 = vpack.c.b16 %v2678, %v2674
      %v2727 = vpack.c.b16 %v2683, %v2679
      %v2728 = vpack.c.b16 %v2684, %v2680
      %v2729 = vpack.c.b16 %v2685, %v2681
      %v2730 = vpack.c.b16 %v2686, %v2682
      %v2765 = vsel %vm1031, %v2690, 0
      %v2768 = vsel %vm1031, %v2694, 0
      %v2771 = vsel %vm1031, %v2698, 0
      %v2774 = vsel %vm1031, %v2702, 0
      %v2777 = vsel %vm1031, %v2706, 0
      %v2780 = vsel %vm1031, %v2710, 0
      %v2783 = vsel %vm1031, %v2714, 0
      %v2786 = vsel %vm1031, %v2718, 0
      %v2789 = vsel %vm1031, %v2722, 0
      %v2792 = vsel %vm1031, %v2726, 0
      %v2795 = vsel %vm1031, %v2730, 0
      %2797 = vmatprep.subr.bf16.mxu0 0
      %2798 = vmatpush1.bf16.msra.mxu0 %v2393
      %2799 = vmatprep.subr.bf16.mxu0 0
      %2800 = vmatpush1.bf16.msra.mxu0 %v2394
      %2801 = vmatprep.subr.bf16.mxu0 0
      %2802 = vmatpush1.bf16.msra.mxu0 %v2395
      %2803 = vmatprep.subr.bf16.mxu0 0
      %2804 = vmatpush1.bf16.msra.mxu0 %v2396
      %2805 = vmatprep.subr.bf16.mxu0 0
      %2806 = vmatpush1.bf16.msra.mxu0 %v2397
      %2807 = vmatprep.subr.bf16.mxu0 0
      %2808 = vmatpush1.bf16.msra.mxu0 %v2398
      %2809 = vmatprep.subr.bf16.mxu0 0
      %2810 = vmatpush1.bf16.msra.mxu0 %v2399
      %2811 = vmatprep.subr.bf16.mxu0 0
      %2812 = vmatpush1.bf16.msra.mxu0 %v2400
      %2813 = vmatprep.subr.bf16.mxu0 0
      %2814 = vmatpush1.bf16.msra.mxu0 %v2401
      %2815 = vmatprep.subr.bf16.mxu0 0
      %2816 = vmatpush1.bf16.msra.mxu0 %v2402
      %2817 = vmatprep.subr.bf16.mxu0 0
      %2818 = vmatpush1.bf16.msra.mxu0 %v2403
      %2819 = vmatprep.subr.bf16.mxu0 0
      %2820 = vmatpush1.bf16.msra.mxu0 %v2404
      %2821 = vmatprep.subr.bf16.mxu0 0
      %2822 = vmatpush1.bf16.msra.mxu0 %v2405
      %2823 = vmatprep.subr.bf16.mxu0 0
      %2824 = vmatpush1.bf16.msra.mxu0 %v2406
      %2825 = vmatprep.subr.bf16.mxu0 0
      %2826 = vmatpush1.bf16.msra.mxu0 %v2407
      %2827 = vmatprep.subr.bf16.mxu0 0
      %2828 = vmatpush1.bf16.msra.mxu0 %v2408
      %2829 = vmatprep.mubr.bf16.mxu0 %v2688
      %2830 = vmatmul.mubr.bf16.gmra.mrb[0].mxu0 %v2687
      %v2831 = vpop.f32.mrb[0].mxu0
      %v2832 = vadd.f32 %v2448, %v2831
      %v2833 = vpop.f32.mrb[0].mxu0
      %v2834 = vpop.f32.mrb[0].mxu0
      %v2835 = vadd.f32 %v2453, %v2834
      %v2836 = vpop.f32.mrb[0].mxu0
      %2837 = vmatprep.mubr.bf16.mxu0 %v2692
      %2838 = vmatmul.mubr.bf16.gmra.mrb[0].mxu0 %v2691
      %v2839 = vpop.f32.mrb[0].mxu0
      %v2840 = vadd.f32 %v2458, %v2839
      %v2841 = vpop.f32.mrb[0].mxu0
      %v2842 = vpop.f32.mrb[0].mxu0
      %v2843 = vadd.f32 %v2463, %v2842
      %v2844 = vpop.f32.mrb[0].mxu0
      %2845 = vmatprep.mubr.bf16.mxu0 %v2696
      %2846 = vmatmul.mubr.bf16.gmra.mrb[0].mxu0 %v2695
      %v2847 = vpop.f32.mrb[0].mxu0
      %v2848 = vadd.f32 %v2468, %v2847
      %v2849 = vpop.f32.mrb[0].mxu0
      %v2850 = vpop.f32.mrb[0].mxu0
      %v2851 = vadd.f32 %v2473, %v2850
      %v2852 = vpop.f32.mrb[0].mxu0
      %2853 = vmatprep.mubr.bf16.mxu0 %v2700
      %2854 = vmatmul.mubr.bf16.gmra.mrb[0].mxu0 %v2699
      %v2855 = vpop.f32.mrb[0].mxu0
      %v2856 = vadd.f32 %v2478, %v2855
      %v2857 = vpop.f32.mrb[0].mxu0
      %v2858 = vpop.f32.mrb[0].mxu0
      %v2859 = vadd.f32 %v2483, %v2858
      %v2860 = vpop.f32.mrb[0].mxu0
      %2861 = vmatprep.mubr.bf16.mxu0 %v2704
      %2862 = vmatmul.mubr.bf16.gmra.mrb[0].mxu0 %v2703
      %v2863 = vpop.f32.mrb[0].mxu0
      %v2864 = vadd.f32 %v2488, %v2863
      %v2865 = vpop.f32.mrb[0].mxu0
      %v2866 = vpop.f32.mrb[0].mxu0
      %v2867 = vadd.f32 %v2493, %v2866
      %v2868 = vpop.f32.mrb[0].mxu0
      %2869 = vmatprep.mubr.bf16.mxu0 %v2708
      %2870 = vmatmul.mubr.bf16.gmra.mrb[0].mxu0 %v2707
      %v2871 = vpop.f32.mrb[0].mxu0
      %v2872 = vadd.f32 %v2498, %v2871
      %v2873 = vpop.f32.mrb[0].mxu0
      %v2874 = vpop.f32.mrb[0].mxu0
      %v2875 = vadd.f32 %v2503, %v2874
      %v2876 = vpop.f32.mrb[0].mxu0
      %2877 = vmatprep.mubr.bf16.mxu0 %v2712
      %2878 = vmatmul.mubr.bf16.gmra.mrb[0].mxu0 %v2711
      %v2879 = vpop.f32.mrb[0].mxu0
      %v2880 = vadd.f32 %v2508, %v2879
      %v2881 = vpop.f32.mrb[0].mxu0
      %v2882 = vpop.f32.mrb[0].mxu0
      %v2883 = vadd.f32 %v2513, %v2882
      %v2884 = vpop.f32.mrb[0].mxu0
      %2885 = vmatprep.mubr.bf16.mxu0 %v2716
      %2886 = vmatmul.mubr.bf16.gmra.mrb[0].mxu0 %v2715
      %v2887 = vpop.f32.mrb[0].mxu0
      %v2888 = vadd.f32 %v2518, %v2887
      %v2889 = vpop.f32.mrb[0].mxu0
      %v2890 = vpop.f32.mrb[0].mxu0
      %v2891 = vadd.f32 %v2523, %v2890
      %v2892 = vpop.f32.mrb[0].mxu0
      %2893 = vmatprep.mubr.bf16.mxu0 %v2720
      %2894 = vmatmul.mubr.bf16.gmra.mrb[0].mxu0 %v2719
      %v2895 = vpop.f32.mrb[0].mxu0
      %v2896 = vadd.f32 %v2528, %v2895
      %v2897 = vpop.f32.mrb[0].mxu0
      %v2898 = vpop.f32.mrb[0].mxu0
      %v2899 = vadd.f32 %v2533, %v2898
      %v2900 = vpop.f32.mrb[0].mxu0
      %2901 = vmatprep.mubr.bf16.mxu0 %v2724
      %2902 = vmatmul.mubr.bf16.gmra.mrb[0].mxu0 %v2723
      %v2903 = vpop.f32.mrb[0].mxu0
      %v2904 = vadd.f32 %v2538, %v2903
      %v2905 = vpop.f32.mrb[0].mxu0
      %v2906 = vpop.f32.mrb[0].mxu0
      %v2907 = vadd.f32 %v2543, %v2906
      %v2908 = vpop.f32.mrb[0].mxu0
      %2909 = vmatprep.mubr.bf16.mxu0 %v2728
      %2910 = vmatmul.mubr.bf16.gmra.mrb[0].mxu0 %v2727
      %v2911 = vpop.f32.mrb[0].mxu0
      %v2912 = vadd.f32 %v2548, %v2911
      %v2913 = vpop.f32.mrb[0].mxu0
      %v2914 = vpop.f32.mrb[0].mxu0
      %v2915 = vadd.f32 %v2553, %v2914
      %v2916 = vpop.f32.mrb[0].mxu0
      %2917 = vdwg.mxu0
      %2918 = vmatprep.subr.bf16.mxu0 0
      %2919 = vmatpush1.bf16.msra.mxu0 %v2409
      %2920 = vmatprep.subr.bf16.mxu0 0
      %2921 = vmatpush1.bf16.msra.mxu0 %v2410
      %2922 = vmatprep.subr.bf16.mxu0 0
      %2923 = vmatpush1.bf16.msra.mxu0 %v2411
      %2924 = vmatprep.subr.bf16.mxu0 0
      %2925 = vmatpush1.bf16.msra.mxu0 %v2412
      %2926 = vmatprep.subr.bf16.mxu0 0
      %2927 = vmatpush1.bf16.msra.mxu0 %v2413
      %2928 = vmatprep.subr.bf16.mxu0 0
      %2929 = vmatpush1.bf16.msra.mxu0 %v2414
      %2930 = vmatprep.subr.bf16.mxu0 0
      %2931 = vmatpush1.bf16.msra.mxu0 %v2415
      %2932 = vmatprep.subr.bf16.mxu0 0
      %2933 = vmatpush1.bf16.msra.mxu0 %v2416
      %2934 = vmatprep.subr.bf16.mxu0 0
      %2935 = vmatpush1.bf16.msra.mxu0 %v2417
      %2936 = vmatprep.subr.bf16.mxu0 0
      %2937 = vmatpush1.bf16.msra.mxu0 %v2418
      %2938 = vmatprep.subr.bf16.mxu0 0
      %2939 = vmatpush1.bf16.msra.mxu0 %v2419
      %2940 = vmatprep.subr.bf16.mxu0 0
      %2941 = vmatpush1.bf16.msra.mxu0 %v2420
      %2942 = vmatprep.subr.bf16.mxu0 0
      %2943 = vmatpush1.bf16.msra.mxu0 %v2421
      %2944 = vmatprep.subr.bf16.mxu0 0
      %2945 = vmatpush1.bf16.msra.mxu0 %v2422
      %2946 = vmatprep.subr.bf16.mxu0 0
      %2947 = vmatpush1.bf16.msra.mxu0 0
      %2948 = vmatprep.subr.bf16.mxu0 0
      %2949 = vmatpush1.bf16.msra.mxu0 0
      %2950 = vmatprep.mubr.bf16.mxu0 %v2765
      %2951 = vmatmul.mubr.bf16.gmra.mrb[0].mxu0 %v2689
      %v2952 = vpop.f32.mrb[0].mxu0
      %v2953 = vadd.f32 %v2832, %v2952
      %v2954 = vpop.f32.mrb[0].mxu0
      %v2955 = vpop.f32.mrb[0].mxu0
      %v2956 = vadd.f32 %v2835, %v2955
      %v2957 = vpop.f32.mrb[0].mxu0
      %2958 = vmatprep.mubr.bf16.mxu0 %v2768
      %2959 = vmatmul.mubr.bf16.gmra.mrb[0].mxu0 %v2693
      %v2960 = vpop.f32.mrb[0].mxu0
      %v2961 = vadd.f32 %v2840, %v2960
      %v2962 = vpop.f32.mrb[0].mxu0
      %v2963 = vpop.f32.mrb[0].mxu0
      %v2964 = vadd.f32 %v2843, %v2963
      %v2965 = vpop.f32.mrb[0].mxu0
      %2966 = vmatprep.mubr.bf16.mxu0 %v2771
      %2967 = vmatmul.mubr.bf16.gmra.mrb[0].mxu0 %v2697
      %v2968 = vpop.f32.mrb[0].mxu0
      %v2969 = vadd.f32 %v2848, %v2968
      %v2970 = vpop.f32.mrb[0].mxu0
      %v2971 = vpop.f32.mrb[0].mxu0
      %v2972 = vadd.f32 %v2851, %v2971
      %v2973 = vpop.f32.mrb[0].mxu0
      %2974 = vmatprep.mubr.bf16.mxu0 %v2774
      %2975 = vmatmul.mubr.bf16.gmra.mrb[0].mxu0 %v2701
      %v2976 = vpop.f32.mrb[0].mxu0
      %v2977 = vadd.f32 %v2856, %v2976
      %v2978 = vpop.f32.mrb[0].mxu0
      %v2979 = vpop.f32.mrb[0].mxu0
      %v2980 = vadd.f32 %v2859, %v2979
      %v2981 = vpop.f32.mrb[0].mxu0
      %2982 = vmatprep.mubr.bf16.mxu0 %v2777
      %2983 = vmatmul.mubr.bf16.gmra.mrb[0].mxu0 %v2705
      %v2984 = vpop.f32.mrb[0].mxu0
      %v2985 = vadd.f32 %v2864, %v2984
      %v2986 = vpop.f32.mrb[0].mxu0
      %v2987 = vpop.f32.mrb[0].mxu0
      %v2988 = vadd.f32 %v2867, %v2987
      %v2989 = vpop.f32.mrb[0].mxu0
      %2990 = vmatprep.mubr.bf16.mxu0 %v2780
      %2991 = vmatmul.mubr.bf16.gmra.mrb[0].mxu0 %v2709
      %v2992 = vpop.f32.mrb[0].mxu0
      %v2993 = vadd.f32 %v2872, %v2992
      %v2994 = vpop.f32.mrb[0].mxu0
      %v2995 = vpop.f32.mrb[0].mxu0
      %v2996 = vadd.f32 %v2875, %v2995
      %v2997 = vpop.f32.mrb[0].mxu0
      %2998 = vmatprep.mubr.bf16.mxu0 %v2783
      %2999 = vmatmul.mubr.bf16.gmra.mrb[0].mxu0 %v2713
      %v3000 = vpop.f32.mrb[0].mxu0
      %v3001 = vadd.f32 %v2880, %v3000
      %v3002 = vpop.f32.mrb[0].mxu0
      %v3003 = vpop.f32.mrb[0].mxu0
      %v3004 = vadd.f32 %v2883, %v3003
      %v3005 = vpop.f32.mrb[0].mxu0
      %3006 = vmatprep.mubr.bf16.mxu0 %v2786
      %3007 = vmatmul.mubr.bf16.gmra.mrb[0].mxu0 %v2717
      %v3008 = vpop.f32.mrb[0].mxu0
      %v3009 = vadd.f32 %v2888, %v3008
      %v3010 = vpop.f32.mrb[0].mxu0
      %v3011 = vpop.f32.mrb[0].mxu0
      %v3012 = vadd.f32 %v2891, %v3011
      %v3013 = vpop.f32.mrb[0].mxu0
      %3014 = vmatprep.mubr.bf16.mxu0 %v2789
      %3015 = vmatmul.mubr.bf16.gmra.mrb[0].mxu0 %v2721
      %v3016 = vpop.f32.mrb[0].mxu0
      %v3017 = vadd.f32 %v2896, %v3016
      %v3018 = vpop.f32.mrb[0].mxu0
      %v3019 = vpop.f32.mrb[0].mxu0
      %v3020 = vadd.f32 %v2899, %v3019
      %v3021 = vpop.f32.mrb[0].mxu0
      %3022 = vmatprep.mubr.bf16.mxu0 %v2792
      %3023 = vmatmul.mubr.bf16.gmra.mrb[0].mxu0 %v2725
      %v3024 = vpop.f32.mrb[0].mxu0
      %v3025 = vadd.f32 %v2904, %v3024
      %v3026 = vpop.f32.mrb[0].mxu0
      %v3027 = vpop.f32.mrb[0].mxu0
      %v3028 = vadd.f32 %v2907, %v3027
      %v3029 = vpop.f32.mrb[0].mxu0
      %3030 = vmatprep.mubr.bf16.mxu0 %v2795
      %3031 = vmatmul.mubr.bf16.gmra.mrb[0].mxu0 %v2729
      %v3032 = vpop.f32.mrb[0].mxu0
      %v3033 = vadd.f32 %v2912, %v3032
      %v3034 = vpop.f32.mrb[0].mxu0
      %v3035 = vpop.f32.mrb[0].mxu0
      %v3036 = vadd.f32 %v2915, %v3035
      %v3037 = vpop.f32.mrb[0].mxu0
      %3038 = vdwg.mxu0
      %v3039 = vxor.u32 %v2953, 2147483648
      %v3040 = vxor.u32 %v2956, 2147483648
      %v3041 = vxor.u32 %v2961, 2147483648
      %v3042 = vxor.u32 %v2964, 2147483648
      %v3043 = vxor.u32 %v2969, 2147483648
      %v3044 = vxor.u32 %v2972, 2147483648
      %v3045 = vxor.u32 %v2977, 2147483648
      %v3046 = vxor.u32 %v2980, 2147483648
      %v3047 = vxor.u32 %v2985, 2147483648
      %v3048 = vxor.u32 %v2988, 2147483648
      %v3049 = vxor.u32 %v2993, 2147483648
      %v3050 = vxor.u32 %v2996, 2147483648
      %v3051 = vxor.u32 %v3001, 2147483648
      %v3052 = vxor.u32 %v3004, 2147483648
      %v3053 = vxor.u32 %v3009, 2147483648
      %v3054 = vxor.u32 %v3012, 2147483648
      %v3055 = vxor.u32 %v3017, 2147483648
      %v3056 = vxor.u32 %v3020, 2147483648
      %v3057 = vxor.u32 %v3025, 2147483648
      %v3058 = vxor.u32 %v3028, 2147483648
      %v3059 = vxor.u32 %v3033, 2147483648
      %v3060 = vxor.u32 %v3036, 2147483648
      %v3061 = vmul.f32 %v3039, 1.442695
      %v3062 = vpow.pop %v3061
      %v3063 = vmul.f32 %v3040, 1.442695
      %v3064 = vpow.pop %v3063
      %v3065 = vmul.f32 %v3041, 1.442695
      %v3066 = vpow.pop %v3065
      %v3067 = vmul.f32 %v3042, 1.442695
      %v3068 = vpow.pop %v3067
      %v3069 = vmul.f32 %v3043, 1.442695
      %v3070 = vpow.pop %v3069
      %v3071 = vmul.f32 %v3044, 1.442695
      %v3072 = vpow.pop %v3071
      %v3073 = vmul.f32 %v3045, 1.442695
      %v3074 = vpow.pop %v3073
      %v3075 = vmul.f32 %v3046, 1.442695
      %v3076 = vpow.pop %v3075
      %v3077 = vmul.f32 %v3047, 1.442695
      %v3078 = vpow.pop %v3077
      %v3079 = vmul.f32 %v3048, 1.442695
      %v3080 = vpow.pop %v3079
      %v3081 = vmul.f32 %v3049, 1.442695
      %v3082 = vpow.pop %v3081
      %v3083 = vmul.f32 %v3050, 1.442695
      %v3084 = vpow.pop %v3083
      %v3085 = vmul.f32 %v3051, 1.442695
      %v3086 = vpow.pop %v3085
      %v3087 = vmul.f32 %v3052, 1.442695
      %v3088 = vpow.pop %v3087
      %v3089 = vmul.f32 %v3053, 1.442695
      %v3090 = vpow.pop %v3089
      %v3091 = vmul.f32 %v3054, 1.442695
      %v3092 = vpow.pop %v3091
      %v3093 = vmul.f32 %v3055, 1.442695
      %v3094 = vpow.pop %v3093
      %v3095 = vmul.f32 %v3056, 1.442695
      %v3096 = vpow.pop %v3095
      %v3097 = vmul.f32 %v3057, 1.442695
      %v3098 = vpow.pop %v3097
      %v3099 = vmul.f32 %v3058, 1.442695
      %v3100 = vpow.pop %v3099
      %v3101 = vmul.f32 %v3059, 1.442695
      %v3102 = vpow.pop %v3101
      %v3103 = vmul.f32 %v3060, 1.442695
      %v3104 = vpow.pop %v3103
      %v3105 = vadd.f32 %v3062, 1.0
      %v3106 = vadd.f32 %v3064, 1.0
      %v3107 = vadd.f32 %v3066, 1.0
      %v3108 = vadd.f32 %v3068, 1.0
      %v3109 = vadd.f32 %v3070, 1.0
      %v3110 = vadd.f32 %v3072, 1.0
      %v3111 = vadd.f32 %v3074, 1.0
      %v3112 = vadd.f32 %v3076, 1.0
      %v3113 = vadd.f32 %v3078, 1.0
      %v3114 = vadd.f32 %v3080, 1.0
      %v3115 = vadd.f32 %v3082, 1.0
      %v3116 = vadd.f32 %v3084, 1.0
      %v3117 = vadd.f32 %v3086, 1.0
      %v3118 = vadd.f32 %v3088, 1.0
      %v3119 = vadd.f32 %v3090, 1.0
      %v3120 = vadd.f32 %v3092, 1.0
      %v3121 = vadd.f32 %v3094, 1.0
      %v3122 = vadd.f32 %v3096, 1.0
      %v3123 = vadd.f32 %v3098, 1.0
      %v3124 = vadd.f32 %v3100, 1.0
      %v3125 = vadd.f32 %v3102, 1.0
      %v3126 = vadd.f32 %v3104, 1.0
      %v3127 = vrcp.pop %v3105
      %v3128 = vmul.f32 1.0, %v3127
      %v3129 = vrcp.pop %v3106
      %v3130 = vmul.f32 1.0, %v3129
      %v3131 = vrcp.pop %v3107
      %v3132 = vmul.f32 1.0, %v3131
      %v3133 = vrcp.pop %v3108
      %v3134 = vmul.f32 1.0, %v3133
      %v3135 = vrcp.pop %v3109
      %v3136 = vmul.f32 1.0, %v3135
      %v3137 = vrcp.pop %v3110
      %v3138 = vmul.f32 1.0, %v3137
      %v3139 = vrcp.pop %v3111
      %v3140 = vmul.f32 1.0, %v3139
      %v3141 = vrcp.pop %v3112
      %v3142 = vmul.f32 1.0, %v3141
      %v3143 = vrcp.pop %v3113
      %v3144 = vmul.f32 1.0, %v3143
      %v3145 = vrcp.pop %v3114
      %v3146 = vmul.f32 1.0, %v3145
      %v3147 = vrcp.pop %v3115
      %v3148 = vmul.f32 1.0, %v3147
      %v3149 = vrcp.pop %v3116
      %v3150 = vmul.f32 1.0, %v3149
      %v3151 = vrcp.pop %v3117
      %v3152 = vmul.f32 1.0, %v3151
      %v3153 = vrcp.pop %v3118
      %v3154 = vmul.f32 1.0, %v3153
      %v3155 = vrcp.pop %v3119
      %v3156 = vmul.f32 1.0, %v3155
      %v3157 = vrcp.pop %v3120
      %v3158 = vmul.f32 1.0, %v3157
      %v3159 = vrcp.pop %v3121
      %v3160 = vmul.f32 1.0, %v3159
      %v3161 = vrcp.pop %v3122
      %v3162 = vmul.f32 1.0, %v3161
      %v3163 = vrcp.pop %v3123
      %v3164 = vmul.f32 1.0, %v3163
      %v3165 = vrcp.pop %v3124
      %v3166 = vmul.f32 1.0, %v3165
      %v3167 = vrcp.pop %v3125
      %v3168 = vmul.f32 1.0, %v3167
      %v3169 = vrcp.pop %v3126
      %v3170 = vmul.f32 1.0, %v3169
      %v3171 = vmul.f32 %v2953, %v3128
      %v3172 = vmul.f32 %v2956, %v3130
      %v3173 = vmul.f32 %v2961, %v3132
      %v3174 = vmul.f32 %v2964, %v3134
      %v3175 = vmul.f32 %v2969, %v3136
      %v3176 = vmul.f32 %v2972, %v3138
      %v3177 = vmul.f32 %v2977, %v3140
      %v3178 = vmul.f32 %v2980, %v3142
      %v3179 = vmul.f32 %v2985, %v3144
      %v3180 = vmul.f32 %v2988, %v3146
      %v3181 = vmul.f32 %v2993, %v3148
      %v3182 = vmul.f32 %v2996, %v3150
      %v3183 = vmul.f32 %v3001, %v3152
      %v3184 = vmul.f32 %v3004, %v3154
      %v3185 = vmul.f32 %v3009, %v3156
      %v3186 = vmul.f32 %v3012, %v3158
      %v3187 = vmul.f32 %v3017, %v3160
      %v3188 = vmul.f32 %v3020, %v3162
      %v3189 = vmul.f32 %v3025, %v3164
      %v3190 = vmul.f32 %v3028, %v3166
      %v3191 = vmul.f32 %v3033, %v3168
      %v3192 = vmul.f32 %v3036, %v3170
      %v3193 = vpack.c.bf16 %v3172, %v3171
      %v3194 = vpack.c.bf16 %v3174, %v3173
      %v3195 = vpack.c.bf16 %v3176, %v3175
      %v3196 = vpack.c.bf16 %v3178, %v3177
      %v3197 = vpack.c.bf16 %v3180, %v3179
      %v3198 = vpack.c.bf16 %v3182, %v3181
      %v3199 = vpack.c.bf16 %v3184, %v3183
      %v3200 = vpack.c.bf16 %v3186, %v3185
      %v3201 = vpack.c.bf16 %v3188, %v3187
      %v3202 = vpack.c.bf16 %v3190, %v3189
      %v3203 = vpack.c.bf16 %v3192, %v3191
      %3204 = vst [vmem:[#allocation3 + $0xb0] sm:$0xff] %v3193
      %3205 = vst [vmem:[#allocation3 + $0xb8] sm:$0xff] %v3194
      %3206 = vst [vmem:[#allocation3 + $0xc0] sm:$0xff] %v3195
      %3207 = vst [vmem:[#allocation3 + $0xc8] sm:$0xff] %v3196
      %3208 = vst [vmem:[#allocation3 + $0xd0] sm:$0xff] %v3197
      %3209 = vst [vmem:[#allocation3 + $0xd8] sm:$0xff] %v3198
      %3210 = vst [vmem:[#allocation3 + $0xe0] sm:$0xff] %v3199
      %3211 = vst [vmem:[#allocation3 + $0xe8] sm:$0xff] %v3200
      %3212 = vst [vmem:[#allocation3 + $0xf0] sm:$0xff] %v3201
      %3213 = vst [vmem:[#allocation3 + $0xf8] sm:$0xff] %v3202
      %3214 = vst [vmem:[#allocation3 + $0x100] sm:$0xff] %v3203
      %v3215 = vld [vmem:[%s1 + $0x420] sm:$0xff]
      %v3216 = vld [vmem:[%s1 + $0x428] sm:$0xff]
      %v3217 = vld [vmem:[%s1 + $0x430] sm:$0xff]
      %v3218 = vld [vmem:[%s1 + $0x438] sm:$0xff]
      %v3219 = vld [vmem:[%s1 + $0x440] sm:$0xff]
      %v3220 = vld [vmem:[%s1 + $0x448] sm:$0xff]
      %v3221 = vld [vmem:[%s1 + $0x450] sm:$0xff]
      %v3222 = vld [vmem:[%s1 + $0x458] sm:$0xff]
      %v3223 = vld [vmem:[%s1 + $0x460] sm:$0xff]
      %v3224 = vld [vmem:[%s1 + $0x468] sm:$0xff]
      %v3225 = vld [vmem:[%s1 + $0x470] sm:$0xff]
      %v3226 = vld [vmem:[%s1 + $0x478] sm:$0xff]
      %v3227 = vld [vmem:[%s1 + $0x480] sm:$0xff]
      %v3228 = vld [vmem:[%s1 + $0x488] sm:$0xff]
      %v3229 = vld [vmem:[%s1 + $0x490] sm:$0xff]
      %v3230 = vld [vmem:[%s1 + $0x498] sm:$0xff]
      %v3231 = vld [vmem:[%s1 + $0x4a0] sm:$0xff]
      %v3232 = vld [vmem:[%s1 + $0x4a8] sm:$0xff]
      %v3233 = vld [vmem:[%s1 + $0x4b0] sm:$0xff]
      %v3234 = vld [vmem:[%s1 + $0x4b8] sm:$0xff]
      %v3235 = vld [vmem:[%s1 + $0x4c0] sm:$0xff]
      %v3236 = vld [vmem:[%s1 + $0x4c8] sm:$0xff]
      %v3237 = vld [vmem:[%s1 + $0x4d0] sm:$0xff]
      %v3238 = vld [vmem:[%s1 + $0x4d8] sm:$0xff]
      %v3239 = vld [vmem:[%s1 + $0x4e0] sm:$0xff]
      %v3240 = vld [vmem:[%s1 + $0x4e8] sm:$0xff]
      %v3241 = vld [vmem:[%s1 + $0x4f0] sm:$0xff]
      %v3242 = vld [vmem:[%s1 + $0x4f8] sm:$0xff]
      %v3243 = vld [vmem:[%s1 + $0x500] sm:$0xff]
      %v3244 = vld [vmem:[%s1 + $0x508] sm:$0xff]
      %v3245 = vld [vmem:[%s1 + $0x510] sm:$0xff]
      %v3246 = vld [vmem:[%s1 + $0x518] sm:$0xff]
      %v3247 = vld [vmem:[%s1 + $0x520] sm:$0xff]
      %v3248 = vld [vmem:[%s1 + $0x528] sm:$0xff]
      %v3249 = vld [vmem:[%s1 + $0x530] sm:$0xff]
      %v3250 = vld [vmem:[%s1 + $0x538] sm:$0xff]
      %v3251 = vld [vmem:[%s1 + $0x540] sm:$0xff]
      %v3252 = vld [vmem:[%s1 + $0x548] sm:$0xff]
      %v3253 = vld [vmem:[%s1 + $0x550] sm:$0xff]
      %v3254 = vld [vmem:[%s1 + $0x558] sm:$0xff]
      %v3255 = vld [vmem:[%s1 + $0x560] sm:$0xff]
      %v3256 = vld [vmem:[%s1 + $0x568] sm:$0xff]
      %v3257 = vld [vmem:[%s1 + $0x570] sm:$0xff]
      %v3258 = vld [vmem:[%s1 + $0x578] sm:$0xff]
      %v3259 = vld [vmem:[#allocation2] sm:$0xff]
      %v3260 = vld [vmem:[#allocation2 + $0x8] sm:$0xff]
      %v3261 = vld [vmem:[#allocation2 + $0x10] sm:$0xff]
      %v3262 = vld [vmem:[#allocation2 + $0x18] sm:$0xff]
      %v3263 = vld [vmem:[#allocation2 + $0x20] sm:$0xff]
      %v3264 = vld [vmem:[#allocation2 + $0x28] sm:$0xff]
      %v3265 = vld [vmem:[#allocation2 + $0x30] sm:$0xff]
      %v3266 = vld [vmem:[#allocation2 + $0x38] sm:$0xff]
      %v3267 = vld [vmem:[#allocation2 + $0x40] sm:$0xff]
      %v3268 = vld [vmem:[#allocation2 + $0x48] sm:$0xff]
      %v3269 = vld [vmem:[#allocation2 + $0x50] sm:$0xff]
      %v3270 = vld [vmem:[#allocation2 + $0x58] sm:$0xff]
      %v3271 = vld [vmem:[#allocation2 + $0x60] sm:$0xff]
      %v3272 = vld [vmem:[#allocation2 + $0x68] sm:$0xff]
      %v3273 = vld [vmem:[#allocation2 + $0x70] sm:$0xff]
      %v3274 = vld [vmem:[#allocation2 + $0x78] sm:$0xff]
      %v3275 = vld [vmem:[#allocation2 + $0x80] sm:$0xff]
      %v3276 = vld [vmem:[#allocation2 + $0x88] sm:$0xff]
      %v3277 = vld [vmem:[#allocation2 + $0x90] sm:$0xff]
      %v3278 = vld [vmem:[#allocation2 + $0x98] sm:$0xff]
      %v3279 = vld [vmem:[#allocation2 + $0xa0] sm:$0xff]
      %v3280 = vld [vmem:[#allocation2 + $0xa8] sm:$0xff]
      %v3281 = vld [vmem:[#allocation2 + $0xb0] sm:$0xff]
      %v3282 = vld [vmem:[#allocation2 + $0xb8] sm:$0xff]
      %v3283 = vld [vmem:[#allocation2 + $0xc0] sm:$0xff]
      %v3284 = vld [vmem:[#allocation2 + $0xc8] sm:$0xff]
      %v3285 = vld [vmem:[#allocation2 + $0xd0] sm:$0xff]
      %v3286 = vld [vmem:[#allocation2 + $0xd8] sm:$0xff]
      %v3287 = vld [vmem:[#allocation2 + $0xe0] sm:$0xff]
      %v3288 = vld [vmem:[#allocation2 + $0xe8] sm:$0xff]
      %v3289 = vld [vmem:[%s2 + $0x210] sm:$0xff]
      %v3290 = vld [vmem:[%s2 + $0x218] sm:$0xff]
      %v3291 = vld [vmem:[%s2 + $0x220] sm:$0xff]
      %v3292 = vld [vmem:[%s2 + $0x228] sm:$0xff]
      %v3293 = vld [vmem:[%s2 + $0x230] sm:$0xff]
      %v3294 = vld [vmem:[%s2 + $0x238] sm:$0xff]
      %v3295 = vld [vmem:[%s2 + $0x240] sm:$0xff]
      %v3296 = vld [vmem:[%s2 + $0x248] sm:$0xff]
      %v3297 = vld [vmem:[%s2 + $0x250] sm:$0xff]
      %v3298 = vld [vmem:[%s2 + $0x258] sm:$0xff]
      %v3299 = vld [vmem:[%s2 + $0x260] sm:$0xff]
      %v3300 = vld [vmem:[%s2 + $0x268] sm:$0xff]
      %v3301 = vld [vmem:[%s2 + $0x270] sm:$0xff]
      %v3302 = vld [vmem:[%s2 + $0x278] sm:$0xff]
      %v3303 = vld [vmem:[%s2 + $0x280] sm:$0xff]
      %v3304 = vld [vmem:[%s2 + $0x288] sm:$0xff]
      %v3305 = vld [vmem:[%s2 + $0x290] sm:$0xff]
      %v3306 = vld [vmem:[%s2 + $0x298] sm:$0xff]
      %v3307 = vld [vmem:[%s2 + $0x2a0] sm:$0xff]
      %v3308 = vld [vmem:[%s2 + $0x2a8] sm:$0xff]
      %v3309 = vld [vmem:[%s2 + $0x2b0] sm:$0xff]
      %v3310 = vld [vmem:[%s2 + $0x2b8] sm:$0xff]
      %3312 = vset.pattern.permute.xlu0 0
      %3313 = vperm.xlu0 %3312, %v3289
      %v3314 = vpop.permute.xlu0 %3313
      %3317 = vset.pattern.permute.xlu0 0
      %3318 = vperm.xlu0 %3317, %v3290
      %v3319 = vpop.permute.xlu0 %3318
      %3322 = vset.pattern.permute.xlu0 0
      %3323 = vperm.xlu0 %3322, %v3291
      %v3324 = vpop.permute.xlu0 %3323
      %3327 = vset.pattern.permute.xlu0 0
      %3328 = vperm.xlu0 %3327, %v3292
      %v3329 = vpop.permute.xlu0 %3328
      %3332 = vset.pattern.permute.xlu0 0
      %3333 = vperm.xlu0 %3332, %v3293
      %v3334 = vpop.permute.xlu0 %3333
      %3337 = vset.pattern.permute.xlu0 0
      %3338 = vperm.xlu0 %3337, %v3294
      %v3339 = vpop.permute.xlu0 %3338
      %3342 = vset.pattern.permute.xlu0 0
      %3343 = vperm.xlu0 %3342, %v3295
      %v3344 = vpop.permute.xlu0 %3343
      %3347 = vset.pattern.permute.xlu0 0
      %3348 = vperm.xlu0 %3347, %v3296
      %v3349 = vpop.permute.xlu0 %3348
      %3352 = vset.pattern.permute.xlu0 0
      %3353 = vperm.xlu0 %3352, %v3297
      %v3354 = vpop.permute.xlu0 %3353
      %3357 = vset.pattern.permute.xlu0 0
      %3358 = vperm.xlu0 %3357, %v3298
      %v3359 = vpop.permute.xlu0 %3358
      %3362 = vset.pattern.permute.xlu0 0
      %3363 = vperm.xlu0 %3362, %v3299
      %v3364 = vpop.permute.xlu0 %3363
      %3367 = vset.pattern.permute.xlu0 0
      %3368 = vperm.xlu0 %3367, %v3300
      %v3369 = vpop.permute.xlu0 %3368
      %3372 = vset.pattern.permute.xlu0 0
      %3373 = vperm.xlu0 %3372, %v3301
      %v3374 = vpop.permute.xlu0 %3373
      %3377 = vset.pattern.permute.xlu0 0
      %3378 = vperm.xlu0 %3377, %v3302
      %v3379 = vpop.permute.xlu0 %3378
      %3382 = vset.pattern.permute.xlu0 0
      %3383 = vperm.xlu0 %3382, %v3303
      %v3384 = vpop.permute.xlu0 %3383
      %3387 = vset.pattern.permute.xlu0 0
      %3388 = vperm.xlu0 %3387, %v3304
      %v3389 = vpop.permute.xlu0 %3388
      %3392 = vset.pattern.permute.xlu0 0
      %3393 = vperm.xlu0 %3392, %v3305
      %v3394 = vpop.permute.xlu0 %3393
      %3397 = vset.pattern.permute.xlu0 0
      %3398 = vperm.xlu0 %3397, %v3306
      %v3399 = vpop.permute.xlu0 %3398
      %3402 = vset.pattern.permute.xlu0 0
      %3403 = vperm.xlu0 %3402, %v3307
      %v3404 = vpop.permute.xlu0 %3403
      %3407 = vset.pattern.permute.xlu0 0
      %3408 = vperm.xlu0 %3407, %v3308
      %v3409 = vpop.permute.xlu0 %3408
      %3412 = vset.pattern.permute.xlu0 0
      %3413 = vperm.xlu0 %3412, %v3309
      %v3414 = vpop.permute.xlu0 %3413
      %3417 = vset.pattern.permute.xlu0 0
      %3418 = vperm.xlu0 %3417, %v3310
      %v3419 = vpop.permute.xlu0 %3418
      %v3465 = vunpack.c.l.b16 %v3215
      %v3466 = vunpack.c.h.b16 %v3215
      %v3467 = vunpack.c.l.b16 %v3216
      %v3468 = vunpack.c.h.b16 %v3216
      %v3469 = vunpack.c.l.b16 %v3217
      %v3470 = vunpack.c.h.b16 %v3217
      %v3471 = vunpack.c.l.b16 %v3218
      %v3472 = vunpack.c.h.b16 %v3218
      %v3473 = vunpack.c.l.b16 %v3219
      %v3474 = vunpack.c.h.b16 %v3219
      %v3475 = vunpack.c.l.b16 %v3220
      %v3476 = vunpack.c.h.b16 %v3220
      %v3477 = vunpack.c.l.b16 %v3221
      %v3478 = vunpack.c.h.b16 %v3221
      %v3479 = vunpack.c.l.b16 %v3222
      %v3480 = vunpack.c.h.b16 %v3222
      %v3481 = vunpack.c.l.b16 %v3223
      %v3482 = vunpack.c.h.b16 %v3223
      %v3483 = vunpack.c.l.b16 %v3224
      %v3484 = vunpack.c.h.b16 %v3224
      %v3485 = vunpack.c.l.b16 %v3225
      %v3486 = vunpack.c.h.b16 %v3225
      %v3487 = vunpack.c.l.b16 %v3226
      %v3488 = vunpack.c.h.b16 %v3226
      %v3489 = vunpack.c.l.b16 %v3227
      %v3490 = vunpack.c.h.b16 %v3227
      %v3491 = vunpack.c.l.b16 %v3228
      %v3492 = vunpack.c.h.b16 %v3228
      %v3493 = vunpack.c.l.b16 %v3229
      %v3494 = vunpack.c.h.b16 %v3229
      %v3495 = vunpack.c.l.b16 %v3230
      %v3496 = vunpack.c.h.b16 %v3230
      %v3497 = vunpack.c.l.b16 %v3231
      %v3498 = vunpack.c.h.b16 %v3231
      %v3499 = vunpack.c.l.b16 %v3232
      %v3500 = vunpack.c.h.b16 %v3232
      %v3501 = vunpack.c.l.b16 %v3233
      %v3502 = vunpack.c.h.b16 %v3233
      %v3503 = vunpack.c.l.b16 %v3234
      %v3504 = vunpack.c.h.b16 %v3234
      %v3505 = vunpack.c.l.b16 %v3235
      %v3506 = vunpack.c.h.b16 %v3235
      %v3507 = vunpack.c.l.b16 %v3236
      %v3508 = vunpack.c.h.b16 %v3236
      %v3509 = vunpack.c.l.b16 %v3237
      %v3510 = vunpack.c.h.b16 %v3237
      %v3511 = vunpack.c.l.b16 %v3238
      %v3512 = vunpack.c.h.b16 %v3238
      %v3513 = vunpack.c.l.b16 %v3239
      %v3514 = vunpack.c.h.b16 %v3239
      %v3515 = vunpack.c.l.b16 %v3240
      %v3516 = vunpack.c.h.b16 %v3240
      %v3517 = vunpack.c.l.b16 %v3241
      %v3518 = vunpack.c.h.b16 %v3241
      %v3519 = vunpack.c.l.b16 %v3242
      %v3520 = vunpack.c.h.b16 %v3242
      %v3521 = vunpack.c.l.b16 %v3243
      %v3522 = vunpack.c.h.b16 %v3243
      %v3523 = vunpack.c.l.b16 %v3244
      %v3524 = vunpack.c.h.b16 %v3244
      %v3525 = vunpack.c.l.b16 %v3245
      %v3526 = vunpack.c.h.b16 %v3245
      %v3527 = vunpack.c.l.b16 %v3246
      %v3528 = vunpack.c.h.b16 %v3246
      %v3529 = vunpack.c.l.b16 %v3247
      %v3530 = vunpack.c.h.b16 %v3247
      %v3531 = vunpack.c.l.b16 %v3248
      %v3532 = vunpack.c.h.b16 %v3248
      %v3533 = vunpack.c.l.b16 %v3249
      %v3534 = vunpack.c.h.b16 %v3249
      %v3535 = vunpack.c.l.b16 %v3250
      %v3536 = vunpack.c.h.b16 %v3250
      %v3537 = vunpack.c.l.b16 %v3251
      %v3538 = vunpack.c.h.b16 %v3251
      %v3539 = vunpack.c.l.b16 %v3252
      %v3540 = vunpack.c.h.b16 %v3252
      %v3541 = vunpack.c.l.b16 %v3253
      %v3542 = vunpack.c.h.b16 %v3253
      %v3543 = vunpack.c.l.b16 %v3254
      %v3544 = vunpack.c.h.b16 %v3254
      %v3545 = vunpack.c.l.b16 %v3255
      %v3546 = vunpack.c.h.b16 %v3255
      %v3547 = vunpack.c.l.b16 %v3256
      %v3548 = vunpack.c.h.b16 %v3256
      %v3549 = vunpack.c.l.b16 %v3257
      %v3550 = vunpack.c.h.b16 %v3257
      %v3551 = vunpack.c.l.b16 %v3258
      %v3552 = vunpack.c.h.b16 %v3258
      %v3553 = vpack.c.b16 %v3469, %v3465
      %v3554 = vpack.c.b16 %v3470, %v3466
      %v3555 = vpack.c.b16 %v3471, %v3467
      %v3556 = vpack.c.b16 %v3472, %v3468
      %v3557 = vpack.c.b16 %v3477, %v3473
      %v3558 = vpack.c.b16 %v3478, %v3474
      %v3559 = vpack.c.b16 %v3479, %v3475
      %v3560 = vpack.c.b16 %v3480, %v3476
      %v3561 = vpack.c.b16 %v3485, %v3481
      %v3562 = vpack.c.b16 %v3486, %v3482
      %v3563 = vpack.c.b16 %v3487, %v3483
      %v3564 = vpack.c.b16 %v3488, %v3484
      %v3565 = vpack.c.b16 %v3493, %v3489
      %v3566 = vpack.c.b16 %v3494, %v3490
      %v3567 = vpack.c.b16 %v3495, %v3491
      %v3568 = vpack.c.b16 %v3496, %v3492
      %v3569 = vpack.c.b16 %v3501, %v3497
      %v3570 = vpack.c.b16 %v3502, %v3498
      %v3571 = vpack.c.b16 %v3503, %v3499
      %v3572 = vpack.c.b16 %v3504, %v3500
      %v3573 = vpack.c.b16 %v3509, %v3505
      %v3574 = vpack.c.b16 %v3510, %v3506
      %v3575 = vpack.c.b16 %v3511, %v3507
      %v3576 = vpack.c.b16 %v3512, %v3508
      %v3577 = vpack.c.b16 %v3517, %v3513
      %v3578 = vpack.c.b16 %v3518, %v3514
      %v3579 = vpack.c.b16 %v3519, %v3515
      %v3580 = vpack.c.b16 %v3520, %v3516
      %v3581 = vpack.c.b16 %v3525, %v3521
      %v3582 = vpack.c.b16 %v3526, %v3522
      %v3583 = vpack.c.b16 %v3527, %v3523
      %v3584 = vpack.c.b16 %v3528, %v3524
      %v3585 = vpack.c.b16 %v3533, %v3529
      %v3586 = vpack.c.b16 %v3534, %v3530
      %v3587 = vpack.c.b16 %v3535, %v3531
      %v3588 = vpack.c.b16 %v3536, %v3532
      %v3589 = vpack.c.b16 %v3541, %v3537
      %v3590 = vpack.c.b16 %v3542, %v3538
      %v3591 = vpack.c.b16 %v3543, %v3539
      %v3592 = vpack.c.b16 %v3544, %v3540
      %v3593 = vpack.c.b16 %v3549, %v3545
      %v3594 = vpack.c.b16 %v3550, %v3546
      %v3595 = vpack.c.b16 %v3551, %v3547
      %v3596 = vpack.c.b16 %v3552, %v3548
      %v3631 = vsel %vm1031, %v3556, 0
      %v3634 = vsel %vm1031, %v3560, 0
      %v3637 = vsel %vm1031, %v3564, 0
      %v3640 = vsel %vm1031, %v3568, 0
      %v3643 = vsel %vm1031, %v3572, 0
      %v3646 = vsel %vm1031, %v3576, 0
      %v3649 = vsel %vm1031, %v3580, 0
      %v3652 = vsel %vm1031, %v3584, 0
      %v3655 = vsel %vm1031, %v3588, 0
      %v3658 = vsel %vm1031, %v3592, 0
      %v3661 = vsel %vm1031, %v3596, 0
      %3663 = vmatprep.subr.bf16.mxu0 0
      %3664 = vmatpush1.bf16.msra.mxu0 %v3259
      %3665 = vmatprep.subr.bf16.mxu0 0
      %3666 = vmatpush1.bf16.msra.mxu0 %v3260
      %3667 = vmatprep.subr.bf16.mxu0 0
      %3668 = vmatpush1.bf16.msra.mxu0 %v3261
      %3669 = vmatprep.subr.bf16.mxu0 0
      %3670 = vmatpush1.bf16.msra.mxu0 %v3262
      %3671 = vmatprep.subr.bf16.mxu0 0
      %3672 = vmatpush1.bf16.msra.mxu0 %v3263
      %3673 = vmatprep.subr.bf16.mxu0 0
      %3674 = vmatpush1.bf16.msra.mxu0 %v3264
      %3675 = vmatprep.subr.bf16.mxu0 0
      %3676 = vmatpush1.bf16.msra.mxu0 %v3265
      %3677 = vmatprep.subr.bf16.mxu0 0
      %3678 = vmatpush1.bf16.msra.mxu0 %v3266
      %3679 = vmatprep.subr.bf16.mxu0 0
      %3680 = vmatpush1.bf16.msra.mxu0 %v3267
      %3681 = vmatprep.subr.bf16.mxu0 0
      %3682 = vmatpush1.bf16.msra.mxu0 %v3268
      %3683 = vmatprep.subr.bf16.mxu0 0
      %3684 = vmatpush1.bf16.msra.mxu0 %v3269
      %3685 = vmatprep.subr.bf16.mxu0 0
      %3686 = vmatpush1.bf16.msra.mxu0 %v3270
      %3687 = vmatprep.subr.bf16.mxu0 0
      %3688 = vmatpush1.bf16.msra.mxu0 %v3271
      %3689 = vmatprep.subr.bf16.mxu0 0
      %3690 = vmatpush1.bf16.msra.mxu0 %v3272
      %3691 = vmatprep.subr.bf16.mxu0 0
      %3692 = vmatpush1.bf16.msra.mxu0 %v3273
      %3693 = vmatprep.subr.bf16.mxu0 0
      %3694 = vmatpush1.bf16.msra.mxu0 %v3274
      %3695 = vmatprep.mubr.bf16.mxu0 %v3554
      %3696 = vmatmul.mubr.bf16.gmra.mrb[0].mxu0 %v3553
      %v3697 = vpop.f32.mrb[0].mxu0
      %v3698 = vadd.f32 %v3314, %v3697
      %v3699 = vpop.f32.mrb[0].mxu0
      %v3700 = vpop.f32.mrb[0].mxu0
      %v3701 = vadd.f32 %v3319, %v3700
      %v3702 = vpop.f32.mrb[0].mxu0
      %3703 = vmatprep.mubr.bf16.mxu0 %v3558
      %3704 = vmatmul.mubr.bf16.gmra.mrb[0].mxu0 %v3557
      %v3705 = vpop.f32.mrb[0].mxu0
      %v3706 = vadd.f32 %v3324, %v3705
      %v3707 = vpop.f32.mrb[0].mxu0
      %v3708 = vpop.f32.mrb[0].mxu0
      %v3709 = vadd.f32 %v3329, %v3708
      %v3710 = vpop.f32.mrb[0].mxu0
      %3711 = vmatprep.mubr.bf16.mxu0 %v3562
      %3712 = vmatmul.mubr.bf16.gmra.mrb[0].mxu0 %v3561
      %v3713 = vpop.f32.mrb[0].mxu0
      %v3714 = vadd.f32 %v3334, %v3713
      %v3715 = vpop.f32.mrb[0].mxu0
      %v3716 = vpop.f32.mrb[0].mxu0
      %v3717 = vadd.f32 %v3339, %v3716
      %v3718 = vpop.f32.mrb[0].mxu0
      %3719 = vmatprep.mubr.bf16.mxu0 %v3566
      %3720 = vmatmul.mubr.bf16.gmra.mrb[0].mxu0 %v3565
      %v3721 = vpop.f32.mrb[0].mxu0
      %v3722 = vadd.f32 %v3344, %v3721
      %v3723 = vpop.f32.mrb[0].mxu0
      %v3724 = vpop.f32.mrb[0].mxu0
      %v3725 = vadd.f32 %v3349, %v3724
      %v3726 = vpop.f32.mrb[0].mxu0
      %3727 = vmatprep.mubr.bf16.mxu0 %v3570
      %3728 = vmatmul.mubr.bf16.gmra.mrb[0].mxu0 %v3569
      %v3729 = vpop.f32.mrb[0].mxu0
      %v3730 = vadd.f32 %v3354, %v3729
      %v3731 = vpop.f32.mrb[0].mxu0
      %v3732 = vpop.f32.mrb[0].mxu0
      %v3733 = vadd.f32 %v3359, %v3732
      %v3734 = vpop.f32.mrb[0].mxu0
      %3735 = vmatprep.mubr.bf16.mxu0 %v3574
      %3736 = vmatmul.mubr.bf16.gmra.mrb[0].mxu0 %v3573
      %v3737 = vpop.f32.mrb[0].mxu0
      %v3738 = vadd.f32 %v3364, %v3737
      %v3739 = vpop.f32.mrb[0].mxu0
      %v3740 = vpop.f32.mrb[0].mxu0
      %v3741 = vadd.f32 %v3369, %v3740
      %v3742 = vpop.f32.mrb[0].mxu0
      %3743 = vmatprep.mubr.bf16.mxu0 %v3578
      %3744 = vmatmul.mubr.bf16.gmra.mrb[0].mxu0 %v3577
      %v3745 = vpop.f32.mrb[0].mxu0
      %v3746 = vadd.f32 %v3374, %v3745
      %v3747 = vpop.f32.mrb[0].mxu0
      %v3748 = vpop.f32.mrb[0].mxu0
      %v3749 = vadd.f32 %v3379, %v3748
      %v3750 = vpop.f32.mrb[0].mxu0
      %3751 = vmatprep.mubr.bf16.mxu0 %v3582
      %3752 = vmatmul.mubr.bf16.gmra.mrb[0].mxu0 %v3581
      %v3753 = vpop.f32.mrb[0].mxu0
      %v3754 = vadd.f32 %v3384, %v3753
      %v3755 = vpop.f32.mrb[0].mxu0
      %v3756 = vpop.f32.mrb[0].mxu0
      %v3757 = vadd.f32 %v3389, %v3756
      %v3758 = vpop.f32.mrb[0].mxu0
      %3759 = vmatprep.mubr.bf16.mxu0 %v3586
      %3760 = vmatmul.mubr.bf16.gmra.mrb[0].mxu0 %v3585
      %v3761 = vpop.f32.mrb[0].mxu0
      %v3762 = vadd.f32 %v3394, %v3761
      %v3763 = vpop.f32.mrb[0].mxu0
      %v3764 = vpop.f32.mrb[0].mxu0
      %v3765 = vadd.f32 %v3399, %v3764
      %v3766 = vpop.f32.mrb[0].mxu0
      %3767 = vmatprep.mubr.bf16.mxu0 %v3590
      %3768 = vmatmul.mubr.bf16.gmra.mrb[0].mxu0 %v3589
      %v3769 = vpop.f32.mrb[0].mxu0
      %v3770 = vadd.f32 %v3404, %v3769
      %v3771 = vpop.f32.mrb[0].mxu0
      %v3772 = vpop.f32.mrb[0].mxu0
      %v3773 = vadd.f32 %v3409, %v3772
      %v3774 = vpop.f32.mrb[0].mxu0
      %3775 = vmatprep.mubr.bf16.mxu0 %v3594
      %3776 = vmatmul.mubr.bf16.gmra.mrb[0].mxu0 %v3593
      %v3777 = vpop.f32.mrb[0].mxu0
      %v3778 = vadd.f32 %v3414, %v3777
      %v3779 = vpop.f32.mrb[0].mxu0
      %v3780 = vpop.f32.mrb[0].mxu0
      %v3781 = vadd.f32 %v3419, %v3780
      %v3782 = vpop.f32.mrb[0].mxu0
      %3783 = vdwg.mxu0
      %3784 = vmatprep.subr.bf16.mxu0 0
      %3785 = vmatpush1.bf16.msra.mxu0 %v3275
      %3786 = vmatprep.subr.bf16.mxu0 0
      %3787 = vmatpush1.bf16.msra.mxu0 %v3276
      %3788 = vmatprep.subr.bf16.mxu0 0
      %3789 = vmatpush1.bf16.msra.mxu0 %v3277
      %3790 = vmatprep.subr.bf16.mxu0 0
      %3791 = vmatpush1.bf16.msra.mxu0 %v3278
      %3792 = vmatprep.subr.bf16.mxu0 0
      %3793 = vmatpush1.bf16.msra.mxu0 %v3279
      %3794 = vmatprep.subr.bf16.mxu0 0
      %3795 = vmatpush1.bf16.msra.mxu0 %v3280
      %3796 = vmatprep.subr.bf16.mxu0 0
      %3797 = vmatpush1.bf16.msra.mxu0 %v3281
      %3798 = vmatprep.subr.bf16.mxu0 0
      %3799 = vmatpush1.bf16.msra.mxu0 %v3282
      %3800 = vmatprep.subr.bf16.mxu0 0
      %3801 = vmatpush1.bf16.msra.mxu0 %v3283
      %3802 = vmatprep.subr.bf16.mxu0 0
      %3803 = vmatpush1.bf16.msra.mxu0 %v3284
      %3804 = vmatprep.subr.bf16.mxu0 0
      %3805 = vmatpush1.bf16.msra.mxu0 %v3285
      %3806 = vmatprep.subr.bf16.mxu0 0
      %3807 = vmatpush1.bf16.msra.mxu0 %v3286
      %3808 = vmatprep.subr.bf16.mxu0 0
      %3809 = vmatpush1.bf16.msra.mxu0 %v3287
      %3810 = vmatprep.subr.bf16.mxu0 0
      %3811 = vmatpush1.bf16.msra.mxu0 %v3288
      %3812 = vmatprep.subr.bf16.mxu0 0
      %3813 = vmatpush1.bf16.msra.mxu0 0
      %3814 = vmatprep.subr.bf16.mxu0 0
      %3815 = vmatpush1.bf16.msra.mxu0 0
      %3816 = vmatprep.mubr.bf16.mxu0 %v3631
      %3817 = vmatmul.mubr.bf16.gmra.mrb[0].mxu0 %v3555
      %v3818 = vpop.f32.mrb[0].mxu0
      %v3819 = vadd.f32 %v3698, %v3818
      %v3820 = vpop.f32.mrb[0].mxu0
      %v3821 = vpop.f32.mrb[0].mxu0
      %v3822 = vadd.f32 %v3701, %v3821
      %v3823 = vpop.f32.mrb[0].mxu0
      %3824 = vmatprep.mubr.bf16.mxu0 %v3634
      %3825 = vmatmul.mubr.bf16.gmra.mrb[0].mxu0 %v3559
      %v3826 = vpop.f32.mrb[0].mxu0
      %v3827 = vadd.f32 %v3706, %v3826
      %v3828 = vpop.f32.mrb[0].mxu0
      %v3829 = vpop.f32.mrb[0].mxu0
      %v3830 = vadd.f32 %v3709, %v3829
      %v3831 = vpop.f32.mrb[0].mxu0
      %3832 = vmatprep.mubr.bf16.mxu0 %v3637
      %3833 = vmatmul.mubr.bf16.gmra.mrb[0].mxu0 %v3563
      %v3834 = vpop.f32.mrb[0].mxu0
      %v3835 = vadd.f32 %v3714, %v3834
      %v3836 = vpop.f32.mrb[0].mxu0
      %v3837 = vpop.f32.mrb[0].mxu0
      %v3838 = vadd.f32 %v3717, %v3837
      %v3839 = vpop.f32.mrb[0].mxu0
      %3840 = vmatprep.mubr.bf16.mxu0 %v3640
      %3841 = vmatmul.mubr.bf16.gmra.mrb[0].mxu0 %v3567
      %v3842 = vpop.f32.mrb[0].mxu0
      %v3843 = vadd.f32 %v3722, %v3842
      %v3844 = vpop.f32.mrb[0].mxu0
      %v3845 = vpop.f32.mrb[0].mxu0
      %v3846 = vadd.f32 %v3725, %v3845
      %v3847 = vpop.f32.mrb[0].mxu0
      %3848 = vmatprep.mubr.bf16.mxu0 %v3643
      %3849 = vmatmul.mubr.bf16.gmra.mrb[0].mxu0 %v3571
      %v3850 = vpop.f32.mrb[0].mxu0
      %v3851 = vadd.f32 %v3730, %v3850
      %v3852 = vpop.f32.mrb[0].mxu0
      %v3853 = vpop.f32.mrb[0].mxu0
      %v3854 = vadd.f32 %v3733, %v3853
      %v3855 = vpop.f32.mrb[0].mxu0
      %3856 = vmatprep.mubr.bf16.mxu0 %v3646
      %3857 = vmatmul.mubr.bf16.gmra.mrb[0].mxu0 %v3575
      %v3858 = vpop.f32.mrb[0].mxu0
      %v3859 = vadd.f32 %v3738, %v3858
      %v3860 = vpop.f32.mrb[0].mxu0
      %v3861 = vpop.f32.mrb[0].mxu0
      %v3862 = vadd.f32 %v3741, %v3861
      %v3863 = vpop.f32.mrb[0].mxu0
      %3864 = vmatprep.mubr.bf16.mxu0 %v3649
      %3865 = vmatmul.mubr.bf16.gmra.mrb[0].mxu0 %v3579
      %v3866 = vpop.f32.mrb[0].mxu0
      %v3867 = vadd.f32 %v3746, %v3866
      %v3868 = vpop.f32.mrb[0].mxu0
      %v3869 = vpop.f32.mrb[0].mxu0
      %v3870 = vadd.f32 %v3749, %v3869
      %v3871 = vpop.f32.mrb[0].mxu0
      %3872 = vmatprep.mubr.bf16.mxu0 %v3652
      %3873 = vmatmul.mubr.bf16.gmra.mrb[0].mxu0 %v3583
      %v3874 = vpop.f32.mrb[0].mxu0
      %v3875 = vadd.f32 %v3754, %v3874
      %v3876 = vpop.f32.mrb[0].mxu0
      %v3877 = vpop.f32.mrb[0].mxu0
      %v3878 = vadd.f32 %v3757, %v3877
      %v3879 = vpop.f32.mrb[0].mxu0
      %3880 = vmatprep.mubr.bf16.mxu0 %v3655
      %3881 = vmatmul.mubr.bf16.gmra.mrb[0].mxu0 %v3587
      %v3882 = vpop.f32.mrb[0].mxu0
      %v3883 = vadd.f32 %v3762, %v3882
      %v3884 = vpop.f32.mrb[0].mxu0
      %v3885 = vpop.f32.mrb[0].mxu0
      %v3886 = vadd.f32 %v3765, %v3885
      %v3887 = vpop.f32.mrb[0].mxu0
      %3888 = vmatprep.mubr.bf16.mxu0 %v3658
      %3889 = vmatmul.mubr.bf16.gmra.mrb[0].mxu0 %v3591
      %v3890 = vpop.f32.mrb[0].mxu0
      %v3891 = vadd.f32 %v3770, %v3890
      %v3892 = vpop.f32.mrb[0].mxu0
      %v3893 = vpop.f32.mrb[0].mxu0
      %v3894 = vadd.f32 %v3773, %v3893
      %v3895 = vpop.f32.mrb[0].mxu0
      %3896 = vmatprep.mubr.bf16.mxu0 %v3661
      %3897 = vmatmul.mubr.bf16.gmra.mrb[0].mxu0 %v3595
      %v3898 = vpop.f32.mrb[0].mxu0
      %v3899 = vadd.f32 %v3778, %v3898
      %v3900 = vpop.f32.mrb[0].mxu0
      %v3901 = vpop.f32.mrb[0].mxu0
      %v3902 = vadd.f32 %v3781, %v3901
      %v3903 = vpop.f32.mrb[0].mxu0
      %3904 = vdwg.mxu0
      %v3905 = vxor.u32 %v3819, 2147483648
      %v3906 = vxor.u32 %v3822, 2147483648
      %v3907 = vxor.u32 %v3827, 2147483648
      %v3908 = vxor.u32 %v3830, 2147483648
      %v3909 = vxor.u32 %v3835, 2147483648
      %v3910 = vxor.u32 %v3838, 2147483648
      %v3911 = vxor.u32 %v3843, 2147483648
      %v3912 = vxor.u32 %v3846, 2147483648
      %v3913 = vxor.u32 %v3851, 2147483648
      %v3914 = vxor.u32 %v3854, 2147483648
      %v3915 = vxor.u32 %v3859, 2147483648
      %v3916 = vxor.u32 %v3862, 2147483648
      %v3917 = vxor.u32 %v3867, 2147483648
      %v3918 = vxor.u32 %v3870, 2147483648
      %v3919 = vxor.u32 %v3875, 2147483648
      %v3920 = vxor.u32 %v3878, 2147483648
      %v3921 = vxor.u32 %v3883, 2147483648
      %v3922 = vxor.u32 %v3886, 2147483648
      %v3923 = vxor.u32 %v3891, 2147483648
      %v3924 = vxor.u32 %v3894, 2147483648
      %v3925 = vxor.u32 %v3899, 2147483648
      %v3926 = vxor.u32 %v3902, 2147483648
      %v3927 = vmul.f32 %v3905, 1.442695
      %v3928 = vpow.pop %v3927
      %v3929 = vmul.f32 %v3906, 1.442695
      %v3930 = vpow.pop %v3929
      %v3931 = vmul.f32 %v3907, 1.442695
      %v3932 = vpow.pop %v3931
      %v3933 = vmul.f32 %v3908, 1.442695
      %v3934 = vpow.pop %v3933
      %v3935 = vmul.f32 %v3909, 1.442695
      %v3936 = vpow.pop %v3935
      %v3937 = vmul.f32 %v3910, 1.442695
      %v3938 = vpow.pop %v3937
      %v3939 = vmul.f32 %v3911, 1.442695
      %v3940 = vpow.pop %v3939
      %v3941 = vmul.f32 %v3912, 1.442695
      %v3942 = vpow.pop %v3941
      %v3943 = vmul.f32 %v3913, 1.442695
      %v3944 = vpow.pop %v3943
      %v3945 = vmul.f32 %v3914, 1.442695
      %v3946 = vpow.pop %v3945
      %v3947 = vmul.f32 %v3915, 1.442695
      %v3948 = vpow.pop %v3947
      %v3949 = vmul.f32 %v3916, 1.442695
      %v3950 = vpow.pop %v3949
      %v3951 = vmul.f32 %v3917, 1.442695
      %v3952 = vpow.pop %v3951
      %v3953 = vmul.f32 %v3918, 1.442695
      %v3954 = vpow.pop %v3953
      %v3955 = vmul.f32 %v3919, 1.442695
      %v3956 = vpow.pop %v3955
      %v3957 = vmul.f32 %v3920, 1.442695
      %v3958 = vpow.pop %v3957
      %v3959 = vmul.f32 %v3921, 1.442695
      %v3960 = vpow.pop %v3959
      %v3961 = vmul.f32 %v3922, 1.442695
      %v3962 = vpow.pop %v3961
      %v3963 = vmul.f32 %v3923, 1.442695
      %v3964 = vpow.pop %v3963
      %v3965 = vmul.f32 %v3924, 1.442695
      %v3966 = vpow.pop %v3965
      %v3967 = vmul.f32 %v3925, 1.442695
      %v3968 = vpow.pop %v3967
      %v3969 = vmul.f32 %v3926, 1.442695
      %v3970 = vpow.pop %v3969
      %v3971 = vadd.f32 %v3928, 1.0
      %v3972 = vadd.f32 %v3930, 1.0
      %v3973 = vadd.f32 %v3932, 1.0
      %v3974 = vadd.f32 %v3934, 1.0
      %v3975 = vadd.f32 %v3936, 1.0
      %v3976 = vadd.f32 %v3938, 1.0
      %v3977 = vadd.f32 %v3940, 1.0
      %v3978 = vadd.f32 %v3942, 1.0
      %v3979 = vadd.f32 %v3944, 1.0
      %v3980 = vadd.f32 %v3946, 1.0
      %v3981 = vadd.f32 %v3948, 1.0
      %v3982 = vadd.f32 %v3950, 1.0
      %v3983 = vadd.f32 %v3952, 1.0
      %v3984 = vadd.f32 %v3954, 1.0
      %v3985 = vadd.f32 %v3956, 1.0
      %v3986 = vadd.f32 %v3958, 1.0
      %v3987 = vadd.f32 %v3960, 1.0
      %v3988 = vadd.f32 %v3962, 1.0
      %v3989 = vadd.f32 %v3964, 1.0
      %v3990 = vadd.f32 %v3966, 1.0
      %v3991 = vadd.f32 %v3968, 1.0
      %v3992 = vadd.f32 %v3970, 1.0
      %v3993 = vrcp.pop %v3971
      %v3994 = vmul.f32 1.0, %v3993
      %v3995 = vrcp.pop %v3972
      %v3996 = vmul.f32 1.0, %v3995
      %v3997 = vrcp.pop %v3973
      %v3998 = vmul.f32 1.0, %v3997
      %v3999 = vrcp.pop %v3974
      %v4000 = vmul.f32 1.0, %v3999
      %v4001 = vrcp.pop %v3975
      %v4002 = vmul.f32 1.0, %v4001
      %v4003 = vrcp.pop %v3976
      %v4004 = vmul.f32 1.0, %v4003
      %v4005 = vrcp.pop %v3977
      %v4006 = vmul.f32 1.0, %v4005
      %v4007 = vrcp.pop %v3978
      %v4008 = vmul.f32 1.0, %v4007
      %v4009 = vrcp.pop %v3979
      %v4010 = vmul.f32 1.0, %v4009
      %v4011 = vrcp.pop %v3980
      %v4012 = vmul.f32 1.0, %v4011
      %v4013 = vrcp.pop %v3981
      %v4014 = vmul.f32 1.0, %v4013
      %v4015 = vrcp.pop %v3982
      %v4016 = vmul.f32 1.0, %v4015
      %v4017 = vrcp.pop %v3983
      %v4018 = vmul.f32 1.0, %v4017
      %v4019 = vrcp.pop %v3984
      %v4020 = vmul.f32 1.0, %v4019
      %v4021 = vrcp.pop %v3985
      %v4022 = vmul.f32 1.0, %v4021
      %v4023 = vrcp.pop %v3986
      %v4024 = vmul.f32 1.0, %v4023
      %v4025 = vrcp.pop %v3987
      %v4026 = vmul.f32 1.0, %v4025
      %v4027 = vrcp.pop %v3988
      %v4028 = vmul.f32 1.0, %v4027
      %v4029 = vrcp.pop %v3989
      %v4030 = vmul.f32 1.0, %v4029
      %v4031 = vrcp.pop %v3990
      %v4032 = vmul.f32 1.0, %v4031
      %v4033 = vrcp.pop %v3991
      %v4034 = vmul.f32 1.0, %v4033
      %v4035 = vrcp.pop %v3992
      %v4036 = vmul.f32 1.0, %v4035
      %v4037 = vmul.f32 %v3819, %v3994
      %v4038 = vmul.f32 %v3822, %v3996
      %v4039 = vmul.f32 %v3827, %v3998
      %v4040 = vmul.f32 %v3830, %v4000
      %v4041 = vmul.f32 %v3835, %v4002
      %v4042 = vmul.f32 %v3838, %v4004
      %v4043 = vmul.f32 %v3843, %v4006
      %v4044 = vmul.f32 %v3846, %v4008
      %v4045 = vmul.f32 %v3851, %v4010
      %v4046 = vmul.f32 %v3854, %v4012
      %v4047 = vmul.f32 %v3859, %v4014
      %v4048 = vmul.f32 %v3862, %v4016
      %v4049 = vmul.f32 %v3867, %v4018
      %v4050 = vmul.f32 %v3870, %v4020
      %v4051 = vmul.f32 %v3875, %v4022
      %v4052 = vmul.f32 %v3878, %v4024
      %v4053 = vmul.f32 %v3883, %v4026
      %v4054 = vmul.f32 %v3886, %v4028
      %v4055 = vmul.f32 %v3891, %v4030
      %v4056 = vmul.f32 %v3894, %v4032
      %v4057 = vmul.f32 %v3899, %v4034
      %v4058 = vmul.f32 %v3902, %v4036
      %v4059 = vpack.c.bf16 %v4038, %v4037
      %v4060 = vpack.c.bf16 %v4040, %v4039
      %v4061 = vpack.c.bf16 %v4042, %v4041
      %v4062 = vpack.c.bf16 %v4044, %v4043
      %v4063 = vpack.c.bf16 %v4046, %v4045
      %v4064 = vpack.c.bf16 %v4048, %v4047
      %v4065 = vpack.c.bf16 %v4050, %v4049
      %v4066 = vpack.c.bf16 %v4052, %v4051
      %v4067 = vpack.c.bf16 %v4054, %v4053
      %v4068 = vpack.c.bf16 %v4056, %v4055
      %v4069 = vpack.c.bf16 %v4058, %v4057
      %4070 = vst [vmem:[#allocation3 + $0x108] sm:$0xff] %v4059
      %4071 = vst [vmem:[#allocation3 + $0x110] sm:$0xff] %v4060
      %4072 = vst [vmem:[#allocation3 + $0x118] sm:$0xff] %v4061
      %4073 = vst [vmem:[#allocation3 + $0x120] sm:$0xff] %v4062
      %4074 = vst [vmem:[#allocation3 + $0x128] sm:$0xff] %v4063
      %4075 = vst [vmem:[#allocation3 + $0x130] sm:$0xff] %v4064
      %4076 = vst [vmem:[#allocation3 + $0x138] sm:$0xff] %v4065
      %4077 = vst [vmem:[#allocation3 + $0x140] sm:$0xff] %v4066
      %4078 = vst [vmem:[#allocation3 + $0x148] sm:$0xff] %v4067
      %4079 = vst [vmem:[#allocation3 + $0x150] sm:$0xff] %v4068
      %4080 = vst [vmem:[#allocation3 + $0x158] sm:$0xff] %v4069
      %v4081 = vld [vmem:[%s1 + $0x580] sm:$0xff]
      %v4082 = vld [vmem:[%s1 + $0x588] sm:$0xff]
      %v4083 = vld [vmem:[%s1 + $0x590] sm:$0xff]
      %v4084 = vld [vmem:[%s1 + $0x598] sm:$0xff]
      %v4085 = vld [vmem:[%s1 + $0x5a0] sm:$0xff]
      %v4086 = vld [vmem:[%s1 + $0x5a8] sm:$0xff]
      %v4087 = vld [vmem:[%s1 + $0x5b0] sm:$0xff]
      %v4088 = vld [vmem:[%s1 + $0x5b8] sm:$0xff]
      %v4089 = vld [vmem:[%s1 + $0x5c0] sm:$0xff]
      %v4090 = vld [vmem:[%s1 + $0x5c8] sm:$0xff]
      %v4091 = vld [vmem:[%s1 + $0x5d0] sm:$0xff]
      %v4092 = vld [vmem:[%s1 + $0x5d8] sm:$0xff]
      %v4093 = vld [vmem:[%s1 + $0x5e0] sm:$0xff]
      %v4094 = vld [vmem:[%s1 + $0x5e8] sm:$0xff]
      %v4095 = vld [vmem:[%s1 + $0x5f0] sm:$0xff]
      %v4096 = vld [vmem:[%s1 + $0x5f8] sm:$0xff]
      %v4097 = vld [vmem:[%s1 + $0x600] sm:$0xff]
      %v4098 = vld [vmem:[%s1 + $0x608] sm:$0xff]
      %v4099 = vld [vmem:[%s1 + $0x610] sm:$0xff]
      %v4100 = vld [vmem:[%s1 + $0x618] sm:$0xff]
      %v4101 = vld [vmem:[%s1 + $0x620] sm:$0xff]
      %v4102 = vld [vmem:[%s1 + $0x628] sm:$0xff]
      %v4103 = vld [vmem:[%s1 + $0x630] sm:$0xff]
      %v4104 = vld [vmem:[%s1 + $0x638] sm:$0xff]
      %v4105 = vld [vmem:[%s1 + $0x640] sm:$0xff]
      %v4106 = vld [vmem:[%s1 + $0x648] sm:$0xff]
      %v4107 = vld [vmem:[%s1 + $0x650] sm:$0xff]
      %v4108 = vld [vmem:[%s1 + $0x658] sm:$0xff]
      %v4109 = vld [vmem:[%s1 + $0x660] sm:$0xff]
      %v4110 = vld [vmem:[%s1 + $0x668] sm:$0xff]
      %v4111 = vld [vmem:[%s1 + $0x670] sm:$0xff]
      %v4112 = vld [vmem:[%s1 + $0x678] sm:$0xff]
      %v4113 = vld [vmem:[%s1 + $0x680] sm:$0xff]
      %v4114 = vld [vmem:[%s1 + $0x688] sm:$0xff]
      %v4115 = vld [vmem:[%s1 + $0x690] sm:$0xff]
      %v4116 = vld [vmem:[%s1 + $0x698] sm:$0xff]
      %v4117 = vld [vmem:[%s1 + $0x6a0] sm:$0xff]
      %v4118 = vld [vmem:[%s1 + $0x6a8] sm:$0xff]
      %v4119 = vld [vmem:[%s1 + $0x6b0] sm:$0xff]
      %v4120 = vld [vmem:[%s1 + $0x6b8] sm:$0xff]
      %v4121 = vld [vmem:[%s1 + $0x6c0] sm:$0xff]
      %v4122 = vld [vmem:[%s1 + $0x6c8] sm:$0xff]
      %v4123 = vld [vmem:[%s1 + $0x6d0] sm:$0xff]
      %v4124 = vld [vmem:[%s1 + $0x6d8] sm:$0xff]
      %v4125 = vld [vmem:[#allocation2] sm:$0xff]
      %v4126 = vld [vmem:[#allocation2 + $0x8] sm:$0xff]
      %v4127 = vld [vmem:[#allocation2 + $0x10] sm:$0xff]
      %v4128 = vld [vmem:[#allocation2 + $0x18] sm:$0xff]
      %v4129 = vld [vmem:[#allocation2 + $0x20] sm:$0xff]
      %v4130 = vld [vmem:[#allocation2 + $0x28] sm:$0xff]
      %v4131 = vld [vmem:[#allocation2 + $0x30] sm:$0xff]
      %v4132 = vld [vmem:[#allocation2 + $0x38] sm:$0xff]
      %v4133 = vld [vmem:[#allocation2 + $0x40] sm:$0xff]
      %v4134 = vld [vmem:[#allocation2 + $0x48] sm:$0xff]
      %v4135 = vld [vmem:[#allocation2 + $0x50] sm:$0xff]
      %v4136 = vld [vmem:[#allocation2 + $0x58] sm:$0xff]
      %v4137 = vld [vmem:[#allocation2 + $0x60] sm:$0xff]
      %v4138 = vld [vmem:[#allocation2 + $0x68] sm:$0xff]
      %v4139 = vld [vmem:[#allocation2 + $0x70] sm:$0xff]
      %v4140 = vld [vmem:[#allocation2 + $0x78] sm:$0xff]
      %v4141 = vld [vmem:[#allocation2 + $0x80] sm:$0xff]
      %v4142 = vld [vmem:[#allocation2 + $0x88] sm:$0xff]
      %v4143 = vld [vmem:[#allocation2 + $0x90] sm:$0xff]
      %v4144 = vld [vmem:[#allocation2 + $0x98] sm:$0xff]
      %v4145 = vld [vmem:[#allocation2 + $0xa0] sm:$0xff]
      %v4146 = vld [vmem:[#allocation2 + $0xa8] sm:$0xff]
      %v4147 = vld [vmem:[#allocation2 + $0xb0] sm:$0xff]
      %v4148 = vld [vmem:[#allocation2 + $0xb8] sm:$0xff]
      %v4149 = vld [vmem:[#allocation2 + $0xc0] sm:$0xff]
      %v4150 = vld [vmem:[#allocation2 + $0xc8] sm:$0xff]
      %v4151 = vld [vmem:[#allocation2 + $0xd0] sm:$0xff]
      %v4152 = vld [vmem:[#allocation2 + $0xd8] sm:$0xff]
      %v4153 = vld [vmem:[#allocation2 + $0xe0] sm:$0xff]
      %v4154 = vld [vmem:[#allocation2 + $0xe8] sm:$0xff]
      %v4155 = vld [vmem:[%s2 + $0x2c0] sm:$0xff]
      %v4156 = vld [vmem:[%s2 + $0x2c8] sm:$0xff]
      %v4157 = vld [vmem:[%s2 + $0x2d0] sm:$0xff]
      %v4158 = vld [vmem:[%s2 + $0x2d8] sm:$0xff]
      %v4159 = vld [vmem:[%s2 + $0x2e0] sm:$0xff]
      %v4160 = vld [vmem:[%s2 + $0x2e8] sm:$0xff]
      %v4161 = vld [vmem:[%s2 + $0x2f0] sm:$0xff]
      %v4162 = vld [vmem:[%s2 + $0x2f8] sm:$0xff]
      %v4163 = vld [vmem:[%s2 + $0x300] sm:$0xff]
      %v4164 = vld [vmem:[%s2 + $0x308] sm:$0xff]
      %v4165 = vld [vmem:[%s2 + $0x310] sm:$0xff]
      %v4166 = vld [vmem:[%s2 + $0x318] sm:$0xff]
      %v4167 = vld [vmem:[%s2 + $0x320] sm:$0xff]
      %v4168 = vld [vmem:[%s2 + $0x328] sm:$0xff]
      %v4169 = vld [vmem:[%s2 + $0x330] sm:$0xff]
      %v4170 = vld [vmem:[%s2 + $0x338] sm:$0xff]
      %v4171 = vld [vmem:[%s2 + $0x340] sm:$0xff]
      %v4172 = vld [vmem:[%s2 + $0x348] sm:$0xff]
      %v4173 = vld [vmem:[%s2 + $0x350] sm:$0xff]
      %v4174 = vld [vmem:[%s2 + $0x358] sm:$0xff]
      %v4175 = vld [vmem:[%s2 + $0x360] sm:$0xff]
      %v4176 = vld [vmem:[%s2 + $0x368] sm:$0xff]
      %4178 = vset.pattern.permute.xlu0 0
      %4179 = vperm.xlu0 %4178, %v4155
      %v4180 = vpop.permute.xlu0 %4179
      %4183 = vset.pattern.permute.xlu0 0
      %4184 = vperm.xlu0 %4183, %v4156
      %v4185 = vpop.permute.xlu0 %4184
      %4188 = vset.pattern.permute.xlu0 0
      %4189 = vperm.xlu0 %4188, %v4157
      %v4190 = vpop.permute.xlu0 %4189
      %4193 = vset.pattern.permute.xlu0 0
      %4194 = vperm.xlu0 %4193, %v4158
      %v4195 = vpop.permute.xlu0 %4194
      %4198 = vset.pattern.permute.xlu0 0
      %4199 = vperm.xlu0 %4198, %v4159
      %v4200 = vpop.permute.xlu0 %4199
      %4203 = vset.pattern.permute.xlu0 0
      %4204 = vperm.xlu0 %4203, %v4160
      %v4205 = vpop.permute.xlu0 %4204
      %4208 = vset.pattern.permute.xlu0 0
      %4209 = vperm.xlu0 %4208, %v4161
      %v4210 = vpop.permute.xlu0 %4209
      %4213 = vset.pattern.permute.xlu0 0
      %4214 = vperm.xlu0 %4213, %v4162
      %v4215 = vpop.permute.xlu0 %4214
      %4218 = vset.pattern.permute.xlu0 0
      %4219 = vperm.xlu0 %4218, %v4163
      %v4220 = vpop.permute.xlu0 %4219
      %4223 = vset.pattern.permute.xlu0 0
      %4224 = vperm.xlu0 %4223, %v4164
      %v4225 = vpop.permute.xlu0 %4224
      %4228 = vset.pattern.permute.xlu0 0
      %4229 = vperm.xlu0 %4228, %v4165
      %v4230 = vpop.permute.xlu0 %4229
      %4233 = vset.pattern.permute.xlu0 0
      %4234 = vperm.xlu0 %4233, %v4166
      %v4235 = vpop.permute.xlu0 %4234
      %4238 = vset.pattern.permute.xlu0 0
      %4239 = vperm.xlu0 %4238, %v4167
      %v4240 = vpop.permute.xlu0 %4239
      %4243 = vset.pattern.permute.xlu0 0
      %4244 = vperm.xlu0 %4243, %v4168
      %v4245 = vpop.permute.xlu0 %4244
      %4248 = vset.pattern.permute.xlu0 0
      %4249 = vperm.xlu0 %4248, %v4169
      %v4250 = vpop.permute.xlu0 %4249
      %4253 = vset.pattern.permute.xlu0 0
      %4254 = vperm.xlu0 %4253, %v4170
      %v4255 = vpop.permute.xlu0 %4254
      %4258 = vset.pattern.permute.xlu0 0
      %4259 = vperm.xlu0 %4258, %v4171
      %v4260 = vpop.permute.xlu0 %4259
      %4263 = vset.pattern.permute.xlu0 0
      %4264 = vperm.xlu0 %4263, %v4172
      %v4265 = vpop.permute.xlu0 %4264
      %4268 = vset.pattern.permute.xlu0 0
      %4269 = vperm.xlu0 %4268, %v4173
      %v4270 = vpop.permute.xlu0 %4269
      %4273 = vset.pattern.permute.xlu0 0
      %4274 = vperm.xlu0 %4273, %v4174
      %v4275 = vpop.permute.xlu0 %4274
      %4278 = vset.pattern.permute.xlu0 0
      %4279 = vperm.xlu0 %4278, %v4175
      %v4280 = vpop.permute.xlu0 %4279
      %4283 = vset.pattern.permute.xlu0 0
      %4284 = vperm.xlu0 %4283, %v4176
      %v4285 = vpop.permute.xlu0 %4284
      %v4331 = vunpack.c.l.b16 %v4081
      %v4332 = vunpack.c.h.b16 %v4081
      %v4333 = vunpack.c.l.b16 %v4082
      %v4334 = vunpack.c.h.b16 %v4082
      %v4335 = vunpack.c.l.b16 %v4083
      %v4336 = vunpack.c.h.b16 %v4083
      %v4337 = vunpack.c.l.b16 %v4084
      %v4338 = vunpack.c.h.b16 %v4084
      %v4339 = vunpack.c.l.b16 %v4085
      %v4340 = vunpack.c.h.b16 %v4085
      %v4341 = vunpack.c.l.b16 %v4086
      %v4342 = vunpack.c.h.b16 %v4086
      %v4343 = vunpack.c.l.b16 %v4087
      %v4344 = vunpack.c.h.b16 %v4087
      %v4345 = vunpack.c.l.b16 %v4088
      %v4346 = vunpack.c.h.b16 %v4088
      %v4347 = vunpack.c.l.b16 %v4089
      %v4348 = vunpack.c.h.b16 %v4089
      %v4349 = vunpack.c.l.b16 %v4090
      %v4350 = vunpack.c.h.b16 %v4090
      %v4351 = vunpack.c.l.b16 %v4091
      %v4352 = vunpack.c.h.b16 %v4091
      %v4353 = vunpack.c.l.b16 %v4092
      %v4354 = vunpack.c.h.b16 %v4092
      %v4355 = vunpack.c.l.b16 %v4093
      %v4356 = vunpack.c.h.b16 %v4093
      %v4357 = vunpack.c.l.b16 %v4094
      %v4358 = vunpack.c.h.b16 %v4094
      %v4359 = vunpack.c.l.b16 %v4095
      %v4360 = vunpack.c.h.b16 %v4095
      %v4361 = vunpack.c.l.b16 %v4096
      %v4362 = vunpack.c.h.b16 %v4096
      %v4363 = vunpack.c.l.b16 %v4097
      %v4364 = vunpack.c.h.b16 %v4097
      %v4365 = vunpack.c.l.b16 %v4098
      %v4366 = vunpack.c.h.b16 %v4098
      %v4367 = vunpack.c.l.b16 %v4099
      %v4368 = vunpack.c.h.b16 %v4099
      %v4369 = vunpack.c.l.b16 %v4100
      %v4370 = vunpack.c.h.b16 %v4100
      %v4371 = vunpack.c.l.b16 %v4101
      %v4372 = vunpack.c.h.b16 %v4101
      %v4373 = vunpack.c.l.b16 %v4102
      %v4374 = vunpack.c.h.b16 %v4102
      %v4375 = vunpack.c.l.b16 %v4103
      %v4376 = vunpack.c.h.b16 %v4103
      %v4377 = vunpack.c.l.b16 %v4104
      %v4378 = vunpack.c.h.b16 %v4104
      %v4379 = vunpack.c.l.b16 %v4105
      %v4380 = vunpack.c.h.b16 %v4105
      %v4381 = vunpack.c.l.b16 %v4106
      %v4382 = vunpack.c.h.b16 %v4106
      %v4383 = vunpack.c.l.b16 %v4107
      %v4384 = vunpack.c.h.b16 %v4107
      %v4385 = vunpack.c.l.b16 %v4108
      %v4386 = vunpack.c.h.b16 %v4108
      %v4387 = vunpack.c.l.b16 %v4109
      %v4388 = vunpack.c.h.b16 %v4109
      %v4389 = vunpack.c.l.b16 %v4110
      %v4390 = vunpack.c.h.b16 %v4110
      %v4391 = vunpack.c.l.b16 %v4111
      %v4392 = vunpack.c.h.b16 %v4111
      %v4393 = vunpack.c.l.b16 %v4112
      %v4394 = vunpack.c.h.b16 %v4112
      %v4395 = vunpack.c.l.b16 %v4113
      %v4396 = vunpack.c.h.b16 %v4113
      %v4397 = vunpack.c.l.b16 %v4114
      %v4398 = vunpack.c.h.b16 %v4114
      %v4399 = vunpack.c.l.b16 %v4115
      %v4400 = vunpack.c.h.b16 %v4115
      %v4401 = vunpack.c.l.b16 %v4116
      %v4402 = vunpack.c.h.b16 %v4116
      %v4403 = vunpack.c.l.b16 %v4117
      %v4404 = vunpack.c.h.b16 %v4117
      %v4405 = vunpack.c.l.b16 %v4118
      %v4406 = vunpack.c.h.b16 %v4118
      %v4407 = vunpack.c.l.b16 %v4119
      %v4408 = vunpack.c.h.b16 %v4119
      %v4409 = vunpack.c.l.b16 %v4120
      %v4410 = vunpack.c.h.b16 %v4120
      %v4411 = vunpack.c.l.b16 %v4121
      %v4412 = vunpack.c.h.b16 %v4121
      %v4413 = vunpack.c.l.b16 %v4122
      %v4414 = vunpack.c.h.b16 %v4122
      %v4415 = vunpack.c.l.b16 %v4123
      %v4416 = vunpack.c.h.b16 %v4123
      %v4417 = vunpack.c.l.b16 %v4124
      %v4418 = vunpack.c.h.b16 %v4124
      %v4419 = vpack.c.b16 %v4335, %v4331
      %v4420 = vpack.c.b16 %v4336, %v4332
      %v4421 = vpack.c.b16 %v4337, %v4333
      %v4422 = vpack.c.b16 %v4338, %v4334
      %v4423 = vpack.c.b16 %v4343, %v4339
      %v4424 = vpack.c.b16 %v4344, %v4340
      %v4425 = vpack.c.b16 %v4345, %v4341
      %v4426 = vpack.c.b16 %v4346, %v4342
      %v4427 = vpack.c.b16 %v4351, %v4347
      %v4428 = vpack.c.b16 %v4352, %v4348
      %v4429 = vpack.c.b16 %v4353, %v4349
      %v4430 = vpack.c.b16 %v4354, %v4350
      %v4431 = vpack.c.b16 %v4359, %v4355
      %v4432 = vpack.c.b16 %v4360, %v4356
      %v4433 = vpack.c.b16 %v4361, %v4357
      %v4434 = vpack.c.b16 %v4362, %v4358
      %v4435 = vpack.c.b16 %v4367, %v4363
      %v4436 = vpack.c.b16 %v4368, %v4364
      %v4437 = vpack.c.b16 %v4369, %v4365
      %v4438 = vpack.c.b16 %v4370, %v4366
      %v4439 = vpack.c.b16 %v4375, %v4371
      %v4440 = vpack.c.b16 %v4376, %v4372
      %v4441 = vpack.c.b16 %v4377, %v4373
      %v4442 = vpack.c.b16 %v4378, %v4374
      %v4443 = vpack.c.b16 %v4383, %v4379
      %v4444 = vpack.c.b16 %v4384, %v4380
      %v4445 = vpack.c.b16 %v4385, %v4381
      %v4446 = vpack.c.b16 %v4386, %v4382
      %v4447 = vpack.c.b16 %v4391, %v4387
      %v4448 = vpack.c.b16 %v4392, %v4388
      %v4449 = vpack.c.b16 %v4393, %v4389
      %v4450 = vpack.c.b16 %v4394, %v4390
      %v4451 = vpack.c.b16 %v4399, %v4395
      %v4452 = vpack.c.b16 %v4400, %v4396
      %v4453 = vpack.c.b16 %v4401, %v4397
      %v4454 = vpack.c.b16 %v4402, %v4398
      %v4455 = vpack.c.b16 %v4407, %v4403
      %v4456 = vpack.c.b16 %v4408, %v4404
      %v4457 = vpack.c.b16 %v4409, %v4405
      %v4458 = vpack.c.b16 %v4410, %v4406
      %v4459 = vpack.c.b16 %v4415, %v4411
      %v4460 = vpack.c.b16 %v4416, %v4412
      %v4461 = vpack.c.b16 %v4417, %v4413
      %v4462 = vpack.c.b16 %v4418, %v4414
      %v4497 = vsel %vm1031, %v4422, 0
      %v4500 = vsel %vm1031, %v4426, 0
      %v4503 = vsel %vm1031, %v4430, 0
      %v4506 = vsel %vm1031, %v4434, 0
      %v4509 = vsel %vm1031, %v4438, 0
      %v4512 = vsel %vm1031, %v4442, 0
      %v4515 = vsel %vm1031, %v4446, 0
      %v4518 = vsel %vm1031, %v4450, 0
      %v4521 = vsel %vm1031, %v4454, 0
      %v4524 = vsel %vm1031, %v4458, 0
      %v4527 = vsel %vm1031, %v4462, 0
      %4529 = vmatprep.subr.bf16.mxu0 0
      %4530 = vmatpush1.bf16.msra.mxu0 %v4125
      %4531 = vmatprep.subr.bf16.mxu0 0
      %4532 = vmatpush1.bf16.msra.mxu0 %v4126
      %4533 = vmatprep.subr.bf16.mxu0 0
      %4534 = vmatpush1.bf16.msra.mxu0 %v4127
      %4535 = vmatprep.subr.bf16.mxu0 0
      %4536 = vmatpush1.bf16.msra.mxu0 %v4128
      %4537 = vmatprep.subr.bf16.mxu0 0
      %4538 = vmatpush1.bf16.msra.mxu0 %v4129
      %4539 = vmatprep.subr.bf16.mxu0 0
      %4540 = vmatpush1.bf16.msra.mxu0 %v4130
      %4541 = vmatprep.subr.bf16.mxu0 0
      %4542 = vmatpush1.bf16.msra.mxu0 %v4131
      %4543 = vmatprep.subr.bf16.mxu0 0
      %4544 = vmatpush1.bf16.msra.mxu0 %v4132
      %4545 = vmatprep.subr.bf16.mxu0 0
      %4546 = vmatpush1.bf16.msra.mxu0 %v4133
      %4547 = vmatprep.subr.bf16.mxu0 0
      %4548 = vmatpush1.bf16.msra.mxu0 %v4134
      %4549 = vmatprep.subr.bf16.mxu0 0
      %4550 = vmatpush1.bf16.msra.mxu0 %v4135
      %4551 = vmatprep.subr.bf16.mxu0 0
      %4552 = vmatpush1.bf16.msra.mxu0 %v4136
      %4553 = vmatprep.subr.bf16.mxu0 0
      %4554 = vmatpush1.bf16.msra.mxu0 %v4137
      %4555 = vmatprep.subr.bf16.mxu0 0
      %4556 = vmatpush1.bf16.msra.mxu0 %v4138
      %4557 = vmatprep.subr.bf16.mxu0 0
      %4558 = vmatpush1.bf16.msra.mxu0 %v4139
      %4559 = vmatprep.subr.bf16.mxu0 0
      %4560 = vmatpush1.bf16.msra.mxu0 %v4140
      %4561 = vmatprep.mubr.bf16.mxu0 %v4420
      %4562 = vmatmul.mubr.bf16.gmra.mrb[0].mxu0 %v4419
      %v4563 = vpop.f32.mrb[0].mxu0
      %v4564 = vadd.f32 %v4180, %v4563
      %v4565 = vpop.f32.mrb[0].mxu0
      %v4566 = vpop.f32.mrb[0].mxu0
      %v4567 = vadd.f32 %v4185, %v4566
      %v4568 = vpop.f32.mrb[0].mxu0
      %4569 = vmatprep.mubr.bf16.mxu0 %v4424
      %4570 = vmatmul.mubr.bf16.gmra.mrb[0].mxu0 %v4423
      %v4571 = vpop.f32.mrb[0].mxu0
      %v4572 = vadd.f32 %v4190, %v4571
      %v4573 = vpop.f32.mrb[0].mxu0
      %v4574 = vpop.f32.mrb[0].mxu0
      %v4575 = vadd.f32 %v4195, %v4574
      %v4576 = vpop.f32.mrb[0].mxu0
      %4577 = vmatprep.mubr.bf16.mxu0 %v4428
      %4578 = vmatmul.mubr.bf16.gmra.mrb[0].mxu0 %v4427
      %v4579 = vpop.f32.mrb[0].mxu0
      %v4580 = vadd.f32 %v4200, %v4579
      %v4581 = vpop.f32.mrb[0].mxu0
      %v4582 = vpop.f32.mrb[0].mxu0
      %v4583 = vadd.f32 %v4205, %v4582
      %v4584 = vpop.f32.mrb[0].mxu0
      %4585 = vmatprep.mubr.bf16.mxu0 %v4432
      %4586 = vmatmul.mubr.bf16.gmra.mrb[0].mxu0 %v4431
      %v4587 = vpop.f32.mrb[0].mxu0
      %v4588 = vadd.f32 %v4210, %v4587
      %v4589 = vpop.f32.mrb[0].mxu0
      %v4590 = vpop.f32.mrb[0].mxu0
      %v4591 = vadd.f32 %v4215, %v4590
      %v4592 = vpop.f32.mrb[0].mxu0
      %4593 = vmatprep.mubr.bf16.mxu0 %v4436
      %4594 = vmatmul.mubr.bf16.gmra.mrb[0].mxu0 %v4435
      %v4595 = vpop.f32.mrb[0].mxu0
      %v4596 = vadd.f32 %v4220, %v4595
      %v4597 = vpop.f32.mrb[0].mxu0
      %v4598 = vpop.f32.mrb[0].mxu0
      %v4599 = vadd.f32 %v4225, %v4598
      %v4600 = vpop.f32.mrb[0].mxu0
      %4601 = vmatprep.mubr.bf16.mxu0 %v4440
      %4602 = vmatmul.mubr.bf16.gmra.mrb[0].mxu0 %v4439
      %v4603 = vpop.f32.mrb[0].mxu0
      %v4604 = vadd.f32 %v4230, %v4603
      %v4605 = vpop.f32.mrb[0].mxu0
      %v4606 = vpop.f32.mrb[0].mxu0
      %v4607 = vadd.f32 %v4235, %v4606
      %v4608 = vpop.f32.mrb[0].mxu0
      %4609 = vmatprep.mubr.bf16.mxu0 %v4444
      %4610 = vmatmul.mubr.bf16.gmra.mrb[0].mxu0 %v4443
      %v4611 = vpop.f32.mrb[0].mxu0
      %v4612 = vadd.f32 %v4240, %v4611
      %v4613 = vpop.f32.mrb[0].mxu0
      %v4614 = vpop.f32.mrb[0].mxu0
      %v4615 = vadd.f32 %v4245, %v4614
      %v4616 = vpop.f32.mrb[0].mxu0
      %4617 = vmatprep.mubr.bf16.mxu0 %v4448
      %4618 = vmatmul.mubr.bf16.gmra.mrb[0].mxu0 %v4447
      %v4619 = vpop.f32.mrb[0].mxu0
      %v4620 = vadd.f32 %v4250, %v4619
      %v4621 = vpop.f32.mrb[0].mxu0
      %v4622 = vpop.f32.mrb[0].mxu0
      %v4623 = vadd.f32 %v4255, %v4622
      %v4624 = vpop.f32.mrb[0].mxu0
      %4625 = vmatprep.mubr.bf16.mxu0 %v4452
      %4626 = vmatmul.mubr.bf16.gmra.mrb[0].mxu0 %v4451
      %v4627 = vpop.f32.mrb[0].mxu0
      %v4628 = vadd.f32 %v4260, %v4627
      %v4629 = vpop.f32.mrb[0].mxu0
      %v4630 = vpop.f32.mrb[0].mxu0
      %v4631 = vadd.f32 %v4265, %v4630
      %v4632 = vpop.f32.mrb[0].mxu0
      %4633 = vmatprep.mubr.bf16.mxu0 %v4456
      %4634 = vmatmul.mubr.bf16.gmra.mrb[0].mxu0 %v4455
      %v4635 = vpop.f32.mrb[0].mxu0
      %v4636 = vadd.f32 %v4270, %v4635
      %v4637 = vpop.f32.mrb[0].mxu0
      %v4638 = vpop.f32.mrb[0].mxu0
      %v4639 = vadd.f32 %v4275, %v4638
      %v4640 = vpop.f32.mrb[0].mxu0
      %4641 = vmatprep.mubr.bf16.mxu0 %v4460
      %4642 = vmatmul.mubr.bf16.gmra.mrb[0].mxu0 %v4459
      %v4643 = vpop.f32.mrb[0].mxu0
      %v4644 = vadd.f32 %v4280, %v4643
      %v4645 = vpop.f32.mrb[0].mxu0
      %v4646 = vpop.f32.mrb[0].mxu0
      %v4647 = vadd.f32 %v4285, %v4646
      %v4648 = vpop.f32.mrb[0].mxu0
      %4649 = vdwg.mxu0
      %4650 = vmatprep.subr.bf16.mxu0 0
      %4651 = vmatpush1.bf16.msra.mxu0 %v4141
      %4652 = vmatprep.subr.bf16.mxu0 0
      %4653 = vmatpush1.bf16.msra.mxu0 %v4142
      %4654 = vmatprep.subr.bf16.mxu0 0
      %4655 = vmatpush1.bf16.msra.mxu0 %v4143
      %4656 = vmatprep.subr.bf16.mxu0 0
      %4657 = vmatpush1.bf16.msra.mxu0 %v4144
      %4658 = vmatprep.subr.bf16.mxu0 0
      %4659 = vmatpush1.bf16.msra.mxu0 %v4145
      %4660 = vmatprep.subr.bf16.mxu0 0
      %4661 = vmatpush1.bf16.msra.mxu0 %v4146
      %4662 = vmatprep.subr.bf16.mxu0 0
      %4663 = vmatpush1.bf16.msra.mxu0 %v4147
      %4664 = vmatprep.subr.bf16.mxu0 0
      %4665 = vmatpush1.bf16.msra.mxu0 %v4148
      %4666 = vmatprep.subr.bf16.mxu0 0
      %4667 = vmatpush1.bf16.msra.mxu0 %v4149
      %4668 = vmatprep.subr.bf16.mxu0 0
      %4669 = vmatpush1.bf16.msra.mxu0 %v4150
      %4670 = vmatprep.subr.bf16.mxu0 0
      %4671 = vmatpush1.bf16.msra.mxu0 %v4151
      %4672 = vmatprep.subr.bf16.mxu0 0
      %4673 = vmatpush1.bf16.msra.mxu0 %v4152
      %4674 = vmatprep.subr.bf16.mxu0 0
      %4675 = vmatpush1.bf16.msra.mxu0 %v4153
      %4676 = vmatprep.subr.bf16.mxu0 0
      %4677 = vmatpush1.bf16.msra.mxu0 %v4154
      %4678 = vmatprep.subr.bf16.mxu0 0
      %4679 = vmatpush1.bf16.msra.mxu0 0
      %4680 = vmatprep.subr.bf16.mxu0 0
      %4681 = vmatpush1.bf16.msra.mxu0 0
      %4682 = vmatprep.mubr.bf16.mxu0 %v4497
      %4683 = vmatmul.mubr.bf16.gmra.mrb[0].mxu0 %v4421
      %v4684 = vpop.f32.mrb[0].mxu0
      %v4685 = vadd.f32 %v4564, %v4684
      %v4686 = vpop.f32.mrb[0].mxu0
      %v4687 = vpop.f32.mrb[0].mxu0
      %v4688 = vadd.f32 %v4567, %v4687
      %v4689 = vpop.f32.mrb[0].mxu0
      %4690 = vmatprep.mubr.bf16.mxu0 %v4500
      %4691 = vmatmul.mubr.bf16.gmra.mrb[0].mxu0 %v4425
      %v4692 = vpop.f32.mrb[0].mxu0
      %v4693 = vadd.f32 %v4572, %v4692
      %v4694 = vpop.f32.mrb[0].mxu0
      %v4695 = vpop.f32.mrb[0].mxu0
      %v4696 = vadd.f32 %v4575, %v4695
      %v4697 = vpop.f32.mrb[0].mxu0
      %4698 = vmatprep.mubr.bf16.mxu0 %v4503
      %4699 = vmatmul.mubr.bf16.gmra.mrb[0].mxu0 %v4429
      %v4700 = vpop.f32.mrb[0].mxu0
      %v4701 = vadd.f32 %v4580, %v4700
      %v4702 = vpop.f32.mrb[0].mxu0
      %v4703 = vpop.f32.mrb[0].mxu0
      %v4704 = vadd.f32 %v4583, %v4703
      %v4705 = vpop.f32.mrb[0].mxu0
      %4706 = vmatprep.mubr.bf16.mxu0 %v4506
      %4707 = vmatmul.mubr.bf16.gmra.mrb[0].mxu0 %v4433
      %v4708 = vpop.f32.mrb[0].mxu0
      %v4709 = vadd.f32 %v4588, %v4708
      %v4710 = vpop.f32.mrb[0].mxu0
      %v4711 = vpop.f32.mrb[0].mxu0
      %v4712 = vadd.f32 %v4591, %v4711
      %v4713 = vpop.f32.mrb[0].mxu0
      %4714 = vmatprep.mubr.bf16.mxu0 %v4509
      %4715 = vmatmul.mubr.bf16.gmra.mrb[0].mxu0 %v4437
      %v4716 = vpop.f32.mrb[0].mxu0
      %v4717 = vadd.f32 %v4596, %v4716
      %v4718 = vpop.f32.mrb[0].mxu0
      %v4719 = vpop.f32.mrb[0].mxu0
      %v4720 = vadd.f32 %v4599, %v4719
      %v4721 = vpop.f32.mrb[0].mxu0
      %4722 = vmatprep.mubr.bf16.mxu0 %v4512
      %4723 = vmatmul.mubr.bf16.gmra.mrb[0].mxu0 %v4441
      %v4724 = vpop.f32.mrb[0].mxu0
      %v4725 = vadd.f32 %v4604, %v4724
      %v4726 = vpop.f32.mrb[0].mxu0
      %v4727 = vpop.f32.mrb[0].mxu0
      %v4728 = vadd.f32 %v4607, %v4727
      %v4729 = vpop.f32.mrb[0].mxu0
      %4730 = vmatprep.mubr.bf16.mxu0 %v4515
      %4731 = vmatmul.mubr.bf16.gmra.mrb[0].mxu0 %v4445
      %v4732 = vpop.f32.mrb[0].mxu0
      %v4733 = vadd.f32 %v4612, %v4732
      %v4734 = vpop.f32.mrb[0].mxu0
      %v4735 = vpop.f32.mrb[0].mxu0
      %v4736 = vadd.f32 %v4615, %v4735
      %v4737 = vpop.f32.mrb[0].mxu0
      %4738 = vmatprep.mubr.bf16.mxu0 %v4518
      %4739 = vmatmul.mubr.bf16.gmra.mrb[0].mxu0 %v4449
      %v4740 = vpop.f32.mrb[0].mxu0
      %v4741 = vadd.f32 %v4620, %v4740
      %v4742 = vpop.f32.mrb[0].mxu0
      %v4743 = vpop.f32.mrb[0].mxu0
      %v4744 = vadd.f32 %v4623, %v4743
      %v4745 = vpop.f32.mrb[0].mxu0
      %4746 = vmatprep.mubr.bf16.mxu0 %v4521
      %4747 = vmatmul.mubr.bf16.gmra.mrb[0].mxu0 %v4453
      %v4748 = vpop.f32.mrb[0].mxu0
      %v4749 = vadd.f32 %v4628, %v4748
      %v4750 = vpop.f32.mrb[0].mxu0
      %v4751 = vpop.f32.mrb[0].mxu0
      %v4752 = vadd.f32 %v4631, %v4751
      %v4753 = vpop.f32.mrb[0].mxu0
      %4754 = vmatprep.mubr.bf16.mxu0 %v4524
      %4755 = vmatmul.mubr.bf16.gmra.mrb[0].mxu0 %v4457
      %v4756 = vpop.f32.mrb[0].mxu0
      %v4757 = vadd.f32 %v4636, %v4756
      %v4758 = vpop.f32.mrb[0].mxu0
      %v4759 = vpop.f32.mrb[0].mxu0
      %v4760 = vadd.f32 %v4639, %v4759
      %v4761 = vpop.f32.mrb[0].mxu0
      %4762 = vmatprep.mubr.bf16.mxu0 %v4527
      %4763 = vmatmul.mubr.bf16.gmra.mrb[0].mxu0 %v4461
      %v4764 = vpop.f32.mrb[0].mxu0
      %v4765 = vadd.f32 %v4644, %v4764
      %v4766 = vpop.f32.mrb[0].mxu0
      %v4767 = vpop.f32.mrb[0].mxu0
      %v4768 = vadd.f32 %v4647, %v4767
      %v4769 = vpop.f32.mrb[0].mxu0
      %4770 = vdwg.mxu0
      %v4771 = vxor.u32 %v4685, 2147483648
      %v4772 = vxor.u32 %v4688, 2147483648
      %v4773 = vxor.u32 %v4693, 2147483648
      %v4774 = vxor.u32 %v4696, 2147483648
      %v4775 = vxor.u32 %v4701, 2147483648
      %v4776 = vxor.u32 %v4704, 2147483648
      %v4777 = vxor.u32 %v4709, 2147483648
      %v4778 = vxor.u32 %v4712, 2147483648
      %v4779 = vxor.u32 %v4717, 2147483648
      %v4780 = vxor.u32 %v4720, 2147483648
      %v4781 = vxor.u32 %v4725, 2147483648
      %v4782 = vxor.u32 %v4728, 2147483648
      %v4783 = vxor.u32 %v4733, 2147483648
      %v4784 = vxor.u32 %v4736, 2147483648
      %v4785 = vxor.u32 %v4741, 2147483648
      %v4786 = vxor.u32 %v4744, 2147483648
      %v4787 = vxor.u32 %v4749, 2147483648
      %v4788 = vxor.u32 %v4752, 2147483648
      %v4789 = vxor.u32 %v4757, 2147483648
      %v4790 = vxor.u32 %v4760, 2147483648
      %v4791 = vxor.u32 %v4765, 2147483648
      %v4792 = vxor.u32 %v4768, 2147483648
      %v4793 = vmul.f32 %v4771, 1.442695
      %v4794 = vpow.pop %v4793
      %v4795 = vmul.f32 %v4772, 1.442695
      %v4796 = vpow.pop %v4795
      %v4797 = vmul.f32 %v4773, 1.442695
      %v4798 = vpow.pop %v4797
      %v4799 = vmul.f32 %v4774, 1.442695
      %v4800 = vpow.pop %v4799
      %v4801 = vmul.f32 %v4775, 1.442695
      %v4802 = vpow.pop %v4801
      %v4803 = vmul.f32 %v4776, 1.442695
      %v4804 = vpow.pop %v4803
      %v4805 = vmul.f32 %v4777, 1.442695
      %v4806 = vpow.pop %v4805
      %v4807 = vmul.f32 %v4778, 1.442695
      %v4808 = vpow.pop %v4807
      %v4809 = vmul.f32 %v4779, 1.442695
      %v4810 = vpow.pop %v4809
      %v4811 = vmul.f32 %v4780, 1.442695
      %v4812 = vpow.pop %v4811
      %v4813 = vmul.f32 %v4781, 1.442695
      %v4814 = vpow.pop %v4813
      %v4815 = vmul.f32 %v4782, 1.442695
      %v4816 = vpow.pop %v4815
      %v4817 = vmul.f32 %v4783, 1.442695
      %v4818 = vpow.pop %v4817
      %v4819 = vmul.f32 %v4784, 1.442695
      %v4820 = vpow.pop %v4819
      %v4821 = vmul.f32 %v4785, 1.442695
      %v4822 = vpow.pop %v4821
      %v4823 = vmul.f32 %v4786, 1.442695
      %v4824 = vpow.pop %v4823
      %v4825 = vmul.f32 %v4787, 1.442695
      %v4826 = vpow.pop %v4825
      %v4827 = vmul.f32 %v4788, 1.442695
      %v4828 = vpow.pop %v4827
      %v4829 = vmul.f32 %v4789, 1.442695
      %v4830 = vpow.pop %v4829
      %v4831 = vmul.f32 %v4790, 1.442695
      %v4832 = vpow.pop %v4831
      %v4833 = vmul.f32 %v4791, 1.442695
      %v4834 = vpow.pop %v4833
      %v4835 = vmul.f32 %v4792, 1.442695
      %v4836 = vpow.pop %v4835
      %v4837 = vadd.f32 %v4794, 1.0
      %v4838 = vadd.f32 %v4796, 1.0
      %v4839 = vadd.f32 %v4798, 1.0
      %v4840 = vadd.f32 %v4800, 1.0
      %v4841 = vadd.f32 %v4802, 1.0
      %v4842 = vadd.f32 %v4804, 1.0
      %v4843 = vadd.f32 %v4806, 1.0
      %v4844 = vadd.f32 %v4808, 1.0
      %v4845 = vadd.f32 %v4810, 1.0
      %v4846 = vadd.f32 %v4812, 1.0
      %v4847 = vadd.f32 %v4814, 1.0
      %v4848 = vadd.f32 %v4816, 1.0
      %v4849 = vadd.f32 %v4818, 1.0
      %v4850 = vadd.f32 %v4820, 1.0
      %v4851 = vadd.f32 %v4822, 1.0
      %v4852 = vadd.f32 %v4824, 1.0
      %v4853 = vadd.f32 %v4826, 1.0
      %v4854 = vadd.f32 %v4828, 1.0
      %v4855 = vadd.f32 %v4830, 1.0
      %v4856 = vadd.f32 %v4832, 1.0
      %v4857 = vadd.f32 %v4834, 1.0
      %v4858 = vadd.f32 %v4836, 1.0
      %v4859 = vrcp.pop %v4837
      %v4860 = vmul.f32 1.0, %v4859
      %v4861 = vrcp.pop %v4838
      %v4862 = vmul.f32 1.0, %v4861
      %v4863 = vrcp.pop %v4839
      %v4864 = vmul.f32 1.0, %v4863
      %v4865 = vrcp.pop %v4840
      %v4866 = vmul.f32 1.0, %v4865
      %v4867 = vrcp.pop %v4841
      %v4868 = vmul.f32 1.0, %v4867
      %v4869 = vrcp.pop %v4842
      %v4870 = vmul.f32 1.0, %v4869
      %v4871 = vrcp.pop %v4843
      %v4872 = vmul.f32 1.0, %v4871
      %v4873 = vrcp.pop %v4844
      %v4874 = vmul.f32 1.0, %v4873
      %v4875 = vrcp.pop %v4845
      %v4876 = vmul.f32 1.0, %v4875
      %v4877 = vrcp.pop %v4846
      %v4878 = vmul.f32 1.0, %v4877
      %v4879 = vrcp.pop %v4847
      %v4880 = vmul.f32 1.0, %v4879
      %v4881 = vrcp.pop %v4848
      %v4882 = vmul.f32 1.0, %v4881
      %v4883 = vrcp.pop %v4849
      %v4884 = vmul.f32 1.0, %v4883
      %v4885 = vrcp.pop %v4850
      %v4886 = vmul.f32 1.0, %v4885
      %v4887 = vrcp.pop %v4851
      %v4888 = vmul.f32 1.0, %v4887
      %v4889 = vrcp.pop %v4852
      %v4890 = vmul.f32 1.0, %v4889
      %v4891 = vrcp.pop %v4853
      %v4892 = vmul.f32 1.0, %v4891
      %v4893 = vrcp.pop %v4854
      %v4894 = vmul.f32 1.0, %v4893
      %v4895 = vrcp.pop %v4855
      %v4896 = vmul.f32 1.0, %v4895
      %v4897 = vrcp.pop %v4856
      %v4898 = vmul.f32 1.0, %v4897
      %v4899 = vrcp.pop %v4857
      %v4900 = vmul.f32 1.0, %v4899
      %v4901 = vrcp.pop %v4858
      %v4902 = vmul.f32 1.0, %v4901
      %v4903 = vmul.f32 %v4685, %v4860
      %v4904 = vmul.f32 %v4688, %v4862
      %v4905 = vmul.f32 %v4693, %v4864
      %v4906 = vmul.f32 %v4696, %v4866
      %v4907 = vmul.f32 %v4701, %v4868
      %v4908 = vmul.f32 %v4704, %v4870
      %v4909 = vmul.f32 %v4709, %v4872
      %v4910 = vmul.f32 %v4712, %v4874
      %v4911 = vmul.f32 %v4717, %v4876
      %v4912 = vmul.f32 %v4720, %v4878
      %v4913 = vmul.f32 %v4725, %v4880
      %v4914 = vmul.f32 %v4728, %v4882
      %v4915 = vmul.f32 %v4733, %v4884
      %v4916 = vmul.f32 %v4736, %v4886
      %v4917 = vmul.f32 %v4741, %v4888
      %v4918 = vmul.f32 %v4744, %v4890
      %v4919 = vmul.f32 %v4749, %v4892
      %v4920 = vmul.f32 %v4752, %v4894
      %v4921 = vmul.f32 %v4757, %v4896
      %v4922 = vmul.f32 %v4760, %v4898
      %v4923 = vmul.f32 %v4765, %v4900
      %v4924 = vmul.f32 %v4768, %v4902
      %v4925 = vpack.c.bf16 %v4904, %v4903
      %v4926 = vpack.c.bf16 %v4906, %v4905
      %v4927 = vpack.c.bf16 %v4908, %v4907
      %v4928 = vpack.c.bf16 %v4910, %v4909
      %v4929 = vpack.c.bf16 %v4912, %v4911
      %v4930 = vpack.c.bf16 %v4914, %v4913
      %v4931 = vpack.c.bf16 %v4916, %v4915
      %v4932 = vpack.c.bf16 %v4918, %v4917
      %v4933 = vpack.c.bf16 %v4920, %v4919
      %v4934 = vpack.c.bf16 %v4922, %v4921
      %v4935 = vpack.c.bf16 %v4924, %v4923
      %4936 = vst [vmem:[#allocation3 + $0x160] sm:$0xff] %v4925
      %4937 = vst [vmem:[#allocation3 + $0x168] sm:$0xff] %v4926
      %4938 = vst [vmem:[#allocation3 + $0x170] sm:$0xff] %v4927
      %4939 = vst [vmem:[#allocation3 + $0x178] sm:$0xff] %v4928
      %4940 = vst [vmem:[#allocation3 + $0x180] sm:$0xff] %v4929
      %4941 = vst [vmem:[#allocation3 + $0x188] sm:$0xff] %v4930
      %4942 = vst [vmem:[#allocation3 + $0x190] sm:$0xff] %v4931
      %4943 = vst [vmem:[#allocation3 + $0x198] sm:$0xff] %v4932
      %4944 = vst [vmem:[#allocation3 + $0x1a0] sm:$0xff] %v4933
      %4945 = vst [vmem:[#allocation3 + $0x1a8] sm:$0xff] %v4934
      %4946 = vst [vmem:[#allocation3 + $0x1b0] sm:$0xff] %v4935
      %v4947 = vld [vmem:[%s3] sm:$0xff]
      %v4948 = vld [vmem:[%s3 + $0x8] sm:$0xff]
      %v4949 = vld [vmem:[%s3 + $0x10] sm:$0xff]
      %v4950 = vld [vmem:[%s3 + $0x18] sm:$0xf]
      %v4951 = vld [vmem:[%s3 + $0x1c] sm:$0xff]
      %v4952 = vld [vmem:[%s3 + $0x24] sm:$0xff]
      %v4953 = vld [vmem:[%s3 + $0x2c] sm:$0xff]
      %v4954 = vld [vmem:[%s3 + $0x34] sm:$0xf]
      %v4955 = vld [vmem:[%s3 + $0x38] sm:$0xff]
      %v4956 = vld [vmem:[%s3 + $0x40] sm:$0xff]
      %v4957 = vld [vmem:[%s3 + $0x48] sm:$0xff]
      %v4958 = vld [vmem:[%s3 + $0x50] sm:$0xf]
      %v4959 = vld [vmem:[%s3 + $0x54] sm:$0xff]
      %v4960 = vld [vmem:[%s3 + $0x5c] sm:$0xff]
      %v4961 = vld [vmem:[%s3 + $0x64] sm:$0xff]
      %v4962 = vld [vmem:[%s3 + $0x6c] sm:$0xf]
      %v4963 = vld [vmem:[%s3 + $0x70] sm:$0xff]
      %v4964 = vld [vmem:[%s3 + $0x78] sm:$0xff]
      %v4965 = vld [vmem:[%s3 + $0x80] sm:$0xff]
      %v4966 = vld [vmem:[%s3 + $0x88] sm:$0xf]
      %v4967 = vld [vmem:[#allocation3] sm:$0xff]
      %v4968 = vld [vmem:[#allocation3 + $0x8] sm:$0xff]
      %v4969 = vld [vmem:[#allocation3 + $0x10] sm:$0xff]
      %v4970 = vld [vmem:[#allocation3 + $0x18] sm:$0xff]
      %v4971 = vld [vmem:[#allocation3 + $0x20] sm:$0xff]
      %v4972 = vld [vmem:[#allocation3 + $0x28] sm:$0xff]
      %v4973 = vld [vmem:[#allocation3 + $0x30] sm:$0xff]
      %v4974 = vld [vmem:[#allocation3 + $0x38] sm:$0xff]
      %v4975 = vld [vmem:[#allocation3 + $0x40] sm:$0xff]
      %v4976 = vld [vmem:[#allocation3 + $0x48] sm:$0xff]
      %v4977 = vld [vmem:[#allocation3 + $0x50] sm:$0xff]
      %v4978 = vld [vmem:[#allocation3 + $0x58] sm:$0xff]
      %v4979 = vld [vmem:[#allocation3 + $0x60] sm:$0xff]
      %v4980 = vld [vmem:[#allocation3 + $0x68] sm:$0xff]
      %v4981 = vld [vmem:[#allocation3 + $0x70] sm:$0xff]
      %v4982 = vld [vmem:[#allocation3 + $0x78] sm:$0xff]
      %v4983 = vld [vmem:[#allocation3 + $0x80] sm:$0xff]
      %v4984 = vld [vmem:[#allocation3 + $0x88] sm:$0xff]
      %v4985 = vld [vmem:[#allocation3 + $0x90] sm:$0xff]
      %v4986 = vld [vmem:[#allocation3 + $0x98] sm:$0xff]
      %v4987 = vld [vmem:[#allocation3 + $0xa0] sm:$0xff]
      %v4988 = vld [vmem:[#allocation3 + $0xa8] sm:$0xff]
      %v4989 = vld [vmem:[#allocation3 + $0xb0] sm:$0xff]
      %v4990 = vld [vmem:[#allocation3 + $0xb8] sm:$0xff]
      %v4991 = vld [vmem:[#allocation3 + $0xc0] sm:$0xff]
      %v4992 = vld [vmem:[#allocation3 + $0xc8] sm:$0xff]
      %v4993 = vld [vmem:[#allocation3 + $0xd0] sm:$0xff]
      %v4994 = vld [vmem:[#allocation3 + $0xd8] sm:$0xff]
      %v4995 = vld [vmem:[#allocation3 + $0xe0] sm:$0xff]
      %v4996 = vld [vmem:[#allocation3 + $0xe8] sm:$0xff]
      %v4997 = vld [vmem:[#allocation3 + $0xf0] sm:$0xff]
      %v4998 = vld [vmem:[#allocation3 + $0xf8] sm:$0xff]
      %v4999 = vld [vmem:[#allocation3 + $0x100] sm:$0xff]
      %v5000 = vld [vmem:[#allocation3 + $0x108] sm:$0xff]
      %v5001 = vld [vmem:[#allocation3 + $0x110] sm:$0xff]
      %v5002 = vld [vmem:[#allocation3 + $0x118] sm:$0xff]
      %v5003 = vld [vmem:[#allocation3 + $0x120] sm:$0xff]
      %v5004 = vld [vmem:[#allocation3 + $0x128] sm:$0xff]
      %v5005 = vld [vmem:[#allocation3 + $0x130] sm:$0xff]
      %v5006 = vld [vmem:[#allocation3 + $0x138] sm:$0xff]
      %v5007 = vld [vmem:[#allocation3 + $0x140] sm:$0xff]
      %v5008 = vld [vmem:[#allocation3 + $0x148] sm:$0xff]
      %v5009 = vld [vmem:[#allocation3 + $0x150] sm:$0xff]
      %v5010 = vld [vmem:[#allocation3 + $0x158] sm:$0xff]
      %v5011 = vld [vmem:[#allocation3 + $0x160] sm:$0xff]
      %v5012 = vld [vmem:[#allocation3 + $0x168] sm:$0xff]
      %v5013 = vld [vmem:[#allocation3 + $0x170] sm:$0xff]
      %v5014 = vld [vmem:[#allocation3 + $0x178] sm:$0xff]
      %v5015 = vld [vmem:[#allocation3 + $0x180] sm:$0xff]
      %v5016 = vld [vmem:[#allocation3 + $0x188] sm:$0xff]
      %v5017 = vld [vmem:[#allocation3 + $0x190] sm:$0xff]
      %v5018 = vld [vmem:[#allocation3 + $0x198] sm:$0xff]
      %v5019 = vld [vmem:[#allocation3 + $0x1a0] sm:$0xff]
      %v5020 = vld [vmem:[#allocation3 + $0x1a8] sm:$0xff]
      %v5021 = vld [vmem:[#allocation3 + $0x1b0] sm:$0xff]
      %v5022 = vld [vmem:[%s4] sm:$0xff]
      %v5023 = vld [vmem:[%s4 + $0x8] sm:$0xff]
      %v5024 = vld [vmem:[%s4 + $0x10] sm:$0xff]
      %v5025 = vld [vmem:[%s4 + $0x18] sm:$0xff]
      %v5026 = vld [vmem:[%s4 + $0x20] sm:$0xff]
      %5028 = vset.pattern.permute.xlu0 0
      %5029 = vperm.xlu0 %5028, %v5022
      %v5030 = vpop.permute.xlu0 %5029
      %5033 = vset.pattern.permute.xlu0 0
      %5034 = vperm.xlu0 %5033, %v5023
      %v5035 = vpop.permute.xlu0 %5034
      %5038 = vset.pattern.permute.xlu0 0
      %5039 = vperm.xlu0 %5038, %v5024
      %v5040 = vpop.permute.xlu0 %5039
      %5043 = vset.pattern.permute.xlu0 0
      %5044 = vperm.xlu0 %5043, %v5025
      %v5045 = vpop.permute.xlu0 %5044
      %5048 = vset.pattern.permute.xlu0 0
      %5049 = vperm.xlu0 %5048, %v5026
      %v5050 = vpop.permute.xlu0 %5049
      %v5072 = vunpack.c.l.b16 %v4947
      %v5073 = vunpack.c.h.b16 %v4947
      %v5074 = vunpack.c.l.b16 %v4948
      %v5075 = vunpack.c.h.b16 %v4948
      %v5076 = vunpack.c.l.b16 %v4949
      %v5077 = vunpack.c.h.b16 %v4949
      %v5078 = vunpack.c.l.b16 %v4950
      %v5079 = vunpack.c.l.b16 %v4951
      %v5080 = vunpack.c.h.b16 %v4951
      %v5081 = vunpack.c.l.b16 %v4952
      %v5082 = vunpack.c.h.b16 %v4952
      %v5083 = vunpack.c.l.b16 %v4953
      %v5084 = vunpack.c.h.b16 %v4953
      %v5085 = vunpack.c.l.b16 %v4954
      %v5086 = vunpack.c.l.b16 %v4955
      %v5087 = vunpack.c.h.b16 %v4955
      %v5088 = vunpack.c.l.b16 %v4956
      %v5089 = vunpack.c.h.b16 %v4956
      %v5090 = vunpack.c.l.b16 %v4957
      %v5091 = vunpack.c.h.b16 %v4957
      %v5092 = vunpack.c.l.b16 %v4958
      %v5093 = vunpack.c.l.b16 %v4959
      %v5094 = vunpack.c.h.b16 %v4959
      %v5095 = vunpack.c.l.b16 %v4960
      %v5096 = vunpack.c.h.b16 %v4960
      %v5097 = vunpack.c.l.b16 %v4961
      %v5098 = vunpack.c.h.b16 %v4961
      %v5099 = vunpack.c.l.b16 %v4962
      %v5100 = vunpack.c.l.b16 %v4963
      %v5101 = vunpack.c.h.b16 %v4963
      %v5102 = vunpack.c.l.b16 %v4964
      %v5103 = vunpack.c.h.b16 %v4964
      %v5104 = vunpack.c.l.b16 %v4965
      %v5105 = vunpack.c.h.b16 %v4965
      %v5106 = vunpack.c.l.b16 %v4966
      %v5107 = vpack.c.b16 %v5079, %v5072
      %v5108 = vpack.c.b16 %v5080, %v5073
      %v5109 = vpack.c.b16 %v5081, %v5074
      %v5110 = vpack.c.b16 %v5082, %v5075
      %v5111 = vpack.c.b16 %v5083, %v5076
      %v5112 = vpack.c.b16 %v5084, %v5077
      %v5113 = vpack.c.b16 %v5085, %v5078
      %v5114 = vpack.c.b16 %v5093, %v5086
      %v5115 = vpack.c.b16 %v5094, %v5087
      %v5116 = vpack.c.b16 %v5095, %v5088
      %v5117 = vpack.c.b16 %v5096, %v5089
      %v5118 = vpack.c.b16 %v5097, %v5090
      %v5119 = vpack.c.b16 %v5098, %v5091
      %v5120 = vpack.c.b16 %v5099, %v5092
      %v5121 = vpack.c.b16 %v5100, %v5100
      %v5122 = vpack.c.b16 %v5101, %v5101
      %v5123 = vpack.c.b16 %v5102, %v5102
      %v5124 = vpack.c.b16 %v5103, %v5103
      %v5125 = vpack.c.b16 %v5104, %v5104
      %v5126 = vpack.c.b16 %v5105, %v5105
      %v5127 = vpack.c.b16 %v5106, %v5106
      %vm5146 = vcmask 916480
      %v5148 = vsel %vm5146, %v5113, 0
      %v5151 = vsel %vm5146, %v5120, 0
      %v5154 = vsel %vm5146, %v5127, 0
      %5156 = vmatprep.subr.bf16.mxu0 0
      %5157 = vmatpush1.bf16.msra.mxu0 %v4967
      %5158 = vmatprep.subr.bf16.mxu0 0
      %5159 = vmatpush1.bf16.msra.mxu0 %v4968
      %5160 = vmatprep.subr.bf16.mxu0 0
      %5161 = vmatpush1.bf16.msra.mxu0 %v4969
      %5162 = vmatprep.subr.bf16.mxu0 0
      %5163 = vmatpush1.bf16.msra.mxu0 %v4970
      %5164 = vmatprep.subr.bf16.mxu0 0
      %5165 = vmatpush1.bf16.msra.mxu0 %v4971
      %5166 = vmatprep.subr.bf16.mxu0 0
      %5167 = vmatpush1.bf16.msra.mxu0 %v4972
      %5168 = vmatprep.subr.bf16.mxu0 0
      %5169 = vmatpush1.bf16.msra.mxu0 %v4973
      %5170 = vmatprep.subr.bf16.mxu0 0
      %5171 = vmatpush1.bf16.msra.mxu0 %v4974
      %5172 = vmatprep.subr.bf16.mxu0 0
      %5173 = vmatpush1.bf16.msra.mxu0 %v4975
      %5174 = vmatprep.subr.bf16.mxu0 0
      %5175 = vmatpush1.bf16.msra.mxu0 %v4976
      %5176 = vmatprep.subr.bf16.mxu0 0
      %5177 = vmatpush1.bf16.msra.mxu0 %v4977
      %5178 = vmatprep.subr.bf16.mxu0 0
      %5179 = vmatpush1.bf16.msra.mxu0 %v4978
      %5180 = vmatprep.subr.bf16.mxu0 0
      %5181 = vmatpush1.bf16.msra.mxu0 %v4979
      %5182 = vmatprep.subr.bf16.mxu0 0
      %5183 = vmatpush1.bf16.msra.mxu0 %v4980
      %5184 = vmatprep.subr.bf16.mxu0 0
      %5185 = vmatpush1.bf16.msra.mxu0 %v4981
      %5186 = vmatprep.subr.bf16.mxu0 0
      %5187 = vmatpush1.bf16.msra.mxu0 %v4982
      %5188 = vmatprep.mubr.bf16.mxu0 %v5108
      %5189 = vmatmul.mubr.bf16.gmra.mrb[0].mxu0 %v5107
      %v5190 = vpop.f32.mrb[0].mxu0
      %v5191 = vadd.f32 %v5030, %v5190
      %v5192 = vpop.f32.mrb[0].mxu0
      %v5193 = vpop.f32.mrb[0].mxu0
      %v5194 = vadd.f32 %v5035, %v5193
      %v5195 = vpop.f32.mrb[0].mxu0
      %5196 = vmatprep.mubr.bf16.mxu0 %v5115
      %5197 = vmatmul.mubr.bf16.gmra.mrb[0].mxu0 %v5114
      %v5198 = vpop.f32.mrb[0].mxu0
      %v5199 = vadd.f32 %v5040, %v5198
      %v5200 = vpop.f32.mrb[0].mxu0
      %v5201 = vpop.f32.mrb[0].mxu0
      %v5202 = vadd.f32 %v5045, %v5201
      %v5203 = vpop.f32.mrb[0].mxu0
      %5204 = vmatprep.mubr.bf16.mxu0 %v5122
      %5205 = vmatmul.mubr.bf16.gmra.mrb[0].mxu0 %v5121
      %v5206 = vpop.f32.mrb[0].mxu0
      %v5207 = vadd.f32 %v5050, %v5206
      %v5208 = vpop.f32.mrb[0].mxu0
      %v5209 = vpop.f32.mrb[0].mxu0
      %v5210 = vpop.f32.mrb[0].mxu0
      %5211 = vdwg.mxu0
      %5212 = vmatprep.subr.bf16.mxu0 0
      %5213 = vmatpush1.bf16.msra.mxu0 %v4983
      %5214 = vmatprep.subr.bf16.mxu0 0
      %5215 = vmatpush1.bf16.msra.mxu0 %v4984
      %5216 = vmatprep.subr.bf16.mxu0 0
      %5217 = vmatpush1.bf16.msra.mxu0 %v4985
      %5218 = vmatprep.subr.bf16.mxu0 0
      %5219 = vmatpush1.bf16.msra.mxu0 %v4986
      %5220 = vmatprep.subr.bf16.mxu0 0
      %5221 = vmatpush1.bf16.msra.mxu0 %v4987
      %5222 = vmatprep.subr.bf16.mxu0 0
      %5223 = vmatpush1.bf16.msra.mxu0 %v4988
      %5224 = vmatprep.subr.bf16.mxu0 0
      %5225 = vmatpush1.bf16.msra.mxu0 %v4989
      %5226 = vmatprep.subr.bf16.mxu0 0
      %5227 = vmatpush1.bf16.msra.mxu0 %v4990
      %5228 = vmatprep.subr.bf16.mxu0 0
      %5229 = vmatpush1.bf16.msra.mxu0 %v4991
      %5230 = vmatprep.subr.bf16.mxu0 0
      %5231 = vmatpush1.bf16.msra.mxu0 %v4992
      %5232 = vmatprep.subr.bf16.mxu0 0
      %5233 = vmatpush1.bf16.msra.mxu0 %v4993
      %5234 = vmatprep.subr.bf16.mxu0 0
      %5235 = vmatpush1.bf16.msra.mxu0 %v4994
      %5236 = vmatprep.subr.bf16.mxu0 0
      %5237 = vmatpush1.bf16.msra.mxu0 %v4995
      %5238 = vmatprep.subr.bf16.mxu0 0
      %5239 = vmatpush1.bf16.msra.mxu0 %v4996
      %5240 = vmatprep.subr.bf16.mxu0 0
      %5241 = vmatpush1.bf16.msra.mxu0 %v4997
      %5242 = vmatprep.subr.bf16.mxu0 0
      %5243 = vmatpush1.bf16.msra.mxu0 %v4998
      %5244 = vmatprep.mubr.bf16.mxu0 %v5110
      %5245 = vmatmul.mubr.bf16.gmra.mrb[0].mxu0 %v5109
      %v5246 = vpop.f32.mrb[0].mxu0
      %v5247 = vadd.f32 %v5191, %v5246
      %v5248 = vpop.f32.mrb[0].mxu0
      %v5249 = vpop.f32.mrb[0].mxu0
      %v5250 = vadd.f32 %v5194, %v5249
      %v5251 = vpop.f32.mrb[0].mxu0
      %5252 = vmatprep.mubr.bf16.mxu0 %v5117
      %5253 = vmatmul.mubr.bf16.gmra.mrb[0].mxu0 %v5116
      %v5254 = vpop.f32.mrb[0].mxu0
      %v5255 = vadd.f32 %v5199, %v5254
      %v5256 = vpop.f32.mrb[0].mxu0
      %v5257 = vpop.f32.mrb[0].mxu0
      %v5258 = vadd.f32 %v5202, %v5257
      %v5259 = vpop.f32.mrb[0].mxu0
      %5260 = vmatprep.mubr.bf16.mxu0 %v5124
      %5261 = vmatmul.mubr.bf16.gmra.mrb[0].mxu0 %v5123
      %v5262 = vpop.f32.mrb[0].mxu0
      %v5263 = vadd.f32 %v5207, %v5262
      %v5264 = vpop.f32.mrb[0].mxu0
      %v5265 = vpop.f32.mrb[0].mxu0
      %v5266 = vpop.f32.mrb[0].mxu0
      %5267 = vdwg.mxu0
      %5268 = vmatprep.subr.bf16.mxu0 0
      %5269 = vmatpush1.bf16.msra.mxu0 %v4999
      %5270 = vmatprep.subr.bf16.mxu0 0
      %5271 = vmatpush1.bf16.msra.mxu0 %v5000
      %5272 = vmatprep.subr.bf16.mxu0 0
      %5273 = vmatpush1.bf16.msra.mxu0 %v5001
      %5274 = vmatprep.subr.bf16.mxu0 0
      %5275 = vmatpush1.bf16.msra.mxu0 %v5002
      %5276 = vmatprep.subr.bf16.mxu0 0
      %5277 = vmatpush1.bf16.msra.mxu0 %v5003
      %5278 = vmatprep.subr.bf16.mxu0 0
      %5279 = vmatpush1.bf16.msra.mxu0 %v5004
      %5280 = vmatprep.subr.bf16.mxu0 0
      %5281 = vmatpush1.bf16.msra.mxu0 %v5005
      %5282 = vmatprep.subr.bf16.mxu0 0
      %5283 = vmatpush1.bf16.msra.mxu0 %v5006
      %5284 = vmatprep.subr.bf16.mxu0 0
      %5285 = vmatpush1.bf16.msra.mxu0 %v5007
      %5286 = vmatprep.subr.bf16.mxu0 0
      %5287 = vmatpush1.bf16.msra.mxu0 %v5008
      %5288 = vmatprep.subr.bf16.mxu0 0
      %5289 = vmatpush1.bf16.msra.mxu0 %v5009
      %5290 = vmatprep.subr.bf16.mxu0 0
      %5291 = vmatpush1.bf16.msra.mxu0 %v5010
      %5292 = vmatprep.subr.bf16.mxu0 0
      %5293 = vmatpush1.bf16.msra.mxu0 %v5011
      %5294 = vmatprep.subr.bf16.mxu0 0
      %5295 = vmatpush1.bf16.msra.mxu0 %v5012
      %5296 = vmatprep.subr.bf16.mxu0 0
      %5297 = vmatpush1.bf16.msra.mxu0 %v5013
      %5298 = vmatprep.subr.bf16.mxu0 0
      %5299 = vmatpush1.bf16.msra.mxu0 %v5014
      %5300 = vmatprep.mubr.bf16.mxu0 %v5112
      %5301 = vmatmul.mubr.bf16.gmra.mrb[0].mxu0 %v5111
      %v5302 = vpop.f32.mrb[0].mxu0
      %v5303 = vadd.f32 %v5247, %v5302
      %v5304 = vpop.f32.mrb[0].mxu0
      %v5305 = vpop.f32.mrb[0].mxu0
      %v5306 = vadd.f32 %v5250, %v5305
      %v5307 = vpop.f32.mrb[0].mxu0
      %5308 = vmatprep.mubr.bf16.mxu0 %v5119
      %5309 = vmatmul.mubr.bf16.gmra.mrb[0].mxu0 %v5118
      %v5310 = vpop.f32.mrb[0].mxu0
      %v5311 = vadd.f32 %v5255, %v5310
      %v5312 = vpop.f32.mrb[0].mxu0
      %v5313 = vpop.f32.mrb[0].mxu0
      %v5314 = vadd.f32 %v5258, %v5313
      %v5315 = vpop.f32.mrb[0].mxu0
      %5316 = vmatprep.mubr.bf16.mxu0 %v5126
      %5317 = vmatmul.mubr.bf16.gmra.mrb[0].mxu0 %v5125
      %v5318 = vpop.f32.mrb[0].mxu0
      %v5319 = vadd.f32 %v5263, %v5318
      %v5320 = vpop.f32.mrb[0].mxu0
      %v5321 = vpop.f32.mrb[0].mxu0
      %v5322 = vpop.f32.mrb[0].mxu0
      %5323 = vdwg.mxu0
      %5324 = vmatprep.subr.bf16.mxu0 0
      %5325 = vmatpush1.bf16.msra.mxu0 %v5015
      %5326 = vmatprep.subr.bf16.mxu0 0
      %5327 = vmatpush1.bf16.msra.mxu0 %v5016
      %5328 = vmatprep.subr.bf16.mxu0 0
      %5329 = vmatpush1.bf16.msra.mxu0 %v5017
      %5330 = vmatprep.subr.bf16.mxu0 0
      %5331 = vmatpush1.bf16.msra.mxu0 %v5018
      %5332 = vmatprep.subr.bf16.mxu0 0
      %5333 = vmatpush1.bf16.msra.mxu0 %v5019
      %5334 = vmatprep.subr.bf16.mxu0 0
      %5335 = vmatpush1.bf16.msra.mxu0 %v5020
      %5336 = vmatprep.subr.bf16.mxu0 0
      %5337 = vmatpush1.bf16.msra.mxu0 %v5021
      %5338 = vmatprep.subr.bf16.mxu0 0
      %5339 = vmatpush1.bf16.msra.mxu0 0
      %5340 = vmatprep.subr.bf16.mxu0 0
      %5341 = vmatpush1.bf16.msra.mxu0 0
      %5342 = vmatprep.subr.bf16.mxu0 0
      %5343 = vmatpush1.bf16.msra.mxu0 0
      %5344 = vmatprep.subr.bf16.mxu0 0
      %5345 = vmatpush1.bf16.msra.mxu0 0
      %5346 = vmatprep.subr.bf16.mxu0 0
      %5347 = vmatpush1.bf16.msra.mxu0 0
      %5348 = vmatprep.subr.bf16.mxu0 0
      %5349 = vmatpush1.bf16.msra.mxu0 0
      %5350 = vmatprep.subr.bf16.mxu0 0
      %5351 = vmatpush1.bf16.msra.mxu0 0
      %5352 = vmatprep.subr.bf16.mxu0 0
      %5353 = vmatpush1.bf16.msra.mxu0 0
      %5354 = vmatprep.subr.bf16.mxu0 0
      %5355 = vmatpush1.bf16.msra.mxu0 0
      %5356 = vmatprep.mubr.bf16.mxu0 0
      %5357 = vmatmul.mubr.bf16.gmra.mrb[0].mxu0 %v5148
      %v5358 = vpop.f32.mrb[0].mxu0
      %v5359 = vadd.f32 %v5303, %v5358
      %v5360 = vpop.f32.mrb[0].mxu0
      %v5361 = vpop.f32.mrb[0].mxu0
      %v5362 = vadd.f32 %v5306, %v5361
      %v5363 = vpop.f32.mrb[0].mxu0
      %5364 = vmatprep.mubr.bf16.mxu0 0
      %5365 = vmatmul.mubr.bf16.gmra.mrb[0].mxu0 %v5151
      %v5366 = vpop.f32.mrb[0].mxu0
      %v5367 = vadd.f32 %v5311, %v5366
      %v5368 = vpop.f32.mrb[0].mxu0
      %v5369 = vpop.f32.mrb[0].mxu0
      %v5370 = vadd.f32 %v5314, %v5369
      %v5371 = vpop.f32.mrb[0].mxu0
      %5372 = vmatprep.mubr.bf16.mxu0 0
      %5373 = vmatmul.mubr.bf16.gmra.mrb[0].mxu0 %v5154
      %v5374 = vpop.f32.mrb[0].mxu0
      %v5375 = vadd.f32 %v5319, %v5374
      %v5376 = vpop.f32.mrb[0].mxu0
      %v5377 = vpop.f32.mrb[0].mxu0
      %v5378 = vpop.f32.mrb[0].mxu0
      %5379 = vdwg.mxu0
      %v5380 = vxor.u32 %v5359, 2147483648
      %v5381 = vxor.u32 %v5362, 2147483648
      %v5382 = vxor.u32 %v5367, 2147483648
      %v5383 = vxor.u32 %v5370, 2147483648
      %v5384 = vxor.u32 %v5375, 2147483648
      %v5385 = vmul.f32 %v5380, 1.442695
      %v5386 = vpow.pop %v5385
      %v5387 = vmul.f32 %v5381, 1.442695
      %v5388 = vpow.pop %v5387
      %v5389 = vmul.f32 %v5382, 1.442695
      %v5390 = vpow.pop %v5389
      %v5391 = vmul.f32 %v5383, 1.442695
      %v5392 = vpow.pop %v5391
      %v5393 = vmul.f32 %v5384, 1.442695
      %v5394 = vpow.pop %v5393
      %v5395 = vadd.f32 %v5386, 1.0
      %v5396 = vadd.f32 %v5388, 1.0
      %v5397 = vadd.f32 %v5390, 1.0
      %v5398 = vadd.f32 %v5392, 1.0
      %v5399 = vadd.f32 %v5394, 1.0
      %v5400 = vrcp.pop %v5395
      %v5401 = vmul.f32 1.0, %v5400
      %v5402 = vrcp.pop %v5396
      %v5403 = vmul.f32 1.0, %v5402
      %v5404 = vrcp.pop %v5397
      %v5405 = vmul.f32 1.0, %v5404
      %v5406 = vrcp.pop %v5398
      %v5407 = vmul.f32 1.0, %v5406
      %v5408 = vrcp.pop %v5399
      %v5409 = vmul.f32 1.0, %v5408
      %v5410 = vmul.f32 %v5359, %v5401
      %v5411 = vmul.f32 %v5362, %v5403
      %v5412 = vmul.f32 %v5367, %v5405
      %v5413 = vmul.f32 %v5370, %v5407
      %v5414 = vmul.f32 %v5375, %v5409
      %v5415 = vld [vmem:[%s5] sm:$0xff]
      %v5416 = vld [vmem:[%s5 + $0x8] sm:$0xff]
      %v5417 = vld [vmem:[%s5 + $0x10] sm:$0xff]
      %v5418 = vld [vmem:[%s5 + $0x18] sm:$0xff]
      %v5419 = vld [vmem:[%s5 + $0x20] sm:$0xff]
      %v5420 = vld [vmem:[%s5 + $0x28] sm:$0xff]
      %v5421 = vld [vmem:[%s5 + $0x30] sm:$0xff]
      %v5422 = vld [vmem:[%s5 + $0x38] sm:$0xff]
      %v5423 = vld [vmem:[%s5 + $0x40] sm:$0xff]
      %v5424 = vld [vmem:[%s5 + $0x48] sm:$0xff]
      %v5425 = vld [vmem:[%s5 + $0x50] sm:$0xff]
      %v5426 = vld [vmem:[%s5 + $0x58] sm:$0xff]
      %v5427 = vld [vmem:[%s5 + $0x60] sm:$0xff]
      %v5428 = vld [vmem:[%s5 + $0x68] sm:$0xff]
      %v5429 = vld [vmem:[%s5 + $0x70] sm:$0xff]
      %v5430 = vld [vmem:[%s5 + $0x78] sm:$0xff]
      %5431 = vmatprep.subr.mxu0 0.0
      %5432 = vmatpush1.msra.mxu0 %v5415
      %5433 = vmatprep.subr.mxu0 0.0
      %5434 = vmatpush1.msra.mxu0 %v5416
      %5435 = vmatprep.subr.mxu0 0.0
      %5436 = vmatpush1.msra.mxu0 %v5417
      %5437 = vmatprep.subr.mxu0 0.0
      %5438 = vmatpush1.msra.mxu0 %v5418
      %5439 = vmatprep.subr.mxu0 0.0
      %5440 = vmatpush1.msra.mxu0 %v5419
      %5441 = vmatprep.subr.mxu0 0.0
      %5442 = vmatpush1.msra.mxu0 %v5420
      %5443 = vmatprep.subr.mxu0 0.0
      %5444 = vmatpush1.msra.mxu0 %v5421
      %5445 = vmatprep.subr.mxu0 0.0
      %5446 = vmatpush1.msra.mxu0 %v5422
      %5447 = vmatprep.subr.mxu0 0.0
      %5448 = vmatpush1.msra.mxu0 %v5423
      %5449 = vmatprep.subr.mxu0 0.0
      %5450 = vmatpush1.msra.mxu0 %v5424
      %5451 = vmatprep.subr.mxu0 0.0
      %5452 = vmatpush1.msra.mxu0 %v5425
      %5453 = vmatprep.subr.mxu0 0.0
      %5454 = vmatpush1.msra.mxu0 %v5426
      %5455 = vmatprep.subr.mxu0 0.0
      %5456 = vmatpush1.msra.mxu0 %v5427
      %5457 = vmatprep.subr.mxu0 0.0
      %5458 = vmatpush1.msra.mxu0 %v5428
      %5459 = vmatprep.subr.mxu0 0.0
      %5460 = vmatpush1.msra.mxu0 %v5429
      %5461 = vmatprep.subr.mxu0 0.0
      %5462 = vmatpush1.msra.mxu0 %v5430
      %5463 = vmatprep.subr.mxu0 0.0
      %5464 = vmatpush1.msra.mxu0 0.0
      %5465 = vmatprep.subr.mxu0 0.0
      %5466 = vmatpush1.msra.mxu0 0.0
      %5467 = vmatprep.subr.mxu0 0.0
      %5468 = vmatpush1.msra.mxu0 0.0
      %5469 = vmatprep.subr.mxu0 0.0
      %5470 = vmatpush1.msra.mxu0 0.0
      %5471 = vmatprep.subr.mxu0 0.0
      %5472 = vmatpush1.msra.mxu0 0.0
      %5473 = vmatprep.subr.mxu0 0.0
      %5474 = vmatpush1.msra.mxu0 0.0
      %5475 = vmatprep.subr.mxu0 0.0
      %5476 = vmatpush1.msra.mxu0 0.0
      %5477 = vmatprep.subr.mxu0 0.0
      %5478 = vmatpush1.msra.mxu0 0.0
      %5479 = vmatprep.subr.mxu0 0.0
      %5480 = vmatpush1.msra.mxu0 0.0
      %5481 = vmatprep.subr.mxu0 0.0
      %5482 = vmatpush1.msra.mxu0 0.0
      %5483 = vmatprep.subr.mxu0 0.0
      %5484 = vmatpush1.msra.mxu0 0.0
      %5485 = vmatprep.subr.mxu0 0.0
      %5486 = vmatpush1.msra.mxu0 0.0
      %5487 = vmatprep.subr.mxu0 0.0
      %5488 = vmatpush1.msra.mxu0 0.0
      %5489 = vmatprep.subr.mxu0 0.0
      %5490 = vmatpush1.msra.mxu0 0.0
      %5491 = vmatprep.subr.mxu0 0.0
      %5492 = vmatpush1.msra.mxu0 0.0
      %5493 = vmatprep.subr.mxu0 0.0
      %5494 = vmatpush1.msra.mxu0 0.0
      %5495 = vmatprep.mubr.f32.mxu0 0.0
      %5496 = vmatmul.mubr.f32.gmra.mrb[0].mxu0 %v5410
      %v5497 = vpop.f32.mrb[0].mxu0
      %v5498 = vadd.f32 0.0, %v5497
      %v5499 = vpop.f32.mrb[0].mxu0
      %5500 = vmatprep.mubr.f32.mxu0 0.0
      %5501 = vmatmul.mubr.f32.gmra.mrb[0].mxu0 %v5411
      %v5502 = vpop.f32.mrb[0].mxu0
      %v5503 = vadd.f32 0.0, %v5502
      %v5504 = vpop.f32.mrb[0].mxu0
      %5505 = vmatprep.mubr.f32.mxu0 0.0
      %5506 = vmatmul.mubr.f32.gmra.mrb[0].mxu0 %v5412
      %v5507 = vpop.f32.mrb[0].mxu0
      %v5508 = vadd.f32 0.0, %v5507
      %v5509 = vpop.f32.mrb[0].mxu0
      %5510 = vmatprep.mubr.f32.mxu0 0.0
      %5511 = vmatmul.mubr.f32.gmra.mrb[0].mxu0 %v5413
      %v5512 = vpop.f32.mrb[0].mxu0
      %v5513 = vadd.f32 0.0, %v5512
      %v5514 = vpop.f32.mrb[0].mxu0
      %5515 = vmatprep.mubr.f32.mxu0 0.0
      %5516 = vmatmul.mubr.f32.gmra.mrb[0].mxu0 %v5414
      %v5517 = vpop.f32.mrb[0].mxu0
      %v5518 = vadd.f32 0.0, %v5517
      %v5519 = vpop.f32.mrb[0].mxu0
      %5520 = vdwg.mxu0
      %v5521 = vld [vmem:[%s6] sm:$0xff]
      %v5522 = vld [vmem:[%s6 + $0x8] sm:$0xff]
      %v5523 = vld [vmem:[%s6 + $0x10] sm:$0xff]
      %v5524 = vld [vmem:[%s6 + $0x18] sm:$0xff]
      %v5525 = vld [vmem:[%s7] sm:$0xff]
      %v5526 = vld [vmem:[%s7 + $0x8] sm:$0xff]
      %v5527 = vld [vmem:[%s7 + $0x10] sm:$0xff]
      %v5528 = vld [vmem:[%s7 + $0x18] sm:$0xff]
      %5530 = vset.pattern.permute.xlu0 0
      %5531 = vperm.xlu0 %5530, %v5525
      %v5532 = vpop.permute.xlu0 %5531
      %5535 = vset.pattern.permute.xlu0 0
      %5536 = vperm.xlu0 %5535, %v5526
      %v5537 = vpop.permute.xlu0 %5536
      %5540 = vset.pattern.permute.xlu0 0
      %5541 = vperm.xlu0 %5540, %v5527
      %v5542 = vpop.permute.xlu0 %5541
      %5545 = vset.pattern.permute.xlu0 0
      %5546 = vperm.xlu0 %5545, %v5528
      %v5547 = vpop.permute.xlu0 %5546
      %vm5549 = vcmask 326656
      %v5551 = vsel %vm5549, %v5521, 0
      %v5554 = vsel %vm5549, %v5522, 0
      %v5557 = vsel %vm5549, %v5523, 0
      %v5560 = vsel %vm5549, %v5524, 0
      %5562 = vmatprep.subr.mxu0 0.0
      %5563 = vmatpush1.msra.mxu0 %v5498
      %5564 = vmatprep.subr.mxu0 0.0
      %5565 = vmatpush1.msra.mxu0 %v5503
      %5566 = vmatprep.subr.mxu0 0.0
      %5567 = vmatpush1.msra.mxu0 %v5508
      %5568 = vmatprep.subr.mxu0 0.0
      %5569 = vmatpush1.msra.mxu0 %v5513
      %5570 = vmatprep.subr.mxu0 0.0
      %5571 = vmatpush1.msra.mxu0 %v5518
      %5572 = vmatprep.subr.mxu0 0.0
      %5573 = vmatpush1.msra.mxu0 0.0
      %5574 = vmatprep.subr.mxu0 0.0
      %5575 = vmatpush1.msra.mxu0 0.0
      %5576 = vmatprep.subr.mxu0 0.0
      %5577 = vmatpush1.msra.mxu0 0.0
      %5578 = vmatprep.subr.mxu0 0.0
      %5579 = vmatpush1.msra.mxu0 0.0
      %5580 = vmatprep.subr.mxu0 0.0
      %5581 = vmatpush1.msra.mxu0 0.0
      %5582 = vmatprep.subr.mxu0 0.0
      %5583 = vmatpush1.msra.mxu0 0.0
      %5584 = vmatprep.subr.mxu0 0.0
      %5585 = vmatpush1.msra.mxu0 0.0
      %5586 = vmatprep.subr.mxu0 0.0
      %5587 = vmatpush1.msra.mxu0 0.0
      %5588 = vmatprep.subr.mxu0 0.0
      %5589 = vmatpush1.msra.mxu0 0.0
      %5590 = vmatprep.subr.mxu0 0.0
      %5591 = vmatpush1.msra.mxu0 0.0
      %5592 = vmatprep.subr.mxu0 0.0
      %5593 = vmatpush1.msra.mxu0 0.0
      %5594 = vmatprep.subr.mxu0 0.0
      %5595 = vmatpush1.msra.mxu0 0.0
      %5596 = vmatprep.subr.mxu0 0.0
      %5597 = vmatpush1.msra.mxu0 0.0
      %5598 = vmatprep.subr.mxu0 0.0
      %5599 = vmatpush1.msra.mxu0 0.0
      %5600 = vmatprep.subr.mxu0 0.0
      %5601 = vmatpush1.msra.mxu0 0.0
      %5602 = vmatprep.subr.mxu0 0.0
      %5603 = vmatpush1.msra.mxu0 0.0
      %5604 = vmatprep.subr.mxu0 0.0
      %5605 = vmatpush1.msra.mxu0 0.0
      %5606 = vmatprep.subr.mxu0 0.0
      %5607 = vmatpush1.msra.mxu0 0.0
      %5608 = vmatprep.subr.mxu0 0.0
      %5609 = vmatpush1.msra.mxu0 0.0
      %5610 = vmatprep.subr.mxu0 0.0
      %5611 = vmatpush1.msra.mxu0 0.0
      %5612 = vmatprep.subr.mxu0 0.0
      %5613 = vmatpush1.msra.mxu0 0.0
      %5614 = vmatprep.subr.mxu0 0.0
      %5615 = vmatpush1.msra.mxu0 0.0
      %5616 = vmatprep.subr.mxu0 0.0
      %5617 = vmatpush1.msra.mxu0 0.0
      %5618 = vmatprep.subr.mxu0 0.0
      %5619 = vmatpush1.msra.mxu0 0.0
      %5620 = vmatprep.subr.mxu0 0.0
      %5621 = vmatpush1.msra.mxu0 0.0
      %5622 = vmatprep.subr.mxu0 0.0
      %5623 = vmatpush1.msra.mxu0 0.0
      %5624 = vmatprep.subr.mxu0 0.0
      %5625 = vmatpush1.msra.mxu0 0.0
      %5626 = vmatprep.mubr.f32.mxu0 0.0
      %5627 = vmatmul.mubr.f32.gmra.mrb[0].mxu0 %v5551
      %v5628 = vpop.f32.mrb[0].mxu0
      %v5629 = vadd.f32 %v5532, %v5628
      %v5630 = vpop.f32.mrb[0].mxu0
      %5631 = vmatprep.mubr.f32.mxu0 0.0
      %5632 = vmatmul.mubr.f32.gmra.mrb[0].mxu0 %v5554
      %v5633 = vpop.f32.mrb[0].mxu0
      %v5634 = vadd.f32 %v5537, %v5633
      %v5635 = vpop.f32.mrb[0].mxu0
      %5636 = vmatprep.mubr.f32.mxu0 0.0
      %5637 = vmatmul.mubr.f32.gmra.mrb[0].mxu0 %v5557
      %v5638 = vpop.f32.mrb[0].mxu0
      %v5639 = vadd.f32 %v5542, %v5638
      %v5640 = vpop.f32.mrb[0].mxu0
      %5641 = vmatprep.mubr.f32.mxu0 0.0
      %5642 = vmatmul.mubr.f32.gmra.mrb[0].mxu0 %v5560
      %v5643 = vpop.f32.mrb[0].mxu0
      %v5644 = vadd.f32 %v5547, %v5643
      %v5645 = vpop.f32.mrb[0].mxu0
      %5646 = vdwg.mxu0
      %vm5647 = vcmask 15360
      %5648 = vst.msk [vmem:[%s305] sm:$0xff] %vm5647, %v5629
      %5649 = vst.msk [vmem:[%s305 + $0x8] sm:$0xff] %vm5647, %v5634
      %5650 = vst.msk [vmem:[%s305 + $0x10] sm:$0xff] %vm5647, %v5639
      %5651 = vst.msk [vmem:[%s305 + $0x18] sm:$0xff] %vm5647, %v5644
      %p5652 = scmp.lt.s32.totalorder %s19, 1
      %s5653 = scalar_select %p5652, %s19, 1
      %s5654 = smul.addr %s5653, 4
      %s5655 = smul.addr %s5654, 8
      %s5656 = scalar_lea.vmem %s8, %s5655
      // Predicated region
      $region53: #{conv_block_forward.1} parent=51 // pred_check
        %p5657 = pneg %p210
      $region54: #{conv_block_forward.1} parent=51 // pred_check_branch
        %5659 = sbr.rel (%p5657) target = $region56
      $region55: #{conv_block_forward.1} parent=51 // pred_region
        _
      $region56: #{conv_block_forward.1} parent=51 // pred_fallthru
        _
    $region52: #{conv_block_forward.1} parent=5 // pred_fallthru
      _
    %p5660 = scmp.le.s32.totalorder 2, %s14
    // Predicated region
    $region57: #{conv_block_forward.1} parent=5 // pred_check
      %p5661 = pneg %p5660
    $region58: #{conv_block_forward.1} parent=5 // pred_check_branch
      %5663 = sbr.rel (%p5661) target = $region60
    $region59: #{conv_block_forward.1} parent=5 // pred_region
      %s5664 = ssub.s32 %s14, 2
      // Predicated region
      $region61: #{conv_block_forward.1} parent=59 // pred_check
        %p5665 = pneg %p216
      $region62: #{conv_block_forward.1} parent=59 // pred_check_branch
        %5667 = sbr.rel (%p5665) target = $region64
      $region63: #{conv_block_forward.1} parent=59 // pred_region
        %p5668 = scmp.lt.s32.totalorder %s20, 1
        %s5669 = scalar_select %p5668, %s20, 1
        %s5670 = smul.addr %s5669, 4
        %s5671 = smul.addr %s5670, 8
        %s5672 = scalar_lea.vmem %s8, %s5671
      $region64: #{conv_block_forward.1} parent=59 // pred_fallthru
        _
    $region60: #{conv_block_forward.1} parent=5 // pred_fallthru
      _
  $region6: #{conv_block_forward.1} parent=0 // loop_footer
    %s18 = sadd.s32 1, %s14
  $region7: #{conv_block_forward.1} parent=0 // loop_footer_branch
    %13 = sbr.rel target = $region3
  $region8: #{conv_block_forward.1} parent=0 // loop_exit
    _

</llo_original>
